<compile_context>
chip_gen: v5e
topology: v5e:2x2
jax: 0.10.0
libtpu: 0.0.40
codegen_flags: <defaults>
</compile_context>

<pallas_src>
import functools
import numpy as np
import jax
import jax.numpy as jnp
from jax import lax
from jax.experimental import pallas as pl
from jax.experimental.pallas import tpu as pltpu


# ---------------------------------------------------------------------------
# Parameters (PyTorch-equivalent) and init-time conversion to kernel layout
# ---------------------------------------------------------------------------

def init_params(key, in_channels, num_classes):
    """PyTorch-equivalent parameters.
    w1/w2: (kh, kw, cin, cout); wfc rows in PyTorch (C, H, W) flatten order."""
    k1, k2, k3, k4, k5, k6 = jax.random.split(key, 6)
    s1 = 1.0 / np.sqrt(9.0 * in_channels)
    s2 = 1.0 / np.sqrt(9.0 * 16.0)
    s3 = 1.0 / np.sqrt(32.0 * 7.0 * 7.0)
    return {
        "w1": jax.random.uniform(k1, (3, 3, in_channels, 16), jnp.float32, -s1, s1),
        "b1": jax.random.uniform(k2, (16,), jnp.float32, -s1, s1),
        "w2": jax.random.uniform(k3, (3, 3, 16, 32), jnp.float32, -s2, s2),
        "b2": jax.random.uniform(k4, (32,), jnp.float32, -s2, s2),
        "wfc": jax.random.uniform(k5, (32 * 7 * 7, num_classes), jnp.float32, -s3, s3),
        "bfc": jax.random.uniform(k6, (num_classes,), jnp.float32, -s3, s3),
    }


def _banded_conv_weight(w, w_in, parity):
    """Banded matmul weight for a 3x3 'same' conv in row layout.

    w: (3, 3, cin, cout).  Returns (3, w_in*cin, (w_in//2)*cout) bf16 so that
      out[i, j2*cout + co]  (output column j = 2*j2 + parity)
        = sum_dy  xpad[i+dy, :] @ big[dy]
    where xpad is the H-zero-padded activation in (row, w*cin) layout.
    W-edge zero padding is implemented by dropping out-of-range input columns.
    """
    _, _, cin, cout = w.shape
    w_out = w_in // 2
    dx = np.arange(3)[:, None, None]
    jin = np.arange(w_in)[None, :, None]
    j2 = np.arange(w_out)[None, None, :]
    sel = (jin == 2 * j2 + parity + dx - 1).astype(np.float32)   # (3, w_in, w_out)
    big = jnp.einsum("xij,yxco->yicjo", jnp.asarray(sel), w)     # (3,w_in,cin,w_out,cout)
    return big.reshape(3, w_in * cin, w_out * cout).astype(jnp.bfloat16)


def prepare_params(params, H, W):
    """One-time (init-time) conversion to the layouts the fused kernel consumes."""
    cin = params["w1"].shape[2]
    nc = params["wfc"].shape[1]
    W2, W4, H4 = W // 2, W // 4, H // 4
    K1 = W * cin
    ncp = max(128, -(-nc // 128) * 128)              # lane-dense fc output
    # conv1: fold the 3 row taps into K (rows dy*K1 + k)
    w1e = _banded_conv_weight(params["w1"], W, 0).reshape(3 * K1, W2 * 16)
    w1o = _banded_conv_weight(params["w1"], W, 1).reshape(3 * K1, W2 * 16)
    # conv2: keep the per-tap structure (3, K2, N2)
    w2e = _banded_conv_weight(params["w2"], W2, 0)
    w2o = _banded_conv_weight(params["w2"], W2, 1)
    # fold PyTorch's (C,H,W) flatten order into the fc rows -> (H,W,C), pad lanes
    wfc_hwc = (params["wfc"].reshape(32, H4, W4, nc)
               .transpose(1, 2, 0, 3).reshape(H4 * W4 * 32, nc))
    wfc_p = jnp.zeros((H4 * W4 * 32, ncp), jnp.float32).at[:, :nc].set(wfc_hwc)
    bfc_p = jnp.zeros((1, ncp), jnp.float32).at[0, :nc].set(params["bfc"])
    return {
        "w1e": w1e,
        "w1o": w1o,
        "b1t": jnp.tile(params["b1"], W2).reshape(1, W2 * 16).astype(jnp.float32),
        "w2e": w2e,
        "w2o": w2o,
        "b2t": jnp.tile(params["b2"], W4).reshape(1, W4 * 32).astype(jnp.float32),
        "wfc": wfc_p.astype(jnp.bfloat16),
        "bfc": bfc_p.astype(jnp.float32),
    }


# ---------------------------------------------------------------------------
# Fused forward pass (single pallas_call, grid over batch tiles of B samples)
# ---------------------------------------------------------------------------

@functools.partial(jax.jit, static_argnames=("num_classes", "block_batch"))
def simple_cnn_forward(kparams, x_nchw, num_classes, block_batch=16):
    n, cin, H, W = x_nchw.shape
    assert H % 4 == 0 and W % 4 == 0, "spatial dims must be divisible by 4"
    B = block_batch
    assert B % 8 == 0, "block_batch must be a multiple of 8"
    H2, W2, H4, W4 = H // 2, W // 2, H // 4, W // 4
    C1, C2 = 16, 32
    K1 = W * cin                      # conv1 lane width per tap
    N1 = W2 * C1                      # conv1 output lanes (= K2)
    K2 = N1
    N2 = W4 * C2                      # conv2 output lanes (= fc per-row width)
    HB2 = H2 + 2                      # conv2 padded rows per sample
    NCP = kparams["wfc"].shape[1]     # lane-padded class dim

    # ---- XLA-side input packing (cheap, runs once per forward) --------------
    n_pad = -(-n // B) * B
    xin = x_nchw if n_pad == n else jnp.pad(
        x_nchw, ((0, n_pad - n), (0, 0), (0, 0), (0, 0)))
    # NCHW -> per-sample row layout (H, W*cin), zero-pad H by 1 on both sides,
    # then pack each output row's 3-row window into lanes: (H, 3*K1).
    xhwc = jnp.transpose(xin, (0, 2, 3, 1)).reshape(n_pad, H, K1)
    xh = jnp.pad(xhwc, ((0, 0), (1, 1), (0, 0)))
    x3 = jnp.concatenate([xh[:, d:d + H, :] for d in range(3)], axis=-1)
    # Interleave rows inside each batch tile: row index = i*B + b  (image-row
    # major, sample minor) so all in-kernel slices are contiguous.
    x3 = x3.reshape(n_pad // B, B, H, 3 * K1).transpose(0, 2, 1, 3)
    x3 = x3.reshape(n_pad // B * H * B, 3 * K1).astype(jnp.bfloat16)

    def kernel(x_ref, w1e_ref, w1o_ref, b1_ref, w2e_ref, w2o_ref, b2_ref,
               wfc_ref, bfc_ref, out_ref, pw1, xp2, pw2):
        # ---- conv1 + bias + ReLU + width-pool (even/odd banded weights) ----
        lhs1 = x_ref[...]                                        # (H*B, 3*K1) bf16
        a_e = jnp.dot(lhs1, w1e_ref[...], preferred_element_type=jnp.float32)
        a_o = jnp.dot(lhs1, w1o_ref[...], preferred_element_type=jnp.float32)
        bias1 = b1_ref[...]
        # even/odd output columns -> their max is the W-direction 2x2 pool
        pw1[...] = jnp.maximum(jnp.maximum(a_e + bias1, 0.0),
                               jnp.maximum(a_o + bias1, 0.0))

        # ---- height-pool conv1 -> zero-padded conv2 input (bf16 scratch) ----
        xp2[0:B, :] = jnp.zeros((B, K2), jnp.bfloat16)                      # top pad
        xp2[(HB2 - 1) * B:(HB2 + 2) * B, :] = jnp.zeros((3 * B, K2), jnp.bfloat16)
        for j in range(H2):                         # 14 contiguous row blocks
            blk = jnp.maximum(pw1[(2 * j) * B:(2 * j + 1) * B, :],
                              pw1[(2 * j + 1) * B:(2 * j + 2) * B, :])
            xp2[(j + 1) * B:(j + 2) * B, :] = blk.astype(jnp.bfloat16)

        # ---- conv2 (3 row taps x even/odd parities) + bias + ReLU + W-pool --
        a2_e = jnp.zeros((HB2 * B, N2), jnp.float32)
        a2_o = jnp.zeros((HB2 * B, N2), jnp.float32)
        for dy in range(3):
            lhs2 = xp2[dy * B:(dy + HB2) * B, :]
            a2_e = a2_e + jnp.dot(lhs2, w2e_ref[dy], preferred_element_type=jnp.float32)
            a2_o = a2_o + jnp.dot(lhs2, w2o_ref[dy], preferred_element_type=jnp.float32)
        bias2 = b2_ref[...]
        pw2[...] = jnp.maximum(jnp.maximum(a2_e + bias2, 0.0),
                               jnp.maximum(a2_o + bias2, 0.0))

        # ---- height-pool conv2 fused into the fc: 7 batched (B,F)@(F,NCP) ---
        logits = jnp.zeros((B, NCP), jnp.float32)
        for r in range(H4):
            row = jnp.maximum(pw2[(2 * r) * B:(2 * r + 1) * B, :],
                              pw2[(2 * r + 1) * B:(2 * r + 2) * B, :])
            logits = logits + jnp.dot(row.astype(jnp.bfloat16),
                                      wfc_ref[r * N2:(r + 1) * N2, :],
                                      preferred_element_type=jnp.float32)
        out_ref[...] = logits + bfc_ref[...]

    grid_spec = pltpu.PrefetchScalarGridSpec(
        num_scalar_prefetch=0,
        grid=(n_pad // B,),
        in_specs=[
            pl.BlockSpec((H * B, 3 * K1), lambda g: (g, 0)),   # packed input tile
            pl.BlockSpec((3 * K1, N1), lambda g: (0, 0)),      # conv1 weights (even)
            pl.BlockSpec((3 * K1, N1), lambda g: (0, 0)),      # conv1 weights (odd)
            pl.BlockSpec((1, N1), lambda g: (0, 0)),           # conv1 bias (tiled)
            pl.BlockSpec((3, K2, N2), lambda g: (0, 0, 0)),    # conv2 weights (even)
            pl.BlockSpec((3, K2, N2), lambda g: (0, 0, 0)),    # conv2 weights (odd)
            pl.BlockSpec((1, N2), lambda g: (0, 0)),           # conv2 bias (tiled)
            pl.BlockSpec((H4 * N2, NCP), lambda g: (0, 0)),    # fc weight (HWC rows)
            pl.BlockSpec((1, NCP), lambda g: (0, 0)),          # fc bias (lane-padded)
        ],
        out_specs=pl.BlockSpec((B, NCP), lambda g: (g, 0)),
        scratch_shapes=[
            pltpu.VMEM((H * B, N1), jnp.float32),          # conv1 W-pooled activation
            pltpu.VMEM(((HB2 + 2) * B, K2), jnp.bfloat16), # zero-padded conv2 input
            pltpu.VMEM((HB2 * B, N2), jnp.float32),        # conv2 W-pooled activation
        ],
    )

    out = pl.pallas_call(
        kernel,
        out_shape=jax.ShapeDtypeStruct((n_pad, NCP), jnp.float32),
        grid_spec=grid_spec,
        compiler_params=pltpu.CompilerParams(
            dimension_semantics=("parallel",)),     # batch tiles split across TCs
    )(x3, kparams["w1e"], kparams["w1o"], kparams["b1t"],
      kparams["w2e"], kparams["w2o"], kparams["b2t"],
      kparams["wfc"], kparams["bfc"])
    return out[:n, :num_classes]


# ---------------------------------------------------------------------------
# Pure-JAX reference (matches the PyTorch module exactly)
# ---------------------------------------------------------------------------

def reference_forward(params, x_nchw):
    dn = ("NCHW", "OIHW", "NCHW")
    hp = lax.Precision.HIGHEST
    w1 = jnp.transpose(params["w1"], (3, 2, 0, 1))
    w2 = jnp.transpose(params["w2"], (3, 2, 0, 1))
    y = lax.conv_general_dilated(x_nchw, w1, (1, 1), ((1, 1), (1, 1)),
                                 dimension_numbers=dn, precision=hp)
    y = jax.nn.relu(y + params["b1"][None, :, None, None])
    y = lax.reduce_window(y, -jnp.inf, lax.max, (1, 1, 2, 2), (1, 1, 2, 2), "VALID")
    y = lax.conv_general_dilated(y, w2, (1, 1), ((1, 1), (1, 1)),
                                 dimension_numbers=dn, precision=hp)
    y = jax.nn.relu(y + params["b2"][None, :, None, None])
    y = lax.reduce_window(y, -jnp.inf, lax.max, (1, 1, 2, 2), (1, 1, 2, 2), "VALID")
    flat = y.reshape(y.shape[0], -1)                 # PyTorch (C,H,W) flatten
    return jnp.dot(flat, params["wfc"], precision=hp) + params["bfc"]


if __name__ == "__main__":
    in_channels = 1
    num_classes = 10
    batch = 2

    key = jax.random.PRNGKey(0)
    kx, kp = jax.random.split(key)
    # fc expects 32*7*7 features -> 28x28 spatial input (MNIST-like)
    x = jax.random.normal(kx, (batch, in_channels, 28, 28), jnp.float32)
    params = init_params(kp, in_channels, num_classes)
    kparams = prepare_params(params, 28, 28)     # init-time layout conversion

    out = jax.block_until_ready(
        simple_cnn_forward(kparams, x, num_classes=num_classes))
    assert out.shape == (batch, num_classes)

    ref = jax.block_until_ready(reference_forward(params, x))
    err = float(jnp.max(jnp.abs(out - ref)))
    assert err < 0.05, f"mismatch vs reference: {err}"
    print("KERNEL_OK")
</pallas_src>

<mosaic_0001>
module attributes {stable_mosaic.version = 11 : i64} {
  func.func @kernel(%arg0: i32, %arg1: memref<448x84xbf16, #tpu.memory_space<vmem>>, %arg2: memref<84x224xbf16, #tpu.memory_space<vmem>>, %arg3: memref<84x224xbf16, #tpu.memory_space<vmem>>, %arg4: memref<1x224xf32, #tpu.memory_space<vmem>>, %arg5: memref<3x224x224xbf16, #tpu.memory_space<vmem>>, %arg6: memref<3x224x224xbf16, #tpu.memory_space<vmem>>, %arg7: memref<1x224xf32, #tpu.memory_space<vmem>>, %arg8: memref<1568x128xbf16, #tpu.memory_space<vmem>>, %arg9: memref<1x128xf32, #tpu.memory_space<vmem>>, %arg10: memref<16x128xf32, #tpu.memory_space<vmem>>, %arg11: memref<448x224xf32, #tpu.memory_space<vmem>>, %arg12: memref<288x224xbf16, #tpu.memory_space<vmem>>, %arg13: memref<256x224xf32, #tpu.memory_space<vmem>>) attributes {dimension_semantics = [#tpu.dimension_semantics<parallel>], iteration_bounds = array<i64: 1>, scalar_prefetch = 0 : i64, scratch_operands = 3 : i64, tpu.core_type = #tpu.core_type<tc>, window_params = [{transform_indices = @transform_0, window_bounds = array<i64: 448, 84>}, {pipeline_mode = #tpu.pipeline_mode<synchronous>, transform_indices = @transform_1, window_bounds = array<i64: 84, 224>}, {pipeline_mode = #tpu.pipeline_mode<synchronous>, transform_indices = @transform_2, window_bounds = array<i64: 84, 224>}, {pipeline_mode = #tpu.pipeline_mode<synchronous>, transform_indices = @transform_3, window_bounds = array<i64: 1, 224>}, {pipeline_mode = #tpu.pipeline_mode<synchronous>, transform_indices = @transform_4, window_bounds = array<i64: 3, 224, 224>}, {pipeline_mode = #tpu.pipeline_mode<synchronous>, transform_indices = @transform_5, window_bounds = array<i64: 3, 224, 224>}, {pipeline_mode = #tpu.pipeline_mode<synchronous>, transform_indices = @transform_6, window_bounds = array<i64: 1, 224>}, {pipeline_mode = #tpu.pipeline_mode<synchronous>, transform_indices = @transform_7, window_bounds = array<i64: 1568, 128>}, {pipeline_mode = #tpu.pipeline_mode<synchronous>, transform_indices = @transform_8, window_bounds = array<i64: 1, 128>}, {transform_indices = @transform_9, window_bounds = array<i64: 16, 128>}]} {
    %c0 = arith.constant 0 : index
    %c0_0 = arith.constant 0 : index
    %0 = vector.load %arg1[%c0, %c0_0] : memref<448x84xbf16, #tpu.memory_space<vmem>>, vector<448x84xbf16>
    %c0_1 = arith.constant 0 : index
    %c0_2 = arith.constant 0 : index
    %1 = vector.load %arg2[%c0_1, %c0_2] : memref<84x224xbf16, #tpu.memory_space<vmem>>, vector<84x224xbf16>
    %cst = arith.constant dense<0.000000e+00> : vector<448x224xf32>
    %2 = tpu.matmul %0, %1, %cst {dimension_numbers = #tpu.dot_dimension_numbers<[1], [0], [0], [1], [0, 0, 1, 1], [], []>} : vector<448x84xbf16>, vector<84x224xbf16>, vector<448x224xf32> -> vector<448x224xf32>
    %c0_3 = arith.constant 0 : index
    %c0_4 = arith.constant 0 : index
    %3 = vector.load %arg3[%c0_3, %c0_4] : memref<84x224xbf16, #tpu.memory_space<vmem>>, vector<84x224xbf16>
    %cst_5 = arith.constant dense<0.000000e+00> : vector<448x224xf32>
    %4 = tpu.matmul %0, %3, %cst_5 {dimension_numbers = #tpu.dot_dimension_numbers<[1], [0], [0], [1], [0, 0, 1, 1], [], []>} : vector<448x84xbf16>, vector<84x224xbf16>, vector<448x224xf32> -> vector<448x224xf32>
    %c0_6 = arith.constant 0 : index
    %c0_7 = arith.constant 0 : index
    %5 = vector.load %arg4[%c0_6, %c0_7] : memref<1x224xf32, #tpu.memory_space<vmem>>, vector<1x224xf32>
    %6 = vector.broadcast %5 : vector<1x224xf32> to vector<448x224xf32>
    %7 = arith.addf %2, %6 : vector<448x224xf32>
    %cst_8 = arith.constant 0.000000e+00 : f32
    %8 = vector.broadcast %cst_8 : f32 to vector<448x224xf32>
    %9 = arith.maximumf %7, %8 : vector<448x224xf32>
    %10 = vector.broadcast %5 : vector<1x224xf32> to vector<448x224xf32>
    %11 = arith.addf %4, %10 : vector<448x224xf32>
    %cst_9 = arith.constant 0.000000e+00 : f32
    %12 = vector.broadcast %cst_9 : f32 to vector<448x224xf32>
    %13 = arith.maximumf %11, %12 : vector<448x224xf32>
    %14 = arith.maximumf %9, %13 : vector<448x224xf32>
    %c0_10 = arith.constant 0 : index
    %c0_11 = arith.constant 0 : index
    %15 = vector.load %arg11[%c0_10, %c0_11] : memref<448x224xf32, #tpu.memory_space<vmem>>, vector<448x224xf32>
    tpu.vector_store %arg11[%c0_10, %c0_11], %14 {strides = array<i32>} : memref<448x224xf32, #tpu.memory_space<vmem>>, vector<448x224xf32>,
    %cst_12 = arith.constant 0.000000e+00 : bf16
    %16 = vector.broadcast %cst_12 : bf16 to vector<16x224xbf16>
    %c0_13 = arith.constant 0 : index
    %c0_14 = arith.constant 0 : index
    %17 = vector.load %arg12[%c0_13, %c0_14] : memref<288x224xbf16, #tpu.memory_space<vmem>>, vector<16x224xbf16>
    tpu.vector_store %arg12[%c0_13, %c0_14], %16 {strides = array<i32>} : memref<288x224xbf16, #tpu.memory_space<vmem>>, vector<16x224xbf16>,
    %cst_15 = arith.constant 0.000000e+00 : bf16
    %18 = vector.broadcast %cst_15 : bf16 to vector<48x224xbf16>
    %c240 = arith.constant 240 : index
    %c0_16 = arith.constant 0 : index
    %19 = vector.load %arg12[%c240, %c0_16] : memref<288x224xbf16, #tpu.memory_space<vmem>>, vector<48x224xbf16>
    tpu.vector_store %arg12[%c240, %c0_16], %18 {strides = array<i32>} : memref<288x224xbf16, #tpu.memory_space<vmem>>, vector<48x224xbf16>,
    %c0_17 = arith.constant 0 : index
    %c0_18 = arith.constant 0 : index
    %20 = vector.load %arg11[%c0_17, %c0_18] : memref<448x224xf32, #tpu.memory_space<vmem>>, vector<16x224xf32>
    %c16 = arith.constant 16 : index
    %c0_19 = arith.constant 0 : index
    %21 = vector.load %arg11[%c16, %c0_19] : memref<448x224xf32, #tpu.memory_space<vmem>>, vector<16x224xf32>
    %22 = arith.maximumf %20, %21 : vector<16x224xf32>
    %23 = arith.truncf %22 : vector<16x224xf32> to vector<16x224xbf16>
    %c16_20 = arith.constant 16 : index
    %c0_21 = arith.constant 0 : index
    %24 = vector.load %arg12[%c16_20, %c0_21] : memref<288x224xbf16, #tpu.memory_space<vmem>>, vector<16x224xbf16>
    tpu.vector_store %arg12[%c16_20, %c0_21], %23 {strides = array<i32>} : memref<288x224xbf16, #tpu.memory_space<vmem>>, vector<16x224xbf16>,
    %c32 = arith.constant 32 : index
    %c0_22 = arith.constant 0 : index
    %25 = vector.load %arg11[%c32, %c0_22] : memref<448x224xf32, #tpu.memory_space<vmem>>, vector<16x224xf32>
    %c48 = arith.constant 48 : index
    %c0_23 = arith.constant 0 : index
    %26 = vector.load %arg11[%c48, %c0_23] : memref<448x224xf32, #tpu.memory_space<vmem>>, vector<16x224xf32>
    %27 = arith.maximumf %25, %26 : vector<16x224xf32>
    %28 = arith.truncf %27 : vector<16x224xf32> to vector<16x224xbf16>
    %c32_24 = arith.constant 32 : index
    %c0_25 = arith.constant 0 : index
    %29 = vector.load %arg12[%c32_24, %c0_25] : memref<288x224xbf16, #tpu.memory_space<vmem>>, vector<16x224xbf16>
    tpu.vector_store %arg12[%c32_24, %c0_25], %28 {strides = array<i32>} : memref<288x224xbf16, #tpu.memory_space<vmem>>, vector<16x224xbf16>,
    %c64 = arith.constant 64 : index
    %c0_26 = arith.constant 0 : index
    %30 = vector.load %arg11[%c64, %c0_26] : memref<448x224xf32, #tpu.memory_space<vmem>>, vector<16x224xf32>
    %c80 = arith.constant 80 : index
    %c0_27 = arith.constant 0 : index
    %31 = vector.load %arg11[%c80, %c0_27] : memref<448x224xf32, #tpu.memory_space<vmem>>, vector<16x224xf32>
    %32 = arith.maximumf %30, %31 : vector<16x224xf32>
    %33 = arith.truncf %32 : vector<16x224xf32> to vector<16x224xbf16>
    %c48_28 = arith.constant 48 : index
    %c0_29 = arith.constant 0 : index
    %34 = vector.load %arg12[%c48_28, %c0_29] : memref<288x224xbf16, #tpu.memory_space<vmem>>, vector<16x224xbf16>
    tpu.vector_store %arg12[%c48_28, %c0_29], %33 {strides = array<i32>} : memref<288x224xbf16, #tpu.memory_space<vmem>>, vector<16x224xbf16>,
    %c96 = arith.constant 96 : index
    %c0_30 = arith.constant 0 : index
    %35 = vector.load %arg11[%c96, %c0_30] : memref<448x224xf32, #tpu.memory_space<vmem>>, vector<16x224xf32>
    %c112 = arith.constant 112 : index
    %c0_31 = arith.constant 0 : index
    %36 = vector.load %arg11[%c112, %c0_31] : memref<448x224xf32, #tpu.memory_space<vmem>>, vector<16x224xf32>
    %37 = arith.maximumf %35, %36 : vector<16x224xf32>
    %38 = arith.truncf %37 : vector<16x224xf32> to vector<16x224xbf16>
    %c64_32 = arith.constant 64 : index
    %c0_33 = arith.constant 0 : index
    %39 = vector.load %arg12[%c64_32, %c0_33] : memref<288x224xbf16, #tpu.memory_space<vmem>>, vector<16x224xbf16>
    tpu.vector_store %arg12[%c64_32, %c0_33], %38 {strides = array<i32>} : memref<288x224xbf16, #tpu.memory_space<vmem>>, vector<16x224xbf16>,
    %c128 = arith.constant 128 : index
    %c0_34 = arith.constant 0 : index
    %40 = vector.load %arg11[%c128, %c0_34] : memref<448x224xf32, #tpu.memory_space<vmem>>, vector<16x224xf32>
    %c144 = arith.constant 144 : index
    %c0_35 = arith.constant 0 : index
    %41 = vector.load %arg11[%c144, %c0_35] : memref<448x224xf32, #tpu.memory_space<vmem>>, vector<16x224xf32>
    %42 = arith.maximumf %40, %41 : vector<16x224xf32>
    %43 = arith.truncf %42 : vector<16x224xf32> to vector<16x224xbf16>
    %c80_36 = arith.constant 80 : index
    %c0_37 = arith.constant 0 : index
    %44 = vector.load %arg12[%c80_36, %c0_37] : memref<288x224xbf16, #tpu.memory_space<vmem>>, vector<16x224xbf16>
    tpu.vector_store %arg12[%c80_36, %c0_37], %43 {strides = array<i32>} : memref<288x224xbf16, #tpu.memory_space<vmem>>, vector<16x224xbf16>,
    %c160 = arith.constant 160 : index
    %c0_38 = arith.constant 0 : index
    %45 = vector.load %arg11[%c160, %c0_38] : memref<448x224xf32, #tpu.memory_space<vmem>>, vector<16x224xf32>
    %c176 = arith.constant 176 : index
    %c0_39 = arith.constant 0 : index
    %46 = vector.load %arg11[%c176, %c0_39] : memref<448x224xf32, #tpu.memory_space<vmem>>, vector<16x224xf32>
    %47 = arith.maximumf %45, %46 : vector<16x224xf32>
    %48 = arith.truncf %47 : vector<16x224xf32> to vector<16x224xbf16>
    %c96_40 = arith.constant 96 : index
    %c0_41 = arith.constant 0 : index
    %49 = vector.load %arg12[%c96_40, %c0_41] : memref<288x224xbf16, #tpu.memory_space<vmem>>, vector<16x224xbf16>
    tpu.vector_store %arg12[%c96_40, %c0_41], %48 {strides = array<i32>} : memref<288x224xbf16, #tpu.memory_space<vmem>>, vector<16x224xbf16>,
    %c192 = arith.constant 192 : index
    %c0_42 = arith.constant 0 : index
    %50 = vector.load %arg11[%c192, %c0_42] : memref<448x224xf32, #tpu.memory_space<vmem>>, vector<16x224xf32>
    %c208 = arith.constant 208 : index
    %c0_43 = arith.constant 0 : index
    %51 = vector.load %arg11[%c208, %c0_43] : memref<448x224xf32, #tpu.memory_space<vmem>>, vector<16x224xf32>
    %52 = arith.maximumf %50, %51 : vector<16x224xf32>
    %53 = arith.truncf %52 : vector<16x224xf32> to vector<16x224xbf16>
    %c112_44 = arith.constant 112 : index
    %c0_45 = arith.constant 0 : index
    %54 = vector.load %arg12[%c112_44, %c0_45] : memref<288x224xbf16, #tpu.memory_space<vmem>>, vector<16x224xbf16>
    tpu.vector_store %arg12[%c112_44, %c0_45], %53 {strides = array<i32>} : memref<288x224xbf16, #tpu.memory_space<vmem>>, vector<16x224xbf16>,
    %c224 = arith.constant 224 : index
    %c0_46 = arith.constant 0 : index
    %55 = vector.load %arg11[%c224, %c0_46] : memref<448x224xf32, #tpu.memory_space<vmem>>, vector<16x224xf32>
    %c240_47 = arith.constant 240 : index
    %c0_48 = arith.constant 0 : index
    %56 = vector.load %arg11[%c240_47, %c0_48] : memref<448x224xf32, #tpu.memory_space<vmem>>, vector<16x224xf32>
    %57 = arith.maximumf %55, %56 : vector<16x224xf32>
    %58 = arith.truncf %57 : vector<16x224xf32> to vector<16x224xbf16>
    %c128_49 = arith.constant 128 : index
    %c0_50 = arith.constant 0 : index
    %59 = vector.load %arg12[%c128_49, %c0_50] : memref<288x224xbf16, #tpu.memory_space<vmem>>, vector<16x224xbf16>
    tpu.vector_store %arg12[%c128_49, %c0_50], %58 {strides = array<i32>} : memref<288x224xbf16, #tpu.memory_space<vmem>>, vector<16x224xbf16>,
    %c256 = arith.constant 256 : index
    %c0_51 = arith.constant 0 : index
    %60 = vector.load %arg11[%c256, %c0_51] : memref<448x224xf32, #tpu.memory_space<vmem>>, vector<16x224xf32>
    %c272 = arith.constant 272 : index
    %c0_52 = arith.constant 0 : index
    %61 = vector.load %arg11[%c272, %c0_52] : memref<448x224xf32, #tpu.memory_space<vmem>>, vector<16x224xf32>
    %62 = arith.maximumf %60, %61 : vector<16x224xf32>
    %63 = arith.truncf %62 : vector<16x224xf32> to vector<16x224xbf16>
    %c144_53 = arith.constant 144 : index
    %c0_54 = arith.constant 0 : index
    %64 = vector.load %arg12[%c144_53, %c0_54] : memref<288x224xbf16, #tpu.memory_space<vmem>>, vector<16x224xbf16>
    tpu.vector_store %arg12[%c144_53, %c0_54], %63 {strides = array<i32>} : memref<288x224xbf16, #tpu.memory_space<vmem>>, vector<16x224xbf16>,
    %c288 = arith.constant 288 : index
    %c0_55 = arith.constant 0 : index
    %65 = vector.load %arg11[%c288, %c0_55] : memref<448x224xf32, #tpu.memory_space<vmem>>, vector<16x224xf32>
    %c304 = arith.constant 304 : index
    %c0_56 = arith.constant 0 : index
    %66 = vector.load %arg11[%c304, %c0_56] : memref<448x224xf32, #tpu.memory_space<vmem>>, vector<16x224xf32>
    %67 = arith.maximumf %65, %66 : vector<16x224xf32>
    %68 = arith.truncf %67 : vector<16x224xf32> to vector<16x224xbf16>
    %c160_57 = arith.constant 160 : index
    %c0_58 = arith.constant 0 : index
    %69 = vector.load %arg12[%c160_57, %c0_58] : memref<288x224xbf16, #tpu.memory_space<vmem>>, vector<16x224xbf16>
    tpu.vector_store %arg12[%c160_57, %c0_58], %68 {strides = array<i32>} : memref<288x224xbf16, #tpu.memory_space<vmem>>, vector<16x224xbf16>,
    %c320 = arith.constant 320 : index
    %c0_59 = arith.constant 0 : index
    %70 = vector.load %arg11[%c320, %c0_59] : memref<448x224xf32, #tpu.memory_space<vmem>>, vector<16x224xf32>
    %c336 = arith.constant 336 : index
    %c0_60 = arith.constant 0 : index
    %71 = vector.load %arg11[%c336, %c0_60] : memref<448x224xf32, #tpu.memory_space<vmem>>, vector<16x224xf32>
    %72 = arith.maximumf %70, %71 : vector<16x224xf32>
    %73 = arith.truncf %72 : vector<16x224xf32> to vector<16x224xbf16>
    %c176_61 = arith.constant 176 : index
    %c0_62 = arith.constant 0 : index
    %74 = vector.load %arg12[%c176_61, %c0_62] : memref<288x224xbf16, #tpu.memory_space<vmem>>, vector<16x224xbf16>
    tpu.vector_store %arg12[%c176_61, %c0_62], %73 {strides = array<i32>} : memref<288x224xbf16, #tpu.memory_space<vmem>>, vector<16x224xbf16>,
    %c352 = arith.constant 352 : index
    %c0_63 = arith.constant 0 : index
    %75 = vector.load %arg11[%c352, %c0_63] : memref<448x224xf32, #tpu.memory_space<vmem>>, vector<16x224xf32>
    %c368 = arith.constant 368 : index
    %c0_64 = arith.constant 0 : index
    %76 = vector.load %arg11[%c368, %c0_64] : memref<448x224xf32, #tpu.memory_space<vmem>>, vector<16x224xf32>
    %77 = arith.maximumf %75, %76 : vector<16x224xf32>
    %78 = arith.truncf %77 : vector<16x224xf32> to vector<16x224xbf16>
    %c192_65 = arith.constant 192 : index
    %c0_66 = arith.constant 0 : index
    %79 = vector.load %arg12[%c192_65, %c0_66] : memref<288x224xbf16, #tpu.memory_space<vmem>>, vector<16x224xbf16>
    tpu.vector_store %arg12[%c192_65, %c0_66], %78 {strides = array<i32>} : memref<288x224xbf16, #tpu.memory_space<vmem>>, vector<16x224xbf16>,
    %c384 = arith.constant 384 : index
    %c0_67 = arith.constant 0 : index
    %80 = vector.load %arg11[%c384, %c0_67] : memref<448x224xf32, #tpu.memory_space<vmem>>, vector<16x224xf32>
    %c400 = arith.constant 400 : index
    %c0_68 = arith.constant 0 : index
    %81 = vector.load %arg11[%c400, %c0_68] : memref<448x224xf32, #tpu.memory_space<vmem>>, vector<16x224xf32>
    %82 = arith.maximumf %80, %81 : vector<16x224xf32>
    %83 = arith.truncf %82 : vector<16x224xf32> to vector<16x224xbf16>
    %c208_69 = arith.constant 208 : index
    %c0_70 = arith.constant 0 : index
    %84 = vector.load %arg12[%c208_69, %c0_70] : memref<288x224xbf16, #tpu.memory_space<vmem>>, vector<16x224xbf16>
    tpu.vector_store %arg12[%c208_69, %c0_70], %83 {strides = array<i32>} : memref<288x224xbf16, #tpu.memory_space<vmem>>, vector<16x224xbf16>,
    %c416 = arith.constant 416 : index
    %c0_71 = arith.constant 0 : index
    %85 = vector.load %arg11[%c416, %c0_71] : memref<448x224xf32, #tpu.memory_space<vmem>>, vector<16x224xf32>
    %c432 = arith.constant 432 : index
    %c0_72 = arith.constant 0 : index
    %86 = vector.load %arg11[%c432, %c0_72] : memref<448x224xf32, #tpu.memory_space<vmem>>, vector<16x224xf32>
    %87 = arith.maximumf %85, %86 : vector<16x224xf32>
    %88 = arith.truncf %87 : vector<16x224xf32> to vector<16x224xbf16>
    %c224_73 = arith.constant 224 : index
    %c0_74 = arith.constant 0 : index
    %89 = vector.load %arg12[%c224_73, %c0_74] : memref<288x224xbf16, #tpu.memory_space<vmem>>, vector<16x224xbf16>
    tpu.vector_store %arg12[%c224_73, %c0_74], %88 {strides = array<i32>} : memref<288x224xbf16, #tpu.memory_space<vmem>>, vector<16x224xbf16>,
    %cst_75 = arith.constant 0.000000e+00 : f32
    %90 = vector.broadcast %cst_75 : f32 to vector<256x224xf32>
    %cst_76 = arith.constant 0.000000e+00 : f32
    %91 = vector.broadcast %cst_76 : f32 to vector<256x224xf32>
    %c0_77 = arith.constant 0 : index
    %c0_78 = arith.constant 0 : index
    %92 = vector.load %arg12[%c0_77, %c0_78] : memref<288x224xbf16, #tpu.memory_space<vmem>>, vector<256x224xbf16>
    %c0_79 = arith.constant 0 : index
    %c0_80 = arith.constant 0 : index
    %c0_81 = arith.constant 0 : index
    %93 = vector.load %arg5[%c0_79, %c0_80, %c0_81] : memref<3x224x224xbf16, #tpu.memory_space<vmem>>, vector<1x224x224xbf16>
    %94 = vector.shape_cast %93 : vector<1x224x224xbf16> to vector<224x224xbf16>
    %cst_82 = arith.constant dense<0.000000e+00> : vector<256x224xf32>
    %95 = tpu.matmul %92, %94, %cst_82 {dimension_numbers = #tpu.dot_dimension_numbers<[1], [0], [0], [1], [0, 0, 1, 1], [], []>} : vector<256x224xbf16>, vector<224x224xbf16>, vector<256x224xf32> -> vector<256x224xf32>
    %96 = arith.addf %90, %95 : vector<256x224xf32>
    %c0_83 = arith.constant 0 : index
    %c0_84 = arith.constant 0 : index
    %c0_85 = arith.constant 0 : index
    %97 = vector.load %arg6[%c0_83, %c0_84, %c0_85] : memref<3x224x224xbf16, #tpu.memory_space<vmem>>, vector<1x224x224xbf16>
    %98 = vector.shape_cast %97 : vector<1x224x224xbf16> to vector<224x224xbf16>
    %cst_86 = arith.constant dense<0.000000e+00> : vector<256x224xf32>
    %99 = tpu.matmul %92, %98, %cst_86 {dimension_numbers = #tpu.dot_dimension_numbers<[1], [0], [0], [1], [0, 0, 1, 1], [], []>} : vector<256x224xbf16>, vector<224x224xbf16>, vector<256x224xf32> -> vector<256x224xf32>
    %100 = arith.addf %91, %99 : vector<256x224xf32>
    %c16_87 = arith.constant 16 : index
    %c0_88 = arith.constant 0 : index
    %101 = vector.load %arg12[%c16_87, %c0_88] : memref<288x224xbf16, #tpu.memory_space<vmem>>, vector<256x224xbf16>
    %c1 = arith.constant 1 : index
    %c0_89 = arith.constant 0 : index
    %c0_90 = arith.constant 0 : index
    %102 = vector.load %arg5[%c1, %c0_89, %c0_90] : memref<3x224x224xbf16, #tpu.memory_space<vmem>>, vector<1x224x224xbf16>
    %103 = vector.shape_cast %102 : vector<1x224x224xbf16> to vector<224x224xbf16>
    %cst_91 = arith.constant dense<0.000000e+00> : vector<256x224xf32>
    %104 = tpu.matmul %101, %103, %cst_91 {dimension_numbers = #tpu.dot_dimension_numbers<[1], [0], [0], [1], [0, 0, 1, 1], [], []>} : vector<256x224xbf16>, vector<224x224xbf16>, vector<256x224xf32> -> vector<256x224xf32>
    %105 = arith.addf %96, %104 : vector<256x224xf32>
    %c1_92 = arith.constant 1 : index
    %c0_93 = arith.constant 0 : index
    %c0_94 = arith.constant 0 : index
    %106 = vector.load %arg6[%c1_92, %c0_93, %c0_94] : memref<3x224x224xbf16, #tpu.memory_space<vmem>>, vector<1x224x224xbf16>
    %107 = vector.shape_cast %106 : vector<1x224x224xbf16> to vector<224x224xbf16>
    %cst_95 = arith.constant dense<0.000000e+00> : vector<256x224xf32>
    %108 = tpu.matmul %101, %107, %cst_95 {dimension_numbers = #tpu.dot_dimension_numbers<[1], [0], [0], [1], [0, 0, 1, 1], [], []>} : vector<256x224xbf16>, vector<224x224xbf16>, vector<256x224xf32> -> vector<256x224xf32>
    %109 = arith.addf %100, %108 : vector<256x224xf32>
    %c32_96 = arith.constant 32 : index
    %c0_97 = arith.constant 0 : index
    %110 = vector.load %arg12[%c32_96, %c0_97] : memref<288x224xbf16, #tpu.memory_space<vmem>>, vector<256x224xbf16>
    %c2 = arith.constant 2 : index
    %c0_98 = arith.constant 0 : index
    %c0_99 = arith.constant 0 : index
    %111 = vector.load %arg5[%c2, %c0_98, %c0_99] : memref<3x224x224xbf16, #tpu.memory_space<vmem>>, vector<1x224x224xbf16>
    %112 = vector.shape_cast %111 : vector<1x224x224xbf16> to vector<224x224xbf16>
    %cst_100 = arith.constant dense<0.000000e+00> : vector<256x224xf32>
    %113 = tpu.matmul %110, %112, %cst_100 {dimension_numbers = #tpu.dot_dimension_numbers<[1], [0], [0], [1], [0, 0, 1, 1], [], []>} : vector<256x224xbf16>, vector<224x224xbf16>, vector<256x224xf32> -> vector<256x224xf32>
    %114 = arith.addf %105, %113 : vector<256x224xf32>
    %c2_101 = arith.constant 2 : index
    %c0_102 = arith.constant 0 : index
    %c0_103 = arith.constant 0 : index
    %115 = vector.load %arg6[%c2_101, %c0_102, %c0_103] : memref<3x224x224xbf16, #tpu.memory_space<vmem>>, vector<1x224x224xbf16>
    %116 = vector.shape_cast %115 : vector<1x224x224xbf16> to vector<224x224xbf16>
    %cst_104 = arith.constant dense<0.000000e+00> : vector<256x224xf32>
    %117 = tpu.matmul %110, %116, %cst_104 {dimension_numbers = #tpu.dot_dimension_numbers<[1], [0], [0], [1], [0, 0, 1, 1], [], []>} : vector<256x224xbf16>, vector<224x224xbf16>, vector<256x224xf32> -> vector<256x224xf32>
    %118 = arith.addf %109, %117 : vector<256x224xf32>
    %c0_105 = arith.constant 0 : index
    %c0_106 = arith.constant 0 : index
    %119 = vector.load %arg7[%c0_105, %c0_106] : memref<1x224xf32, #tpu.memory_space<vmem>>, vector<1x224xf32>
    %120 = vector.broadcast %119 : vector<1x224xf32> to vector<256x224xf32>
    %121 = arith.addf %114, %120 : vector<256x224xf32>
    %cst_107 = arith.constant 0.000000e+00 : f32
    %122 = vector.broadcast %cst_107 : f32 to vector<256x224xf32>
    %123 = arith.maximumf %121, %122 : vector<256x224xf32>
    %124 = vector.broadcast %119 : vector<1x224xf32> to vector<256x224xf32>
    %125 = arith.addf %118, %124 : vector<256x224xf32>
    %cst_108 = arith.constant 0.000000e+00 : f32
    %126 = vector.broadcast %cst_108 : f32 to vector<256x224xf32>
    %127 = arith.maximumf %125, %126 : vector<256x224xf32>
    %128 = arith.maximumf %123, %127 : vector<256x224xf32>
    %c0_109 = arith.constant 0 : index
    %c0_110 = arith.constant 0 : index
    %129 = vector.load %arg13[%c0_109, %c0_110] : memref<256x224xf32, #tpu.memory_space<vmem>>, vector<256x224xf32>
    tpu.vector_store %arg13[%c0_109, %c0_110], %128 {strides = array<i32>} : memref<256x224xf32, #tpu.memory_space<vmem>>, vector<256x224xf32>,
    %cst_111 = arith.constant 0.000000e+00 : f32
    %130 = vector.broadcast %cst_111 : f32 to vector<16x128xf32>
    %c0_112 = arith.constant 0 : index
    %c0_113 = arith.constant 0 : index
    %131 = vector.load %arg13[%c0_112, %c0_113] : memref<256x224xf32, #tpu.memory_space<vmem>>, vector<16x224xf32>
    %c16_114 = arith.constant 16 : index
    %c0_115 = arith.constant 0 : index
    %132 = vector.load %arg13[%c16_114, %c0_115] : memref<256x224xf32, #tpu.memory_space<vmem>>, vector<16x224xf32>
    %133 = arith.maximumf %131, %132 : vector<16x224xf32>
    %134 = arith.truncf %133 : vector<16x224xf32> to vector<16x224xbf16>
    %c0_116 = arith.constant 0 : index
    %c0_117 = arith.constant 0 : index
    %135 = vector.load %arg8[%c0_116, %c0_117] : memref<1568x128xbf16, #tpu.memory_space<vmem>>, vector<224x128xbf16>
    %cst_118 = arith.constant dense<0.000000e+00> : vector<16x128xf32>
    %136 = tpu.matmul %134, %135, %cst_118 {dimension_numbers = #tpu.dot_dimension_numbers<[1], [0], [0], [1], [0, 0, 1, 1], [], []>} : vector<16x224xbf16>, vector<224x128xbf16>, vector<16x128xf32> -> vector<16x128xf32>
    %137 = arith.addf %130, %136 : vector<16x128xf32>
    %c32_119 = arith.constant 32 : index
    %c0_120 = arith.constant 0 : index
    %138 = vector.load %arg13[%c32_119, %c0_120] : memref<256x224xf32, #tpu.memory_space<vmem>>, vector<16x224xf32>
    %c48_121 = arith.constant 48 : index
    %c0_122 = arith.constant 0 : index
    %139 = vector.load %arg13[%c48_121, %c0_122] : memref<256x224xf32, #tpu.memory_space<vmem>>, vector<16x224xf32>
    %140 = arith.maximumf %138, %139 : vector<16x224xf32>
    %141 = arith.truncf %140 : vector<16x224xf32> to vector<16x224xbf16>
    %c224_123 = arith.constant 224 : index
    %c0_124 = arith.constant 0 : index
    %142 = vector.load %arg8[%c224_123, %c0_124] : memref<1568x128xbf16, #tpu.memory_space<vmem>>, vector<224x128xbf16>
    %cst_125 = arith.constant dense<0.000000e+00> : vector<16x128xf32>
    %143 = tpu.matmul %141, %142, %cst_125 {dimension_numbers = #tpu.dot_dimension_numbers<[1], [0], [0], [1], [0, 0, 1, 1], [], []>} : vector<16x224xbf16>, vector<224x128xbf16>, vector<16x128xf32> -> vector<16x128xf32>
    %144 = arith.addf %137, %143 : vector<16x128xf32>
    %c64_126 = arith.constant 64 : index
    %c0_127 = arith.constant 0 : index
    %145 = vector.load %arg13[%c64_126, %c0_127] : memref<256x224xf32, #tpu.memory_space<vmem>>, vector<16x224xf32>
    %c80_128 = arith.constant 80 : index
    %c0_129 = arith.constant 0 : index
    %146 = vector.load %arg13[%c80_128, %c0_129] : memref<256x224xf32, #tpu.memory_space<vmem>>, vector<16x224xf32>
    %147 = arith.maximumf %145, %146 : vector<16x224xf32>
    %148 = arith.truncf %147 : vector<16x224xf32> to vector<16x224xbf16>
    %c448 = arith.constant 448 : index
    %c0_130 = arith.constant 0 : index
    %149 = vector.load %arg8[%c448, %c0_130] : memref<1568x128xbf16, #tpu.memory_space<vmem>>, vector<224x128xbf16>
    %cst_131 = arith.constant dense<0.000000e+00> : vector<16x128xf32>
    %150 = tpu.matmul %148, %149, %cst_131 {dimension_numbers = #tpu.dot_dimension_numbers<[1], [0], [0], [1], [0, 0, 1, 1], [], []>} : vector<16x224xbf16>, vector<224x128xbf16>, vector<16x128xf32> -> vector<16x128xf32>
    %151 = arith.addf %144, %150 : vector<16x128xf32>
    %c96_132 = arith.constant 96 : index
    %c0_133 = arith.constant 0 : index
    %152 = vector.load %arg13[%c96_132, %c0_133] : memref<256x224xf32, #tpu.memory_space<vmem>>, vector<16x224xf32>
    %c112_134 = arith.constant 112 : index
    %c0_135 = arith.constant 0 : index
    %153 = vector.load %arg13[%c112_134, %c0_135] : memref<256x224xf32, #tpu.memory_space<vmem>>, vector<16x224xf32>
    %154 = arith.maximumf %152, %153 : vector<16x224xf32>
    %155 = arith.truncf %154 : vector<16x224xf32> to vector<16x224xbf16>
    %c672 = arith.constant 672 : index
    %c0_136 = arith.constant 0 : index
    %156 = vector.load %arg8[%c672, %c0_136] : memref<1568x128xbf16, #tpu.memory_space<vmem>>, vector<224x128xbf16>
    %cst_137 = arith.constant dense<0.000000e+00> : vector<16x128xf32>
    %157 = tpu.matmul %155, %156, %cst_137 {dimension_numbers = #tpu.dot_dimension_numbers<[1], [0], [0], [1], [0, 0, 1, 1], [], []>} : vector<16x224xbf16>, vector<224x128xbf16>, vector<16x128xf32> -> vector<16x128xf32>
    %158 = arith.addf %151, %157 : vector<16x128xf32>
    %c128_138 = arith.constant 128 : index
    %c0_139 = arith.constant 0 : index
    %159 = vector.load %arg13[%c128_138, %c0_139] : memref<256x224xf32, #tpu.memory_space<vmem>>, vector<16x224xf32>
    %c144_140 = arith.constant 144 : index
    %c0_141 = arith.constant 0 : index
    %160 = vector.load %arg13[%c144_140, %c0_141] : memref<256x224xf32, #tpu.memory_space<vmem>>, vector<16x224xf32>
    %161 = arith.maximumf %159, %160 : vector<16x224xf32>
    %162 = arith.truncf %161 : vector<16x224xf32> to vector<16x224xbf16>
    %c896 = arith.constant 896 : index
    %c0_142 = arith.constant 0 : index
    %163 = vector.load %arg8[%c896, %c0_142] : memref<1568x128xbf16, #tpu.memory_space<vmem>>, vector<224x128xbf16>
    %cst_143 = arith.constant dense<0.000000e+00> : vector<16x128xf32>
    %164 = tpu.matmul %162, %163, %cst_143 {dimension_numbers = #tpu.dot_dimension_numbers<[1], [0], [0], [1], [0, 0, 1, 1], [], []>} : vector<16x224xbf16>, vector<224x128xbf16>, vector<16x128xf32> -> vector<16x128xf32>
    %165 = arith.addf %158, %164 : vector<16x128xf32>
    %c160_144 = arith.constant 160 : index
    %c0_145 = arith.constant 0 : index
    %166 = vector.load %arg13[%c160_144, %c0_145] : memref<256x224xf32, #tpu.memory_space<vmem>>, vector<16x224xf32>
    %c176_146 = arith.constant 176 : index
    %c0_147 = arith.constant 0 : index
    %167 = vector.load %arg13[%c176_146, %c0_147] : memref<256x224xf32, #tpu.memory_space<vmem>>, vector<16x224xf32>
    %168 = arith.maximumf %166, %167 : vector<16x224xf32>
    %169 = arith.truncf %168 : vector<16x224xf32> to vector<16x224xbf16>
    %c1120 = arith.constant 1120 : index
    %c0_148 = arith.constant 0 : index
    %170 = vector.load %arg8[%c1120, %c0_148] : memref<1568x128xbf16, #tpu.memory_space<vmem>>, vector<224x128xbf16>
    %cst_149 = arith.constant dense<0.000000e+00> : vector<16x128xf32>
    %171 = tpu.matmul %169, %170, %cst_149 {dimension_numbers = #tpu.dot_dimension_numbers<[1], [0], [0], [1], [0, 0, 1, 1], [], []>} : vector<16x224xbf16>, vector<224x128xbf16>, vector<16x128xf32> -> vector<16x128xf32>
    %172 = arith.addf %165, %171 : vector<16x128xf32>
    %c192_150 = arith.constant 192 : index
    %c0_151 = arith.constant 0 : index
    %173 = vector.load %arg13[%c192_150, %c0_151] : memref<256x224xf32, #tpu.memory_space<vmem>>, vector<16x224xf32>
    %c208_152 = arith.constant 208 : index
    %c0_153 = arith.constant 0 : index
    %174 = vector.load %arg13[%c208_152, %c0_153] : memref<256x224xf32, #tpu.memory_space<vmem>>, vector<16x224xf32>
    %175 = arith.maximumf %173, %174 : vector<16x224xf32>
    %176 = arith.truncf %175 : vector<16x224xf32> to vector<16x224xbf16>
    %c1344 = arith.constant 1344 : index
    %c0_154 = arith.constant 0 : index
    %177 = vector.load %arg8[%c1344, %c0_154] : memref<1568x128xbf16, #tpu.memory_space<vmem>>, vector<224x128xbf16>
    %cst_155 = arith.constant dense<0.000000e+00> : vector<16x128xf32>
    %178 = tpu.matmul %176, %177, %cst_155 {dimension_numbers = #tpu.dot_dimension_numbers<[1], [0], [0], [1], [0, 0, 1, 1], [], []>} : vector<16x224xbf16>, vector<224x128xbf16>, vector<16x128xf32> -> vector<16x128xf32>
    %179 = arith.addf %172, %178 : vector<16x128xf32>
    %c0_156 = arith.constant 0 : index
    %c0_157 = arith.constant 0 : index
    %180 = vector.load %arg9[%c0_156, %c0_157] : memref<1x128xf32, #tpu.memory_space<vmem>>, vector<1x128xf32>
    %181 = vector.broadcast %180 : vector<1x128xf32> to vector<16x128xf32>
    %182 = arith.addf %179, %181 : vector<16x128xf32>
    %c0_158 = arith.constant 0 : index
    %c0_159 = arith.constant 0 : index
    %183 = vector.load %arg10[%c0_158, %c0_159] : memref<16x128xf32, #tpu.memory_space<vmem>>, vector<16x128xf32>
    tpu.vector_store %arg10[%c0_158, %c0_159], %182 {strides = array<i32>} : memref<16x128xf32, #tpu.memory_space<vmem>>, vector<16x128xf32>,
    return
  }
  func.func @transform_0(%arg0: i32) -> (i32, i32) {
    %c0_i32 = arith.constant 0 : i32
    %c0_i32_0 = arith.constant 0 : i32
    return %arg0, %c0_i32 : i32, i32
  }
  func.func @transform_1(%arg0: i32) -> (i32, i32) {
    %c0_i32 = arith.constant 0 : i32
    %c0_i32_0 = arith.constant 0 : i32
    %c0_i32_1 = arith.constant 0 : i32
    return %c0_i32, %c0_i32_0 : i32, i32
  }
  func.func @transform_2(%arg0: i32) -> (i32, i32) {
    %c0_i32 = arith.constant 0 : i32
    %c0_i32_0 = arith.constant 0 : i32
    %c0_i32_1 = arith.constant 0 : i32
    return %c0_i32, %c0_i32_0 : i32, i32
  }
  func.func @transform_3(%arg0: i32) -> (i32, i32) {
    %c0_i32 = arith.constant 0 : i32
    %c0_i32_0 = arith.constant 0 : i32
    %c0_i32_1 = arith.constant 0 : i32
    return %c0_i32, %c0_i32_0 : i32, i32
  }
  func.func @transform_4(%arg0: i32) -> (i32, i32, i32) {
    %c0_i32 = arith.constant 0 : i32
    %c0_i32_0 = arith.constant 0 : i32
    %c0_i32_1 = arith.constant 0 : i32
    %c0_i32_2 = arith.constant 0 : i32
    return %c0_i32, %c0_i32_0, %c0_i32_1 : i32, i32, i32
  }
  func.func @transform_5(%arg0: i32) -> (i32, i32, i32) {
    %c0_i32 = arith.constant 0 : i32
    %c0_i32_0 = arith.constant 0 : i32
    %c0_i32_1 = arith.constant 0 : i32
    %c0_i32_2 = arith.constant 0 : i32
    return %c0_i32, %c0_i32_0, %c0_i32_1 : i32, i32, i32
  }
  func.func @transform_6(%arg0: i32) -> (i32, i32) {
    %c0_i32 = arith.constant 0 : i32
    %c0_i32_0 = arith.constant 0 : i32
    %c0_i32_1 = arith.constant 0 : i32
    return %c0_i32, %c0_i32_0 : i32, i32
  }
  func.func @transform_7(%arg0: i32) -> (i32, i32) {
    %c0_i32 = arith.constant 0 : i32
    %c0_i32_0 = arith.constant 0 : i32
    %c0_i32_1 = arith.constant 0 : i32
    return %c0_i32, %c0_i32_0 : i32, i32
  }
  func.func @transform_8(%arg0: i32) -> (i32, i32) {
    %c0_i32 = arith.constant 0 : i32
    %c0_i32_0 = arith.constant 0 : i32
    %c0_i32_1 = arith.constant 0 : i32
    return %c0_i32, %c0_i32_0 : i32, i32
  }
  func.func @transform_9(%arg0: i32) -> (i32, i32) {
    %c0_i32 = arith.constant 0 : i32
    %c0_i32_0 = arith.constant 0 : i32
    return %arg0, %c0_i32 : i32, i32
  }
}

</mosaic_0001>

<llo_original>
// kernel: simple_cnn_forward.1
$region0: #{simple_cnn_forward.1}
  #allocation0 [shape = 'u32[]', space=smem, size = 0x4, offset = 0x4, fixed_abs, tag = 'smem constant byte address 0x4 - core index']
  #allocation1 [shape = 'u32[72,128]{1,0:T(1,128)}', space=vmem, size = 0x9000, scoped, tag = 'internal scratch']
  #allocation2 [shape = 'f32[448,224]{1,0:T(8,128)}', space=vmem, size = 0x70000, scoped, tag = 'scratch operand']
  #allocation3 [shape = 'bf16[288,224]{1,0:T(8,128)(2,1)}', space=vmem, size = 0x24000, scoped, tag = 'scratch operand']
  #allocation4 [shape = 'f32[256,224]{1,0:T(8,128)}', space=vmem, size = 0x40000, scoped, tag = 'scratch operand']
  %s0 = inlined_call_operand.vmem [shape: bf16[448,84], index: 0, kind: input, shape index: {}]
  %s1 = inlined_call_operand.vmem [shape: bf16[84,224], index: 1, kind: input, shape index: {}]
  %s2 = inlined_call_operand.vmem [shape: bf16[84,224], index: 2, kind: input, shape index: {}]
  %s3 = inlined_call_operand.vmem [shape: f32[1,224], index: 3, kind: input, shape index: {}]
  %s4 = inlined_call_operand.vmem [shape: bf16[3,224,224], index: 4, kind: input, shape index: {}]
  %s5 = inlined_call_operand.vmem [shape: bf16[3,224,224], index: 5, kind: input, shape index: {}]
  %s6 = inlined_call_operand.vmem [shape: f32[1,224], index: 6, kind: input, shape index: {}]
  %s7 = inlined_call_operand.vmem [shape: bf16[1568,128], index: 7, kind: input, shape index: {}]
  %s8 = inlined_call_operand.vmem [shape: f32[1,128], index: 8, kind: input, shape index: {}]
  %s9 = inlined_call_operand.vmem [shape: f32[16,128], index: 9, kind: output, shape index: {}]
  %s10 = sld [smem:[#allocation0]]
  $region46: #{simple_cnn_forward.1} parent=0
    _
  %s12 = ssub.s32 1, %s10
  %s13 = scalar_select 0, %s12, %s10
  // Predicated region
  $region2: #{simple_cnn_forward.1} parent=0 // pred_check
    _
  $region3: #{simple_cnn_forward.1} parent=0 // pred_check_branch
    %15 = sbr.rel (0) target = $region5
  $region4: #{simple_cnn_forward.1} parent=0 // pred_region
    _
  $region5: #{simple_cnn_forward.1} parent=0 // pred_fallthru
    _
  // Predicated region
  $region6: #{simple_cnn_forward.1} parent=0 // pred_check
    _
  $region7: #{simple_cnn_forward.1} parent=0 // pred_check_branch
    %17 = sbr.rel (0) target = $region9
  $region8: #{simple_cnn_forward.1} parent=0 // pred_region
    _
  $region9: #{simple_cnn_forward.1} parent=0 // pred_fallthru
    _
  // Predicated region
  $region10: #{simple_cnn_forward.1} parent=0 // pred_check
    _
  $region11: #{simple_cnn_forward.1} parent=0 // pred_check_branch
    %19 = sbr.rel (0) target = $region13
  $region12: #{simple_cnn_forward.1} parent=0 // pred_region
    _
  $region13: #{simple_cnn_forward.1} parent=0 // pred_fallthru
    _
  // Predicated region
  $region14: #{simple_cnn_forward.1} parent=0 // pred_check
    _
  $region15: #{simple_cnn_forward.1} parent=0 // pred_check_branch
    %21 = sbr.rel (0) target = $region17
  $region16: #{simple_cnn_forward.1} parent=0 // pred_region
    _
  $region17: #{simple_cnn_forward.1} parent=0 // pred_fallthru
    _
  // Predicated region
  $region18: #{simple_cnn_forward.1} parent=0 // pred_check
    _
  $region19: #{simple_cnn_forward.1} parent=0 // pred_check_branch
    %23 = sbr.rel (0) target = $region21
  $region20: #{simple_cnn_forward.1} parent=0 // pred_region
    _
  $region21: #{simple_cnn_forward.1} parent=0 // pred_fallthru
    _
  // Predicated region
  $region22: #{simple_cnn_forward.1} parent=0 // pred_check
    _
  $region23: #{simple_cnn_forward.1} parent=0 // pred_check_branch
    %25 = sbr.rel (0) target = $region25
  $region24: #{simple_cnn_forward.1} parent=0 // pred_region
    _
  $region25: #{simple_cnn_forward.1} parent=0 // pred_fallthru
    _
  // Predicated region
  $region26: #{simple_cnn_forward.1} parent=0 // pred_check
    _
  $region27: #{simple_cnn_forward.1} parent=0 // pred_check_branch
    %27 = sbr.rel (0) target = $region29
  $region28: #{simple_cnn_forward.1} parent=0 // pred_region
    _
  $region29: #{simple_cnn_forward.1} parent=0 // pred_fallthru
    _
  // Predicated region
  $region30: #{simple_cnn_forward.1} parent=0 // pred_check
    _
  $region31: #{simple_cnn_forward.1} parent=0 // pred_check_branch
    %29 = sbr.rel (0) target = $region33
  $region32: #{simple_cnn_forward.1} parent=0 // pred_region
    _
  $region33: #{simple_cnn_forward.1} parent=0 // pred_fallthru
    _
  // Predicated region
  $region34: #{simple_cnn_forward.1} parent=0 // pred_check
    _
  $region35: #{simple_cnn_forward.1} parent=0 // pred_check_branch
    %31 = sbr.rel (0) target = $region37
  $region36: #{simple_cnn_forward.1} parent=0 // pred_region
    _
  $region37: #{simple_cnn_forward.1} parent=0 // pred_fallthru
    _
  %v33 = vld [vmem:[%s0] sm:$0xf]
  %v34 = vld [vmem:[%s0 + $0x4] sm:$0xf]
  %v35 = vld [vmem:[%s0 + $0x8] sm:$0xf]
  %v36 = vld [vmem:[%s0 + $0xc] sm:$0xf]
  %v37 = vld [vmem:[%s0 + $0x10] sm:$0xf]
  %v38 = vld [vmem:[%s0 + $0x14] sm:$0xf]
  %v39 = vld [vmem:[%s0 + $0x18] sm:$0xf]
  %v40 = vld [vmem:[%s0 + $0x1c] sm:$0xf]
  %v41 = vld [vmem:[%s0 + $0x20] sm:$0xf]
  %v42 = vld [vmem:[%s0 + $0x24] sm:$0xf]
  %v43 = vld [vmem:[%s0 + $0x28] sm:$0xf]
  %v44 = vld [vmem:[%s0 + $0x2c] sm:$0xf]
  %v45 = vld [vmem:[%s0 + $0x30] sm:$0xf]
  %v46 = vld [vmem:[%s0 + $0x34] sm:$0xf]
  %v47 = vld [vmem:[%s0 + $0x38] sm:$0xf]
  %v48 = vld [vmem:[%s0 + $0x3c] sm:$0xf]
  %v49 = vld [vmem:[%s0 + $0x40] sm:$0xf]
  %v50 = vld [vmem:[%s0 + $0x44] sm:$0xf]
  %v51 = vld [vmem:[%s0 + $0x48] sm:$0xf]
  %v52 = vld [vmem:[%s0 + $0x4c] sm:$0xf]
  %v53 = vld [vmem:[%s0 + $0x50] sm:$0xf]
  %v54 = vld [vmem:[%s0 + $0x54] sm:$0xf]
  %v55 = vld [vmem:[%s0 + $0x58] sm:$0xf]
  %v56 = vld [vmem:[%s0 + $0x5c] sm:$0xf]
  %v57 = vld [vmem:[%s0 + $0x60] sm:$0xf]
  %v58 = vld [vmem:[%s0 + $0x64] sm:$0xf]
  %v59 = vld [vmem:[%s0 + $0x68] sm:$0xf]
  %v60 = vld [vmem:[%s0 + $0x6c] sm:$0xf]
  %v61 = vld [vmem:[%s0 + $0x70] sm:$0xf]
  %v62 = vld [vmem:[%s0 + $0x74] sm:$0xf]
  %v63 = vld [vmem:[%s0 + $0x78] sm:$0xf]
  %v64 = vld [vmem:[%s0 + $0x7c] sm:$0xf]
  %v65 = vld [vmem:[%s0 + $0x80] sm:$0xf]
  %v66 = vld [vmem:[%s0 + $0x84] sm:$0xf]
  %v67 = vld [vmem:[%s0 + $0x88] sm:$0xf]
  %v68 = vld [vmem:[%s0 + $0x8c] sm:$0xf]
  %v69 = vld [vmem:[%s0 + $0x90] sm:$0xf]
  %v70 = vld [vmem:[%s0 + $0x94] sm:$0xf]
  %v71 = vld [vmem:[%s0 + $0x98] sm:$0xf]
  %v72 = vld [vmem:[%s0 + $0x9c] sm:$0xf]
  %v73 = vld [vmem:[%s0 + $0xa0] sm:$0xf]
  %v74 = vld [vmem:[%s0 + $0xa4] sm:$0xf]
  %v75 = vld [vmem:[%s0 + $0xa8] sm:$0xf]
  %v76 = vld [vmem:[%s0 + $0xac] sm:$0xf]
  %v77 = vld [vmem:[%s0 + $0xb0] sm:$0xf]
  %v78 = vld [vmem:[%s0 + $0xb4] sm:$0xf]
  %v79 = vld [vmem:[%s0 + $0xb8] sm:$0xf]
  %v80 = vld [vmem:[%s0 + $0xbc] sm:$0xf]
  %v81 = vld [vmem:[%s0 + $0xc0] sm:$0xf]
  %v82 = vld [vmem:[%s0 + $0xc4] sm:$0xf]
  %v83 = vld [vmem:[%s0 + $0xc8] sm:$0xf]
  %v84 = vld [vmem:[%s0 + $0xcc] sm:$0xf]
  %v85 = vld [vmem:[%s0 + $0xd0] sm:$0xf]
  %v86 = vld [vmem:[%s0 + $0xd4] sm:$0xf]
  %v87 = vld [vmem:[%s0 + $0xd8] sm:$0xf]
  %v88 = vld [vmem:[%s0 + $0xdc] sm:$0xf]
  %v89 = vld [vmem:[%s1] sm:$0xff]
  %v90 = vld [vmem:[%s1 + $0x8] sm:$0xff]
  %v91 = vld [vmem:[%s1 + $0x10] sm:$0xff]
  %v92 = vld [vmem:[%s1 + $0x18] sm:$0xff]
  %v93 = vld [vmem:[%s1 + $0x20] sm:$0xff]
  %v94 = vld [vmem:[%s1 + $0x28] sm:$0xff]
  %v95 = vld [vmem:[%s1 + $0x30] sm:$0xff]
  %v96 = vld [vmem:[%s1 + $0x38] sm:$0xff]
  %v97 = vld [vmem:[%s1 + $0x40] sm:$0xff]
  %v98 = vld [vmem:[%s1 + $0x48] sm:$0xff]
  %v99 = vld [vmem:[%s1 + $0x50] sm:$0x33]
  %v100 = vld [vmem:[%s2] sm:$0xff]
  %v101 = vld [vmem:[%s2 + $0x8] sm:$0xff]
  %v102 = vld [vmem:[%s2 + $0x10] sm:$0xff]
  %v103 = vld [vmem:[%s2 + $0x18] sm:$0xff]
  %v104 = vld [vmem:[%s2 + $0x20] sm:$0xff]
  %v105 = vld [vmem:[%s2 + $0x28] sm:$0xff]
  %v106 = vld [vmem:[%s2 + $0x30] sm:$0xff]
  %v107 = vld [vmem:[%s2 + $0x38] sm:$0xff]
  %v108 = vld [vmem:[%s2 + $0x40] sm:$0xff]
  %v109 = vld [vmem:[%s2 + $0x48] sm:$0xff]
  %v110 = vld [vmem:[%s2 + $0x50] sm:$0x33]
  %v111 = vld [vmem:[%s3] sm:$0x3]
  %v113 = vperm.slane %v111, 0
  %v114 = vperm.slane %v111, 1
  %v173 = vunpack.c.l.b16 %v33
  %v174 = vunpack.c.l.b16 %v34
  %v175 = vunpack.c.l.b16 %v35
  %v176 = vunpack.c.l.b16 %v36
  %v177 = vunpack.c.l.b16 %v37
  %v178 = vunpack.c.l.b16 %v38
  %v179 = vunpack.c.l.b16 %v39
  %v180 = vunpack.c.l.b16 %v40
  %v181 = vunpack.c.l.b16 %v41
  %v182 = vunpack.c.l.b16 %v42
  %v183 = vunpack.c.l.b16 %v43
  %v184 = vunpack.c.l.b16 %v44
  %v185 = vunpack.c.l.b16 %v45
  %v186 = vunpack.c.l.b16 %v46
  %v187 = vunpack.c.l.b16 %v47
  %v188 = vunpack.c.l.b16 %v48
  %v189 = vunpack.c.l.b16 %v49
  %v190 = vunpack.c.l.b16 %v50
  %v191 = vunpack.c.l.b16 %v51
  %v192 = vunpack.c.l.b16 %v52
  %v193 = vunpack.c.l.b16 %v53
  %v194 = vunpack.c.l.b16 %v54
  %v195 = vunpack.c.l.b16 %v55
  %v196 = vunpack.c.l.b16 %v56
  %v197 = vunpack.c.l.b16 %v57
  %v198 = vunpack.c.l.b16 %v58
  %v199 = vunpack.c.l.b16 %v59
  %v200 = vunpack.c.l.b16 %v60
  %v201 = vunpack.c.l.b16 %v61
  %v202 = vunpack.c.l.b16 %v62
  %v203 = vunpack.c.l.b16 %v63
  %v204 = vunpack.c.l.b16 %v64
  %v205 = vunpack.c.l.b16 %v65
  %v206 = vunpack.c.l.b16 %v66
  %v207 = vunpack.c.l.b16 %v67
  %v208 = vunpack.c.l.b16 %v68
  %v209 = vunpack.c.l.b16 %v69
  %v210 = vunpack.c.l.b16 %v70
  %v211 = vunpack.c.l.b16 %v71
  %v212 = vunpack.c.l.b16 %v72
  %v213 = vunpack.c.l.b16 %v73
  %v214 = vunpack.c.l.b16 %v74
  %v215 = vunpack.c.l.b16 %v75
  %v216 = vunpack.c.l.b16 %v76
  %v217 = vunpack.c.l.b16 %v77
  %v218 = vunpack.c.l.b16 %v78
  %v219 = vunpack.c.l.b16 %v79
  %v220 = vunpack.c.l.b16 %v80
  %v221 = vunpack.c.l.b16 %v81
  %v222 = vunpack.c.l.b16 %v82
  %v223 = vunpack.c.l.b16 %v83
  %v224 = vunpack.c.l.b16 %v84
  %v225 = vunpack.c.l.b16 %v85
  %v226 = vunpack.c.l.b16 %v86
  %v227 = vunpack.c.l.b16 %v87
  %v228 = vunpack.c.l.b16 %v88
  %v229 = vpack.c.b16 %v174, %v173
  %v230 = vpack.c.b16 %v176, %v175
  %v231 = vpack.c.b16 %v178, %v177
  %v232 = vpack.c.b16 %v180, %v179
  %v233 = vpack.c.b16 %v182, %v181
  %v234 = vpack.c.b16 %v184, %v183
  %v235 = vpack.c.b16 %v186, %v185
  %v236 = vpack.c.b16 %v188, %v187
  %v237 = vpack.c.b16 %v190, %v189
  %v238 = vpack.c.b16 %v192, %v191
  %v239 = vpack.c.b16 %v194, %v193
  %v240 = vpack.c.b16 %v196, %v195
  %v241 = vpack.c.b16 %v198, %v197
  %v242 = vpack.c.b16 %v200, %v199
  %v243 = vpack.c.b16 %v202, %v201
  %v244 = vpack.c.b16 %v204, %v203
  %v245 = vpack.c.b16 %v206, %v205
  %v246 = vpack.c.b16 %v208, %v207
  %v247 = vpack.c.b16 %v210, %v209
  %v248 = vpack.c.b16 %v212, %v211
  %v249 = vpack.c.b16 %v214, %v213
  %v250 = vpack.c.b16 %v216, %v215
  %v251 = vpack.c.b16 %v218, %v217
  %v252 = vpack.c.b16 %v220, %v219
  %v253 = vpack.c.b16 %v222, %v221
  %v254 = vpack.c.b16 %v224, %v223
  %v255 = vpack.c.b16 %v226, %v225
  %v256 = vpack.c.b16 %v228, %v227
  %v268 = vunpack.c.l.b16 %v89
  %v269 = vunpack.c.h.b16 %v89
  %v270 = vunpack.c.l.b16 %v90
  %v271 = vunpack.c.h.b16 %v90
  %v272 = vunpack.c.l.b16 %v91
  %v273 = vunpack.c.h.b16 %v91
  %v274 = vunpack.c.l.b16 %v92
  %v275 = vunpack.c.h.b16 %v92
  %v276 = vunpack.c.l.b16 %v93
  %v277 = vunpack.c.h.b16 %v93
  %v278 = vunpack.c.l.b16 %v94
  %v279 = vunpack.c.h.b16 %v94
  %v280 = vunpack.c.l.b16 %v95
  %v281 = vunpack.c.h.b16 %v95
  %v282 = vunpack.c.l.b16 %v96
  %v283 = vunpack.c.h.b16 %v96
  %v284 = vunpack.c.l.b16 %v97
  %v285 = vunpack.c.h.b16 %v97
  %v286 = vunpack.c.l.b16 %v98
  %v287 = vunpack.c.h.b16 %v98
  %v288 = vunpack.c.l.b16 %v99
  %v289 = vunpack.c.h.b16 %v99
  %v290 = vpack.c.b16 %v270, %v268
  %v291 = vpack.c.b16 %v271, %v269
  %v292 = vpack.c.b16 %v274, %v272
  %v293 = vpack.c.b16 %v275, %v273
  %v294 = vpack.c.b16 %v278, %v276
  %v295 = vpack.c.b16 %v279, %v277
  %v296 = vpack.c.b16 %v282, %v280
  %v297 = vpack.c.b16 %v283, %v281
  %v298 = vpack.c.b16 %v286, %v284
  %v299 = vpack.c.b16 %v287, %v285
  %v300 = vpack.c.b16 %v288, %v288
  %v301 = vpack.c.b16 %v289, %v289
  %vm312 = vcmask 687104
  %v314 = vsel %vm312, %v229, 0
  %v317 = vsel %vm312, %v230, 0
  %v320 = vsel %vm312, %v231, 0
  %v323 = vsel %vm312, %v232, 0
  %v326 = vsel %vm312, %v233, 0
  %v329 = vsel %vm312, %v234, 0
  %v332 = vsel %vm312, %v235, 0
  %v335 = vsel %vm312, %v236, 0
  %v338 = vsel %vm312, %v237, 0
  %v341 = vsel %vm312, %v238, 0
  %v344 = vsel %vm312, %v239, 0
  %v347 = vsel %vm312, %v240, 0
  %v350 = vsel %vm312, %v241, 0
  %v353 = vsel %vm312, %v242, 0
  %v356 = vsel %vm312, %v243, 0
  %v359 = vsel %vm312, %v244, 0
  %v362 = vsel %vm312, %v245, 0
  %v365 = vsel %vm312, %v246, 0
  %v368 = vsel %vm312, %v247, 0
  %v371 = vsel %vm312, %v248, 0
  %v374 = vsel %vm312, %v249, 0
  %v377 = vsel %vm312, %v250, 0
  %v380 = vsel %vm312, %v251, 0
  %v383 = vsel %vm312, %v252, 0
  %v386 = vsel %vm312, %v253, 0
  %v389 = vsel %vm312, %v254, 0
  %v392 = vsel %vm312, %v255, 0
  %v395 = vsel %vm312, %v256, 0
  %vm397 = vcmask 1041408
  %v399 = vsel %vm397, %v300, 0
  %v402 = vsel %vm397, %v301, 0
  %404 = vmatpush.bf16.msra.mxu0 0
  %405 = vmatpush.bf16.msra.mxu0 0
  %406 = vmatpush.bf16.msra.mxu0 %v399
  %407 = vmatpush.bf16.msra.mxu0 %v298
  %408 = vmatpush.bf16.msra.mxu0 %v296
  %409 = vmatpush.bf16.msra.mxu0 %v294
  %410 = vmatpush.bf16.msra.mxu0 %v292
  %411 = vmatpush.bf16.msra.mxu0 %v290
  %412 = vmatmul.bf16.gmra.mxu0 %v314
  %v413 = vpop.f32.mrf.mxu0
  %v414 = vadd.f32 %v113, %v413
  %v415 = vpop.f32.mrf.mxu0
  %v416 = vadd.f32 %v113, %v415
  %417 = vmatmul.bf16.gmra.mxu0 %v317
  %v418 = vpop.f32.mrf.mxu0
  %v419 = vadd.f32 %v113, %v418
  %v420 = vpop.f32.mrf.mxu0
  %v421 = vadd.f32 %v113, %v420
  %422 = vmatmul.bf16.gmra.mxu0 %v320
  %v423 = vpop.f32.mrf.mxu0
  %v424 = vadd.f32 %v113, %v423
  %v425 = vpop.f32.mrf.mxu0
  %v426 = vadd.f32 %v113, %v425
  %427 = vmatmul.bf16.gmra.mxu0 %v323
  %v428 = vpop.f32.mrf.mxu0
  %v429 = vadd.f32 %v113, %v428
  %v430 = vpop.f32.mrf.mxu0
  %v431 = vadd.f32 %v113, %v430
  %432 = vmatmul.bf16.gmra.mxu0 %v326
  %v433 = vpop.f32.mrf.mxu0
  %v434 = vadd.f32 %v113, %v433
  %v435 = vpop.f32.mrf.mxu0
  %v436 = vadd.f32 %v113, %v435
  %437 = vmatmul.bf16.gmra.mxu0 %v329
  %v438 = vpop.f32.mrf.mxu0
  %v439 = vadd.f32 %v113, %v438
  %v440 = vpop.f32.mrf.mxu0
  %v441 = vadd.f32 %v113, %v440
  %442 = vmatmul.bf16.gmra.mxu0 %v332
  %v443 = vpop.f32.mrf.mxu0
  %v444 = vadd.f32 %v113, %v443
  %v445 = vpop.f32.mrf.mxu0
  %v446 = vadd.f32 %v113, %v445
  %447 = vmatmul.bf16.gmra.mxu0 %v335
  %v448 = vpop.f32.mrf.mxu0
  %v449 = vadd.f32 %v113, %v448
  %v450 = vpop.f32.mrf.mxu0
  %v451 = vadd.f32 %v113, %v450
  %452 = vmatmul.bf16.gmra.mxu0 %v338
  %v453 = vpop.f32.mrf.mxu0
  %v454 = vadd.f32 %v113, %v453
  %v455 = vpop.f32.mrf.mxu0
  %v456 = vadd.f32 %v113, %v455
  %457 = vmatmul.bf16.gmra.mxu0 %v341
  %v458 = vpop.f32.mrf.mxu0
  %v459 = vadd.f32 %v113, %v458
  %v460 = vpop.f32.mrf.mxu0
  %v461 = vadd.f32 %v113, %v460
  %462 = vmatmul.bf16.gmra.mxu0 %v344
  %v463 = vpop.f32.mrf.mxu0
  %v464 = vadd.f32 %v113, %v463
  %v465 = vpop.f32.mrf.mxu0
  %v466 = vadd.f32 %v113, %v465
  %467 = vmatmul.bf16.gmra.mxu0 %v347
  %v468 = vpop.f32.mrf.mxu0
  %v469 = vadd.f32 %v113, %v468
  %v470 = vpop.f32.mrf.mxu0
  %v471 = vadd.f32 %v113, %v470
  %472 = vmatmul.bf16.gmra.mxu0 %v350
  %v473 = vpop.f32.mrf.mxu0
  %v474 = vadd.f32 %v113, %v473
  %v475 = vpop.f32.mrf.mxu0
  %v476 = vadd.f32 %v113, %v475
  %477 = vmatmul.bf16.gmra.mxu0 %v353
  %v478 = vpop.f32.mrf.mxu0
  %v479 = vadd.f32 %v113, %v478
  %v480 = vpop.f32.mrf.mxu0
  %v481 = vadd.f32 %v113, %v480
  %482 = vmatmul.bf16.gmra.mxu0 %v356
  %v483 = vpop.f32.mrf.mxu0
  %v484 = vadd.f32 %v113, %v483
  %v485 = vpop.f32.mrf.mxu0
  %v486 = vadd.f32 %v113, %v485
  %487 = vmatmul.bf16.gmra.mxu0 %v359
  %v488 = vpop.f32.mrf.mxu0
  %v489 = vadd.f32 %v113, %v488
  %v490 = vpop.f32.mrf.mxu0
  %v491 = vadd.f32 %v113, %v490
  %492 = vmatmul.bf16.gmra.mxu0 %v362
  %v493 = vpop.f32.mrf.mxu0
  %v494 = vadd.f32 %v113, %v493
  %v495 = vpop.f32.mrf.mxu0
  %v496 = vadd.f32 %v113, %v495
  %497 = vmatmul.bf16.gmra.mxu0 %v365
  %v498 = vpop.f32.mrf.mxu0
  %v499 = vadd.f32 %v113, %v498
  %v500 = vpop.f32.mrf.mxu0
  %v501 = vadd.f32 %v113, %v500
  %502 = vmatmul.bf16.gmra.mxu0 %v368
  %v503 = vpop.f32.mrf.mxu0
  %v504 = vadd.f32 %v113, %v503
  %v505 = vpop.f32.mrf.mxu0
  %v506 = vadd.f32 %v113, %v505
  %507 = vmatmul.bf16.gmra.mxu0 %v371
  %v508 = vpop.f32.mrf.mxu0
  %v509 = vadd.f32 %v113, %v508
  %v510 = vpop.f32.mrf.mxu0
  %v511 = vadd.f32 %v113, %v510
  %512 = vmatmul.bf16.gmra.mxu0 %v374
  %v513 = vpop.f32.mrf.mxu0
  %v514 = vadd.f32 %v113, %v513
  %v515 = vpop.f32.mrf.mxu0
  %v516 = vadd.f32 %v113, %v515
  %517 = vmatmul.bf16.gmra.mxu0 %v377
  %v518 = vpop.f32.mrf.mxu0
  %v519 = vadd.f32 %v113, %v518
  %v520 = vpop.f32.mrf.mxu0
  %v521 = vadd.f32 %v113, %v520
  %522 = vmatmul.bf16.gmra.mxu0 %v380
  %v523 = vpop.f32.mrf.mxu0
  %v524 = vadd.f32 %v113, %v523
  %v525 = vpop.f32.mrf.mxu0
  %v526 = vadd.f32 %v113, %v525
  %527 = vmatmul.bf16.gmra.mxu0 %v383
  %v528 = vpop.f32.mrf.mxu0
  %v529 = vadd.f32 %v113, %v528
  %v530 = vpop.f32.mrf.mxu0
  %v531 = vadd.f32 %v113, %v530
  %532 = vmatmul.bf16.gmra.mxu0 %v386
  %v533 = vpop.f32.mrf.mxu0
  %v534 = vadd.f32 %v113, %v533
  %v535 = vpop.f32.mrf.mxu0
  %v536 = vadd.f32 %v113, %v535
  %537 = vmatmul.bf16.gmra.mxu0 %v389
  %v538 = vpop.f32.mrf.mxu0
  %v539 = vadd.f32 %v113, %v538
  %v540 = vpop.f32.mrf.mxu0
  %v541 = vadd.f32 %v113, %v540
  %542 = vmatmul.bf16.gmra.mxu0 %v392
  %v543 = vpop.f32.mrf.mxu0
  %v544 = vadd.f32 %v113, %v543
  %v545 = vpop.f32.mrf.mxu0
  %v546 = vadd.f32 %v113, %v545
  %547 = vmatmul.bf16.gmra.mxu0 %v395
  %v548 = vpop.f32.mrf.mxu0
  %v549 = vadd.f32 %v113, %v548
  %v550 = vpop.f32.mrf.mxu0
  %v551 = vadd.f32 %v113, %v550
  %552 = vdwg.mxu0
  %553 = vmatpush.bf16.msra.mxu0 0
  %554 = vmatpush.bf16.msra.mxu0 0
  %555 = vmatpush.bf16.msra.mxu0 %v402
  %556 = vmatpush.bf16.msra.mxu0 %v299
  %557 = vmatpush.bf16.msra.mxu0 %v297
  %558 = vmatpush.bf16.msra.mxu0 %v295
  %559 = vmatpush.bf16.msra.mxu0 %v293
  %560 = vmatpush.bf16.msra.mxu0 %v291
  %561 = vmatmul.bf16.gmra.mxu0 %v314
  %v562 = vpop.f32.mrf.mxu0
  %v563 = vadd.f32 %v114, %v562
  %v564 = vpop.f32.mrf.mxu0
  %v565 = vadd.f32 %v114, %v564
  %566 = vmatmul.bf16.gmra.mxu0 %v317
  %v567 = vpop.f32.mrf.mxu0
  %v568 = vadd.f32 %v114, %v567
  %v569 = vpop.f32.mrf.mxu0
  %v570 = vadd.f32 %v114, %v569
  %571 = vmatmul.bf16.gmra.mxu0 %v320
  %v572 = vpop.f32.mrf.mxu0
  %v573 = vadd.f32 %v114, %v572
  %v574 = vpop.f32.mrf.mxu0
  %v575 = vadd.f32 %v114, %v574
  %576 = vmatmul.bf16.gmra.mxu0 %v323
  %v577 = vpop.f32.mrf.mxu0
  %v578 = vadd.f32 %v114, %v577
  %v579 = vpop.f32.mrf.mxu0
  %v580 = vadd.f32 %v114, %v579
  %581 = vmatmul.bf16.gmra.mxu0 %v326
  %v582 = vpop.f32.mrf.mxu0
  %v583 = vadd.f32 %v114, %v582
  %v584 = vpop.f32.mrf.mxu0
  %v585 = vadd.f32 %v114, %v584
  %586 = vmatmul.bf16.gmra.mxu0 %v329
  %v587 = vpop.f32.mrf.mxu0
  %v588 = vadd.f32 %v114, %v587
  %v589 = vpop.f32.mrf.mxu0
  %v590 = vadd.f32 %v114, %v589
  %591 = vmatmul.bf16.gmra.mxu0 %v332
  %v592 = vpop.f32.mrf.mxu0
  %v593 = vadd.f32 %v114, %v592
  %v594 = vpop.f32.mrf.mxu0
  %v595 = vadd.f32 %v114, %v594
  %596 = vmatmul.bf16.gmra.mxu0 %v335
  %v597 = vpop.f32.mrf.mxu0
  %v598 = vadd.f32 %v114, %v597
  %v599 = vpop.f32.mrf.mxu0
  %v600 = vadd.f32 %v114, %v599
  %601 = vmatmul.bf16.gmra.mxu0 %v338
  %v602 = vpop.f32.mrf.mxu0
  %v603 = vadd.f32 %v114, %v602
  %v604 = vpop.f32.mrf.mxu0
  %v605 = vadd.f32 %v114, %v604
  %606 = vmatmul.bf16.gmra.mxu0 %v341
  %v607 = vpop.f32.mrf.mxu0
  %v608 = vadd.f32 %v114, %v607
  %v609 = vpop.f32.mrf.mxu0
  %v610 = vadd.f32 %v114, %v609
  %611 = vmatmul.bf16.gmra.mxu0 %v344
  %v612 = vpop.f32.mrf.mxu0
  %v613 = vadd.f32 %v114, %v612
  %v614 = vpop.f32.mrf.mxu0
  %v615 = vadd.f32 %v114, %v614
  %616 = vmatmul.bf16.gmra.mxu0 %v347
  %v617 = vpop.f32.mrf.mxu0
  %v618 = vadd.f32 %v114, %v617
  %v619 = vpop.f32.mrf.mxu0
  %v620 = vadd.f32 %v114, %v619
  %621 = vmatmul.bf16.gmra.mxu0 %v350
  %v622 = vpop.f32.mrf.mxu0
  %v623 = vadd.f32 %v114, %v622
  %v624 = vpop.f32.mrf.mxu0
  %v625 = vadd.f32 %v114, %v624
  %626 = vmatmul.bf16.gmra.mxu0 %v353
  %v627 = vpop.f32.mrf.mxu0
  %v628 = vadd.f32 %v114, %v627
  %v629 = vpop.f32.mrf.mxu0
  %v630 = vadd.f32 %v114, %v629
  %631 = vmatmul.bf16.gmra.mxu0 %v356
  %v632 = vpop.f32.mrf.mxu0
  %v633 = vadd.f32 %v114, %v632
  %v634 = vpop.f32.mrf.mxu0
  %v635 = vadd.f32 %v114, %v634
  %636 = vmatmul.bf16.gmra.mxu0 %v359
  %v637 = vpop.f32.mrf.mxu0
  %v638 = vadd.f32 %v114, %v637
  %v639 = vpop.f32.mrf.mxu0
  %v640 = vadd.f32 %v114, %v639
  %641 = vmatmul.bf16.gmra.mxu0 %v362
  %v642 = vpop.f32.mrf.mxu0
  %v643 = vadd.f32 %v114, %v642
  %v644 = vpop.f32.mrf.mxu0
  %v645 = vadd.f32 %v114, %v644
  %646 = vmatmul.bf16.gmra.mxu0 %v365
  %v647 = vpop.f32.mrf.mxu0
  %v648 = vadd.f32 %v114, %v647
  %v649 = vpop.f32.mrf.mxu0
  %v650 = vadd.f32 %v114, %v649
  %651 = vmatmul.bf16.gmra.mxu0 %v368
  %v652 = vpop.f32.mrf.mxu0
  %v653 = vadd.f32 %v114, %v652
  %v654 = vpop.f32.mrf.mxu0
  %v655 = vadd.f32 %v114, %v654
  %656 = vmatmul.bf16.gmra.mxu0 %v371
  %v657 = vpop.f32.mrf.mxu0
  %v658 = vadd.f32 %v114, %v657
  %v659 = vpop.f32.mrf.mxu0
  %v660 = vadd.f32 %v114, %v659
  %661 = vmatmul.bf16.gmra.mxu0 %v374
  %v662 = vpop.f32.mrf.mxu0
  %v663 = vadd.f32 %v114, %v662
  %v664 = vpop.f32.mrf.mxu0
  %v665 = vadd.f32 %v114, %v664
  %666 = vmatmul.bf16.gmra.mxu0 %v377
  %v667 = vpop.f32.mrf.mxu0
  %v668 = vadd.f32 %v114, %v667
  %v669 = vpop.f32.mrf.mxu0
  %v670 = vadd.f32 %v114, %v669
  %671 = vmatmul.bf16.gmra.mxu0 %v380
  %v672 = vpop.f32.mrf.mxu0
  %v673 = vadd.f32 %v114, %v672
  %v674 = vpop.f32.mrf.mxu0
  %v675 = vadd.f32 %v114, %v674
  %676 = vmatmul.bf16.gmra.mxu0 %v383
  %v677 = vpop.f32.mrf.mxu0
  %v678 = vadd.f32 %v114, %v677
  %v679 = vpop.f32.mrf.mxu0
  %v680 = vadd.f32 %v114, %v679
  %681 = vmatmul.bf16.gmra.mxu0 %v386
  %v682 = vpop.f32.mrf.mxu0
  %v683 = vadd.f32 %v114, %v682
  %v684 = vpop.f32.mrf.mxu0
  %v685 = vadd.f32 %v114, %v684
  %686 = vmatmul.bf16.gmra.mxu0 %v389
  %v687 = vpop.f32.mrf.mxu0
  %v688 = vadd.f32 %v114, %v687
  %v689 = vpop.f32.mrf.mxu0
  %v690 = vadd.f32 %v114, %v689
  %691 = vmatmul.bf16.gmra.mxu0 %v392
  %v692 = vpop.f32.mrf.mxu0
  %v693 = vadd.f32 %v114, %v692
  %v694 = vpop.f32.mrf.mxu0
  %v695 = vadd.f32 %v114, %v694
  %696 = vmatmul.bf16.gmra.mxu0 %v395
  %v697 = vpop.f32.mrf.mxu0
  %v698 = vadd.f32 %v114, %v697
  %v699 = vpop.f32.mrf.mxu0
  %v700 = vadd.f32 %v114, %v699
  %701 = vdwg.mxu0
  %v702 = vmax.f32 %v414, 0.0
  %v703 = vmax.f32 %v563, 0.0
  %v704 = vmax.f32 %v416, 0.0
  %v705 = vmax.f32 %v565, 0.0
  %v706 = vmax.f32 %v419, 0.0
  %v707 = vmax.f32 %v568, 0.0
  %v708 = vmax.f32 %v421, 0.0
  %v709 = vmax.f32 %v570, 0.0
  %v710 = vmax.f32 %v424, 0.0
  %v711 = vmax.f32 %v573, 0.0
  %v712 = vmax.f32 %v426, 0.0
  %v713 = vmax.f32 %v575, 0.0
  %v714 = vmax.f32 %v429, 0.0
  %v715 = vmax.f32 %v578, 0.0
  %v716 = vmax.f32 %v431, 0.0
  %v717 = vmax.f32 %v580, 0.0
  %v718 = vmax.f32 %v434, 0.0
  %v719 = vmax.f32 %v583, 0.0
  %v720 = vmax.f32 %v436, 0.0
  %v721 = vmax.f32 %v585, 0.0
  %v722 = vmax.f32 %v439, 0.0
  %v723 = vmax.f32 %v588, 0.0
  %v724 = vmax.f32 %v441, 0.0
  %v725 = vmax.f32 %v590, 0.0
  %v726 = vmax.f32 %v444, 0.0
  %v727 = vmax.f32 %v593, 0.0
  %v728 = vmax.f32 %v446, 0.0
  %v729 = vmax.f32 %v595, 0.0
  %v730 = vmax.f32 %v449, 0.0
  %v731 = vmax.f32 %v598, 0.0
  %v732 = vmax.f32 %v451, 0.0
  %v733 = vmax.f32 %v600, 0.0
  %v734 = vmax.f32 %v454, 0.0
  %v735 = vmax.f32 %v603, 0.0
  %v736 = vmax.f32 %v456, 0.0
  %v737 = vmax.f32 %v605, 0.0
  %v738 = vmax.f32 %v459, 0.0
  %v739 = vmax.f32 %v608, 0.0
  %v740 = vmax.f32 %v461, 0.0
  %v741 = vmax.f32 %v610, 0.0
  %v742 = vmax.f32 %v464, 0.0
  %v743 = vmax.f32 %v613, 0.0
  %v744 = vmax.f32 %v466, 0.0
  %v745 = vmax.f32 %v615, 0.0
  %v746 = vmax.f32 %v469, 0.0
  %v747 = vmax.f32 %v618, 0.0
  %v748 = vmax.f32 %v471, 0.0
  %v749 = vmax.f32 %v620, 0.0
  %v750 = vmax.f32 %v474, 0.0
  %v751 = vmax.f32 %v623, 0.0
  %v752 = vmax.f32 %v476, 0.0
  %v753 = vmax.f32 %v625, 0.0
  %v754 = vmax.f32 %v479, 0.0
  %v755 = vmax.f32 %v628, 0.0
  %v756 = vmax.f32 %v481, 0.0
  %v757 = vmax.f32 %v630, 0.0
  %v758 = vmax.f32 %v484, 0.0
  %v759 = vmax.f32 %v633, 0.0
  %v760 = vmax.f32 %v486, 0.0
  %v761 = vmax.f32 %v635, 0.0
  %v762 = vmax.f32 %v489, 0.0
  %v763 = vmax.f32 %v638, 0.0
  %v764 = vmax.f32 %v491, 0.0
  %v765 = vmax.f32 %v640, 0.0
  %v766 = vmax.f32 %v494, 0.0
  %v767 = vmax.f32 %v643, 0.0
  %v768 = vmax.f32 %v496, 0.0
  %v769 = vmax.f32 %v645, 0.0
  %v770 = vmax.f32 %v499, 0.0
  %v771 = vmax.f32 %v648, 0.0
  %v772 = vmax.f32 %v501, 0.0
  %v773 = vmax.f32 %v650, 0.0
  %v774 = vmax.f32 %v504, 0.0
  %v775 = vmax.f32 %v653, 0.0
  %v776 = vmax.f32 %v506, 0.0
  %v777 = vmax.f32 %v655, 0.0
  %v778 = vmax.f32 %v509, 0.0
  %v779 = vmax.f32 %v658, 0.0
  %v780 = vmax.f32 %v511, 0.0
  %v781 = vmax.f32 %v660, 0.0
  %v782 = vmax.f32 %v514, 0.0
  %v783 = vmax.f32 %v663, 0.0
  %v784 = vmax.f32 %v516, 0.0
  %v785 = vmax.f32 %v665, 0.0
  %v786 = vmax.f32 %v519, 0.0
  %v787 = vmax.f32 %v668, 0.0
  %v788 = vmax.f32 %v521, 0.0
  %v789 = vmax.f32 %v670, 0.0
  %v790 = vmax.f32 %v524, 0.0
  %v791 = vmax.f32 %v673, 0.0
  %v792 = vmax.f32 %v526, 0.0
  %v793 = vmax.f32 %v675, 0.0
  %v794 = vmax.f32 %v529, 0.0
  %v795 = vmax.f32 %v678, 0.0
  %v796 = vmax.f32 %v531, 0.0
  %v797 = vmax.f32 %v680, 0.0
  %v798 = vmax.f32 %v534, 0.0
  %v799 = vmax.f32 %v683, 0.0
  %v800 = vmax.f32 %v536, 0.0
  %v801 = vmax.f32 %v685, 0.0
  %v802 = vmax.f32 %v539, 0.0
  %v803 = vmax.f32 %v688, 0.0
  %v804 = vmax.f32 %v541, 0.0
  %v805 = vmax.f32 %v690, 0.0
  %v806 = vmax.f32 %v544, 0.0
  %v807 = vmax.f32 %v693, 0.0
  %v808 = vmax.f32 %v546, 0.0
  %v809 = vmax.f32 %v695, 0.0
  %v810 = vmax.f32 %v549, 0.0
  %v811 = vmax.f32 %v698, 0.0
  %v812 = vmax.f32 %v551, 0.0
  %v813 = vmax.f32 %v700, 0.0
  %v825 = vunpack.c.l.b16 %v100
  %v826 = vunpack.c.h.b16 %v100
  %v827 = vunpack.c.l.b16 %v101
  %v828 = vunpack.c.h.b16 %v101
  %v829 = vunpack.c.l.b16 %v102
  %v830 = vunpack.c.h.b16 %v102
  %v831 = vunpack.c.l.b16 %v103
  %v832 = vunpack.c.h.b16 %v103
  %v833 = vunpack.c.l.b16 %v104
  %v834 = vunpack.c.h.b16 %v104
  %v835 = vunpack.c.l.b16 %v105
  %v836 = vunpack.c.h.b16 %v105
  %v837 = vunpack.c.l.b16 %v106
  %v838 = vunpack.c.h.b16 %v106
  %v839 = vunpack.c.l.b16 %v107
  %v840 = vunpack.c.h.b16 %v107
  %v841 = vunpack.c.l.b16 %v108
  %v842 = vunpack.c.h.b16 %v108
  %v843 = vunpack.c.l.b16 %v109
  %v844 = vunpack.c.h.b16 %v109
  %v845 = vunpack.c.l.b16 %v110
  %v846 = vunpack.c.h.b16 %v110
  %v847 = vpack.c.b16 %v827, %v825
  %v848 = vpack.c.b16 %v828, %v826
  %v849 = vpack.c.b16 %v831, %v829
  %v850 = vpack.c.b16 %v832, %v830
  %v851 = vpack.c.b16 %v835, %v833
  %v852 = vpack.c.b16 %v836, %v834
  %v853 = vpack.c.b16 %v839, %v837
  %v854 = vpack.c.b16 %v840, %v838
  %v855 = vpack.c.b16 %v843, %v841
  %v856 = vpack.c.b16 %v844, %v842
  %v857 = vpack.c.b16 %v845, %v845
  %v858 = vpack.c.b16 %v846, %v846
  %v870 = vsel %vm397, %v857, 0
  %v873 = vsel %vm397, %v858, 0
  %875 = vmatpush.bf16.msra.mxu0 0
  %876 = vmatpush.bf16.msra.mxu0 0
  %877 = vmatpush.bf16.msra.mxu0 %v870
  %878 = vmatpush.bf16.msra.mxu0 %v855
  %879 = vmatpush.bf16.msra.mxu0 %v853
  %880 = vmatpush.bf16.msra.mxu0 %v851
  %881 = vmatpush.bf16.msra.mxu0 %v849
  %882 = vmatpush.bf16.msra.mxu0 %v847
  %883 = vmatmul.bf16.gmra.mxu0 %v314
  %v884 = vpop.f32.mrf.mxu0
  %v885 = vadd.f32 %v113, %v884
  %v886 = vpop.f32.mrf.mxu0
  %v887 = vadd.f32 %v113, %v886
  %888 = vmatmul.bf16.gmra.mxu0 %v317
  %v889 = vpop.f32.mrf.mxu0
  %v890 = vadd.f32 %v113, %v889
  %v891 = vpop.f32.mrf.mxu0
  %v892 = vadd.f32 %v113, %v891
  %893 = vmatmul.bf16.gmra.mxu0 %v320
  %v894 = vpop.f32.mrf.mxu0
  %v895 = vadd.f32 %v113, %v894
  %v896 = vpop.f32.mrf.mxu0
  %v897 = vadd.f32 %v113, %v896
  %898 = vmatmul.bf16.gmra.mxu0 %v323
  %v899 = vpop.f32.mrf.mxu0
  %v900 = vadd.f32 %v113, %v899
  %v901 = vpop.f32.mrf.mxu0
  %v902 = vadd.f32 %v113, %v901
  %903 = vmatmul.bf16.gmra.mxu0 %v326
  %v904 = vpop.f32.mrf.mxu0
  %v905 = vadd.f32 %v113, %v904
  %v906 = vpop.f32.mrf.mxu0
  %v907 = vadd.f32 %v113, %v906
  %908 = vmatmul.bf16.gmra.mxu0 %v329
  %v909 = vpop.f32.mrf.mxu0
  %v910 = vadd.f32 %v113, %v909
  %v911 = vpop.f32.mrf.mxu0
  %v912 = vadd.f32 %v113, %v911
  %913 = vmatmul.bf16.gmra.mxu0 %v332
  %v914 = vpop.f32.mrf.mxu0
  %v915 = vadd.f32 %v113, %v914
  %v916 = vpop.f32.mrf.mxu0
  %v917 = vadd.f32 %v113, %v916
  %918 = vmatmul.bf16.gmra.mxu0 %v335
  %v919 = vpop.f32.mrf.mxu0
  %v920 = vadd.f32 %v113, %v919
  %v921 = vpop.f32.mrf.mxu0
  %v922 = vadd.f32 %v113, %v921
  %923 = vmatmul.bf16.gmra.mxu0 %v338
  %v924 = vpop.f32.mrf.mxu0
  %v925 = vadd.f32 %v113, %v924
  %v926 = vpop.f32.mrf.mxu0
  %v927 = vadd.f32 %v113, %v926
  %928 = vmatmul.bf16.gmra.mxu0 %v341
  %v929 = vpop.f32.mrf.mxu0
  %v930 = vadd.f32 %v113, %v929
  %v931 = vpop.f32.mrf.mxu0
  %v932 = vadd.f32 %v113, %v931
  %933 = vmatmul.bf16.gmra.mxu0 %v344
  %v934 = vpop.f32.mrf.mxu0
  %v935 = vadd.f32 %v113, %v934
  %v936 = vpop.f32.mrf.mxu0
  %v937 = vadd.f32 %v113, %v936
  %938 = vmatmul.bf16.gmra.mxu0 %v347
  %v939 = vpop.f32.mrf.mxu0
  %v940 = vadd.f32 %v113, %v939
  %v941 = vpop.f32.mrf.mxu0
  %v942 = vadd.f32 %v113, %v941
  %943 = vmatmul.bf16.gmra.mxu0 %v350
  %v944 = vpop.f32.mrf.mxu0
  %v945 = vadd.f32 %v113, %v944
  %v946 = vpop.f32.mrf.mxu0
  %v947 = vadd.f32 %v113, %v946
  %948 = vmatmul.bf16.gmra.mxu0 %v353
  %v949 = vpop.f32.mrf.mxu0
  %v950 = vadd.f32 %v113, %v949
  %v951 = vpop.f32.mrf.mxu0
  %v952 = vadd.f32 %v113, %v951
  %953 = vmatmul.bf16.gmra.mxu0 %v356
  %v954 = vpop.f32.mrf.mxu0
  %v955 = vadd.f32 %v113, %v954
  %v956 = vpop.f32.mrf.mxu0
  %v957 = vadd.f32 %v113, %v956
  %958 = vmatmul.bf16.gmra.mxu0 %v359
  %v959 = vpop.f32.mrf.mxu0
  %v960 = vadd.f32 %v113, %v959
  %v961 = vpop.f32.mrf.mxu0
  %v962 = vadd.f32 %v113, %v961
  %963 = vmatmul.bf16.gmra.mxu0 %v362
  %v964 = vpop.f32.mrf.mxu0
  %v965 = vadd.f32 %v113, %v964
  %v966 = vpop.f32.mrf.mxu0
  %v967 = vadd.f32 %v113, %v966
  %968 = vmatmul.bf16.gmra.mxu0 %v365
  %v969 = vpop.f32.mrf.mxu0
  %v970 = vadd.f32 %v113, %v969
  %v971 = vpop.f32.mrf.mxu0
  %v972 = vadd.f32 %v113, %v971
  %973 = vmatmul.bf16.gmra.mxu0 %v368
  %v974 = vpop.f32.mrf.mxu0
  %v975 = vadd.f32 %v113, %v974
  %v976 = vpop.f32.mrf.mxu0
  %v977 = vadd.f32 %v113, %v976
  %978 = vmatmul.bf16.gmra.mxu0 %v371
  %v979 = vpop.f32.mrf.mxu0
  %v980 = vadd.f32 %v113, %v979
  %v981 = vpop.f32.mrf.mxu0
  %v982 = vadd.f32 %v113, %v981
  %983 = vmatmul.bf16.gmra.mxu0 %v374
  %v984 = vpop.f32.mrf.mxu0
  %v985 = vadd.f32 %v113, %v984
  %v986 = vpop.f32.mrf.mxu0
  %v987 = vadd.f32 %v113, %v986
  %988 = vmatmul.bf16.gmra.mxu0 %v377
  %v989 = vpop.f32.mrf.mxu0
  %v990 = vadd.f32 %v113, %v989
  %v991 = vpop.f32.mrf.mxu0
  %v992 = vadd.f32 %v113, %v991
  %993 = vmatmul.bf16.gmra.mxu0 %v380
  %v994 = vpop.f32.mrf.mxu0
  %v995 = vadd.f32 %v113, %v994
  %v996 = vpop.f32.mrf.mxu0
  %v997 = vadd.f32 %v113, %v996
  %998 = vmatmul.bf16.gmra.mxu0 %v383
  %v999 = vpop.f32.mrf.mxu0
  %v1000 = vadd.f32 %v113, %v999
  %v1001 = vpop.f32.mrf.mxu0
  %v1002 = vadd.f32 %v113, %v1001
  %1003 = vmatmul.bf16.gmra.mxu0 %v386
  %v1004 = vpop.f32.mrf.mxu0
  %v1005 = vadd.f32 %v113, %v1004
  %v1006 = vpop.f32.mrf.mxu0
  %v1007 = vadd.f32 %v113, %v1006
  %1008 = vmatmul.bf16.gmra.mxu0 %v389
  %v1009 = vpop.f32.mrf.mxu0
  %v1010 = vadd.f32 %v113, %v1009
  %v1011 = vpop.f32.mrf.mxu0
  %v1012 = vadd.f32 %v113, %v1011
  %1013 = vmatmul.bf16.gmra.mxu0 %v392
  %v1014 = vpop.f32.mrf.mxu0
  %v1015 = vadd.f32 %v113, %v1014
  %v1016 = vpop.f32.mrf.mxu0
  %v1017 = vadd.f32 %v113, %v1016
  %1018 = vmatmul.bf16.gmra.mxu0 %v395
  %v1019 = vpop.f32.mrf.mxu0
  %v1020 = vadd.f32 %v113, %v1019
  %v1021 = vpop.f32.mrf.mxu0
  %v1022 = vadd.f32 %v113, %v1021
  %1023 = vdwg.mxu0
  %1024 = vmatpush.bf16.msra.mxu0 0
  %1025 = vmatpush.bf16.msra.mxu0 0
  %1026 = vmatpush.bf16.msra.mxu0 %v873
  %1027 = vmatpush.bf16.msra.mxu0 %v856
  %1028 = vmatpush.bf16.msra.mxu0 %v854
  %1029 = vmatpush.bf16.msra.mxu0 %v852
  %1030 = vmatpush.bf16.msra.mxu0 %v850
  %1031 = vmatpush.bf16.msra.mxu0 %v848
  %1032 = vmatmul.bf16.gmra.mxu0 %v314
  %v1033 = vpop.f32.mrf.mxu0
  %v1034 = vadd.f32 %v114, %v1033
  %v1035 = vpop.f32.mrf.mxu0
  %v1036 = vadd.f32 %v114, %v1035
  %1037 = vmatmul.bf16.gmra.mxu0 %v317
  %v1038 = vpop.f32.mrf.mxu0
  %v1039 = vadd.f32 %v114, %v1038
  %v1040 = vpop.f32.mrf.mxu0
  %v1041 = vadd.f32 %v114, %v1040
  %1042 = vmatmul.bf16.gmra.mxu0 %v320
  %v1043 = vpop.f32.mrf.mxu0
  %v1044 = vadd.f32 %v114, %v1043
  %v1045 = vpop.f32.mrf.mxu0
  %v1046 = vadd.f32 %v114, %v1045
  %1047 = vmatmul.bf16.gmra.mxu0 %v323
  %v1048 = vpop.f32.mrf.mxu0
  %v1049 = vadd.f32 %v114, %v1048
  %v1050 = vpop.f32.mrf.mxu0
  %v1051 = vadd.f32 %v114, %v1050
  %1052 = vmatmul.bf16.gmra.mxu0 %v326
  %v1053 = vpop.f32.mrf.mxu0
  %v1054 = vadd.f32 %v114, %v1053
  %v1055 = vpop.f32.mrf.mxu0
  %v1056 = vadd.f32 %v114, %v1055
  %1057 = vmatmul.bf16.gmra.mxu0 %v329
  %v1058 = vpop.f32.mrf.mxu0
  %v1059 = vadd.f32 %v114, %v1058
  %v1060 = vpop.f32.mrf.mxu0
  %v1061 = vadd.f32 %v114, %v1060
  %1062 = vmatmul.bf16.gmra.mxu0 %v332
  %v1063 = vpop.f32.mrf.mxu0
  %v1064 = vadd.f32 %v114, %v1063
  %v1065 = vpop.f32.mrf.mxu0
  %v1066 = vadd.f32 %v114, %v1065
  %1067 = vmatmul.bf16.gmra.mxu0 %v335
  %v1068 = vpop.f32.mrf.mxu0
  %v1069 = vadd.f32 %v114, %v1068
  %v1070 = vpop.f32.mrf.mxu0
  %v1071 = vadd.f32 %v114, %v1070
  %1072 = vmatmul.bf16.gmra.mxu0 %v338
  %v1073 = vpop.f32.mrf.mxu0
  %v1074 = vadd.f32 %v114, %v1073
  %v1075 = vpop.f32.mrf.mxu0
  %v1076 = vadd.f32 %v114, %v1075
  %1077 = vmatmul.bf16.gmra.mxu0 %v341
  %v1078 = vpop.f32.mrf.mxu0
  %v1079 = vadd.f32 %v114, %v1078
  %v1080 = vpop.f32.mrf.mxu0
  %v1081 = vadd.f32 %v114, %v1080
  %1082 = vmatmul.bf16.gmra.mxu0 %v344
  %v1083 = vpop.f32.mrf.mxu0
  %v1084 = vadd.f32 %v114, %v1083
  %v1085 = vpop.f32.mrf.mxu0
  %v1086 = vadd.f32 %v114, %v1085
  %1087 = vmatmul.bf16.gmra.mxu0 %v347
  %v1088 = vpop.f32.mrf.mxu0
  %v1089 = vadd.f32 %v114, %v1088
  %v1090 = vpop.f32.mrf.mxu0
  %v1091 = vadd.f32 %v114, %v1090
  %1092 = vmatmul.bf16.gmra.mxu0 %v350
  %v1093 = vpop.f32.mrf.mxu0
  %v1094 = vadd.f32 %v114, %v1093
  %v1095 = vpop.f32.mrf.mxu0
  %v1096 = vadd.f32 %v114, %v1095
  %1097 = vmatmul.bf16.gmra.mxu0 %v353
  %v1098 = vpop.f32.mrf.mxu0
  %v1099 = vadd.f32 %v114, %v1098
  %v1100 = vpop.f32.mrf.mxu0
  %v1101 = vadd.f32 %v114, %v1100
  %1102 = vmatmul.bf16.gmra.mxu0 %v356
  %v1103 = vpop.f32.mrf.mxu0
  %v1104 = vadd.f32 %v114, %v1103
  %v1105 = vpop.f32.mrf.mxu0
  %v1106 = vadd.f32 %v114, %v1105
  %1107 = vmatmul.bf16.gmra.mxu0 %v359
  %v1108 = vpop.f32.mrf.mxu0
  %v1109 = vadd.f32 %v114, %v1108
  %v1110 = vpop.f32.mrf.mxu0
  %v1111 = vadd.f32 %v114, %v1110
  %1112 = vmatmul.bf16.gmra.mxu0 %v362
  %v1113 = vpop.f32.mrf.mxu0
  %v1114 = vadd.f32 %v114, %v1113
  %v1115 = vpop.f32.mrf.mxu0
  %v1116 = vadd.f32 %v114, %v1115
  %1117 = vmatmul.bf16.gmra.mxu0 %v365
  %v1118 = vpop.f32.mrf.mxu0
  %v1119 = vadd.f32 %v114, %v1118
  %v1120 = vpop.f32.mrf.mxu0
  %v1121 = vadd.f32 %v114, %v1120
  %1122 = vmatmul.bf16.gmra.mxu0 %v368
  %v1123 = vpop.f32.mrf.mxu0
  %v1124 = vadd.f32 %v114, %v1123
  %v1125 = vpop.f32.mrf.mxu0
  %v1126 = vadd.f32 %v114, %v1125
  %1127 = vmatmul.bf16.gmra.mxu0 %v371
  %v1128 = vpop.f32.mrf.mxu0
  %v1129 = vadd.f32 %v114, %v1128
  %v1130 = vpop.f32.mrf.mxu0
  %v1131 = vadd.f32 %v114, %v1130
  %1132 = vmatmul.bf16.gmra.mxu0 %v374
  %v1133 = vpop.f32.mrf.mxu0
  %v1134 = vadd.f32 %v114, %v1133
  %v1135 = vpop.f32.mrf.mxu0
  %v1136 = vadd.f32 %v114, %v1135
  %1137 = vmatmul.bf16.gmra.mxu0 %v377
  %v1138 = vpop.f32.mrf.mxu0
  %v1139 = vadd.f32 %v114, %v1138
  %v1140 = vpop.f32.mrf.mxu0
  %v1141 = vadd.f32 %v114, %v1140
  %1142 = vmatmul.bf16.gmra.mxu0 %v380
  %v1143 = vpop.f32.mrf.mxu0
  %v1144 = vadd.f32 %v114, %v1143
  %v1145 = vpop.f32.mrf.mxu0
  %v1146 = vadd.f32 %v114, %v1145
  %1147 = vmatmul.bf16.gmra.mxu0 %v383
  %v1148 = vpop.f32.mrf.mxu0
  %v1149 = vadd.f32 %v114, %v1148
  %v1150 = vpop.f32.mrf.mxu0
  %v1151 = vadd.f32 %v114, %v1150
  %1152 = vmatmul.bf16.gmra.mxu0 %v386
  %v1153 = vpop.f32.mrf.mxu0
  %v1154 = vadd.f32 %v114, %v1153
  %v1155 = vpop.f32.mrf.mxu0
  %v1156 = vadd.f32 %v114, %v1155
  %1157 = vmatmul.bf16.gmra.mxu0 %v389
  %v1158 = vpop.f32.mrf.mxu0
  %v1159 = vadd.f32 %v114, %v1158
  %v1160 = vpop.f32.mrf.mxu0
  %v1161 = vadd.f32 %v114, %v1160
  %1162 = vmatmul.bf16.gmra.mxu0 %v392
  %v1163 = vpop.f32.mrf.mxu0
  %v1164 = vadd.f32 %v114, %v1163
  %v1165 = vpop.f32.mrf.mxu0
  %v1166 = vadd.f32 %v114, %v1165
  %1167 = vmatmul.bf16.gmra.mxu0 %v395
  %v1168 = vpop.f32.mrf.mxu0
  %v1169 = vadd.f32 %v114, %v1168
  %v1170 = vpop.f32.mrf.mxu0
  %v1171 = vadd.f32 %v114, %v1170
  %1172 = vdwg.mxu0
  %v1173 = vmax.f32 %v885, 0.0
  %v1174 = vmax.f32 %v1034, 0.0
  %v1175 = vmax.f32 %v887, 0.0
  %v1176 = vmax.f32 %v1036, 0.0
  %v1177 = vmax.f32 %v890, 0.0
  %v1178 = vmax.f32 %v1039, 0.0
  %v1179 = vmax.f32 %v892, 0.0
  %v1180 = vmax.f32 %v1041, 0.0
  %v1181 = vmax.f32 %v895, 0.0
  %v1182 = vmax.f32 %v1044, 0.0
  %v1183 = vmax.f32 %v897, 0.0
  %v1184 = vmax.f32 %v1046, 0.0
  %v1185 = vmax.f32 %v900, 0.0
  %v1186 = vmax.f32 %v1049, 0.0
  %v1187 = vmax.f32 %v902, 0.0
  %v1188 = vmax.f32 %v1051, 0.0
  %v1189 = vmax.f32 %v905, 0.0
  %v1190 = vmax.f32 %v1054, 0.0
  %v1191 = vmax.f32 %v907, 0.0
  %v1192 = vmax.f32 %v1056, 0.0
  %v1193 = vmax.f32 %v910, 0.0
  %v1194 = vmax.f32 %v1059, 0.0
  %v1195 = vmax.f32 %v912, 0.0
  %v1196 = vmax.f32 %v1061, 0.0
  %v1197 = vmax.f32 %v915, 0.0
  %v1198 = vmax.f32 %v1064, 0.0
  %v1199 = vmax.f32 %v917, 0.0
  %v1200 = vmax.f32 %v1066, 0.0
  %v1201 = vmax.f32 %v920, 0.0
  %v1202 = vmax.f32 %v1069, 0.0
  %v1203 = vmax.f32 %v922, 0.0
  %v1204 = vmax.f32 %v1071, 0.0
  %v1205 = vmax.f32 %v925, 0.0
  %v1206 = vmax.f32 %v1074, 0.0
  %v1207 = vmax.f32 %v927, 0.0
  %v1208 = vmax.f32 %v1076, 0.0
  %v1209 = vmax.f32 %v930, 0.0
  %v1210 = vmax.f32 %v1079, 0.0
  %v1211 = vmax.f32 %v932, 0.0
  %v1212 = vmax.f32 %v1081, 0.0
  %v1213 = vmax.f32 %v935, 0.0
  %v1214 = vmax.f32 %v1084, 0.0
  %v1215 = vmax.f32 %v937, 0.0
  %v1216 = vmax.f32 %v1086, 0.0
  %v1217 = vmax.f32 %v940, 0.0
  %v1218 = vmax.f32 %v1089, 0.0
  %v1219 = vmax.f32 %v942, 0.0
  %v1220 = vmax.f32 %v1091, 0.0
  %v1221 = vmax.f32 %v945, 0.0
  %v1222 = vmax.f32 %v1094, 0.0
  %v1223 = vmax.f32 %v947, 0.0
  %v1224 = vmax.f32 %v1096, 0.0
  %v1225 = vmax.f32 %v950, 0.0
  %v1226 = vmax.f32 %v1099, 0.0
  %v1227 = vmax.f32 %v952, 0.0
  %v1228 = vmax.f32 %v1101, 0.0
  %v1229 = vmax.f32 %v955, 0.0
  %v1230 = vmax.f32 %v1104, 0.0
  %v1231 = vmax.f32 %v957, 0.0
  %v1232 = vmax.f32 %v1106, 0.0
  %v1233 = vmax.f32 %v960, 0.0
  %v1234 = vmax.f32 %v1109, 0.0
  %v1235 = vmax.f32 %v962, 0.0
  %v1236 = vmax.f32 %v1111, 0.0
  %v1237 = vmax.f32 %v965, 0.0
  %v1238 = vmax.f32 %v1114, 0.0
  %v1239 = vmax.f32 %v967, 0.0
  %v1240 = vmax.f32 %v1116, 0.0
  %v1241 = vmax.f32 %v970, 0.0
  %v1242 = vmax.f32 %v1119, 0.0
  %v1243 = vmax.f32 %v972, 0.0
  %v1244 = vmax.f32 %v1121, 0.0
  %v1245 = vmax.f32 %v975, 0.0
  %v1246 = vmax.f32 %v1124, 0.0
  %v1247 = vmax.f32 %v977, 0.0
  %v1248 = vmax.f32 %v1126, 0.0
  %v1249 = vmax.f32 %v980, 0.0
  %v1250 = vmax.f32 %v1129, 0.0
  %v1251 = vmax.f32 %v982, 0.0
  %v1252 = vmax.f32 %v1131, 0.0
  %v1253 = vmax.f32 %v985, 0.0
  %v1254 = vmax.f32 %v1134, 0.0
  %v1255 = vmax.f32 %v987, 0.0
  %v1256 = vmax.f32 %v1136, 0.0
  %v1257 = vmax.f32 %v990, 0.0
  %v1258 = vmax.f32 %v1139, 0.0
  %v1259 = vmax.f32 %v992, 0.0
  %v1260 = vmax.f32 %v1141, 0.0
  %v1261 = vmax.f32 %v995, 0.0
  %v1262 = vmax.f32 %v1144, 0.0
  %v1263 = vmax.f32 %v997, 0.0
  %v1264 = vmax.f32 %v1146, 0.0
  %v1265 = vmax.f32 %v1000, 0.0
  %v1266 = vmax.f32 %v1149, 0.0
  %v1267 = vmax.f32 %v1002, 0.0
  %v1268 = vmax.f32 %v1151, 0.0
  %v1269 = vmax.f32 %v1005, 0.0
  %v1270 = vmax.f32 %v1154, 0.0
  %v1271 = vmax.f32 %v1007, 0.0
  %v1272 = vmax.f32 %v1156, 0.0
  %v1273 = vmax.f32 %v1010, 0.0
  %v1274 = vmax.f32 %v1159, 0.0
  %v1275 = vmax.f32 %v1012, 0.0
  %v1276 = vmax.f32 %v1161, 0.0
  %v1277 = vmax.f32 %v1015, 0.0
  %v1278 = vmax.f32 %v1164, 0.0
  %v1279 = vmax.f32 %v1017, 0.0
  %v1280 = vmax.f32 %v1166, 0.0
  %v1281 = vmax.f32 %v1020, 0.0
  %v1282 = vmax.f32 %v1169, 0.0
  %v1283 = vmax.f32 %v1022, 0.0
  %v1284 = vmax.f32 %v1171, 0.0
  %v1285 = vmax.f32 %v702, %v1173
  %v1286 = vmax.f32 %v703, %v1174
  %v1287 = vmax.f32 %v704, %v1175
  %v1288 = vmax.f32 %v705, %v1176
  %v1289 = vmax.f32 %v706, %v1177
  %v1290 = vmax.f32 %v707, %v1178
  %v1291 = vmax.f32 %v708, %v1179
  %v1292 = vmax.f32 %v709, %v1180
  %v1293 = vmax.f32 %v710, %v1181
  %v1294 = vmax.f32 %v711, %v1182
  %v1295 = vmax.f32 %v712, %v1183
  %v1296 = vmax.f32 %v713, %v1184
  %v1297 = vmax.f32 %v714, %v1185
  %v1298 = vmax.f32 %v715, %v1186
  %v1299 = vmax.f32 %v716, %v1187
  %v1300 = vmax.f32 %v717, %v1188
  %v1301 = vmax.f32 %v718, %v1189
  %v1302 = vmax.f32 %v719, %v1190
  %v1303 = vmax.f32 %v720, %v1191
  %v1304 = vmax.f32 %v721, %v1192
  %v1305 = vmax.f32 %v722, %v1193
  %v1306 = vmax.f32 %v723, %v1194
  %v1307 = vmax.f32 %v724, %v1195
  %v1308 = vmax.f32 %v725, %v1196
  %v1309 = vmax.f32 %v726, %v1197
  %v1310 = vmax.f32 %v727, %v1198
  %v1311 = vmax.f32 %v728, %v1199
  %v1312 = vmax.f32 %v729, %v1200
  %v1313 = vmax.f32 %v730, %v1201
  %v1314 = vmax.f32 %v731, %v1202
  %v1315 = vmax.f32 %v732, %v1203
  %v1316 = vmax.f32 %v733, %v1204
  %v1317 = vmax.f32 %v734, %v1205
  %v1318 = vmax.f32 %v735, %v1206
  %v1319 = vmax.f32 %v736, %v1207
  %v1320 = vmax.f32 %v737, %v1208
  %v1321 = vmax.f32 %v738, %v1209
  %v1322 = vmax.f32 %v739, %v1210
  %v1323 = vmax.f32 %v740, %v1211
  %v1324 = vmax.f32 %v741, %v1212
  %v1325 = vmax.f32 %v742, %v1213
  %v1326 = vmax.f32 %v743, %v1214
  %v1327 = vmax.f32 %v744, %v1215
  %v1328 = vmax.f32 %v745, %v1216
  %v1329 = vmax.f32 %v746, %v1217
  %v1330 = vmax.f32 %v747, %v1218
  %v1331 = vmax.f32 %v748, %v1219
  %v1332 = vmax.f32 %v749, %v1220
  %v1333 = vmax.f32 %v750, %v1221
  %v1334 = vmax.f32 %v751, %v1222
  %v1335 = vmax.f32 %v752, %v1223
  %v1336 = vmax.f32 %v753, %v1224
  %v1337 = vmax.f32 %v754, %v1225
  %v1338 = vmax.f32 %v755, %v1226
  %v1339 = vmax.f32 %v756, %v1227
  %v1340 = vmax.f32 %v757, %v1228
  %v1341 = vmax.f32 %v758, %v1229
  %v1342 = vmax.f32 %v759, %v1230
  %v1343 = vmax.f32 %v760, %v1231
  %v1344 = vmax.f32 %v761, %v1232
  %v1345 = vmax.f32 %v762, %v1233
  %v1346 = vmax.f32 %v763, %v1234
  %v1347 = vmax.f32 %v764, %v1235
  %v1348 = vmax.f32 %v765, %v1236
  %v1349 = vmax.f32 %v766, %v1237
  %v1350 = vmax.f32 %v767, %v1238
  %v1351 = vmax.f32 %v768, %v1239
  %v1352 = vmax.f32 %v769, %v1240
  %v1353 = vmax.f32 %v770, %v1241
  %v1354 = vmax.f32 %v771, %v1242
  %v1355 = vmax.f32 %v772, %v1243
  %v1356 = vmax.f32 %v773, %v1244
  %v1357 = vmax.f32 %v774, %v1245
  %v1358 = vmax.f32 %v775, %v1246
  %v1359 = vmax.f32 %v776, %v1247
  %v1360 = vmax.f32 %v777, %v1248
  %v1361 = vmax.f32 %v778, %v1249
  %v1362 = vmax.f32 %v779, %v1250
  %v1363 = vmax.f32 %v780, %v1251
  %v1364 = vmax.f32 %v781, %v1252
  %v1365 = vmax.f32 %v782, %v1253
  %v1366 = vmax.f32 %v783, %v1254
  %v1367 = vmax.f32 %v784, %v1255
  %v1368 = vmax.f32 %v785, %v1256
  %v1369 = vmax.f32 %v786, %v1257
  %v1370 = vmax.f32 %v787, %v1258
  %v1371 = vmax.f32 %v788, %v1259
  %v1372 = vmax.f32 %v789, %v1260
  %v1373 = vmax.f32 %v790, %v1261
  %v1374 = vmax.f32 %v791, %v1262
  %v1375 = vmax.f32 %v792, %v1263
  %v1376 = vmax.f32 %v793, %v1264
  %v1377 = vmax.f32 %v794, %v1265
  %v1378 = vmax.f32 %v795, %v1266
  %v1379 = vmax.f32 %v796, %v1267
  %v1380 = vmax.f32 %v797, %v1268
  %v1381 = vmax.f32 %v798, %v1269
  %v1382 = vmax.f32 %v799, %v1270
  %v1383 = vmax.f32 %v800, %v1271
  %v1384 = vmax.f32 %v801, %v1272
  %v1385 = vmax.f32 %v802, %v1273
  %v1386 = vmax.f32 %v803, %v1274
  %v1387 = vmax.f32 %v804, %v1275
  %v1388 = vmax.f32 %v805, %v1276
  %v1389 = vmax.f32 %v806, %v1277
  %v1390 = vmax.f32 %v807, %v1278
  %v1391 = vmax.f32 %v808, %v1279
  %v1392 = vmax.f32 %v809, %v1280
  %v1393 = vmax.f32 %v810, %v1281
  %v1394 = vmax.f32 %v811, %v1282
  %v1395 = vmax.f32 %v812, %v1283
  %v1396 = vmax.f32 %v813, %v1284
  %1397 = vst [vmem:[#allocation2] sm:$0xff] %v1285
  %vm1398 = vcmask 785408
  %1399 = vst.msk [vmem:[#allocation2 + $0x8] sm:$0xff] %vm1398, %v1286
  %1400 = vst [vmem:[#allocation2 + $0x10] sm:$0xff] %v1287
  %1401 = vst.msk [vmem:[#allocation2 + $0x18] sm:$0xff] %vm1398, %v1288
  %1402 = vst [vmem:[#allocation2 + $0x20] sm:$0xff] %v1289
  %1403 = vst.msk [vmem:[#allocation2 + $0x28] sm:$0xff] %vm1398, %v1290
  %1404 = vst [vmem:[#allocation2 + $0x30] sm:$0xff] %v1291
  %1405 = vst.msk [vmem:[#allocation2 + $0x38] sm:$0xff] %vm1398, %v1292
  %1406 = vst [vmem:[#allocation2 + $0x40] sm:$0xff] %v1293
  %1407 = vst.msk [vmem:[#allocation2 + $0x48] sm:$0xff] %vm1398, %v1294
  %1408 = vst [vmem:[#allocation2 + $0x50] sm:$0xff] %v1295
  %1409 = vst.msk [vmem:[#allocation2 + $0x58] sm:$0xff] %vm1398, %v1296
  %1410 = vst [vmem:[#allocation2 + $0x60] sm:$0xff] %v1297
  %1411 = vst.msk [vmem:[#allocation2 + $0x68] sm:$0xff] %vm1398, %v1298
  %1412 = vst [vmem:[#allocation2 + $0x70] sm:$0xff] %v1299
  %1413 = vst.msk [vmem:[#allocation2 + $0x78] sm:$0xff] %vm1398, %v1300
  %1414 = vst [vmem:[#allocation2 + $0x80] sm:$0xff] %v1301
  %1415 = vst.msk [vmem:[#allocation2 + $0x88] sm:$0xff] %vm1398, %v1302
  %1416 = vst [vmem:[#allocation2 + $0x90] sm:$0xff] %v1303
  %1417 = vst.msk [vmem:[#allocation2 + $0x98] sm:$0xff] %vm1398, %v1304
  %1418 = vst [vmem:[#allocation2 + $0xa0] sm:$0xff] %v1305
  %1419 = vst.msk [vmem:[#allocation2 + $0xa8] sm:$0xff] %vm1398, %v1306
  %1420 = vst [vmem:[#allocation2 + $0xb0] sm:$0xff] %v1307
  %1421 = vst.msk [vmem:[#allocation2 + $0xb8] sm:$0xff] %vm1398, %v1308
  %1422 = vst [vmem:[#allocation2 + $0xc0] sm:$0xff] %v1309
  %1423 = vst.msk [vmem:[#allocation2 + $0xc8] sm:$0xff] %vm1398, %v1310
  %1424 = vst [vmem:[#allocation2 + $0xd0] sm:$0xff] %v1311
  %1425 = vst.msk [vmem:[#allocation2 + $0xd8] sm:$0xff] %vm1398, %v1312
  %1426 = vst [vmem:[#allocation2 + $0xe0] sm:$0xff] %v1313
  %1427 = vst.msk [vmem:[#allocation2 + $0xe8] sm:$0xff] %vm1398, %v1314
  %1428 = vst [vmem:[#allocation2 + $0xf0] sm:$0xff] %v1315
  %1429 = vst.msk [vmem:[#allocation2 + $0xf8] sm:$0xff] %vm1398, %v1316
  %1430 = vst [vmem:[#allocation2 + $0x100] sm:$0xff] %v1317
  %1431 = vst.msk [vmem:[#allocation2 + $0x108] sm:$0xff] %vm1398, %v1318
  %1432 = vst [vmem:[#allocation2 + $0x110] sm:$0xff] %v1319
  %1433 = vst.msk [vmem:[#allocation2 + $0x118] sm:$0xff] %vm1398, %v1320
  %1434 = vst [vmem:[#allocation2 + $0x120] sm:$0xff] %v1321
  %1435 = vst.msk [vmem:[#allocation2 + $0x128] sm:$0xff] %vm1398, %v1322
  %1436 = vst [vmem:[#allocation2 + $0x130] sm:$0xff] %v1323
  %1437 = vst.msk [vmem:[#allocation2 + $0x138] sm:$0xff] %vm1398, %v1324
  %1438 = vst [vmem:[#allocation2 + $0x140] sm:$0xff] %v1325
  %1439 = vst.msk [vmem:[#allocation2 + $0x148] sm:$0xff] %vm1398, %v1326
  %1440 = vst [vmem:[#allocation2 + $0x150] sm:$0xff] %v1327
  %1441 = vst.msk [vmem:[#allocation2 + $0x158] sm:$0xff] %vm1398, %v1328
  %1442 = vst [vmem:[#allocation2 + $0x160] sm:$0xff] %v1329
  %1443 = vst.msk [vmem:[#allocation2 + $0x168] sm:$0xff] %vm1398, %v1330
  %1444 = vst [vmem:[#allocation2 + $0x170] sm:$0xff] %v1331
  %1445 = vst.msk [vmem:[#allocation2 + $0x178] sm:$0xff] %vm1398, %v1332
  %1446 = vst [vmem:[#allocation2 + $0x180] sm:$0xff] %v1333
  %1447 = vst.msk [vmem:[#allocation2 + $0x188] sm:$0xff] %vm1398, %v1334
  %1448 = vst [vmem:[#allocation2 + $0x190] sm:$0xff] %v1335
  %1449 = vst.msk [vmem:[#allocation2 + $0x198] sm:$0xff] %vm1398, %v1336
  %1450 = vst [vmem:[#allocation2 + $0x1a0] sm:$0xff] %v1337
  %1451 = vst.msk [vmem:[#allocation2 + $0x1a8] sm:$0xff] %vm1398, %v1338
  %1452 = vst [vmem:[#allocation2 + $0x1b0] sm:$0xff] %v1339
  %1453 = vst.msk [vmem:[#allocation2 + $0x1b8] sm:$0xff] %vm1398, %v1340
  %1454 = vst [vmem:[#allocation2 + $0x1c0] sm:$0xff] %v1341
  %1455 = vst.msk [vmem:[#allocation2 + $0x1c8] sm:$0xff] %vm1398, %v1342
  %1456 = vst [vmem:[#allocation2 + $0x1d0] sm:$0xff] %v1343
  %1457 = vst.msk [vmem:[#allocation2 + $0x1d8] sm:$0xff] %vm1398, %v1344
  %1458 = vst [vmem:[#allocation2 + $0x1e0] sm:$0xff] %v1345
  %1459 = vst.msk [vmem:[#allocation2 + $0x1e8] sm:$0xff] %vm1398, %v1346
  %1460 = vst [vmem:[#allocation2 + $0x1f0] sm:$0xff] %v1347
  %1461 = vst.msk [vmem:[#allocation2 + $0x1f8] sm:$0xff] %vm1398, %v1348
  %1462 = vst [vmem:[#allocation2 + $0x200] sm:$0xff] %v1349
  %1463 = vst.msk [vmem:[#allocation2 + $0x208] sm:$0xff] %vm1398, %v1350
  %1464 = vst [vmem:[#allocation2 + $0x210] sm:$0xff] %v1351
  %1465 = vst.msk [vmem:[#allocation2 + $0x218] sm:$0xff] %vm1398, %v1352
  %1466 = vst [vmem:[#allocation2 + $0x220] sm:$0xff] %v1353
  %1467 = vst.msk [vmem:[#allocation2 + $0x228] sm:$0xff] %vm1398, %v1354
  %1468 = vst [vmem:[#allocation2 + $0x230] sm:$0xff] %v1355
  %1469 = vst.msk [vmem:[#allocation2 + $0x238] sm:$0xff] %vm1398, %v1356
  %1470 = vst [vmem:[#allocation2 + $0x240] sm:$0xff] %v1357
  %1471 = vst.msk [vmem:[#allocation2 + $0x248] sm:$0xff] %vm1398, %v1358
  %1472 = vst [vmem:[#allocation2 + $0x250] sm:$0xff] %v1359
  %1473 = vst.msk [vmem:[#allocation2 + $0x258] sm:$0xff] %vm1398, %v1360
  %1474 = vst [vmem:[#allocation2 + $0x260] sm:$0xff] %v1361
  %1475 = vst.msk [vmem:[#allocation2 + $0x268] sm:$0xff] %vm1398, %v1362
  %1476 = vst [vmem:[#allocation2 + $0x270] sm:$0xff] %v1363
  %1477 = vst.msk [vmem:[#allocation2 + $0x278] sm:$0xff] %vm1398, %v1364
  %1478 = vst [vmem:[#allocation2 + $0x280] sm:$0xff] %v1365
  %1479 = vst.msk [vmem:[#allocation2 + $0x288] sm:$0xff] %vm1398, %v1366
  %1480 = vst [vmem:[#allocation2 + $0x290] sm:$0xff] %v1367
  %1481 = vst.msk [vmem:[#allocation2 + $0x298] sm:$0xff] %vm1398, %v1368
  %1482 = vst [vmem:[#allocation2 + $0x2a0] sm:$0xff] %v1369
  %1483 = vst.msk [vmem:[#allocation2 + $0x2a8] sm:$0xff] %vm1398, %v1370
  %1484 = vst [vmem:[#allocation2 + $0x2b0] sm:$0xff] %v1371
  %1485 = vst.msk [vmem:[#allocation2 + $0x2b8] sm:$0xff] %vm1398, %v1372
  %1486 = vst [vmem:[#allocation2 + $0x2c0] sm:$0xff] %v1373
  %1487 = vst.msk [vmem:[#allocation2 + $0x2c8] sm:$0xff] %vm1398, %v1374
  %1488 = vst [vmem:[#allocation2 + $0x2d0] sm:$0xff] %v1375
  %1489 = vst.msk [vmem:[#allocation2 + $0x2d8] sm:$0xff] %vm1398, %v1376
  %1490 = vst [vmem:[#allocation2 + $0x2e0] sm:$0xff] %v1377
  %1491 = vst.msk [vmem:[#allocation2 + $0x2e8] sm:$0xff] %vm1398, %v1378
  %1492 = vst [vmem:[#allocation2 + $0x2f0] sm:$0xff] %v1379
  %1493 = vst.msk [vmem:[#allocation2 + $0x2f8] sm:$0xff] %vm1398, %v1380
  %1494 = vst [vmem:[#allocation2 + $0x300] sm:$0xff] %v1381
  %1495 = vst.msk [vmem:[#allocation2 + $0x308] sm:$0xff] %vm1398, %v1382
  %1496 = vst [vmem:[#allocation2 + $0x310] sm:$0xff] %v1383
  %1497 = vst.msk [vmem:[#allocation2 + $0x318] sm:$0xff] %vm1398, %v1384
  %1498 = vst [vmem:[#allocation2 + $0x320] sm:$0xff] %v1385
  %1499 = vst.msk [vmem:[#allocation2 + $0x328] sm:$0xff] %vm1398, %v1386
  %1500 = vst [vmem:[#allocation2 + $0x330] sm:$0xff] %v1387
  %1501 = vst.msk [vmem:[#allocation2 + $0x338] sm:$0xff] %vm1398, %v1388
  %1502 = vst [vmem:[#allocation2 + $0x340] sm:$0xff] %v1389
  %1503 = vst.msk [vmem:[#allocation2 + $0x348] sm:$0xff] %vm1398, %v1390
  %1504 = vst [vmem:[#allocation2 + $0x350] sm:$0xff] %v1391
  %1505 = vst.msk [vmem:[#allocation2 + $0x358] sm:$0xff] %vm1398, %v1392
  %1506 = vst [vmem:[#allocation2 + $0x360] sm:$0xff] %v1393
  %1507 = vst.msk [vmem:[#allocation2 + $0x368] sm:$0xff] %vm1398, %v1394
  %1508 = vst [vmem:[#allocation2 + $0x370] sm:$0xff] %v1395
  %1509 = vst.msk [vmem:[#allocation2 + $0x378] sm:$0xff] %vm1398, %v1396
  %vm1510 = vcmask 1043456
  %vm1511 = vcmask 785412
  %vm1512 = vmor %vm1511, %vm1510
  %1513 = vst.msk [vmem:[#allocation3] sm:$0xff] %vm1512, 0
  %1514 = vst.msk [vmem:[#allocation3 + $0x8] sm:$0xff] %vm1512, 0
  %1515 = vst.msk [vmem:[#allocation3 + $0xf0] sm:$0xff] %vm1512, 0
  %1516 = vst.msk [vmem:[#allocation3 + $0xf8] sm:$0xff] %vm1512, 0
  %1517 = vst.msk [vmem:[#allocation3 + $0x100] sm:$0xff] %vm1512, 0
  %1518 = vst.msk [vmem:[#allocation3 + $0x108] sm:$0xff] %vm1512, 0
  %1519 = vst.msk [vmem:[#allocation3 + $0x110] sm:$0xff] %vm1512, 0
  %1520 = vst.msk [vmem:[#allocation3 + $0x118] sm:$0xff] %vm1512, 0
  %v1521 = vld [vmem:[#allocation2] sm:$0xff]
  %v1522 = vld [vmem:[#allocation2 + $0x8] sm:$0xff]
  %v1523 = vld [vmem:[#allocation2 + $0x10] sm:$0xff]
  %v1524 = vld [vmem:[#allocation2 + $0x18] sm:$0xff]
  %v1525 = vld [vmem:[#allocation2 + $0x20] sm:$0xff]
  %v1526 = vld [vmem:[#allocation2 + $0x28] sm:$0xff]
  %v1527 = vld [vmem:[#allocation2 + $0x30] sm:$0xff]
  %v1528 = vld [vmem:[#allocation2 + $0x38] sm:$0xff]
  %v1529 = vmax.f32 %v1521, %v1525
  %v1530 = vmax.f32 %v1522, %v1526
  %v1531 = vmax.f32 %v1523, %v1527
  %v1532 = vmax.f32 %v1524, %v1528
  %v1533 = vpack.c.bf16 %v1530, %v1529
  %v1534 = vpack.c.bf16 %v1532, %v1531
  %1535 = vst.msk [vmem:[#allocation3 + $0x10] sm:$0xff] %vm1512, %v1533
  %1536 = vst.msk [vmem:[#allocation3 + $0x18] sm:$0xff] %vm1512, %v1534
  %v1537 = vld [vmem:[#allocation2 + $0x40] sm:$0xff]
  %v1538 = vld [vmem:[#allocation2 + $0x48] sm:$0xff]
  %v1539 = vld [vmem:[#allocation2 + $0x50] sm:$0xff]
  %v1540 = vld [vmem:[#allocation2 + $0x58] sm:$0xff]
  %v1541 = vld [vmem:[#allocation2 + $0x60] sm:$0xff]
  %v1542 = vld [vmem:[#allocation2 + $0x68] sm:$0xff]
  %v1543 = vld [vmem:[#allocation2 + $0x70] sm:$0xff]
  %v1544 = vld [vmem:[#allocation2 + $0x78] sm:$0xff]
  %v1545 = vmax.f32 %v1537, %v1541
  %v1546 = vmax.f32 %v1538, %v1542
  %v1547 = vmax.f32 %v1539, %v1543
  %v1548 = vmax.f32 %v1540, %v1544
  %v1549 = vpack.c.bf16 %v1546, %v1545
  %v1550 = vpack.c.bf16 %v1548, %v1547
  %1551 = vst.msk [vmem:[#allocation3 + $0x20] sm:$0xff] %vm1512, %v1549
  %1552 = vst.msk [vmem:[#allocation3 + $0x28] sm:$0xff] %vm1512, %v1550
  %v1553 = vld [vmem:[#allocation2 + $0x80] sm:$0xff]
  %v1554 = vld [vmem:[#allocation2 + $0x88] sm:$0xff]
  %v1555 = vld [vmem:[#allocation2 + $0x90] sm:$0xff]
  %v1556 = vld [vmem:[#allocation2 + $0x98] sm:$0xff]
  %v1557 = vld [vmem:[#allocation2 + $0xa0] sm:$0xff]
  %v1558 = vld [vmem:[#allocation2 + $0xa8] sm:$0xff]
  %v1559 = vld [vmem:[#allocation2 + $0xb0] sm:$0xff]
  %v1560 = vld [vmem:[#allocation2 + $0xb8] sm:$0xff]
  %v1561 = vmax.f32 %v1553, %v1557
  %v1562 = vmax.f32 %v1554, %v1558
  %v1563 = vmax.f32 %v1555, %v1559
  %v1564 = vmax.f32 %v1556, %v1560
  %v1565 = vpack.c.bf16 %v1562, %v1561
  %v1566 = vpack.c.bf16 %v1564, %v1563
  %1567 = vst.msk [vmem:[#allocation3 + $0x30] sm:$0xff] %vm1512, %v1565
  %1568 = vst.msk [vmem:[#allocation3 + $0x38] sm:$0xff] %vm1512, %v1566
  %v1569 = vld [vmem:[#allocation2 + $0xc0] sm:$0xff]
  %v1570 = vld [vmem:[#allocation2 + $0xc8] sm:$0xff]
  %v1571 = vld [vmem:[#allocation2 + $0xd0] sm:$0xff]
  %v1572 = vld [vmem:[#allocation2 + $0xd8] sm:$0xff]
  %v1573 = vld [vmem:[#allocation2 + $0xe0] sm:$0xff]
  %v1574 = vld [vmem:[#allocation2 + $0xe8] sm:$0xff]
  %v1575 = vld [vmem:[#allocation2 + $0xf0] sm:$0xff]
  %v1576 = vld [vmem:[#allocation2 + $0xf8] sm:$0xff]
  %v1577 = vmax.f32 %v1569, %v1573
  %v1578 = vmax.f32 %v1570, %v1574
  %v1579 = vmax.f32 %v1571, %v1575
  %v1580 = vmax.f32 %v1572, %v1576
  %v1581 = vpack.c.bf16 %v1578, %v1577
  %v1582 = vpack.c.bf16 %v1580, %v1579
  %1583 = vst.msk [vmem:[#allocation3 + $0x40] sm:$0xff] %vm1512, %v1581
  %1584 = vst.msk [vmem:[#allocation3 + $0x48] sm:$0xff] %vm1512, %v1582
  %v1585 = vld [vmem:[#allocation2 + $0x100] sm:$0xff]
  %v1586 = vld [vmem:[#allocation2 + $0x108] sm:$0xff]
  %v1587 = vld [vmem:[#allocation2 + $0x110] sm:$0xff]
  %v1588 = vld [vmem:[#allocation2 + $0x118] sm:$0xff]
  %v1589 = vld [vmem:[#allocation2 + $0x120] sm:$0xff]
  %v1590 = vld [vmem:[#allocation2 + $0x128] sm:$0xff]
  %v1591 = vld [vmem:[#allocation2 + $0x130] sm:$0xff]
  %v1592 = vld [vmem:[#allocation2 + $0x138] sm:$0xff]
  %v1593 = vmax.f32 %v1585, %v1589
  %v1594 = vmax.f32 %v1586, %v1590
  %v1595 = vmax.f32 %v1587, %v1591
  %v1596 = vmax.f32 %v1588, %v1592
  %v1597 = vpack.c.bf16 %v1594, %v1593
  %v1598 = vpack.c.bf16 %v1596, %v1595
  %1599 = vst.msk [vmem:[#allocation3 + $0x50] sm:$0xff] %vm1512, %v1597
  %1600 = vst.msk [vmem:[#allocation3 + $0x58] sm:$0xff] %vm1512, %v1598
  %v1601 = vld [vmem:[#allocation2 + $0x140] sm:$0xff]
  %v1602 = vld [vmem:[#allocation2 + $0x148] sm:$0xff]
  %v1603 = vld [vmem:[#allocation2 + $0x150] sm:$0xff]
  %v1604 = vld [vmem:[#allocation2 + $0x158] sm:$0xff]
  %v1605 = vld [vmem:[#allocation2 + $0x160] sm:$0xff]
  %v1606 = vld [vmem:[#allocation2 + $0x168] sm:$0xff]
  %v1607 = vld [vmem:[#allocation2 + $0x170] sm:$0xff]
  %v1608 = vld [vmem:[#allocation2 + $0x178] sm:$0xff]
  %v1609 = vmax.f32 %v1601, %v1605
  %v1610 = vmax.f32 %v1602, %v1606
  %v1611 = vmax.f32 %v1603, %v1607
  %v1612 = vmax.f32 %v1604, %v1608
  %v1613 = vpack.c.bf16 %v1610, %v1609
  %v1614 = vpack.c.bf16 %v1612, %v1611
  %1615 = vst.msk [vmem:[#allocation3 + $0x60] sm:$0xff] %vm1512, %v1613
  %1616 = vst.msk [vmem:[#allocation3 + $0x68] sm:$0xff] %vm1512, %v1614
  %v1617 = vld [vmem:[#allocation2 + $0x180] sm:$0xff]
  %v1618 = vld [vmem:[#allocation2 + $0x188] sm:$0xff]
  %v1619 = vld [vmem:[#allocation2 + $0x190] sm:$0xff]
  %v1620 = vld [vmem:[#allocation2 + $0x198] sm:$0xff]
  %v1621 = vld [vmem:[#allocation2 + $0x1a0] sm:$0xff]
  %v1622 = vld [vmem:[#allocation2 + $0x1a8] sm:$0xff]
  %v1623 = vld [vmem:[#allocation2 + $0x1b0] sm:$0xff]
  %v1624 = vld [vmem:[#allocation2 + $0x1b8] sm:$0xff]
  %v1625 = vmax.f32 %v1617, %v1621
  %v1626 = vmax.f32 %v1618, %v1622
  %v1627 = vmax.f32 %v1619, %v1623
  %v1628 = vmax.f32 %v1620, %v1624
  %v1629 = vpack.c.bf16 %v1626, %v1625
  %v1630 = vpack.c.bf16 %v1628, %v1627
  %1631 = vst.msk [vmem:[#allocation3 + $0x70] sm:$0xff] %vm1512, %v1629
  %1632 = vst.msk [vmem:[#allocation3 + $0x78] sm:$0xff] %vm1512, %v1630
  %v1633 = vld [vmem:[#allocation2 + $0x1c0] sm:$0xff]
  %v1634 = vld [vmem:[#allocation2 + $0x1c8] sm:$0xff]
  %v1635 = vld [vmem:[#allocation2 + $0x1d0] sm:$0xff]
  %v1636 = vld [vmem:[#allocation2 + $0x1d8] sm:$0xff]
  %v1637 = vld [vmem:[#allocation2 + $0x1e0] sm:$0xff]
  %v1638 = vld [vmem:[#allocation2 + $0x1e8] sm:$0xff]
  %v1639 = vld [vmem:[#allocation2 + $0x1f0] sm:$0xff]
  %v1640 = vld [vmem:[#allocation2 + $0x1f8] sm:$0xff]
  %v1641 = vmax.f32 %v1633, %v1637
  %v1642 = vmax.f32 %v1634, %v1638
  %v1643 = vmax.f32 %v1635, %v1639
  %v1644 = vmax.f32 %v1636, %v1640
  %v1645 = vpack.c.bf16 %v1642, %v1641
  %v1646 = vpack.c.bf16 %v1644, %v1643
  %1647 = vst.msk [vmem:[#allocation3 + $0x80] sm:$0xff] %vm1512, %v1645
  %1648 = vst.msk [vmem:[#allocation3 + $0x88] sm:$0xff] %vm1512, %v1646
  %v1649 = vld [vmem:[#allocation2 + $0x200] sm:$0xff]
  %v1650 = vld [vmem:[#allocation2 + $0x208] sm:$0xff]
  %v1651 = vld [vmem:[#allocation2 + $0x210] sm:$0xff]
  %v1652 = vld [vmem:[#allocation2 + $0x218] sm:$0xff]
  %v1653 = vld [vmem:[#allocation2 + $0x220] sm:$0xff]
  %v1654 = vld [vmem:[#allocation2 + $0x228] sm:$0xff]
  %v1655 = vld [vmem:[#allocation2 + $0x230] sm:$0xff]
  %v1656 = vld [vmem:[#allocation2 + $0x238] sm:$0xff]
  %v1657 = vmax.f32 %v1649, %v1653
  %v1658 = vmax.f32 %v1650, %v1654
  %v1659 = vmax.f32 %v1651, %v1655
  %v1660 = vmax.f32 %v1652, %v1656
  %v1661 = vpack.c.bf16 %v1658, %v1657
  %v1662 = vpack.c.bf16 %v1660, %v1659
  %1663 = vst.msk [vmem:[#allocation3 + $0x90] sm:$0xff] %vm1512, %v1661
  %1664 = vst.msk [vmem:[#allocation3 + $0x98] sm:$0xff] %vm1512, %v1662
  %v1665 = vld [vmem:[#allocation2 + $0x240] sm:$0xff]
  %v1666 = vld [vmem:[#allocation2 + $0x248] sm:$0xff]
  %v1667 = vld [vmem:[#allocation2 + $0x250] sm:$0xff]
  %v1668 = vld [vmem:[#allocation2 + $0x258] sm:$0xff]
  %v1669 = vld [vmem:[#allocation2 + $0x260] sm:$0xff]
  %v1670 = vld [vmem:[#allocation2 + $0x268] sm:$0xff]
  %v1671 = vld [vmem:[#allocation2 + $0x270] sm:$0xff]
  %v1672 = vld [vmem:[#allocation2 + $0x278] sm:$0xff]
  %v1673 = vmax.f32 %v1665, %v1669
  %v1674 = vmax.f32 %v1666, %v1670
  %v1675 = vmax.f32 %v1667, %v1671
  %v1676 = vmax.f32 %v1668, %v1672
  %v1677 = vpack.c.bf16 %v1674, %v1673
  %v1678 = vpack.c.bf16 %v1676, %v1675
  %1679 = vst.msk [vmem:[#allocation3 + $0xa0] sm:$0xff] %vm1512, %v1677
  %1680 = vst.msk [vmem:[#allocation3 + $0xa8] sm:$0xff] %vm1512, %v1678
  %v1681 = vld [vmem:[#allocation2 + $0x280] sm:$0xff]
  %v1682 = vld [vmem:[#allocation2 + $0x288] sm:$0xff]
  %v1683 = vld [vmem:[#allocation2 + $0x290] sm:$0xff]
  %v1684 = vld [vmem:[#allocation2 + $0x298] sm:$0xff]
  %v1685 = vld [vmem:[#allocation2 + $0x2a0] sm:$0xff]
  %v1686 = vld [vmem:[#allocation2 + $0x2a8] sm:$0xff]
  %v1687 = vld [vmem:[#allocation2 + $0x2b0] sm:$0xff]
  %v1688 = vld [vmem:[#allocation2 + $0x2b8] sm:$0xff]
  %v1689 = vmax.f32 %v1681, %v1685
  %v1690 = vmax.f32 %v1682, %v1686
  %v1691 = vmax.f32 %v1683, %v1687
  %v1692 = vmax.f32 %v1684, %v1688
  %v1693 = vpack.c.bf16 %v1690, %v1689
  %v1694 = vpack.c.bf16 %v1692, %v1691
  %1695 = vst.msk [vmem:[#allocation3 + $0xb0] sm:$0xff] %vm1512, %v1693
  %1696 = vst.msk [vmem:[#allocation3 + $0xb8] sm:$0xff] %vm1512, %v1694
  %v1697 = vld [vmem:[#allocation2 + $0x2c0] sm:$0xff]
  %v1698 = vld [vmem:[#allocation2 + $0x2c8] sm:$0xff]
  %v1699 = vld [vmem:[#allocation2 + $0x2d0] sm:$0xff]
  %v1700 = vld [vmem:[#allocation2 + $0x2d8] sm:$0xff]
  %v1701 = vld [vmem:[#allocation2 + $0x2e0] sm:$0xff]
  %v1702 = vld [vmem:[#allocation2 + $0x2e8] sm:$0xff]
  %v1703 = vld [vmem:[#allocation2 + $0x2f0] sm:$0xff]
  %v1704 = vld [vmem:[#allocation2 + $0x2f8] sm:$0xff]
  %v1705 = vmax.f32 %v1697, %v1701
  %v1706 = vmax.f32 %v1698, %v1702
  %v1707 = vmax.f32 %v1699, %v1703
  %v1708 = vmax.f32 %v1700, %v1704
  %v1709 = vpack.c.bf16 %v1706, %v1705
  %v1710 = vpack.c.bf16 %v1708, %v1707
  %1711 = vst.msk [vmem:[#allocation3 + $0xc0] sm:$0xff] %vm1512, %v1709
  %1712 = vst.msk [vmem:[#allocation3 + $0xc8] sm:$0xff] %vm1512, %v1710
  %v1713 = vld [vmem:[#allocation2 + $0x300] sm:$0xff]
  %v1714 = vld [vmem:[#allocation2 + $0x308] sm:$0xff]
  %v1715 = vld [vmem:[#allocation2 + $0x310] sm:$0xff]
  %v1716 = vld [vmem:[#allocation2 + $0x318] sm:$0xff]
  %v1717 = vld [vmem:[#allocation2 + $0x320] sm:$0xff]
  %v1718 = vld [vmem:[#allocation2 + $0x328] sm:$0xff]
  %v1719 = vld [vmem:[#allocation2 + $0x330] sm:$0xff]
  %v1720 = vld [vmem:[#allocation2 + $0x338] sm:$0xff]
  %v1721 = vmax.f32 %v1713, %v1717
  %v1722 = vmax.f32 %v1714, %v1718
  %v1723 = vmax.f32 %v1715, %v1719
  %v1724 = vmax.f32 %v1716, %v1720
  %v1725 = vpack.c.bf16 %v1722, %v1721
  %v1726 = vpack.c.bf16 %v1724, %v1723
  %1727 = vst.msk [vmem:[#allocation3 + $0xd0] sm:$0xff] %vm1512, %v1725
  %1728 = vst.msk [vmem:[#allocation3 + $0xd8] sm:$0xff] %vm1512, %v1726
  %v1729 = vld [vmem:[#allocation2 + $0x340] sm:$0xff]
  %v1730 = vld [vmem:[#allocation2 + $0x348] sm:$0xff]
  %v1731 = vld [vmem:[#allocation2 + $0x350] sm:$0xff]
  %v1732 = vld [vmem:[#allocation2 + $0x358] sm:$0xff]
  %v1733 = vld [vmem:[#allocation2 + $0x360] sm:$0xff]
  %v1734 = vld [vmem:[#allocation2 + $0x368] sm:$0xff]
  %v1735 = vld [vmem:[#allocation2 + $0x370] sm:$0xff]
  %v1736 = vld [vmem:[#allocation2 + $0x378] sm:$0xff]
  %v1737 = vmax.f32 %v1729, %v1733
  %v1738 = vmax.f32 %v1730, %v1734
  %v1739 = vmax.f32 %v1731, %v1735
  %v1740 = vmax.f32 %v1732, %v1736
  %v1741 = vpack.c.bf16 %v1738, %v1737
  %v1742 = vpack.c.bf16 %v1740, %v1739
  %1743 = vst.msk [vmem:[#allocation3 + $0xe0] sm:$0xff] %vm1512, %v1741
  %1744 = vst.msk [vmem:[#allocation3 + $0xe8] sm:$0xff] %vm1512, %v1742
  %v1745 = vld [vmem:[#allocation3] sm:$0xff]
  %v1746 = vld [vmem:[#allocation3 + $0x8] sm:$0xff]
  %v1747 = vld [vmem:[#allocation3 + $0x10] sm:$0xff]
  %v1748 = vld [vmem:[#allocation3 + $0x18] sm:$0xff]
  %v1749 = vld [vmem:[#allocation3 + $0x20] sm:$0xff]
  %v1750 = vld [vmem:[#allocation3 + $0x28] sm:$0xff]
  %v1751 = vld [vmem:[#allocation3 + $0x30] sm:$0xff]
  %v1752 = vld [vmem:[#allocation3 + $0x38] sm:$0xff]
  %v1753 = vld [vmem:[#allocation3 + $0x40] sm:$0xff]
  %v1754 = vld [vmem:[#allocation3 + $0x48] sm:$0xff]
  %v1755 = vld [vmem:[#allocation3 + $0x50] sm:$0xff]
  %v1756 = vld [vmem:[#allocation3 + $0x58] sm:$0xff]
  %v1757 = vld [vmem:[#allocation3 + $0x60] sm:$0xff]
  %v1758 = vld [vmem:[#allocation3 + $0x68] sm:$0xff]
  %v1759 = vld [vmem:[#allocation3 + $0x70] sm:$0xff]
  %v1760 = vld [vmem:[#allocation3 + $0x78] sm:$0xff]
  %v1761 = vld [vmem:[#allocation3 + $0x80] sm:$0xff]
  %v1762 = vld [vmem:[#allocation3 + $0x88] sm:$0xff]
  %v1763 = vld [vmem:[#allocation3 + $0x90] sm:$0xff]
  %v1764 = vld [vmem:[#allocation3 + $0x98] sm:$0xff]
  %v1765 = vld [vmem:[#allocation3 + $0xa0] sm:$0xff]
  %v1766 = vld [vmem:[#allocation3 + $0xa8] sm:$0xff]
  %v1767 = vld [vmem:[#allocation3 + $0xb0] sm:$0xff]
  %v1768 = vld [vmem:[#allocation3 + $0xb8] sm:$0xff]
  %v1769 = vld [vmem:[#allocation3 + $0xc0] sm:$0xff]
  %v1770 = vld [vmem:[#allocation3 + $0xc8] sm:$0xff]
  %v1771 = vld [vmem:[#allocation3 + $0xd0] sm:$0xff]
  %v1772 = vld [vmem:[#allocation3 + $0xd8] sm:$0xff]
  %v1773 = vld [vmem:[#allocation3 + $0xe0] sm:$0xff]
  %v1774 = vld [vmem:[#allocation3 + $0xe8] sm:$0xff]
  %v1775 = vld [vmem:[#allocation3 + $0xf0] sm:$0xff]
  %v1776 = vld [vmem:[#allocation3 + $0xf8] sm:$0xff]
  %v1777 = vld [vmem:[%s4] sm:$0xff]
  %v1778 = vld [vmem:[%s4 + $0x8] sm:$0xff]
  %v1779 = vld [vmem:[%s4 + $0x10] sm:$0xff]
  %v1780 = vld [vmem:[%s4 + $0x18] sm:$0xff]
  %v1781 = vld [vmem:[%s4 + $0x20] sm:$0xff]
  %v1782 = vld [vmem:[%s4 + $0x28] sm:$0xff]
  %v1783 = vld [vmem:[%s4 + $0x30] sm:$0xff]
  %v1784 = vld [vmem:[%s4 + $0x38] sm:$0xff]
  %v1785 = vld [vmem:[%s4 + $0x40] sm:$0xff]
  %v1786 = vld [vmem:[%s4 + $0x48] sm:$0xff]
  %v1787 = vld [vmem:[%s4 + $0x50] sm:$0xff]
  %v1788 = vld [vmem:[%s4 + $0x58] sm:$0xff]
  %v1789 = vld [vmem:[%s4 + $0x60] sm:$0xff]
  %v1790 = vld [vmem:[%s4 + $0x68] sm:$0xff]
  %v1791 = vld [vmem:[%s4 + $0x70] sm:$0xff]
  %v1792 = vld [vmem:[%s4 + $0x78] sm:$0xff]
  %v1793 = vld [vmem:[%s4 + $0x80] sm:$0xff]
  %v1794 = vld [vmem:[%s4 + $0x88] sm:$0xff]
  %v1795 = vld [vmem:[%s4 + $0x90] sm:$0xff]
  %v1796 = vld [vmem:[%s4 + $0x98] sm:$0xff]
  %v1797 = vld [vmem:[%s4 + $0xa0] sm:$0xff]
  %v1798 = vld [vmem:[%s4 + $0xa8] sm:$0xff]
  %v1799 = vld [vmem:[%s4 + $0xb0] sm:$0xff]
  %v1800 = vld [vmem:[%s4 + $0xb8] sm:$0xff]
  %v1801 = vld [vmem:[%s4 + $0xc0] sm:$0xff]
  %v1802 = vld [vmem:[%s4 + $0xc8] sm:$0xff]
  %v1803 = vld [vmem:[%s4 + $0xd0] sm:$0xff]
  %v1804 = vld [vmem:[%s4 + $0xd8] sm:$0xff]
  %v1805 = vld [vmem:[%s5] sm:$0xff]
  %v1806 = vld [vmem:[%s5 + $0x8] sm:$0xff]
  %v1807 = vld [vmem:[%s5 + $0x10] sm:$0xff]
  %v1808 = vld [vmem:[%s5 + $0x18] sm:$0xff]
  %v1809 = vld [vmem:[%s5 + $0x20] sm:$0xff]
  %v1810 = vld [vmem:[%s5 + $0x28] sm:$0xff]
  %v1811 = vld [vmem:[%s5 + $0x30] sm:$0xff]
  %v1812 = vld [vmem:[%s5 + $0x38] sm:$0xff]
  %v1813 = vld [vmem:[%s5 + $0x40] sm:$0xff]
  %v1814 = vld [vmem:[%s5 + $0x48] sm:$0xff]
  %v1815 = vld [vmem:[%s5 + $0x50] sm:$0xff]
  %v1816 = vld [vmem:[%s5 + $0x58] sm:$0xff]
  %v1817 = vld [vmem:[%s5 + $0x60] sm:$0xff]
  %v1818 = vld [vmem:[%s5 + $0x68] sm:$0xff]
  %v1819 = vld [vmem:[%s5 + $0x70] sm:$0xff]
  %v1820 = vld [vmem:[%s5 + $0x78] sm:$0xff]
  %v1821 = vld [vmem:[%s5 + $0x80] sm:$0xff]
  %v1822 = vld [vmem:[%s5 + $0x88] sm:$0xff]
  %v1823 = vld [vmem:[%s5 + $0x90] sm:$0xff]
  %v1824 = vld [vmem:[%s5 + $0x98] sm:$0xff]
  %v1825 = vld [vmem:[%s5 + $0xa0] sm:$0xff]
  %v1826 = vld [vmem:[%s5 + $0xa8] sm:$0xff]
  %v1827 = vld [vmem:[%s5 + $0xb0] sm:$0xff]
  %v1828 = vld [vmem:[%s5 + $0xb8] sm:$0xff]
  %v1829 = vld [vmem:[%s5 + $0xc0] sm:$0xff]
  %v1830 = vld [vmem:[%s5 + $0xc8] sm:$0xff]
  %v1831 = vld [vmem:[%s5 + $0xd0] sm:$0xff]
  %v1832 = vld [vmem:[%s5 + $0xd8] sm:$0xff]
  %v1833 = vld [vmem:[#allocation3 + $0x100] sm:$0xff]
  %v1834 = vld [vmem:[#allocation3 + $0x108] sm:$0xff]
  %s1835 = scalar_lea.vmem %s4, 224
  %v1836 = vld [vmem:[%s1835] sm:$0xff]
  %v1837 = vld [vmem:[%s1835 + $0x8] sm:$0xff]
  %v1838 = vld [vmem:[%s1835 + $0x10] sm:$0xff]
  %v1839 = vld [vmem:[%s1835 + $0x18] sm:$0xff]
  %v1840 = vld [vmem:[%s1835 + $0x20] sm:$0xff]
  %v1841 = vld [vmem:[%s1835 + $0x28] sm:$0xff]
  %v1842 = vld [vmem:[%s1835 + $0x30] sm:$0xff]
  %v1843 = vld [vmem:[%s1835 + $0x38] sm:$0xff]
  %v1844 = vld [vmem:[%s1835 + $0x40] sm:$0xff]
  %v1845 = vld [vmem:[%s1835 + $0x48] sm:$0xff]
  %v1846 = vld [vmem:[%s1835 + $0x50] sm:$0xff]
  %v1847 = vld [vmem:[%s1835 + $0x58] sm:$0xff]
  %v1848 = vld [vmem:[%s1835 + $0x60] sm:$0xff]
  %v1849 = vld [vmem:[%s1835 + $0x68] sm:$0xff]
  %v1850 = vld [vmem:[%s1835 + $0x70] sm:$0xff]
  %v1851 = vld [vmem:[%s1835 + $0x78] sm:$0xff]
  %v1852 = vld [vmem:[%s1835 + $0x80] sm:$0xff]
  %v1853 = vld [vmem:[%s1835 + $0x88] sm:$0xff]
  %v1854 = vld [vmem:[%s1835 + $0x90] sm:$0xff]
  %v1855 = vld [vmem:[%s1835 + $0x98] sm:$0xff]
  %v1856 = vld [vmem:[%s1835 + $0xa0] sm:$0xff]
  %v1857 = vld [vmem:[%s1835 + $0xa8] sm:$0xff]
  %v1858 = vld [vmem:[%s1835 + $0xb0] sm:$0xff]
  %v1859 = vld [vmem:[%s1835 + $0xb8] sm:$0xff]
  %v1860 = vld [vmem:[%s1835 + $0xc0] sm:$0xff]
  %v1861 = vld [vmem:[%s1835 + $0xc8] sm:$0xff]
  %v1862 = vld [vmem:[%s1835 + $0xd0] sm:$0xff]
  %v1863 = vld [vmem:[%s1835 + $0xd8] sm:$0xff]
  %v1896 = vunpack.c.l.b16 %v1747
  %v1897 = vunpack.c.h.b16 %v1747
  %v1898 = vunpack.c.l.b16 %v1748
  %v1899 = vunpack.c.h.b16 %v1748
  %v1900 = vunpack.c.l.b16 %v1749
  %v1901 = vunpack.c.h.b16 %v1749
  %v1902 = vunpack.c.l.b16 %v1750
  %v1903 = vunpack.c.h.b16 %v1750
  %v1904 = vunpack.c.l.b16 %v1751
  %v1905 = vunpack.c.h.b16 %v1751
  %v1906 = vunpack.c.l.b16 %v1752
  %v1907 = vunpack.c.h.b16 %v1752
  %v1908 = vunpack.c.l.b16 %v1753
  %v1909 = vunpack.c.h.b16 %v1753
  %v1910 = vunpack.c.l.b16 %v1754
  %v1911 = vunpack.c.h.b16 %v1754
  %v1912 = vunpack.c.l.b16 %v1755
  %v1913 = vunpack.c.h.b16 %v1755
  %v1914 = vunpack.c.l.b16 %v1756
  %v1915 = vunpack.c.h.b16 %v1756
  %v1916 = vunpack.c.l.b16 %v1757
  %v1917 = vunpack.c.h.b16 %v1757
  %v1918 = vunpack.c.l.b16 %v1758
  %v1919 = vunpack.c.h.b16 %v1758
  %v1920 = vunpack.c.l.b16 %v1759
  %v1921 = vunpack.c.h.b16 %v1759
  %v1922 = vunpack.c.l.b16 %v1760
  %v1923 = vunpack.c.h.b16 %v1760
  %v1924 = vunpack.c.l.b16 %v1761
  %v1925 = vunpack.c.h.b16 %v1761
  %v1926 = vunpack.c.l.b16 %v1762
  %v1927 = vunpack.c.h.b16 %v1762
  %v1928 = vunpack.c.l.b16 %v1763
  %v1929 = vunpack.c.h.b16 %v1763
  %v1930 = vunpack.c.l.b16 %v1764
  %v1931 = vunpack.c.h.b16 %v1764
  %v1932 = vunpack.c.l.b16 %v1765
  %v1933 = vunpack.c.h.b16 %v1765
  %v1934 = vunpack.c.l.b16 %v1766
  %v1935 = vunpack.c.h.b16 %v1766
  %v1936 = vunpack.c.l.b16 %v1767
  %v1937 = vunpack.c.h.b16 %v1767
  %v1938 = vunpack.c.l.b16 %v1768
  %v1939 = vunpack.c.h.b16 %v1768
  %v1940 = vunpack.c.l.b16 %v1769
  %v1941 = vunpack.c.h.b16 %v1769
  %v1942 = vunpack.c.l.b16 %v1770
  %v1943 = vunpack.c.h.b16 %v1770
  %v1944 = vunpack.c.l.b16 %v1771
  %v1945 = vunpack.c.h.b16 %v1771
  %v1946 = vunpack.c.l.b16 %v1772
  %v1947 = vunpack.c.h.b16 %v1772
  %v1948 = vunpack.c.l.b16 %v1773
  %v1949 = vunpack.c.h.b16 %v1773
  %v1950 = vunpack.c.l.b16 %v1774
  %v1951 = vunpack.c.h.b16 %v1774
  %v1952 = vunpack.c.l.b16 %v1775
  %v1953 = vunpack.c.h.b16 %v1775
  %v1954 = vunpack.c.l.b16 %v1776
  %v1955 = vunpack.c.h.b16 %v1776
  %v1956 = vunpack.c.l.b16 %v1833
  %v1957 = vunpack.c.h.b16 %v1833
  %v1958 = vunpack.c.l.b16 %v1834
  %v1959 = vunpack.c.h.b16 %v1834
  %v1960 = vpack.c.b16 %v1898, %v1896
  %v1961 = vpack.c.b16 %v1899, %v1897
  %v1962 = vpack.c.b16 %v1902, %v1900
  %v1963 = vpack.c.b16 %v1903, %v1901
  %v1964 = vpack.c.b16 %v1906, %v1904
  %v1965 = vpack.c.b16 %v1907, %v1905
  %v1966 = vpack.c.b16 %v1910, %v1908
  %v1967 = vpack.c.b16 %v1911, %v1909
  %v1968 = vpack.c.b16 %v1914, %v1912
  %v1969 = vpack.c.b16 %v1915, %v1913
  %v1970 = vpack.c.b16 %v1918, %v1916
  %v1971 = vpack.c.b16 %v1919, %v1917
  %v1972 = vpack.c.b16 %v1922, %v1920
  %v1973 = vpack.c.b16 %v1923, %v1921
  %v1974 = vpack.c.b16 %v1926, %v1924
  %v1975 = vpack.c.b16 %v1927, %v1925
  %v1976 = vpack.c.b16 %v1930, %v1928
  %v1977 = vpack.c.b16 %v1931, %v1929
  %v1978 = vpack.c.b16 %v1934, %v1932
  %v1979 = vpack.c.b16 %v1935, %v1933
  %v1980 = vpack.c.b16 %v1938, %v1936
  %v1981 = vpack.c.b16 %v1939, %v1937
  %v1982 = vpack.c.b16 %v1942, %v1940
  %v1983 = vpack.c.b16 %v1943, %v1941
  %v1984 = vpack.c.b16 %v1946, %v1944
  %v1985 = vpack.c.b16 %v1947, %v1945
  %v1986 = vpack.c.b16 %v1950, %v1948
  %v1987 = vpack.c.b16 %v1951, %v1949
  %v1988 = vpack.c.b16 %v1954, %v1952
  %v1989 = vpack.c.b16 %v1955, %v1953
  %v1990 = vpack.c.b16 %v1958, %v1956
  %v1991 = vpack.c.b16 %v1959, %v1957
  %v2036 = vunpack.c.l.b16 %v1836
  %v2037 = vunpack.c.h.b16 %v1836
  %v2038 = vunpack.c.l.b16 %v1837
  %v2039 = vunpack.c.h.b16 %v1837
  %v2040 = vunpack.c.l.b16 %v1838
  %v2041 = vunpack.c.h.b16 %v1838
  %v2042 = vunpack.c.l.b16 %v1839
  %v2043 = vunpack.c.h.b16 %v1839
  %v2044 = vunpack.c.l.b16 %v1840
  %v2045 = vunpack.c.h.b16 %v1840
  %v2046 = vunpack.c.l.b16 %v1841
  %v2047 = vunpack.c.h.b16 %v1841
  %v2048 = vunpack.c.l.b16 %v1842
  %v2049 = vunpack.c.h.b16 %v1842
  %v2050 = vunpack.c.l.b16 %v1843
  %v2051 = vunpack.c.h.b16 %v1843
  %v2052 = vunpack.c.l.b16 %v1844
  %v2053 = vunpack.c.h.b16 %v1844
  %v2054 = vunpack.c.l.b16 %v1845
  %v2055 = vunpack.c.h.b16 %v1845
  %v2056 = vunpack.c.l.b16 %v1846
  %v2057 = vunpack.c.h.b16 %v1846
  %v2058 = vunpack.c.l.b16 %v1847
  %v2059 = vunpack.c.h.b16 %v1847
  %v2060 = vunpack.c.l.b16 %v1848
  %v2061 = vunpack.c.h.b16 %v1848
  %v2062 = vunpack.c.l.b16 %v1849
  %v2063 = vunpack.c.h.b16 %v1849
  %v2064 = vunpack.c.l.b16 %v1850
  %v2065 = vunpack.c.h.b16 %v1850
  %v2066 = vunpack.c.l.b16 %v1851
  %v2067 = vunpack.c.h.b16 %v1851
  %v2068 = vunpack.c.l.b16 %v1852
  %v2069 = vunpack.c.h.b16 %v1852
  %v2070 = vunpack.c.l.b16 %v1853
  %v2071 = vunpack.c.h.b16 %v1853
  %v2072 = vunpack.c.l.b16 %v1854
  %v2073 = vunpack.c.h.b16 %v1854
  %v2074 = vunpack.c.l.b16 %v1855
  %v2075 = vunpack.c.h.b16 %v1855
  %v2076 = vunpack.c.l.b16 %v1856
  %v2077 = vunpack.c.h.b16 %v1856
  %v2078 = vunpack.c.l.b16 %v1857
  %v2079 = vunpack.c.h.b16 %v1857
  %v2080 = vunpack.c.l.b16 %v1858
  %v2081 = vunpack.c.h.b16 %v1858
  %v2082 = vunpack.c.l.b16 %v1859
  %v2083 = vunpack.c.h.b16 %v1859
  %v2084 = vunpack.c.l.b16 %v1860
  %v2085 = vunpack.c.h.b16 %v1860
  %v2086 = vunpack.c.l.b16 %v1861
  %v2087 = vunpack.c.h.b16 %v1861
  %v2088 = vunpack.c.l.b16 %v1862
  %v2089 = vunpack.c.h.b16 %v1862
  %v2090 = vunpack.c.l.b16 %v1863
  %v2091 = vunpack.c.h.b16 %v1863
  %v2092 = vpack.c.b16 %v2038, %v2036
  %v2093 = vpack.c.b16 %v2039, %v2037
  %v2094 = vpack.c.b16 %v2042, %v2040
  %v2095 = vpack.c.b16 %v2043, %v2041
  %v2096 = vpack.c.b16 %v2046, %v2044
  %v2097 = vpack.c.b16 %v2047, %v2045
  %v2098 = vpack.c.b16 %v2050, %v2048
  %v2099 = vpack.c.b16 %v2051, %v2049
  %v2100 = vpack.c.b16 %v2054, %v2052
  %v2101 = vpack.c.b16 %v2055, %v2053
  %v2102 = vpack.c.b16 %v2058, %v2056
  %v2103 = vpack.c.b16 %v2059, %v2057
  %v2104 = vpack.c.b16 %v2062, %v2060
  %v2105 = vpack.c.b16 %v2063, %v2061
  %v2106 = vpack.c.b16 %v2066, %v2064
  %v2107 = vpack.c.b16 %v2067, %v2065
  %v2108 = vpack.c.b16 %v2070, %v2068
  %v2109 = vpack.c.b16 %v2071, %v2069
  %v2110 = vpack.c.b16 %v2074, %v2072
  %v2111 = vpack.c.b16 %v2075, %v2073
  %v2112 = vpack.c.b16 %v2078, %v2076
  %v2113 = vpack.c.b16 %v2079, %v2077
  %v2114 = vpack.c.b16 %v2082, %v2080
  %v2115 = vpack.c.b16 %v2083, %v2081
  %v2116 = vpack.c.b16 %v2086, %v2084
  %v2117 = vpack.c.b16 %v2087, %v2085
  %v2118 = vpack.c.b16 %v2090, %v2088
  %v2119 = vpack.c.b16 %v2091, %v2089
  %v2149 = vsel %vm1398, %v1961, 0
  %v2152 = vsel %vm1398, %v1963, 0
  %v2155 = vsel %vm1398, %v1965, 0
  %v2158 = vsel %vm1398, %v1967, 0
  %v2161 = vsel %vm1398, %v1969, 0
  %v2164 = vsel %vm1398, %v1971, 0
  %v2167 = vsel %vm1398, %v1973, 0
  %v2170 = vsel %vm1398, %v1975, 0
  %v2173 = vsel %vm1398, %v1977, 0
  %v2176 = vsel %vm1398, %v1979, 0
  %v2179 = vsel %vm1398, %v1981, 0
  %v2182 = vsel %vm1398, %v1983, 0
  %v2185 = vsel %vm1398, %v1985, 0
  %v2188 = vsel %vm1398, %v1987, 0
  %v2191 = vsel %vm1398, %v1989, 0
  %v2194 = vsel %vm1398, %v1991, 0
  %2196 = vmatpush.bf16.msra.mxu0 %v2106
  %2197 = vmatpush.bf16.msra.mxu0 %v2104
  %2198 = vmatpush.bf16.msra.mxu0 %v2102
  %2199 = vmatpush.bf16.msra.mxu0 %v2100
  %2200 = vmatpush.bf16.msra.mxu0 %v2098
  %2201 = vmatpush.bf16.msra.mxu0 %v2096
  %2202 = vmatpush.bf16.msra.mxu0 %v2094
  %2203 = vmatpush.bf16.msra.mxu0 %v2092
  %2204 = vmatmul.bf16.gmra.mxu0 %v1960
  %v2205 = vpop.f32.mrf.mxu0
  %v2206 = vadd.f32 0.0, %v2205
  %v2207 = vpop.f32.mrf.mxu0
  %v2208 = vadd.f32 0.0, %v2207
  %2209 = vmatmul.bf16.gmra.mxu0 %v1962
  %v2210 = vpop.f32.mrf.mxu0
  %v2211 = vadd.f32 0.0, %v2210
  %v2212 = vpop.f32.mrf.mxu0
  %v2213 = vadd.f32 0.0, %v2212
  %2214 = vmatmul.bf16.gmra.mxu0 %v1964
  %v2215 = vpop.f32.mrf.mxu0
  %v2216 = vadd.f32 0.0, %v2215
  %v2217 = vpop.f32.mrf.mxu0
  %v2218 = vadd.f32 0.0, %v2217
  %2219 = vmatmul.bf16.gmra.mxu0 %v1966
  %v2220 = vpop.f32.mrf.mxu0
  %v2221 = vadd.f32 0.0, %v2220
  %v2222 = vpop.f32.mrf.mxu0
  %v2223 = vadd.f32 0.0, %v2222
  %2224 = vmatmul.bf16.gmra.mxu0 %v1968
  %v2225 = vpop.f32.mrf.mxu0
  %v2226 = vadd.f32 0.0, %v2225
  %v2227 = vpop.f32.mrf.mxu0
  %v2228 = vadd.f32 0.0, %v2227
  %2229 = vmatmul.bf16.gmra.mxu0 %v1970
  %v2230 = vpop.f32.mrf.mxu0
  %v2231 = vadd.f32 0.0, %v2230
  %v2232 = vpop.f32.mrf.mxu0
  %v2233 = vadd.f32 0.0, %v2232
  %2234 = vmatmul.bf16.gmra.mxu0 %v1972
  %v2235 = vpop.f32.mrf.mxu0
  %v2236 = vadd.f32 0.0, %v2235
  %v2237 = vpop.f32.mrf.mxu0
  %v2238 = vadd.f32 0.0, %v2237
  %2239 = vmatmul.bf16.gmra.mxu0 %v1974
  %v2240 = vpop.f32.mrf.mxu0
  %v2241 = vadd.f32 0.0, %v2240
  %v2242 = vpop.f32.mrf.mxu0
  %v2243 = vadd.f32 0.0, %v2242
  %2244 = vmatmul.bf16.gmra.mxu0 %v1976
  %v2245 = vpop.f32.mrf.mxu0
  %v2246 = vadd.f32 0.0, %v2245
  %v2247 = vpop.f32.mrf.mxu0
  %v2248 = vadd.f32 0.0, %v2247
  %2249 = vmatmul.bf16.gmra.mxu0 %v1978
  %v2250 = vpop.f32.mrf.mxu0
  %v2251 = vadd.f32 0.0, %v2250
  %v2252 = vpop.f32.mrf.mxu0
  %v2253 = vadd.f32 0.0, %v2252
  %2254 = vmatmul.bf16.gmra.mxu0 %v1980
  %v2255 = vpop.f32.mrf.mxu0
  %v2256 = vadd.f32 0.0, %v2255
  %v2257 = vpop.f32.mrf.mxu0
  %v2258 = vadd.f32 0.0, %v2257
  %2259 = vmatmul.bf16.gmra.mxu0 %v1982
  %v2260 = vpop.f32.mrf.mxu0
  %v2261 = vadd.f32 0.0, %v2260
  %v2262 = vpop.f32.mrf.mxu0
  %v2263 = vadd.f32 0.0, %v2262
  %2264 = vmatmul.bf16.gmra.mxu0 %v1984
  %v2265 = vpop.f32.mrf.mxu0
  %v2266 = vadd.f32 0.0, %v2265
  %v2267 = vpop.f32.mrf.mxu0
  %v2268 = vadd.f32 0.0, %v2267
  %2269 = vmatmul.bf16.gmra.mxu0 %v1986
  %v2270 = vpop.f32.mrf.mxu0
  %v2271 = vadd.f32 0.0, %v2270
  %v2272 = vpop.f32.mrf.mxu0
  %v2273 = vadd.f32 0.0, %v2272
  %2274 = vmatmul.bf16.gmra.mxu0 %v1988
  %v2275 = vpop.f32.mrf.mxu0
  %v2276 = vadd.f32 0.0, %v2275
  %v2277 = vpop.f32.mrf.mxu0
  %v2278 = vadd.f32 0.0, %v2277
  %2279 = vmatmul.bf16.gmra.mxu0 %v1990
  %v2280 = vpop.f32.mrf.mxu0
  %v2281 = vadd.f32 0.0, %v2280
  %v2282 = vpop.f32.mrf.mxu0
  %v2283 = vadd.f32 0.0, %v2282
  %2284 = vdwg.mxu0
  %2285 = vmatpush.bf16.msra.mxu0 0
  %2286 = vmatpush.bf16.msra.mxu0 0
  %2287 = vmatpush.bf16.msra.mxu0 %v2118
  %2288 = vmatpush.bf16.msra.mxu0 %v2116
  %2289 = vmatpush.bf16.msra.mxu0 %v2114
  %2290 = vmatpush.bf16.msra.mxu0 %v2112
  %2291 = vmatpush.bf16.msra.mxu0 %v2110
  %2292 = vmatpush.bf16.msra.mxu0 %v2108
  %2293 = vmatmul.bf16.gmra.mxu0 %v2149
  %v2294 = vpop.f32.mrf.mxu0
  %v2295 = vadd.f32 %v2206, %v2294
  %v2296 = vpop.f32.mrf.mxu0
  %v2297 = vadd.f32 %v2208, %v2296
  %2298 = vmatmul.bf16.gmra.mxu0 %v2152
  %v2299 = vpop.f32.mrf.mxu0
  %v2300 = vadd.f32 %v2211, %v2299
  %v2301 = vpop.f32.mrf.mxu0
  %v2302 = vadd.f32 %v2213, %v2301
  %2303 = vmatmul.bf16.gmra.mxu0 %v2155
  %v2304 = vpop.f32.mrf.mxu0
  %v2305 = vadd.f32 %v2216, %v2304
  %v2306 = vpop.f32.mrf.mxu0
  %v2307 = vadd.f32 %v2218, %v2306
  %2308 = vmatmul.bf16.gmra.mxu0 %v2158
  %v2309 = vpop.f32.mrf.mxu0
  %v2310 = vadd.f32 %v2221, %v2309
  %v2311 = vpop.f32.mrf.mxu0
  %v2312 = vadd.f32 %v2223, %v2311
  %2313 = vmatmul.bf16.gmra.mxu0 %v2161
  %v2314 = vpop.f32.mrf.mxu0
  %v2315 = vadd.f32 %v2226, %v2314
  %v2316 = vpop.f32.mrf.mxu0
  %v2317 = vadd.f32 %v2228, %v2316
  %2318 = vmatmul.bf16.gmra.mxu0 %v2164
  %v2319 = vpop.f32.mrf.mxu0
  %v2320 = vadd.f32 %v2231, %v2319
  %v2321 = vpop.f32.mrf.mxu0
  %v2322 = vadd.f32 %v2233, %v2321
  %2323 = vmatmul.bf16.gmra.mxu0 %v2167
  %v2324 = vpop.f32.mrf.mxu0
  %v2325 = vadd.f32 %v2236, %v2324
  %v2326 = vpop.f32.mrf.mxu0
  %v2327 = vadd.f32 %v2238, %v2326
  %2328 = vmatmul.bf16.gmra.mxu0 %v2170
  %v2329 = vpop.f32.mrf.mxu0
  %v2330 = vadd.f32 %v2241, %v2329
  %v2331 = vpop.f32.mrf.mxu0
  %v2332 = vadd.f32 %v2243, %v2331
  %2333 = vmatmul.bf16.gmra.mxu0 %v2173
  %v2334 = vpop.f32.mrf.mxu0
  %v2335 = vadd.f32 %v2246, %v2334
  %v2336 = vpop.f32.mrf.mxu0
  %v2337 = vadd.f32 %v2248, %v2336
  %2338 = vmatmul.bf16.gmra.mxu0 %v2176
  %v2339 = vpop.f32.mrf.mxu0
  %v2340 = vadd.f32 %v2251, %v2339
  %v2341 = vpop.f32.mrf.mxu0
  %v2342 = vadd.f32 %v2253, %v2341
  %2343 = vmatmul.bf16.gmra.mxu0 %v2179
  %v2344 = vpop.f32.mrf.mxu0
  %v2345 = vadd.f32 %v2256, %v2344
  %v2346 = vpop.f32.mrf.mxu0
  %v2347 = vadd.f32 %v2258, %v2346
  %2348 = vmatmul.bf16.gmra.mxu0 %v2182
  %v2349 = vpop.f32.mrf.mxu0
  %v2350 = vadd.f32 %v2261, %v2349
  %v2351 = vpop.f32.mrf.mxu0
  %v2352 = vadd.f32 %v2263, %v2351
  %2353 = vmatmul.bf16.gmra.mxu0 %v2185
  %v2354 = vpop.f32.mrf.mxu0
  %v2355 = vadd.f32 %v2266, %v2354
  %v2356 = vpop.f32.mrf.mxu0
  %v2357 = vadd.f32 %v2268, %v2356
  %2358 = vmatmul.bf16.gmra.mxu0 %v2188
  %v2359 = vpop.f32.mrf.mxu0
  %v2360 = vadd.f32 %v2271, %v2359
  %v2361 = vpop.f32.mrf.mxu0
  %v2362 = vadd.f32 %v2273, %v2361
  %2363 = vmatmul.bf16.gmra.mxu0 %v2191
  %v2364 = vpop.f32.mrf.mxu0
  %v2365 = vadd.f32 %v2276, %v2364
  %v2366 = vpop.f32.mrf.mxu0
  %v2367 = vadd.f32 %v2278, %v2366
  %2368 = vmatmul.bf16.gmra.mxu0 %v2194
  %v2369 = vpop.f32.mrf.mxu0
  %v2370 = vadd.f32 %v2281, %v2369
  %v2371 = vpop.f32.mrf.mxu0
  %v2372 = vadd.f32 %v2283, %v2371
  %2373 = vdwg.mxu0
  %2374 = vmatpush.bf16.msra.mxu0 %v2107
  %2375 = vmatpush.bf16.msra.mxu0 %v2105
  %2376 = vmatpush.bf16.msra.mxu0 %v2103
  %2377 = vmatpush.bf16.msra.mxu0 %v2101
  %2378 = vmatpush.bf16.msra.mxu0 %v2099
  %2379 = vmatpush.bf16.msra.mxu0 %v2097
  %2380 = vmatpush.bf16.msra.mxu0 %v2095
  %2381 = vmatpush.bf16.msra.mxu0 %v2093
  %2382 = vmatmul.bf16.gmra.mxu0 %v1960
  %v2383 = vpop.f32.mrf.mxu0
  %v2384 = vadd.f32 0.0, %v2383
  %v2385 = vpop.f32.mrf.mxu0
  %v2386 = vadd.f32 0.0, %v2385
  %2387 = vmatmul.bf16.gmra.mxu0 %v1962
  %v2388 = vpop.f32.mrf.mxu0
  %v2389 = vadd.f32 0.0, %v2388
  %v2390 = vpop.f32.mrf.mxu0
  %v2391 = vadd.f32 0.0, %v2390
  %2392 = vmatmul.bf16.gmra.mxu0 %v1964
  %v2393 = vpop.f32.mrf.mxu0
  %v2394 = vadd.f32 0.0, %v2393
  %v2395 = vpop.f32.mrf.mxu0
  %v2396 = vadd.f32 0.0, %v2395
  %2397 = vmatmul.bf16.gmra.mxu0 %v1966
  %v2398 = vpop.f32.mrf.mxu0
  %v2399 = vadd.f32 0.0, %v2398
  %v2400 = vpop.f32.mrf.mxu0
  %v2401 = vadd.f32 0.0, %v2400
  %2402 = vmatmul.bf16.gmra.mxu0 %v1968
  %v2403 = vpop.f32.mrf.mxu0
  %v2404 = vadd.f32 0.0, %v2403
  %v2405 = vpop.f32.mrf.mxu0
  %v2406 = vadd.f32 0.0, %v2405
  %2407 = vmatmul.bf16.gmra.mxu0 %v1970
  %v2408 = vpop.f32.mrf.mxu0
  %v2409 = vadd.f32 0.0, %v2408
  %v2410 = vpop.f32.mrf.mxu0
  %v2411 = vadd.f32 0.0, %v2410
  %2412 = vmatmul.bf16.gmra.mxu0 %v1972
  %v2413 = vpop.f32.mrf.mxu0
  %v2414 = vadd.f32 0.0, %v2413
  %v2415 = vpop.f32.mrf.mxu0
  %v2416 = vadd.f32 0.0, %v2415
  %2417 = vmatmul.bf16.gmra.mxu0 %v1974
  %v2418 = vpop.f32.mrf.mxu0
  %v2419 = vadd.f32 0.0, %v2418
  %v2420 = vpop.f32.mrf.mxu0
  %v2421 = vadd.f32 0.0, %v2420
  %2422 = vmatmul.bf16.gmra.mxu0 %v1976
  %v2423 = vpop.f32.mrf.mxu0
  %v2424 = vadd.f32 0.0, %v2423
  %v2425 = vpop.f32.mrf.mxu0
  %v2426 = vadd.f32 0.0, %v2425
  %2427 = vmatmul.bf16.gmra.mxu0 %v1978
  %v2428 = vpop.f32.mrf.mxu0
  %v2429 = vadd.f32 0.0, %v2428
  %v2430 = vpop.f32.mrf.mxu0
  %v2431 = vadd.f32 0.0, %v2430
  %2432 = vmatmul.bf16.gmra.mxu0 %v1980
  %v2433 = vpop.f32.mrf.mxu0
  %v2434 = vadd.f32 0.0, %v2433
  %v2435 = vpop.f32.mrf.mxu0
  %v2436 = vadd.f32 0.0, %v2435
  %2437 = vmatmul.bf16.gmra.mxu0 %v1982
  %v2438 = vpop.f32.mrf.mxu0
  %v2439 = vadd.f32 0.0, %v2438
  %v2440 = vpop.f32.mrf.mxu0
  %v2441 = vadd.f32 0.0, %v2440
  %2442 = vmatmul.bf16.gmra.mxu0 %v1984
  %v2443 = vpop.f32.mrf.mxu0
  %v2444 = vadd.f32 0.0, %v2443
  %v2445 = vpop.f32.mrf.mxu0
  %v2446 = vadd.f32 0.0, %v2445
  %2447 = vmatmul.bf16.gmra.mxu0 %v1986
  %v2448 = vpop.f32.mrf.mxu0
  %v2449 = vadd.f32 0.0, %v2448
  %v2450 = vpop.f32.mrf.mxu0
  %v2451 = vadd.f32 0.0, %v2450
  %2452 = vmatmul.bf16.gmra.mxu0 %v1988
  %v2453 = vpop.f32.mrf.mxu0
  %v2454 = vadd.f32 0.0, %v2453
  %v2455 = vpop.f32.mrf.mxu0
  %v2456 = vadd.f32 0.0, %v2455
  %2457 = vmatmul.bf16.gmra.mxu0 %v1990
  %v2458 = vpop.f32.mrf.mxu0
  %v2459 = vadd.f32 0.0, %v2458
  %v2460 = vpop.f32.mrf.mxu0
  %v2461 = vadd.f32 0.0, %v2460
  %2462 = vdwg.mxu0
  %2463 = vmatpush.bf16.msra.mxu0 0
  %2464 = vmatpush.bf16.msra.mxu0 0
  %2465 = vmatpush.bf16.msra.mxu0 %v2119
  %2466 = vmatpush.bf16.msra.mxu0 %v2117
  %2467 = vmatpush.bf16.msra.mxu0 %v2115
  %2468 = vmatpush.bf16.msra.mxu0 %v2113
  %2469 = vmatpush.bf16.msra.mxu0 %v2111
  %2470 = vmatpush.bf16.msra.mxu0 %v2109
  %2471 = vmatmul.bf16.gmra.mxu0 %v2149
  %v2472 = vpop.f32.mrf.mxu0
  %v2473 = vadd.f32 %v2384, %v2472
  %v2474 = vpop.f32.mrf.mxu0
  %v2475 = vadd.f32 %v2386, %v2474
  %2476 = vmatmul.bf16.gmra.mxu0 %v2152
  %v2477 = vpop.f32.mrf.mxu0
  %v2478 = vadd.f32 %v2389, %v2477
  %v2479 = vpop.f32.mrf.mxu0
  %v2480 = vadd.f32 %v2391, %v2479
  %2481 = vmatmul.bf16.gmra.mxu0 %v2155
  %v2482 = vpop.f32.mrf.mxu0
  %v2483 = vadd.f32 %v2394, %v2482
  %v2484 = vpop.f32.mrf.mxu0
  %v2485 = vadd.f32 %v2396, %v2484
  %2486 = vmatmul.bf16.gmra.mxu0 %v2158
  %v2487 = vpop.f32.mrf.mxu0
  %v2488 = vadd.f32 %v2399, %v2487
  %v2489 = vpop.f32.mrf.mxu0
  %v2490 = vadd.f32 %v2401, %v2489
  %2491 = vmatmul.bf16.gmra.mxu0 %v2161
  %v2492 = vpop.f32.mrf.mxu0
  %v2493 = vadd.f32 %v2404, %v2492
  %v2494 = vpop.f32.mrf.mxu0
  %v2495 = vadd.f32 %v2406, %v2494
  %2496 = vmatmul.bf16.gmra.mxu0 %v2164
  %v2497 = vpop.f32.mrf.mxu0
  %v2498 = vadd.f32 %v2409, %v2497
  %v2499 = vpop.f32.mrf.mxu0
  %v2500 = vadd.f32 %v2411, %v2499
  %2501 = vmatmul.bf16.gmra.mxu0 %v2167
  %v2502 = vpop.f32.mrf.mxu0
  %v2503 = vadd.f32 %v2414, %v2502
  %v2504 = vpop.f32.mrf.mxu0
  %v2505 = vadd.f32 %v2416, %v2504
  %2506 = vmatmul.bf16.gmra.mxu0 %v2170
  %v2507 = vpop.f32.mrf.mxu0
  %v2508 = vadd.f32 %v2419, %v2507
  %v2509 = vpop.f32.mrf.mxu0
  %v2510 = vadd.f32 %v2421, %v2509
  %2511 = vmatmul.bf16.gmra.mxu0 %v2173
  %v2512 = vpop.f32.mrf.mxu0
  %v2513 = vadd.f32 %v2424, %v2512
  %v2514 = vpop.f32.mrf.mxu0
  %v2515 = vadd.f32 %v2426, %v2514
  %2516 = vmatmul.bf16.gmra.mxu0 %v2176
  %v2517 = vpop.f32.mrf.mxu0
  %v2518 = vadd.f32 %v2429, %v2517
  %v2519 = vpop.f32.mrf.mxu0
  %v2520 = vadd.f32 %v2431, %v2519
  %2521 = vmatmul.bf16.gmra.mxu0 %v2179
  %v2522 = vpop.f32.mrf.mxu0
  %v2523 = vadd.f32 %v2434, %v2522
  %v2524 = vpop.f32.mrf.mxu0
  %v2525 = vadd.f32 %v2436, %v2524
  %2526 = vmatmul.bf16.gmra.mxu0 %v2182
  %v2527 = vpop.f32.mrf.mxu0
  %v2528 = vadd.f32 %v2439, %v2527
  %v2529 = vpop.f32.mrf.mxu0
  %v2530 = vadd.f32 %v2441, %v2529
  %2531 = vmatmul.bf16.gmra.mxu0 %v2185
  %v2532 = vpop.f32.mrf.mxu0
  %v2533 = vadd.f32 %v2444, %v2532
  %v2534 = vpop.f32.mrf.mxu0
  %v2535 = vadd.f32 %v2446, %v2534
  %2536 = vmatmul.bf16.gmra.mxu0 %v2188
  %v2537 = vpop.f32.mrf.mxu0
  %v2538 = vadd.f32 %v2449, %v2537
  %v2539 = vpop.f32.mrf.mxu0
  %v2540 = vadd.f32 %v2451, %v2539
  %2541 = vmatmul.bf16.gmra.mxu0 %v2191
  %v2542 = vpop.f32.mrf.mxu0
  %v2543 = vadd.f32 %v2454, %v2542
  %v2544 = vpop.f32.mrf.mxu0
  %v2545 = vadd.f32 %v2456, %v2544
  %2546 = vmatmul.bf16.gmra.mxu0 %v2194
  %v2547 = vpop.f32.mrf.mxu0
  %v2548 = vadd.f32 %v2459, %v2547
  %v2549 = vpop.f32.mrf.mxu0
  %v2550 = vadd.f32 %v2461, %v2549
  %2551 = vdwg.mxu0
  %v2554 = vunpack.c.l.b16 %v1745
  %v2555 = vunpack.c.h.b16 %v1745
  %v2556 = vunpack.c.l.b16 %v1746
  %v2557 = vunpack.c.h.b16 %v1746
  %v2558 = vpack.c.b16 %v2556, %v2554
  %v2559 = vpack.c.b16 %v2557, %v2555
  %v2589 = vunpack.c.l.b16 %v1777
  %v2590 = vunpack.c.h.b16 %v1777
  %v2591 = vunpack.c.l.b16 %v1778
  %v2592 = vunpack.c.h.b16 %v1778
  %v2593 = vunpack.c.l.b16 %v1779
  %v2594 = vunpack.c.h.b16 %v1779
  %v2595 = vunpack.c.l.b16 %v1780
  %v2596 = vunpack.c.h.b16 %v1780
  %v2597 = vunpack.c.l.b16 %v1781
  %v2598 = vunpack.c.h.b16 %v1781
  %v2599 = vunpack.c.l.b16 %v1782
  %v2600 = vunpack.c.h.b16 %v1782
  %v2601 = vunpack.c.l.b16 %v1783
  %v2602 = vunpack.c.h.b16 %v1783
  %v2603 = vunpack.c.l.b16 %v1784
  %v2604 = vunpack.c.h.b16 %v1784
  %v2605 = vunpack.c.l.b16 %v1785
  %v2606 = vunpack.c.h.b16 %v1785
  %v2607 = vunpack.c.l.b16 %v1786
  %v2608 = vunpack.c.h.b16 %v1786
  %v2609 = vunpack.c.l.b16 %v1787
  %v2610 = vunpack.c.h.b16 %v1787
  %v2611 = vunpack.c.l.b16 %v1788
  %v2612 = vunpack.c.h.b16 %v1788
  %v2613 = vunpack.c.l.b16 %v1789
  %v2614 = vunpack.c.h.b16 %v1789
  %v2615 = vunpack.c.l.b16 %v1790
  %v2616 = vunpack.c.h.b16 %v1790
  %v2617 = vunpack.c.l.b16 %v1791
  %v2618 = vunpack.c.h.b16 %v1791
  %v2619 = vunpack.c.l.b16 %v1792
  %v2620 = vunpack.c.h.b16 %v1792
  %v2621 = vunpack.c.l.b16 %v1793
  %v2622 = vunpack.c.h.b16 %v1793
  %v2623 = vunpack.c.l.b16 %v1794
  %v2624 = vunpack.c.h.b16 %v1794
  %v2625 = vunpack.c.l.b16 %v1795
  %v2626 = vunpack.c.h.b16 %v1795
  %v2627 = vunpack.c.l.b16 %v1796
  %v2628 = vunpack.c.h.b16 %v1796
  %v2629 = vunpack.c.l.b16 %v1797
  %v2630 = vunpack.c.h.b16 %v1797
  %v2631 = vunpack.c.l.b16 %v1798
  %v2632 = vunpack.c.h.b16 %v1798
  %v2633 = vunpack.c.l.b16 %v1799
  %v2634 = vunpack.c.h.b16 %v1799
  %v2635 = vunpack.c.l.b16 %v1800
  %v2636 = vunpack.c.h.b16 %v1800
  %v2637 = vunpack.c.l.b16 %v1801
  %v2638 = vunpack.c.h.b16 %v1801
  %v2639 = vunpack.c.l.b16 %v1802
  %v2640 = vunpack.c.h.b16 %v1802
  %v2641 = vunpack.c.l.b16 %v1803
  %v2642 = vunpack.c.h.b16 %v1803
  %v2643 = vunpack.c.l.b16 %v1804
  %v2644 = vunpack.c.h.b16 %v1804
  %v2645 = vpack.c.b16 %v2591, %v2589
  %v2646 = vpack.c.b16 %v2592, %v2590
  %v2647 = vpack.c.b16 %v2595, %v2593
  %v2648 = vpack.c.b16 %v2596, %v2594
  %v2649 = vpack.c.b16 %v2599, %v2597
  %v2650 = vpack.c.b16 %v2600, %v2598
  %v2651 = vpack.c.b16 %v2603, %v2601
  %v2652 = vpack.c.b16 %v2604, %v2602
  %v2653 = vpack.c.b16 %v2607, %v2605
  %v2654 = vpack.c.b16 %v2608, %v2606
  %v2655 = vpack.c.b16 %v2611, %v2609
  %v2656 = vpack.c.b16 %v2612, %v2610
  %v2657 = vpack.c.b16 %v2615, %v2613
  %v2658 = vpack.c.b16 %v2616, %v2614
  %v2659 = vpack.c.b16 %v2619, %v2617
  %v2660 = vpack.c.b16 %v2620, %v2618
  %v2661 = vpack.c.b16 %v2623, %v2621
  %v2662 = vpack.c.b16 %v2624, %v2622
  %v2663 = vpack.c.b16 %v2627, %v2625
  %v2664 = vpack.c.b16 %v2628, %v2626
  %v2665 = vpack.c.b16 %v2631, %v2629
  %v2666 = vpack.c.b16 %v2632, %v2630
  %v2667 = vpack.c.b16 %v2635, %v2633
  %v2668 = vpack.c.b16 %v2636, %v2634
  %v2669 = vpack.c.b16 %v2639, %v2637
  %v2670 = vpack.c.b16 %v2640, %v2638
  %v2671 = vpack.c.b16 %v2643, %v2641
  %v2672 = vpack.c.b16 %v2644, %v2642
  %v2702 = vsel %vm1398, %v2559, 0
  %2704 = vmatpush.bf16.msra.mxu0 %v2659
  %2705 = vmatpush.bf16.msra.mxu0 %v2657
  %2706 = vmatpush.bf16.msra.mxu0 %v2655
  %2707 = vmatpush.bf16.msra.mxu0 %v2653
  %2708 = vmatpush.bf16.msra.mxu0 %v2651
  %2709 = vmatpush.bf16.msra.mxu0 %v2649
  %2710 = vmatpush.bf16.msra.mxu0 %v2647
  %2711 = vmatpush.bf16.msra.mxu0 %v2645
  %2712 = vmatmul.bf16.gmra.mxu0 %v2558
  %v2713 = vpop.f32.mrf.mxu0
  %v2714 = vadd.f32 %v2295, %v2713
  %v2715 = vpop.f32.mrf.mxu0
  %v2716 = vadd.f32 %v2297, %v2715
  %2717 = vmatmul.bf16.gmra.mxu0 %v1960
  %v2718 = vpop.f32.mrf.mxu0
  %v2719 = vadd.f32 %v2300, %v2718
  %v2720 = vpop.f32.mrf.mxu0
  %v2721 = vadd.f32 %v2302, %v2720
  %2722 = vmatmul.bf16.gmra.mxu0 %v1962
  %v2723 = vpop.f32.mrf.mxu0
  %v2724 = vadd.f32 %v2305, %v2723
  %v2725 = vpop.f32.mrf.mxu0
  %v2726 = vadd.f32 %v2307, %v2725
  %2727 = vmatmul.bf16.gmra.mxu0 %v1964
  %v2728 = vpop.f32.mrf.mxu0
  %v2729 = vadd.f32 %v2310, %v2728
  %v2730 = vpop.f32.mrf.mxu0
  %v2731 = vadd.f32 %v2312, %v2730
  %2732 = vmatmul.bf16.gmra.mxu0 %v1966
  %v2733 = vpop.f32.mrf.mxu0
  %v2734 = vadd.f32 %v2315, %v2733
  %v2735 = vpop.f32.mrf.mxu0
  %v2736 = vadd.f32 %v2317, %v2735
  %2737 = vmatmul.bf16.gmra.mxu0 %v1968
  %v2738 = vpop.f32.mrf.mxu0
  %v2739 = vadd.f32 %v2320, %v2738
  %v2740 = vpop.f32.mrf.mxu0
  %v2741 = vadd.f32 %v2322, %v2740
  %2742 = vmatmul.bf16.gmra.mxu0 %v1970
  %v2743 = vpop.f32.mrf.mxu0
  %v2744 = vadd.f32 %v2325, %v2743
  %v2745 = vpop.f32.mrf.mxu0
  %v2746 = vadd.f32 %v2327, %v2745
  %2747 = vmatmul.bf16.gmra.mxu0 %v1972
  %v2748 = vpop.f32.mrf.mxu0
  %v2749 = vadd.f32 %v2330, %v2748
  %v2750 = vpop.f32.mrf.mxu0
  %v2751 = vadd.f32 %v2332, %v2750
  %2752 = vmatmul.bf16.gmra.mxu0 %v1974
  %v2753 = vpop.f32.mrf.mxu0
  %v2754 = vadd.f32 %v2335, %v2753
  %v2755 = vpop.f32.mrf.mxu0
  %v2756 = vadd.f32 %v2337, %v2755
  %2757 = vmatmul.bf16.gmra.mxu0 %v1976
  %v2758 = vpop.f32.mrf.mxu0
  %v2759 = vadd.f32 %v2340, %v2758
  %v2760 = vpop.f32.mrf.mxu0
  %v2761 = vadd.f32 %v2342, %v2760
  %2762 = vmatmul.bf16.gmra.mxu0 %v1978
  %v2763 = vpop.f32.mrf.mxu0
  %v2764 = vadd.f32 %v2345, %v2763
  %v2765 = vpop.f32.mrf.mxu0
  %v2766 = vadd.f32 %v2347, %v2765
  %2767 = vmatmul.bf16.gmra.mxu0 %v1980
  %v2768 = vpop.f32.mrf.mxu0
  %v2769 = vadd.f32 %v2350, %v2768
  %v2770 = vpop.f32.mrf.mxu0
  %v2771 = vadd.f32 %v2352, %v2770
  %2772 = vmatmul.bf16.gmra.mxu0 %v1982
  %v2773 = vpop.f32.mrf.mxu0
  %v2774 = vadd.f32 %v2355, %v2773
  %v2775 = vpop.f32.mrf.mxu0
  %v2776 = vadd.f32 %v2357, %v2775
  %2777 = vmatmul.bf16.gmra.mxu0 %v1984
  %v2778 = vpop.f32.mrf.mxu0
  %v2779 = vadd.f32 %v2360, %v2778
  %v2780 = vpop.f32.mrf.mxu0
  %v2781 = vadd.f32 %v2362, %v2780
  %2782 = vmatmul.bf16.gmra.mxu0 %v1986
  %v2783 = vpop.f32.mrf.mxu0
  %v2784 = vadd.f32 %v2365, %v2783
  %v2785 = vpop.f32.mrf.mxu0
  %v2786 = vadd.f32 %v2367, %v2785
  %2787 = vmatmul.bf16.gmra.mxu0 %v1988
  %v2788 = vpop.f32.mrf.mxu0
  %v2789 = vadd.f32 %v2370, %v2788
  %v2790 = vpop.f32.mrf.mxu0
  %v2791 = vadd.f32 %v2372, %v2790
  %2792 = vdwg.mxu0
  %2793 = vmatpush.bf16.msra.mxu0 0
  %2794 = vmatpush.bf16.msra.mxu0 0
  %2795 = vmatpush.bf16.msra.mxu0 %v2671
  %2796 = vmatpush.bf16.msra.mxu0 %v2669
  %2797 = vmatpush.bf16.msra.mxu0 %v2667
  %2798 = vmatpush.bf16.msra.mxu0 %v2665
  %2799 = vmatpush.bf16.msra.mxu0 %v2663
  %2800 = vmatpush.bf16.msra.mxu0 %v2661
  %2801 = vmatmul.bf16.gmra.mxu0 %v2702
  %v2802 = vpop.f32.mrf.mxu0
  %v2803 = vadd.f32 %v2714, %v2802
  %v2804 = vpop.f32.mrf.mxu0
  %v2805 = vadd.f32 %v2716, %v2804
  %2806 = vmatmul.bf16.gmra.mxu0 %v2149
  %v2807 = vpop.f32.mrf.mxu0
  %v2808 = vadd.f32 %v2719, %v2807
  %v2809 = vpop.f32.mrf.mxu0
  %v2810 = vadd.f32 %v2721, %v2809
  %2811 = vmatmul.bf16.gmra.mxu0 %v2152
  %v2812 = vpop.f32.mrf.mxu0
  %v2813 = vadd.f32 %v2724, %v2812
  %v2814 = vpop.f32.mrf.mxu0
  %v2815 = vadd.f32 %v2726, %v2814
  %2816 = vmatmul.bf16.gmra.mxu0 %v2155
  %v2817 = vpop.f32.mrf.mxu0
  %v2818 = vadd.f32 %v2729, %v2817
  %v2819 = vpop.f32.mrf.mxu0
  %v2820 = vadd.f32 %v2731, %v2819
  %2821 = vmatmul.bf16.gmra.mxu0 %v2158
  %v2822 = vpop.f32.mrf.mxu0
  %v2823 = vadd.f32 %v2734, %v2822
  %v2824 = vpop.f32.mrf.mxu0
  %v2825 = vadd.f32 %v2736, %v2824
  %2826 = vmatmul.bf16.gmra.mxu0 %v2161
  %v2827 = vpop.f32.mrf.mxu0
  %v2828 = vadd.f32 %v2739, %v2827
  %v2829 = vpop.f32.mrf.mxu0
  %v2830 = vadd.f32 %v2741, %v2829
  %2831 = vmatmul.bf16.gmra.mxu0 %v2164
  %v2832 = vpop.f32.mrf.mxu0
  %v2833 = vadd.f32 %v2744, %v2832
  %v2834 = vpop.f32.mrf.mxu0
  %v2835 = vadd.f32 %v2746, %v2834
  %2836 = vmatmul.bf16.gmra.mxu0 %v2167
  %v2837 = vpop.f32.mrf.mxu0
  %v2838 = vadd.f32 %v2749, %v2837
  %v2839 = vpop.f32.mrf.mxu0
  %v2840 = vadd.f32 %v2751, %v2839
  %2841 = vmatmul.bf16.gmra.mxu0 %v2170
  %v2842 = vpop.f32.mrf.mxu0
  %v2843 = vadd.f32 %v2754, %v2842
  %v2844 = vpop.f32.mrf.mxu0
  %v2845 = vadd.f32 %v2756, %v2844
  %2846 = vmatmul.bf16.gmra.mxu0 %v2173
  %v2847 = vpop.f32.mrf.mxu0
  %v2848 = vadd.f32 %v2759, %v2847
  %v2849 = vpop.f32.mrf.mxu0
  %v2850 = vadd.f32 %v2761, %v2849
  %2851 = vmatmul.bf16.gmra.mxu0 %v2176
  %v2852 = vpop.f32.mrf.mxu0
  %v2853 = vadd.f32 %v2764, %v2852
  %v2854 = vpop.f32.mrf.mxu0
  %v2855 = vadd.f32 %v2766, %v2854
  %2856 = vmatmul.bf16.gmra.mxu0 %v2179
  %v2857 = vpop.f32.mrf.mxu0
  %v2858 = vadd.f32 %v2769, %v2857
  %v2859 = vpop.f32.mrf.mxu0
  %v2860 = vadd.f32 %v2771, %v2859
  %2861 = vmatmul.bf16.gmra.mxu0 %v2182
  %v2862 = vpop.f32.mrf.mxu0
  %v2863 = vadd.f32 %v2774, %v2862
  %v2864 = vpop.f32.mrf.mxu0
  %v2865 = vadd.f32 %v2776, %v2864
  %2866 = vmatmul.bf16.gmra.mxu0 %v2185
  %v2867 = vpop.f32.mrf.mxu0
  %v2868 = vadd.f32 %v2779, %v2867
  %v2869 = vpop.f32.mrf.mxu0
  %v2870 = vadd.f32 %v2781, %v2869
  %2871 = vmatmul.bf16.gmra.mxu0 %v2188
  %v2872 = vpop.f32.mrf.mxu0
  %v2873 = vadd.f32 %v2784, %v2872
  %v2874 = vpop.f32.mrf.mxu0
  %v2875 = vadd.f32 %v2786, %v2874
  %2876 = vmatmul.bf16.gmra.mxu0 %v2191
  %v2877 = vpop.f32.mrf.mxu0
  %v2878 = vadd.f32 %v2789, %v2877
  %v2879 = vpop.f32.mrf.mxu0
  %v2880 = vadd.f32 %v2791, %v2879
  %2881 = vdwg.mxu0
  %2882 = vmatpush.bf16.msra.mxu0 %v2660
  %2883 = vmatpush.bf16.msra.mxu0 %v2658
  %2884 = vmatpush.bf16.msra.mxu0 %v2656
  %2885 = vmatpush.bf16.msra.mxu0 %v2654
  %2886 = vmatpush.bf16.msra.mxu0 %v2652
  %2887 = vmatpush.bf16.msra.mxu0 %v2650
  %2888 = vmatpush.bf16.msra.mxu0 %v2648
  %2889 = vmatpush.bf16.msra.mxu0 %v2646
  %2890 = vmatmul.bf16.gmra.mxu0 %v2558
  %v2891 = vpop.f32.mrf.mxu0
  %v2892 = vadd.f32 %v2473, %v2891
  %v2893 = vpop.f32.mrf.mxu0
  %v2894 = vadd.f32 %v2475, %v2893
  %2895 = vmatmul.bf16.gmra.mxu0 %v1960
  %v2896 = vpop.f32.mrf.mxu0
  %v2897 = vadd.f32 %v2478, %v2896
  %v2898 = vpop.f32.mrf.mxu0
  %v2899 = vadd.f32 %v2480, %v2898
  %2900 = vmatmul.bf16.gmra.mxu0 %v1962
  %v2901 = vpop.f32.mrf.mxu0
  %v2902 = vadd.f32 %v2483, %v2901
  %v2903 = vpop.f32.mrf.mxu0
  %v2904 = vadd.f32 %v2485, %v2903
  %2905 = vmatmul.bf16.gmra.mxu0 %v1964
  %v2906 = vpop.f32.mrf.mxu0
  %v2907 = vadd.f32 %v2488, %v2906
  %v2908 = vpop.f32.mrf.mxu0
  %v2909 = vadd.f32 %v2490, %v2908
  %2910 = vmatmul.bf16.gmra.mxu0 %v1966
  %v2911 = vpop.f32.mrf.mxu0
  %v2912 = vadd.f32 %v2493, %v2911
  %v2913 = vpop.f32.mrf.mxu0
  %v2914 = vadd.f32 %v2495, %v2913
  %2915 = vmatmul.bf16.gmra.mxu0 %v1968
  %v2916 = vpop.f32.mrf.mxu0
  %v2917 = vadd.f32 %v2498, %v2916
  %v2918 = vpop.f32.mrf.mxu0
  %v2919 = vadd.f32 %v2500, %v2918
  %2920 = vmatmul.bf16.gmra.mxu0 %v1970
  %v2921 = vpop.f32.mrf.mxu0
  %v2922 = vadd.f32 %v2503, %v2921
  %v2923 = vpop.f32.mrf.mxu0
  %v2924 = vadd.f32 %v2505, %v2923
  %2925 = vmatmul.bf16.gmra.mxu0 %v1972
  %v2926 = vpop.f32.mrf.mxu0
  %v2927 = vadd.f32 %v2508, %v2926
  %v2928 = vpop.f32.mrf.mxu0
  %v2929 = vadd.f32 %v2510, %v2928
  %2930 = vmatmul.bf16.gmra.mxu0 %v1974
  %v2931 = vpop.f32.mrf.mxu0
  %v2932 = vadd.f32 %v2513, %v2931
  %v2933 = vpop.f32.mrf.mxu0
  %v2934 = vadd.f32 %v2515, %v2933
  %2935 = vmatmul.bf16.gmra.mxu0 %v1976
  %v2936 = vpop.f32.mrf.mxu0
  %v2937 = vadd.f32 %v2518, %v2936
  %v2938 = vpop.f32.mrf.mxu0
  %v2939 = vadd.f32 %v2520, %v2938
  %2940 = vmatmul.bf16.gmra.mxu0 %v1978
  %v2941 = vpop.f32.mrf.mxu0
  %v2942 = vadd.f32 %v2523, %v2941
  %v2943 = vpop.f32.mrf.mxu0
  %v2944 = vadd.f32 %v2525, %v2943
  %2945 = vmatmul.bf16.gmra.mxu0 %v1980
  %v2946 = vpop.f32.mrf.mxu0
  %v2947 = vadd.f32 %v2528, %v2946
  %v2948 = vpop.f32.mrf.mxu0
  %v2949 = vadd.f32 %v2530, %v2948
  %2950 = vmatmul.bf16.gmra.mxu0 %v1982
  %v2951 = vpop.f32.mrf.mxu0
  %v2952 = vadd.f32 %v2533, %v2951
  %v2953 = vpop.f32.mrf.mxu0
  %v2954 = vadd.f32 %v2535, %v2953
  %2955 = vmatmul.bf16.gmra.mxu0 %v1984
  %v2956 = vpop.f32.mrf.mxu0
  %v2957 = vadd.f32 %v2538, %v2956
  %v2958 = vpop.f32.mrf.mxu0
  %v2959 = vadd.f32 %v2540, %v2958
  %2960 = vmatmul.bf16.gmra.mxu0 %v1986
  %v2961 = vpop.f32.mrf.mxu0
  %v2962 = vadd.f32 %v2543, %v2961
  %v2963 = vpop.f32.mrf.mxu0
  %v2964 = vadd.f32 %v2545, %v2963
  %2965 = vmatmul.bf16.gmra.mxu0 %v1988
  %v2966 = vpop.f32.mrf.mxu0
  %v2967 = vadd.f32 %v2548, %v2966
  %v2968 = vpop.f32.mrf.mxu0
  %v2969 = vadd.f32 %v2550, %v2968
  %2970 = vdwg.mxu0
  %2971 = vmatpush.bf16.msra.mxu0 0
  %2972 = vmatpush.bf16.msra.mxu0 0
  %2973 = vmatpush.bf16.msra.mxu0 %v2672
  %2974 = vmatpush.bf16.msra.mxu0 %v2670
  %2975 = vmatpush.bf16.msra.mxu0 %v2668
  %2976 = vmatpush.bf16.msra.mxu0 %v2666
  %2977 = vmatpush.bf16.msra.mxu0 %v2664
  %2978 = vmatpush.bf16.msra.mxu0 %v2662
  %2979 = vmatmul.bf16.gmra.mxu0 %v2702
  %v2980 = vpop.f32.mrf.mxu0
  %v2981 = vadd.f32 %v2892, %v2980
  %v2982 = vpop.f32.mrf.mxu0
  %v2983 = vadd.f32 %v2894, %v2982
  %2984 = vmatmul.bf16.gmra.mxu0 %v2149
  %v2985 = vpop.f32.mrf.mxu0
  %v2986 = vadd.f32 %v2897, %v2985
  %v2987 = vpop.f32.mrf.mxu0
  %v2988 = vadd.f32 %v2899, %v2987
  %2989 = vmatmul.bf16.gmra.mxu0 %v2152
  %v2990 = vpop.f32.mrf.mxu0
  %v2991 = vadd.f32 %v2902, %v2990
  %v2992 = vpop.f32.mrf.mxu0
  %v2993 = vadd.f32 %v2904, %v2992
  %2994 = vmatmul.bf16.gmra.mxu0 %v2155
  %v2995 = vpop.f32.mrf.mxu0
  %v2996 = vadd.f32 %v2907, %v2995
  %v2997 = vpop.f32.mrf.mxu0
  %v2998 = vadd.f32 %v2909, %v2997
  %2999 = vmatmul.bf16.gmra.mxu0 %v2158
  %v3000 = vpop.f32.mrf.mxu0
  %v3001 = vadd.f32 %v2912, %v3000
  %v3002 = vpop.f32.mrf.mxu0
  %v3003 = vadd.f32 %v2914, %v3002
  %3004 = vmatmul.bf16.gmra.mxu0 %v2161
  %v3005 = vpop.f32.mrf.mxu0
  %v3006 = vadd.f32 %v2917, %v3005
  %v3007 = vpop.f32.mrf.mxu0
  %v3008 = vadd.f32 %v2919, %v3007
  %3009 = vmatmul.bf16.gmra.mxu0 %v2164
  %v3010 = vpop.f32.mrf.mxu0
  %v3011 = vadd.f32 %v2922, %v3010
  %v3012 = vpop.f32.mrf.mxu0
  %v3013 = vadd.f32 %v2924, %v3012
  %3014 = vmatmul.bf16.gmra.mxu0 %v2167
  %v3015 = vpop.f32.mrf.mxu0
  %v3016 = vadd.f32 %v2927, %v3015
  %v3017 = vpop.f32.mrf.mxu0
  %v3018 = vadd.f32 %v2929, %v3017
  %3019 = vmatmul.bf16.gmra.mxu0 %v2170
  %v3020 = vpop.f32.mrf.mxu0
  %v3021 = vadd.f32 %v2932, %v3020
  %v3022 = vpop.f32.mrf.mxu0
  %v3023 = vadd.f32 %v2934, %v3022
  %3024 = vmatmul.bf16.gmra.mxu0 %v2173
  %v3025 = vpop.f32.mrf.mxu0
  %v3026 = vadd.f32 %v2937, %v3025
  %v3027 = vpop.f32.mrf.mxu0
  %v3028 = vadd.f32 %v2939, %v3027
  %3029 = vmatmul.bf16.gmra.mxu0 %v2176
  %v3030 = vpop.f32.mrf.mxu0
  %v3031 = vadd.f32 %v2942, %v3030
  %v3032 = vpop.f32.mrf.mxu0
  %v3033 = vadd.f32 %v2944, %v3032
  %3034 = vmatmul.bf16.gmra.mxu0 %v2179
  %v3035 = vpop.f32.mrf.mxu0
  %v3036 = vadd.f32 %v2947, %v3035
  %v3037 = vpop.f32.mrf.mxu0
  %v3038 = vadd.f32 %v2949, %v3037
  %3039 = vmatmul.bf16.gmra.mxu0 %v2182
  %v3040 = vpop.f32.mrf.mxu0
  %v3041 = vadd.f32 %v2952, %v3040
  %v3042 = vpop.f32.mrf.mxu0
  %v3043 = vadd.f32 %v2954, %v3042
  %3044 = vmatmul.bf16.gmra.mxu0 %v2185
  %v3045 = vpop.f32.mrf.mxu0
  %v3046 = vadd.f32 %v2957, %v3045
  %v3047 = vpop.f32.mrf.mxu0
  %v3048 = vadd.f32 %v2959, %v3047
  %3049 = vmatmul.bf16.gmra.mxu0 %v2188
  %v3050 = vpop.f32.mrf.mxu0
  %v3051 = vadd.f32 %v2962, %v3050
  %v3052 = vpop.f32.mrf.mxu0
  %v3053 = vadd.f32 %v2964, %v3052
  %3054 = vmatmul.bf16.gmra.mxu0 %v2191
  %v3055 = vpop.f32.mrf.mxu0
  %v3056 = vadd.f32 %v2967, %v3055
  %v3057 = vpop.f32.mrf.mxu0
  %v3058 = vadd.f32 %v2969, %v3057
  %3059 = vdwg.mxu0
  %s3060 = scalar_lea.vmem %s5, 224
  %v3061 = vld [vmem:[%s3060] sm:$0xff]
  %v3062 = vld [vmem:[%s3060 + $0x8] sm:$0xff]
  %v3063 = vld [vmem:[%s3060 + $0x10] sm:$0xff]
  %v3064 = vld [vmem:[%s3060 + $0x18] sm:$0xff]
  %v3065 = vld [vmem:[%s3060 + $0x20] sm:$0xff]
  %v3066 = vld [vmem:[%s3060 + $0x28] sm:$0xff]
  %v3067 = vld [vmem:[%s3060 + $0x30] sm:$0xff]
  %v3068 = vld [vmem:[%s3060 + $0x38] sm:$0xff]
  %v3069 = vld [vmem:[%s3060 + $0x40] sm:$0xff]
  %v3070 = vld [vmem:[%s3060 + $0x48] sm:$0xff]
  %v3071 = vld [vmem:[%s3060 + $0x50] sm:$0xff]
  %v3072 = vld [vmem:[%s3060 + $0x58] sm:$0xff]
  %v3073 = vld [vmem:[%s3060 + $0x60] sm:$0xff]
  %v3074 = vld [vmem:[%s3060 + $0x68] sm:$0xff]
  %v3075 = vld [vmem:[%s3060 + $0x70] sm:$0xff]
  %v3076 = vld [vmem:[%s3060 + $0x78] sm:$0xff]
  %v3077 = vld [vmem:[%s3060 + $0x80] sm:$0xff]
  %v3078 = vld [vmem:[%s3060 + $0x88] sm:$0xff]
  %v3079 = vld [vmem:[%s3060 + $0x90] sm:$0xff]
  %v3080 = vld [vmem:[%s3060 + $0x98] sm:$0xff]
  %v3081 = vld [vmem:[%s3060 + $0xa0] sm:$0xff]
  %v3082 = vld [vmem:[%s3060 + $0xa8] sm:$0xff]
  %v3083 = vld [vmem:[%s3060 + $0xb0] sm:$0xff]
  %v3084 = vld [vmem:[%s3060 + $0xb8] sm:$0xff]
  %v3085 = vld [vmem:[%s3060 + $0xc0] sm:$0xff]
  %v3086 = vld [vmem:[%s3060 + $0xc8] sm:$0xff]
  %v3087 = vld [vmem:[%s3060 + $0xd0] sm:$0xff]
  %v3088 = vld [vmem:[%s3060 + $0xd8] sm:$0xff]
  %v3117 = vunpack.c.l.b16 %v3061
  %v3118 = vunpack.c.h.b16 %v3061
  %v3119 = vunpack.c.l.b16 %v3062
  %v3120 = vunpack.c.h.b16 %v3062
  %v3121 = vunpack.c.l.b16 %v3063
  %v3122 = vunpack.c.h.b16 %v3063
  %v3123 = vunpack.c.l.b16 %v3064
  %v3124 = vunpack.c.h.b16 %v3064
  %v3125 = vunpack.c.l.b16 %v3065
  %v3126 = vunpack.c.h.b16 %v3065
  %v3127 = vunpack.c.l.b16 %v3066
  %v3128 = vunpack.c.h.b16 %v3066
  %v3129 = vunpack.c.l.b16 %v3067
  %v3130 = vunpack.c.h.b16 %v3067
  %v3131 = vunpack.c.l.b16 %v3068
  %v3132 = vunpack.c.h.b16 %v3068
  %v3133 = vunpack.c.l.b16 %v3069
  %v3134 = vunpack.c.h.b16 %v3069
  %v3135 = vunpack.c.l.b16 %v3070
  %v3136 = vunpack.c.h.b16 %v3070
  %v3137 = vunpack.c.l.b16 %v3071
  %v3138 = vunpack.c.h.b16 %v3071
  %v3139 = vunpack.c.l.b16 %v3072
  %v3140 = vunpack.c.h.b16 %v3072
  %v3141 = vunpack.c.l.b16 %v3073
  %v3142 = vunpack.c.h.b16 %v3073
  %v3143 = vunpack.c.l.b16 %v3074
  %v3144 = vunpack.c.h.b16 %v3074
  %v3145 = vunpack.c.l.b16 %v3075
  %v3146 = vunpack.c.h.b16 %v3075
  %v3147 = vunpack.c.l.b16 %v3076
  %v3148 = vunpack.c.h.b16 %v3076
  %v3149 = vunpack.c.l.b16 %v3077
  %v3150 = vunpack.c.h.b16 %v3077
  %v3151 = vunpack.c.l.b16 %v3078
  %v3152 = vunpack.c.h.b16 %v3078
  %v3153 = vunpack.c.l.b16 %v3079
  %v3154 = vunpack.c.h.b16 %v3079
  %v3155 = vunpack.c.l.b16 %v3080
  %v3156 = vunpack.c.h.b16 %v3080
  %v3157 = vunpack.c.l.b16 %v3081
  %v3158 = vunpack.c.h.b16 %v3081
  %v3159 = vunpack.c.l.b16 %v3082
  %v3160 = vunpack.c.h.b16 %v3082
  %v3161 = vunpack.c.l.b16 %v3083
  %v3162 = vunpack.c.h.b16 %v3083
  %v3163 = vunpack.c.l.b16 %v3084
  %v3164 = vunpack.c.h.b16 %v3084
  %v3165 = vunpack.c.l.b16 %v3085
  %v3166 = vunpack.c.h.b16 %v3085
  %v3167 = vunpack.c.l.b16 %v3086
  %v3168 = vunpack.c.h.b16 %v3086
  %v3169 = vunpack.c.l.b16 %v3087
  %v3170 = vunpack.c.h.b16 %v3087
  %v3171 = vunpack.c.l.b16 %v3088
  %v3172 = vunpack.c.h.b16 %v3088
  %v3173 = vpack.c.b16 %v3119, %v3117
  %v3174 = vpack.c.b16 %v3120, %v3118
  %v3175 = vpack.c.b16 %v3123, %v3121
  %v3176 = vpack.c.b16 %v3124, %v3122
  %v3177 = vpack.c.b16 %v3127, %v3125
  %v3178 = vpack.c.b16 %v3128, %v3126
  %v3179 = vpack.c.b16 %v3131, %v3129
  %v3180 = vpack.c.b16 %v3132, %v3130
  %v3181 = vpack.c.b16 %v3135, %v3133
  %v3182 = vpack.c.b16 %v3136, %v3134
  %v3183 = vpack.c.b16 %v3139, %v3137
  %v3184 = vpack.c.b16 %v3140, %v3138
  %v3185 = vpack.c.b16 %v3143, %v3141
  %v3186 = vpack.c.b16 %v3144, %v3142
  %v3187 = vpack.c.b16 %v3147, %v3145
  %v3188 = vpack.c.b16 %v3148, %v3146
  %v3189 = vpack.c.b16 %v3151, %v3149
  %v3190 = vpack.c.b16 %v3152, %v3150
  %v3191 = vpack.c.b16 %v3155, %v3153
  %v3192 = vpack.c.b16 %v3156, %v3154
  %v3193 = vpack.c.b16 %v3159, %v3157
  %v3194 = vpack.c.b16 %v3160, %v3158
  %v3195 = vpack.c.b16 %v3163, %v3161
  %v3196 = vpack.c.b16 %v3164, %v3162
  %v3197 = vpack.c.b16 %v3167, %v3165
  %v3198 = vpack.c.b16 %v3168, %v3166
  %v3199 = vpack.c.b16 %v3171, %v3169
  %v3200 = vpack.c.b16 %v3172, %v3170
  %3229 = vmatpush.bf16.msra.mxu0 %v3187
  %3230 = vmatpush.bf16.msra.mxu0 %v3185
  %3231 = vmatpush.bf16.msra.mxu0 %v3183
  %3232 = vmatpush.bf16.msra.mxu0 %v3181
  %3233 = vmatpush.bf16.msra.mxu0 %v3179
  %3234 = vmatpush.bf16.msra.mxu0 %v3177
  %3235 = vmatpush.bf16.msra.mxu0 %v3175
  %3236 = vmatpush.bf16.msra.mxu0 %v3173
  %3237 = vmatmul.bf16.gmra.mxu0 %v1960
  %v3238 = vpop.f32.mrf.mxu0
  %v3239 = vadd.f32 0.0, %v3238
  %v3240 = vpop.f32.mrf.mxu0
  %v3241 = vadd.f32 0.0, %v3240
  %3242 = vmatmul.bf16.gmra.mxu0 %v1962
  %v3243 = vpop.f32.mrf.mxu0
  %v3244 = vadd.f32 0.0, %v3243
  %v3245 = vpop.f32.mrf.mxu0
  %v3246 = vadd.f32 0.0, %v3245
  %3247 = vmatmul.bf16.gmra.mxu0 %v1964
  %v3248 = vpop.f32.mrf.mxu0
  %v3249 = vadd.f32 0.0, %v3248
  %v3250 = vpop.f32.mrf.mxu0
  %v3251 = vadd.f32 0.0, %v3250
  %3252 = vmatmul.bf16.gmra.mxu0 %v1966
  %v3253 = vpop.f32.mrf.mxu0
  %v3254 = vadd.f32 0.0, %v3253
  %v3255 = vpop.f32.mrf.mxu0
  %v3256 = vadd.f32 0.0, %v3255
  %3257 = vmatmul.bf16.gmra.mxu0 %v1968
  %v3258 = vpop.f32.mrf.mxu0
  %v3259 = vadd.f32 0.0, %v3258
  %v3260 = vpop.f32.mrf.mxu0
  %v3261 = vadd.f32 0.0, %v3260
  %3262 = vmatmul.bf16.gmra.mxu0 %v1970
  %v3263 = vpop.f32.mrf.mxu0
  %v3264 = vadd.f32 0.0, %v3263
  %v3265 = vpop.f32.mrf.mxu0
  %v3266 = vadd.f32 0.0, %v3265
  %3267 = vmatmul.bf16.gmra.mxu0 %v1972
  %v3268 = vpop.f32.mrf.mxu0
  %v3269 = vadd.f32 0.0, %v3268
  %v3270 = vpop.f32.mrf.mxu0
  %v3271 = vadd.f32 0.0, %v3270
  %3272 = vmatmul.bf16.gmra.mxu0 %v1974
  %v3273 = vpop.f32.mrf.mxu0
  %v3274 = vadd.f32 0.0, %v3273
  %v3275 = vpop.f32.mrf.mxu0
  %v3276 = vadd.f32 0.0, %v3275
  %3277 = vmatmul.bf16.gmra.mxu0 %v1976
  %v3278 = vpop.f32.mrf.mxu0
  %v3279 = vadd.f32 0.0, %v3278
  %v3280 = vpop.f32.mrf.mxu0
  %v3281 = vadd.f32 0.0, %v3280
  %3282 = vmatmul.bf16.gmra.mxu0 %v1978
  %v3283 = vpop.f32.mrf.mxu0
  %v3284 = vadd.f32 0.0, %v3283
  %v3285 = vpop.f32.mrf.mxu0
  %v3286 = vadd.f32 0.0, %v3285
  %3287 = vmatmul.bf16.gmra.mxu0 %v1980
  %v3288 = vpop.f32.mrf.mxu0
  %v3289 = vadd.f32 0.0, %v3288
  %v3290 = vpop.f32.mrf.mxu0
  %v3291 = vadd.f32 0.0, %v3290
  %3292 = vmatmul.bf16.gmra.mxu0 %v1982
  %v3293 = vpop.f32.mrf.mxu0
  %v3294 = vadd.f32 0.0, %v3293
  %v3295 = vpop.f32.mrf.mxu0
  %v3296 = vadd.f32 0.0, %v3295
  %3297 = vmatmul.bf16.gmra.mxu0 %v1984
  %v3298 = vpop.f32.mrf.mxu0
  %v3299 = vadd.f32 0.0, %v3298
  %v3300 = vpop.f32.mrf.mxu0
  %v3301 = vadd.f32 0.0, %v3300
  %3302 = vmatmul.bf16.gmra.mxu0 %v1986
  %v3303 = vpop.f32.mrf.mxu0
  %v3304 = vadd.f32 0.0, %v3303
  %v3305 = vpop.f32.mrf.mxu0
  %v3306 = vadd.f32 0.0, %v3305
  %3307 = vmatmul.bf16.gmra.mxu0 %v1988
  %v3308 = vpop.f32.mrf.mxu0
  %v3309 = vadd.f32 0.0, %v3308
  %v3310 = vpop.f32.mrf.mxu0
  %v3311 = vadd.f32 0.0, %v3310
  %3312 = vmatmul.bf16.gmra.mxu0 %v1990
  %v3313 = vpop.f32.mrf.mxu0
  %v3314 = vadd.f32 0.0, %v3313
  %v3315 = vpop.f32.mrf.mxu0
  %v3316 = vadd.f32 0.0, %v3315
  %3317 = vdwg.mxu0
  %3318 = vmatpush.bf16.msra.mxu0 0
  %3319 = vmatpush.bf16.msra.mxu0 0
  %3320 = vmatpush.bf16.msra.mxu0 %v3199
  %3321 = vmatpush.bf16.msra.mxu0 %v3197
  %3322 = vmatpush.bf16.msra.mxu0 %v3195
  %3323 = vmatpush.bf16.msra.mxu0 %v3193
  %3324 = vmatpush.bf16.msra.mxu0 %v3191
  %3325 = vmatpush.bf16.msra.mxu0 %v3189
  %3326 = vmatmul.bf16.gmra.mxu0 %v2149
  %v3327 = vpop.f32.mrf.mxu0
  %v3328 = vadd.f32 %v3239, %v3327
  %v3329 = vpop.f32.mrf.mxu0
  %v3330 = vadd.f32 %v3241, %v3329
  %3331 = vmatmul.bf16.gmra.mxu0 %v2152
  %v3332 = vpop.f32.mrf.mxu0
  %v3333 = vadd.f32 %v3244, %v3332
  %v3334 = vpop.f32.mrf.mxu0
  %v3335 = vadd.f32 %v3246, %v3334
  %3336 = vmatmul.bf16.gmra.mxu0 %v2155
  %v3337 = vpop.f32.mrf.mxu0
  %v3338 = vadd.f32 %v3249, %v3337
  %v3339 = vpop.f32.mrf.mxu0
  %v3340 = vadd.f32 %v3251, %v3339
  %3341 = vmatmul.bf16.gmra.mxu0 %v2158
  %v3342 = vpop.f32.mrf.mxu0
  %v3343 = vadd.f32 %v3254, %v3342
  %v3344 = vpop.f32.mrf.mxu0
  %v3345 = vadd.f32 %v3256, %v3344
  %3346 = vmatmul.bf16.gmra.mxu0 %v2161
  %v3347 = vpop.f32.mrf.mxu0
  %v3348 = vadd.f32 %v3259, %v3347
  %v3349 = vpop.f32.mrf.mxu0
  %v3350 = vadd.f32 %v3261, %v3349
  %3351 = vmatmul.bf16.gmra.mxu0 %v2164
  %v3352 = vpop.f32.mrf.mxu0
  %v3353 = vadd.f32 %v3264, %v3352
  %v3354 = vpop.f32.mrf.mxu0
  %v3355 = vadd.f32 %v3266, %v3354
  %3356 = vmatmul.bf16.gmra.mxu0 %v2167
  %v3357 = vpop.f32.mrf.mxu0
  %v3358 = vadd.f32 %v3269, %v3357
  %v3359 = vpop.f32.mrf.mxu0
  %v3360 = vadd.f32 %v3271, %v3359
  %3361 = vmatmul.bf16.gmra.mxu0 %v2170
  %v3362 = vpop.f32.mrf.mxu0
  %v3363 = vadd.f32 %v3274, %v3362
  %v3364 = vpop.f32.mrf.mxu0
  %v3365 = vadd.f32 %v3276, %v3364
  %3366 = vmatmul.bf16.gmra.mxu0 %v2173
  %v3367 = vpop.f32.mrf.mxu0
  %v3368 = vadd.f32 %v3279, %v3367
  %v3369 = vpop.f32.mrf.mxu0
  %v3370 = vadd.f32 %v3281, %v3369
  %3371 = vmatmul.bf16.gmra.mxu0 %v2176
  %v3372 = vpop.f32.mrf.mxu0
  %v3373 = vadd.f32 %v3284, %v3372
  %v3374 = vpop.f32.mrf.mxu0
  %v3375 = vadd.f32 %v3286, %v3374
  %3376 = vmatmul.bf16.gmra.mxu0 %v2179
  %v3377 = vpop.f32.mrf.mxu0
  %v3378 = vadd.f32 %v3289, %v3377
  %v3379 = vpop.f32.mrf.mxu0
  %v3380 = vadd.f32 %v3291, %v3379
  %3381 = vmatmul.bf16.gmra.mxu0 %v2182
  %v3382 = vpop.f32.mrf.mxu0
  %v3383 = vadd.f32 %v3294, %v3382
  %v3384 = vpop.f32.mrf.mxu0
  %v3385 = vadd.f32 %v3296, %v3384
  %3386 = vmatmul.bf16.gmra.mxu0 %v2185
  %v3387 = vpop.f32.mrf.mxu0
  %v3388 = vadd.f32 %v3299, %v3387
  %v3389 = vpop.f32.mrf.mxu0
  %v3390 = vadd.f32 %v3301, %v3389
  %3391 = vmatmul.bf16.gmra.mxu0 %v2188
  %v3392 = vpop.f32.mrf.mxu0
  %v3393 = vadd.f32 %v3304, %v3392
  %v3394 = vpop.f32.mrf.mxu0
  %v3395 = vadd.f32 %v3306, %v3394
  %3396 = vmatmul.bf16.gmra.mxu0 %v2191
  %v3397 = vpop.f32.mrf.mxu0
  %v3398 = vadd.f32 %v3309, %v3397
  %v3399 = vpop.f32.mrf.mxu0
  %v3400 = vadd.f32 %v3311, %v3399
  %3401 = vmatmul.bf16.gmra.mxu0 %v2194
  %v3402 = vpop.f32.mrf.mxu0
  %v3403 = vadd.f32 %v3314, %v3402
  %v3404 = vpop.f32.mrf.mxu0
  %v3405 = vadd.f32 %v3316, %v3404
  %3406 = vdwg.mxu0
  %3407 = vmatpush.bf16.msra.mxu0 %v3188
  %3408 = vmatpush.bf16.msra.mxu0 %v3186
  %3409 = vmatpush.bf16.msra.mxu0 %v3184
  %3410 = vmatpush.bf16.msra.mxu0 %v3182
  %3411 = vmatpush.bf16.msra.mxu0 %v3180
  %3412 = vmatpush.bf16.msra.mxu0 %v3178
  %3413 = vmatpush.bf16.msra.mxu0 %v3176
  %3414 = vmatpush.bf16.msra.mxu0 %v3174
  %3415 = vmatmul.bf16.gmra.mxu0 %v1960
  %v3416 = vpop.f32.mrf.mxu0
  %v3417 = vadd.f32 0.0, %v3416
  %v3418 = vpop.f32.mrf.mxu0
  %v3419 = vadd.f32 0.0, %v3418
  %3420 = vmatmul.bf16.gmra.mxu0 %v1962
  %v3421 = vpop.f32.mrf.mxu0
  %v3422 = vadd.f32 0.0, %v3421
  %v3423 = vpop.f32.mrf.mxu0
  %v3424 = vadd.f32 0.0, %v3423
  %3425 = vmatmul.bf16.gmra.mxu0 %v1964
  %v3426 = vpop.f32.mrf.mxu0
  %v3427 = vadd.f32 0.0, %v3426
  %v3428 = vpop.f32.mrf.mxu0
  %v3429 = vadd.f32 0.0, %v3428
  %3430 = vmatmul.bf16.gmra.mxu0 %v1966
  %v3431 = vpop.f32.mrf.mxu0
  %v3432 = vadd.f32 0.0, %v3431
  %v3433 = vpop.f32.mrf.mxu0
  %v3434 = vadd.f32 0.0, %v3433
  %3435 = vmatmul.bf16.gmra.mxu0 %v1968
  %v3436 = vpop.f32.mrf.mxu0
  %v3437 = vadd.f32 0.0, %v3436
  %v3438 = vpop.f32.mrf.mxu0
  %v3439 = vadd.f32 0.0, %v3438
  %3440 = vmatmul.bf16.gmra.mxu0 %v1970
  %v3441 = vpop.f32.mrf.mxu0
  %v3442 = vadd.f32 0.0, %v3441
  %v3443 = vpop.f32.mrf.mxu0
  %v3444 = vadd.f32 0.0, %v3443
  %3445 = vmatmul.bf16.gmra.mxu0 %v1972
  %v3446 = vpop.f32.mrf.mxu0
  %v3447 = vadd.f32 0.0, %v3446
  %v3448 = vpop.f32.mrf.mxu0
  %v3449 = vadd.f32 0.0, %v3448
  %3450 = vmatmul.bf16.gmra.mxu0 %v1974
  %v3451 = vpop.f32.mrf.mxu0
  %v3452 = vadd.f32 0.0, %v3451
  %v3453 = vpop.f32.mrf.mxu0
  %v3454 = vadd.f32 0.0, %v3453
  %3455 = vmatmul.bf16.gmra.mxu0 %v1976
  %v3456 = vpop.f32.mrf.mxu0
  %v3457 = vadd.f32 0.0, %v3456
  %v3458 = vpop.f32.mrf.mxu0
  %v3459 = vadd.f32 0.0, %v3458
  %3460 = vmatmul.bf16.gmra.mxu0 %v1978
  %v3461 = vpop.f32.mrf.mxu0
  %v3462 = vadd.f32 0.0, %v3461
  %v3463 = vpop.f32.mrf.mxu0
  %v3464 = vadd.f32 0.0, %v3463
  %3465 = vmatmul.bf16.gmra.mxu0 %v1980
  %v3466 = vpop.f32.mrf.mxu0
  %v3467 = vadd.f32 0.0, %v3466
  %v3468 = vpop.f32.mrf.mxu0
  %v3469 = vadd.f32 0.0, %v3468
  %3470 = vmatmul.bf16.gmra.mxu0 %v1982
  %v3471 = vpop.f32.mrf.mxu0
  %v3472 = vadd.f32 0.0, %v3471
  %v3473 = vpop.f32.mrf.mxu0
  %v3474 = vadd.f32 0.0, %v3473
  %3475 = vmatmul.bf16.gmra.mxu0 %v1984
  %v3476 = vpop.f32.mrf.mxu0
  %v3477 = vadd.f32 0.0, %v3476
  %v3478 = vpop.f32.mrf.mxu0
  %v3479 = vadd.f32 0.0, %v3478
  %3480 = vmatmul.bf16.gmra.mxu0 %v1986
  %v3481 = vpop.f32.mrf.mxu0
  %v3482 = vadd.f32 0.0, %v3481
  %v3483 = vpop.f32.mrf.mxu0
  %v3484 = vadd.f32 0.0, %v3483
  %3485 = vmatmul.bf16.gmra.mxu0 %v1988
  %v3486 = vpop.f32.mrf.mxu0
  %v3487 = vadd.f32 0.0, %v3486
  %v3488 = vpop.f32.mrf.mxu0
  %v3489 = vadd.f32 0.0, %v3488
  %3490 = vmatmul.bf16.gmra.mxu0 %v1990
  %v3491 = vpop.f32.mrf.mxu0
  %v3492 = vadd.f32 0.0, %v3491
  %v3493 = vpop.f32.mrf.mxu0
  %v3494 = vadd.f32 0.0, %v3493
  %3495 = vdwg.mxu0
  %3496 = vmatpush.bf16.msra.mxu0 0
  %3497 = vmatpush.bf16.msra.mxu0 0
  %3498 = vmatpush.bf16.msra.mxu0 %v3200
  %3499 = vmatpush.bf16.msra.mxu0 %v3198
  %3500 = vmatpush.bf16.msra.mxu0 %v3196
  %3501 = vmatpush.bf16.msra.mxu0 %v3194
  %3502 = vmatpush.bf16.msra.mxu0 %v3192
  %3503 = vmatpush.bf16.msra.mxu0 %v3190
  %3504 = vmatmul.bf16.gmra.mxu0 %v2149
  %v3505 = vpop.f32.mrf.mxu0
  %v3506 = vadd.f32 %v3417, %v3505
  %v3507 = vpop.f32.mrf.mxu0
  %v3508 = vadd.f32 %v3419, %v3507
  %3509 = vmatmul.bf16.gmra.mxu0 %v2152
  %v3510 = vpop.f32.mrf.mxu0
  %v3511 = vadd.f32 %v3422, %v3510
  %v3512 = vpop.f32.mrf.mxu0
  %v3513 = vadd.f32 %v3424, %v3512
  %3514 = vmatmul.bf16.gmra.mxu0 %v2155
  %v3515 = vpop.f32.mrf.mxu0
  %v3516 = vadd.f32 %v3427, %v3515
  %v3517 = vpop.f32.mrf.mxu0
  %v3518 = vadd.f32 %v3429, %v3517
  %3519 = vmatmul.bf16.gmra.mxu0 %v2158
  %v3520 = vpop.f32.mrf.mxu0
  %v3521 = vadd.f32 %v3432, %v3520
  %v3522 = vpop.f32.mrf.mxu0
  %v3523 = vadd.f32 %v3434, %v3522
  %3524 = vmatmul.bf16.gmra.mxu0 %v2161
  %v3525 = vpop.f32.mrf.mxu0
  %v3526 = vadd.f32 %v3437, %v3525
  %v3527 = vpop.f32.mrf.mxu0
  %v3528 = vadd.f32 %v3439, %v3527
  %3529 = vmatmul.bf16.gmra.mxu0 %v2164
  %v3530 = vpop.f32.mrf.mxu0
  %v3531 = vadd.f32 %v3442, %v3530
  %v3532 = vpop.f32.mrf.mxu0
  %v3533 = vadd.f32 %v3444, %v3532
  %3534 = vmatmul.bf16.gmra.mxu0 %v2167
  %v3535 = vpop.f32.mrf.mxu0
  %v3536 = vadd.f32 %v3447, %v3535
  %v3537 = vpop.f32.mrf.mxu0
  %v3538 = vadd.f32 %v3449, %v3537
  %3539 = vmatmul.bf16.gmra.mxu0 %v2170
  %v3540 = vpop.f32.mrf.mxu0
  %v3541 = vadd.f32 %v3452, %v3540
  %v3542 = vpop.f32.mrf.mxu0
  %v3543 = vadd.f32 %v3454, %v3542
  %3544 = vmatmul.bf16.gmra.mxu0 %v2173
  %v3545 = vpop.f32.mrf.mxu0
  %v3546 = vadd.f32 %v3457, %v3545
  %v3547 = vpop.f32.mrf.mxu0
  %v3548 = vadd.f32 %v3459, %v3547
  %3549 = vmatmul.bf16.gmra.mxu0 %v2176
  %v3550 = vpop.f32.mrf.mxu0
  %v3551 = vadd.f32 %v3462, %v3550
  %v3552 = vpop.f32.mrf.mxu0
  %v3553 = vadd.f32 %v3464, %v3552
  %3554 = vmatmul.bf16.gmra.mxu0 %v2179
  %v3555 = vpop.f32.mrf.mxu0
  %v3556 = vadd.f32 %v3467, %v3555
  %v3557 = vpop.f32.mrf.mxu0
  %v3558 = vadd.f32 %v3469, %v3557
  %3559 = vmatmul.bf16.gmra.mxu0 %v2182
  %v3560 = vpop.f32.mrf.mxu0
  %v3561 = vadd.f32 %v3472, %v3560
  %v3562 = vpop.f32.mrf.mxu0
  %v3563 = vadd.f32 %v3474, %v3562
  %3564 = vmatmul.bf16.gmra.mxu0 %v2185
  %v3565 = vpop.f32.mrf.mxu0
  %v3566 = vadd.f32 %v3477, %v3565
  %v3567 = vpop.f32.mrf.mxu0
  %v3568 = vadd.f32 %v3479, %v3567
  %3569 = vmatmul.bf16.gmra.mxu0 %v2188
  %v3570 = vpop.f32.mrf.mxu0
  %v3571 = vadd.f32 %v3482, %v3570
  %v3572 = vpop.f32.mrf.mxu0
  %v3573 = vadd.f32 %v3484, %v3572
  %3574 = vmatmul.bf16.gmra.mxu0 %v2191
  %v3575 = vpop.f32.mrf.mxu0
  %v3576 = vadd.f32 %v3487, %v3575
  %v3577 = vpop.f32.mrf.mxu0
  %v3578 = vadd.f32 %v3489, %v3577
  %3579 = vmatmul.bf16.gmra.mxu0 %v2194
  %v3580 = vpop.f32.mrf.mxu0
  %v3581 = vadd.f32 %v3492, %v3580
  %v3582 = vpop.f32.mrf.mxu0
  %v3583 = vadd.f32 %v3494, %v3582
  %3584 = vdwg.mxu0
  %v3613 = vunpack.c.l.b16 %v1805
  %v3614 = vunpack.c.h.b16 %v1805
  %v3615 = vunpack.c.l.b16 %v1806
  %v3616 = vunpack.c.h.b16 %v1806
  %v3617 = vunpack.c.l.b16 %v1807
  %v3618 = vunpack.c.h.b16 %v1807
  %v3619 = vunpack.c.l.b16 %v1808
  %v3620 = vunpack.c.h.b16 %v1808
  %v3621 = vunpack.c.l.b16 %v1809
  %v3622 = vunpack.c.h.b16 %v1809
  %v3623 = vunpack.c.l.b16 %v1810
  %v3624 = vunpack.c.h.b16 %v1810
  %v3625 = vunpack.c.l.b16 %v1811
  %v3626 = vunpack.c.h.b16 %v1811
  %v3627 = vunpack.c.l.b16 %v1812
  %v3628 = vunpack.c.h.b16 %v1812
  %v3629 = vunpack.c.l.b16 %v1813
  %v3630 = vunpack.c.h.b16 %v1813
  %v3631 = vunpack.c.l.b16 %v1814
  %v3632 = vunpack.c.h.b16 %v1814
  %v3633 = vunpack.c.l.b16 %v1815
  %v3634 = vunpack.c.h.b16 %v1815
  %v3635 = vunpack.c.l.b16 %v1816
  %v3636 = vunpack.c.h.b16 %v1816
  %v3637 = vunpack.c.l.b16 %v1817
  %v3638 = vunpack.c.h.b16 %v1817
  %v3639 = vunpack.c.l.b16 %v1818
  %v3640 = vunpack.c.h.b16 %v1818
  %v3641 = vunpack.c.l.b16 %v1819
  %v3642 = vunpack.c.h.b16 %v1819
  %v3643 = vunpack.c.l.b16 %v1820
  %v3644 = vunpack.c.h.b16 %v1820
  %v3645 = vunpack.c.l.b16 %v1821
  %v3646 = vunpack.c.h.b16 %v1821
  %v3647 = vunpack.c.l.b16 %v1822
  %v3648 = vunpack.c.h.b16 %v1822
  %v3649 = vunpack.c.l.b16 %v1823
  %v3650 = vunpack.c.h.b16 %v1823
  %v3651 = vunpack.c.l.b16 %v1824
  %v3652 = vunpack.c.h.b16 %v1824
  %v3653 = vunpack.c.l.b16 %v1825
  %v3654 = vunpack.c.h.b16 %v1825
  %v3655 = vunpack.c.l.b16 %v1826
  %v3656 = vunpack.c.h.b16 %v1826
  %v3657 = vunpack.c.l.b16 %v1827
  %v3658 = vunpack.c.h.b16 %v1827
  %v3659 = vunpack.c.l.b16 %v1828
  %v3660 = vunpack.c.h.b16 %v1828
  %v3661 = vunpack.c.l.b16 %v1829
  %v3662 = vunpack.c.h.b16 %v1829
  %v3663 = vunpack.c.l.b16 %v1830
  %v3664 = vunpack.c.h.b16 %v1830
  %v3665 = vunpack.c.l.b16 %v1831
  %v3666 = vunpack.c.h.b16 %v1831
  %v3667 = vunpack.c.l.b16 %v1832
  %v3668 = vunpack.c.h.b16 %v1832
  %v3669 = vpack.c.b16 %v3615, %v3613
  %v3670 = vpack.c.b16 %v3616, %v3614
  %v3671 = vpack.c.b16 %v3619, %v3617
  %v3672 = vpack.c.b16 %v3620, %v3618
  %v3673 = vpack.c.b16 %v3623, %v3621
  %v3674 = vpack.c.b16 %v3624, %v3622
  %v3675 = vpack.c.b16 %v3627, %v3625
  %v3676 = vpack.c.b16 %v3628, %v3626
  %v3677 = vpack.c.b16 %v3631, %v3629
  %v3678 = vpack.c.b16 %v3632, %v3630
  %v3679 = vpack.c.b16 %v3635, %v3633
  %v3680 = vpack.c.b16 %v3636, %v3634
  %v3681 = vpack.c.b16 %v3639, %v3637
  %v3682 = vpack.c.b16 %v3640, %v3638
  %v3683 = vpack.c.b16 %v3643, %v3641
  %v3684 = vpack.c.b16 %v3644, %v3642
  %v3685 = vpack.c.b16 %v3647, %v3645
  %v3686 = vpack.c.b16 %v3648, %v3646
  %v3687 = vpack.c.b16 %v3651, %v3649
  %v3688 = vpack.c.b16 %v3652, %v3650
  %v3689 = vpack.c.b16 %v3655, %v3653
  %v3690 = vpack.c.b16 %v3656, %v3654
  %v3691 = vpack.c.b16 %v3659, %v3657
  %v3692 = vpack.c.b16 %v3660, %v3658
  %v3693 = vpack.c.b16 %v3663, %v3661
  %v3694 = vpack.c.b16 %v3664, %v3662
  %v3695 = vpack.c.b16 %v3667, %v3665
  %v3696 = vpack.c.b16 %v3668, %v3666
  %3725 = vmatpush.bf16.msra.mxu0 %v3683
  %3726 = vmatpush.bf16.msra.mxu0 %v3681
  %3727 = vmatpush.bf16.msra.mxu0 %v3679
  %3728 = vmatpush.bf16.msra.mxu0 %v3677
  %3729 = vmatpush.bf16.msra.mxu0 %v3675
  %3730 = vmatpush.bf16.msra.mxu0 %v3673
  %3731 = vmatpush.bf16.msra.mxu0 %v3671
  %3732 = vmatpush.bf16.msra.mxu0 %v3669
  %3733 = vmatmul.bf16.gmra.mxu0 %v2558
  %v3734 = vpop.f32.mrf.mxu0
  %v3735 = vadd.f32 %v3328, %v3734
  %v3736 = vpop.f32.mrf.mxu0
  %v3737 = vadd.f32 %v3330, %v3736
  %3738 = vmatmul.bf16.gmra.mxu0 %v1960
  %v3739 = vpop.f32.mrf.mxu0
  %v3740 = vadd.f32 %v3333, %v3739
  %v3741 = vpop.f32.mrf.mxu0
  %v3742 = vadd.f32 %v3335, %v3741
  %3743 = vmatmul.bf16.gmra.mxu0 %v1962
  %v3744 = vpop.f32.mrf.mxu0
  %v3745 = vadd.f32 %v3338, %v3744
  %v3746 = vpop.f32.mrf.mxu0
  %v3747 = vadd.f32 %v3340, %v3746
  %3748 = vmatmul.bf16.gmra.mxu0 %v1964
  %v3749 = vpop.f32.mrf.mxu0
  %v3750 = vadd.f32 %v3343, %v3749
  %v3751 = vpop.f32.mrf.mxu0
  %v3752 = vadd.f32 %v3345, %v3751
  %3753 = vmatmul.bf16.gmra.mxu0 %v1966
  %v3754 = vpop.f32.mrf.mxu0
  %v3755 = vadd.f32 %v3348, %v3754
  %v3756 = vpop.f32.mrf.mxu0
  %v3757 = vadd.f32 %v3350, %v3756
  %3758 = vmatmul.bf16.gmra.mxu0 %v1968
  %v3759 = vpop.f32.mrf.mxu0
  %v3760 = vadd.f32 %v3353, %v3759
  %v3761 = vpop.f32.mrf.mxu0
  %v3762 = vadd.f32 %v3355, %v3761
  %3763 = vmatmul.bf16.gmra.mxu0 %v1970
  %v3764 = vpop.f32.mrf.mxu0
  %v3765 = vadd.f32 %v3358, %v3764
  %v3766 = vpop.f32.mrf.mxu0
  %v3767 = vadd.f32 %v3360, %v3766
  %3768 = vmatmul.bf16.gmra.mxu0 %v1972
  %v3769 = vpop.f32.mrf.mxu0
  %v3770 = vadd.f32 %v3363, %v3769
  %v3771 = vpop.f32.mrf.mxu0
  %v3772 = vadd.f32 %v3365, %v3771
  %3773 = vmatmul.bf16.gmra.mxu0 %v1974
  %v3774 = vpop.f32.mrf.mxu0
  %v3775 = vadd.f32 %v3368, %v3774
  %v3776 = vpop.f32.mrf.mxu0
  %v3777 = vadd.f32 %v3370, %v3776
  %3778 = vmatmul.bf16.gmra.mxu0 %v1976
  %v3779 = vpop.f32.mrf.mxu0
  %v3780 = vadd.f32 %v3373, %v3779
  %v3781 = vpop.f32.mrf.mxu0
  %v3782 = vadd.f32 %v3375, %v3781
  %3783 = vmatmul.bf16.gmra.mxu0 %v1978
  %v3784 = vpop.f32.mrf.mxu0
  %v3785 = vadd.f32 %v3378, %v3784
  %v3786 = vpop.f32.mrf.mxu0
  %v3787 = vadd.f32 %v3380, %v3786
  %3788 = vmatmul.bf16.gmra.mxu0 %v1980
  %v3789 = vpop.f32.mrf.mxu0
  %v3790 = vadd.f32 %v3383, %v3789
  %v3791 = vpop.f32.mrf.mxu0
  %v3792 = vadd.f32 %v3385, %v3791
  %3793 = vmatmul.bf16.gmra.mxu0 %v1982
  %v3794 = vpop.f32.mrf.mxu0
  %v3795 = vadd.f32 %v3388, %v3794
  %v3796 = vpop.f32.mrf.mxu0
  %v3797 = vadd.f32 %v3390, %v3796
  %3798 = vmatmul.bf16.gmra.mxu0 %v1984
  %v3799 = vpop.f32.mrf.mxu0
  %v3800 = vadd.f32 %v3393, %v3799
  %v3801 = vpop.f32.mrf.mxu0
  %v3802 = vadd.f32 %v3395, %v3801
  %3803 = vmatmul.bf16.gmra.mxu0 %v1986
  %v3804 = vpop.f32.mrf.mxu0
  %v3805 = vadd.f32 %v3398, %v3804
  %v3806 = vpop.f32.mrf.mxu0
  %v3807 = vadd.f32 %v3400, %v3806
  %3808 = vmatmul.bf16.gmra.mxu0 %v1988
  %v3809 = vpop.f32.mrf.mxu0
  %v3810 = vadd.f32 %v3403, %v3809
  %v3811 = vpop.f32.mrf.mxu0
  %v3812 = vadd.f32 %v3405, %v3811
  %3813 = vdwg.mxu0
  %3814 = vmatpush.bf16.msra.mxu0 0
  %3815 = vmatpush.bf16.msra.mxu0 0
  %3816 = vmatpush.bf16.msra.mxu0 %v3695
  %3817 = vmatpush.bf16.msra.mxu0 %v3693
  %3818 = vmatpush.bf16.msra.mxu0 %v3691
  %3819 = vmatpush.bf16.msra.mxu0 %v3689
  %3820 = vmatpush.bf16.msra.mxu0 %v3687
  %3821 = vmatpush.bf16.msra.mxu0 %v3685
  %3822 = vmatmul.bf16.gmra.mxu0 %v2702
  %v3823 = vpop.f32.mrf.mxu0
  %v3824 = vadd.f32 %v3735, %v3823
  %v3825 = vpop.f32.mrf.mxu0
  %v3826 = vadd.f32 %v3737, %v3825
  %3827 = vmatmul.bf16.gmra.mxu0 %v2149
  %v3828 = vpop.f32.mrf.mxu0
  %v3829 = vadd.f32 %v3740, %v3828
  %v3830 = vpop.f32.mrf.mxu0
  %v3831 = vadd.f32 %v3742, %v3830
  %3832 = vmatmul.bf16.gmra.mxu0 %v2152
  %v3833 = vpop.f32.mrf.mxu0
  %v3834 = vadd.f32 %v3745, %v3833
  %v3835 = vpop.f32.mrf.mxu0
  %v3836 = vadd.f32 %v3747, %v3835
  %3837 = vmatmul.bf16.gmra.mxu0 %v2155
  %v3838 = vpop.f32.mrf.mxu0
  %v3839 = vadd.f32 %v3750, %v3838
  %v3840 = vpop.f32.mrf.mxu0
  %v3841 = vadd.f32 %v3752, %v3840
  %3842 = vmatmul.bf16.gmra.mxu0 %v2158
  %v3843 = vpop.f32.mrf.mxu0
  %v3844 = vadd.f32 %v3755, %v3843
  %v3845 = vpop.f32.mrf.mxu0
  %v3846 = vadd.f32 %v3757, %v3845
  %3847 = vmatmul.bf16.gmra.mxu0 %v2161
  %v3848 = vpop.f32.mrf.mxu0
  %v3849 = vadd.f32 %v3760, %v3848
  %v3850 = vpop.f32.mrf.mxu0
  %v3851 = vadd.f32 %v3762, %v3850
  %3852 = vmatmul.bf16.gmra.mxu0 %v2164
  %v3853 = vpop.f32.mrf.mxu0
  %v3854 = vadd.f32 %v3765, %v3853
  %v3855 = vpop.f32.mrf.mxu0
  %v3856 = vadd.f32 %v3767, %v3855
  %3857 = vmatmul.bf16.gmra.mxu0 %v2167
  %v3858 = vpop.f32.mrf.mxu0
  %v3859 = vadd.f32 %v3770, %v3858
  %v3860 = vpop.f32.mrf.mxu0
  %v3861 = vadd.f32 %v3772, %v3860
  %3862 = vmatmul.bf16.gmra.mxu0 %v2170
  %v3863 = vpop.f32.mrf.mxu0
  %v3864 = vadd.f32 %v3775, %v3863
  %v3865 = vpop.f32.mrf.mxu0
  %v3866 = vadd.f32 %v3777, %v3865
  %3867 = vmatmul.bf16.gmra.mxu0 %v2173
  %v3868 = vpop.f32.mrf.mxu0
  %v3869 = vadd.f32 %v3780, %v3868
  %v3870 = vpop.f32.mrf.mxu0
  %v3871 = vadd.f32 %v3782, %v3870
  %3872 = vmatmul.bf16.gmra.mxu0 %v2176
  %v3873 = vpop.f32.mrf.mxu0
  %v3874 = vadd.f32 %v3785, %v3873
  %v3875 = vpop.f32.mrf.mxu0
  %v3876 = vadd.f32 %v3787, %v3875
  %3877 = vmatmul.bf16.gmra.mxu0 %v2179
  %v3878 = vpop.f32.mrf.mxu0
  %v3879 = vadd.f32 %v3790, %v3878
  %v3880 = vpop.f32.mrf.mxu0
  %v3881 = vadd.f32 %v3792, %v3880
  %3882 = vmatmul.bf16.gmra.mxu0 %v2182
  %v3883 = vpop.f32.mrf.mxu0
  %v3884 = vadd.f32 %v3795, %v3883
  %v3885 = vpop.f32.mrf.mxu0
  %v3886 = vadd.f32 %v3797, %v3885
  %3887 = vmatmul.bf16.gmra.mxu0 %v2185
  %v3888 = vpop.f32.mrf.mxu0
  %v3889 = vadd.f32 %v3800, %v3888
  %v3890 = vpop.f32.mrf.mxu0
  %v3891 = vadd.f32 %v3802, %v3890
  %3892 = vmatmul.bf16.gmra.mxu0 %v2188
  %v3893 = vpop.f32.mrf.mxu0
  %v3894 = vadd.f32 %v3805, %v3893
  %v3895 = vpop.f32.mrf.mxu0
  %v3896 = vadd.f32 %v3807, %v3895
  %3897 = vmatmul.bf16.gmra.mxu0 %v2191
  %v3898 = vpop.f32.mrf.mxu0
  %v3899 = vadd.f32 %v3810, %v3898
  %v3900 = vpop.f32.mrf.mxu0
  %v3901 = vadd.f32 %v3812, %v3900
  %3902 = vdwg.mxu0
  %3903 = vmatpush.bf16.msra.mxu0 %v3684
  %3904 = vmatpush.bf16.msra.mxu0 %v3682
  %3905 = vmatpush.bf16.msra.mxu0 %v3680
  %3906 = vmatpush.bf16.msra.mxu0 %v3678
  %3907 = vmatpush.bf16.msra.mxu0 %v3676
  %3908 = vmatpush.bf16.msra.mxu0 %v3674
  %3909 = vmatpush.bf16.msra.mxu0 %v3672
  %3910 = vmatpush.bf16.msra.mxu0 %v3670
  %3911 = vmatmul.bf16.gmra.mxu0 %v2558
  %v3912 = vpop.f32.mrf.mxu0
  %v3913 = vadd.f32 %v3506, %v3912
  %v3914 = vpop.f32.mrf.mxu0
  %v3915 = vadd.f32 %v3508, %v3914
  %3916 = vmatmul.bf16.gmra.mxu0 %v1960
  %v3917 = vpop.f32.mrf.mxu0
  %v3918 = vadd.f32 %v3511, %v3917
  %v3919 = vpop.f32.mrf.mxu0
  %v3920 = vadd.f32 %v3513, %v3919
  %3921 = vmatmul.bf16.gmra.mxu0 %v1962
  %v3922 = vpop.f32.mrf.mxu0
  %v3923 = vadd.f32 %v3516, %v3922
  %v3924 = vpop.f32.mrf.mxu0
  %v3925 = vadd.f32 %v3518, %v3924
  %3926 = vmatmul.bf16.gmra.mxu0 %v1964
  %v3927 = vpop.f32.mrf.mxu0
  %v3928 = vadd.f32 %v3521, %v3927
  %v3929 = vpop.f32.mrf.mxu0
  %v3930 = vadd.f32 %v3523, %v3929
  %3931 = vmatmul.bf16.gmra.mxu0 %v1966
  %v3932 = vpop.f32.mrf.mxu0
  %v3933 = vadd.f32 %v3526, %v3932
  %v3934 = vpop.f32.mrf.mxu0
  %v3935 = vadd.f32 %v3528, %v3934
  %3936 = vmatmul.bf16.gmra.mxu0 %v1968
  %v3937 = vpop.f32.mrf.mxu0
  %v3938 = vadd.f32 %v3531, %v3937
  %v3939 = vpop.f32.mrf.mxu0
  %v3940 = vadd.f32 %v3533, %v3939
  %3941 = vmatmul.bf16.gmra.mxu0 %v1970
  %v3942 = vpop.f32.mrf.mxu0
  %v3943 = vadd.f32 %v3536, %v3942
  %v3944 = vpop.f32.mrf.mxu0
  %v3945 = vadd.f32 %v3538, %v3944
  %3946 = vmatmul.bf16.gmra.mxu0 %v1972
  %v3947 = vpop.f32.mrf.mxu0
  %v3948 = vadd.f32 %v3541, %v3947
  %v3949 = vpop.f32.mrf.mxu0
  %v3950 = vadd.f32 %v3543, %v3949
  %3951 = vmatmul.bf16.gmra.mxu0 %v1974
  %v3952 = vpop.f32.mrf.mxu0
  %v3953 = vadd.f32 %v3546, %v3952
  %v3954 = vpop.f32.mrf.mxu0
  %v3955 = vadd.f32 %v3548, %v3954
  %3956 = vmatmul.bf16.gmra.mxu0 %v1976
  %v3957 = vpop.f32.mrf.mxu0
  %v3958 = vadd.f32 %v3551, %v3957
  %v3959 = vpop.f32.mrf.mxu0
  %v3960 = vadd.f32 %v3553, %v3959
  %3961 = vmatmul.bf16.gmra.mxu0 %v1978
  %v3962 = vpop.f32.mrf.mxu0
  %v3963 = vadd.f32 %v3556, %v3962
  %v3964 = vpop.f32.mrf.mxu0
  %v3965 = vadd.f32 %v3558, %v3964
  %3966 = vmatmul.bf16.gmra.mxu0 %v1980
  %v3967 = vpop.f32.mrf.mxu0
  %v3968 = vadd.f32 %v3561, %v3967
  %v3969 = vpop.f32.mrf.mxu0
  %v3970 = vadd.f32 %v3563, %v3969
  %3971 = vmatmul.bf16.gmra.mxu0 %v1982
  %v3972 = vpop.f32.mrf.mxu0
  %v3973 = vadd.f32 %v3566, %v3972
  %v3974 = vpop.f32.mrf.mxu0
  %v3975 = vadd.f32 %v3568, %v3974
  %3976 = vmatmul.bf16.gmra.mxu0 %v1984
  %v3977 = vpop.f32.mrf.mxu0
  %v3978 = vadd.f32 %v3571, %v3977
  %v3979 = vpop.f32.mrf.mxu0
  %v3980 = vadd.f32 %v3573, %v3979
  %3981 = vmatmul.bf16.gmra.mxu0 %v1986
  %v3982 = vpop.f32.mrf.mxu0
  %v3983 = vadd.f32 %v3576, %v3982
  %v3984 = vpop.f32.mrf.mxu0
  %v3985 = vadd.f32 %v3578, %v3984
  %3986 = vmatmul.bf16.gmra.mxu0 %v1988
  %v3987 = vpop.f32.mrf.mxu0
  %v3988 = vadd.f32 %v3581, %v3987
  %v3989 = vpop.f32.mrf.mxu0
  %v3990 = vadd.f32 %v3583, %v3989
  %3991 = vdwg.mxu0
  %3992 = vmatpush.bf16.msra.mxu0 0
  %3993 = vmatpush.bf16.msra.mxu0 0
  %3994 = vmatpush.bf16.msra.mxu0 %v3696
  %3995 = vmatpush.bf16.msra.mxu0 %v3694
  %3996 = vmatpush.bf16.msra.mxu0 %v3692
  %3997 = vmatpush.bf16.msra.mxu0 %v3690
  %3998 = vmatpush.bf16.msra.mxu0 %v3688
  %3999 = vmatpush.bf16.msra.mxu0 %v3686
  %4000 = vmatmul.bf16.gmra.mxu0 %v2702
  %v4001 = vpop.f32.mrf.mxu0
  %v4002 = vadd.f32 %v3913, %v4001
  %v4003 = vpop.f32.mrf.mxu0
  %v4004 = vadd.f32 %v3915, %v4003
  %4005 = vmatmul.bf16.gmra.mxu0 %v2149
  %v4006 = vpop.f32.mrf.mxu0
  %v4007 = vadd.f32 %v3918, %v4006
  %v4008 = vpop.f32.mrf.mxu0
  %v4009 = vadd.f32 %v3920, %v4008
  %4010 = vmatmul.bf16.gmra.mxu0 %v2152
  %v4011 = vpop.f32.mrf.mxu0
  %v4012 = vadd.f32 %v3923, %v4011
  %v4013 = vpop.f32.mrf.mxu0
  %v4014 = vadd.f32 %v3925, %v4013
  %4015 = vmatmul.bf16.gmra.mxu0 %v2155
  %v4016 = vpop.f32.mrf.mxu0
  %v4017 = vadd.f32 %v3928, %v4016
  %v4018 = vpop.f32.mrf.mxu0
  %v4019 = vadd.f32 %v3930, %v4018
  %4020 = vmatmul.bf16.gmra.mxu0 %v2158
  %v4021 = vpop.f32.mrf.mxu0
  %v4022 = vadd.f32 %v3933, %v4021
  %v4023 = vpop.f32.mrf.mxu0
  %v4024 = vadd.f32 %v3935, %v4023
  %4025 = vmatmul.bf16.gmra.mxu0 %v2161
  %v4026 = vpop.f32.mrf.mxu0
  %v4027 = vadd.f32 %v3938, %v4026
  %v4028 = vpop.f32.mrf.mxu0
  %v4029 = vadd.f32 %v3940, %v4028
  %4030 = vmatmul.bf16.gmra.mxu0 %v2164
  %v4031 = vpop.f32.mrf.mxu0
  %v4032 = vadd.f32 %v3943, %v4031
  %v4033 = vpop.f32.mrf.mxu0
  %v4034 = vadd.f32 %v3945, %v4033
  %4035 = vmatmul.bf16.gmra.mxu0 %v2167
  %v4036 = vpop.f32.mrf.mxu0
  %v4037 = vadd.f32 %v3948, %v4036
  %v4038 = vpop.f32.mrf.mxu0
  %v4039 = vadd.f32 %v3950, %v4038
  %4040 = vmatmul.bf16.gmra.mxu0 %v2170
  %v4041 = vpop.f32.mrf.mxu0
  %v4042 = vadd.f32 %v3953, %v4041
  %v4043 = vpop.f32.mrf.mxu0
  %v4044 = vadd.f32 %v3955, %v4043
  %4045 = vmatmul.bf16.gmra.mxu0 %v2173
  %v4046 = vpop.f32.mrf.mxu0
  %v4047 = vadd.f32 %v3958, %v4046
  %v4048 = vpop.f32.mrf.mxu0
  %v4049 = vadd.f32 %v3960, %v4048
  %4050 = vmatmul.bf16.gmra.mxu0 %v2176
  %v4051 = vpop.f32.mrf.mxu0
  %v4052 = vadd.f32 %v3963, %v4051
  %v4053 = vpop.f32.mrf.mxu0
  %v4054 = vadd.f32 %v3965, %v4053
  %4055 = vmatmul.bf16.gmra.mxu0 %v2179
  %v4056 = vpop.f32.mrf.mxu0
  %v4057 = vadd.f32 %v3968, %v4056
  %v4058 = vpop.f32.mrf.mxu0
  %v4059 = vadd.f32 %v3970, %v4058
  %4060 = vmatmul.bf16.gmra.mxu0 %v2182
  %v4061 = vpop.f32.mrf.mxu0
  %v4062 = vadd.f32 %v3973, %v4061
  %v4063 = vpop.f32.mrf.mxu0
  %v4064 = vadd.f32 %v3975, %v4063
  %4065 = vmatmul.bf16.gmra.mxu0 %v2185
  %v4066 = vpop.f32.mrf.mxu0
  %v4067 = vadd.f32 %v3978, %v4066
  %v4068 = vpop.f32.mrf.mxu0
  %v4069 = vadd.f32 %v3980, %v4068
  %4070 = vmatmul.bf16.gmra.mxu0 %v2188
  %v4071 = vpop.f32.mrf.mxu0
  %v4072 = vadd.f32 %v3983, %v4071
  %v4073 = vpop.f32.mrf.mxu0
  %v4074 = vadd.f32 %v3985, %v4073
  %4075 = vmatmul.bf16.gmra.mxu0 %v2191
  %v4076 = vpop.f32.mrf.mxu0
  %v4077 = vadd.f32 %v3988, %v4076
  %v4078 = vpop.f32.mrf.mxu0
  %v4079 = vadd.f32 %v3990, %v4078
  %4080 = vdwg.mxu0
  %v4081 = vld [vmem:[#allocation3 + $0x20] sm:$0xff]
  %v4082 = vld [vmem:[#allocation3 + $0x28] sm:$0xff]
  %v4083 = vld [vmem:[#allocation3 + $0x30] sm:$0xff]
  %v4084 = vld [vmem:[#allocation3 + $0x38] sm:$0xff]
  %v4085 = vld [vmem:[#allocation3 + $0x40] sm:$0xff]
  %v4086 = vld [vmem:[#allocation3 + $0x48] sm:$0xff]
  %v4087 = vld [vmem:[#allocation3 + $0x50] sm:$0xff]
  %v4088 = vld [vmem:[#allocation3 + $0x58] sm:$0xff]
  %v4089 = vld [vmem:[#allocation3 + $0x60] sm:$0xff]
  %v4090 = vld [vmem:[#allocation3 + $0x68] sm:$0xff]
  %v4091 = vld [vmem:[#allocation3 + $0x70] sm:$0xff]
  %v4092 = vld [vmem:[#allocation3 + $0x78] sm:$0xff]
  %v4093 = vld [vmem:[#allocation3 + $0x80] sm:$0xff]
  %v4094 = vld [vmem:[#allocation3 + $0x88] sm:$0xff]
  %v4095 = vld [vmem:[#allocation3 + $0x90] sm:$0xff]
  %v4096 = vld [vmem:[#allocation3 + $0x98] sm:$0xff]
  %v4097 = vld [vmem:[#allocation3 + $0xa0] sm:$0xff]
  %v4098 = vld [vmem:[#allocation3 + $0xa8] sm:$0xff]
  %v4099 = vld [vmem:[#allocation3 + $0xb0] sm:$0xff]
  %v4100 = vld [vmem:[#allocation3 + $0xb8] sm:$0xff]
  %v4101 = vld [vmem:[#allocation3 + $0xc0] sm:$0xff]
  %v4102 = vld [vmem:[#allocation3 + $0xc8] sm:$0xff]
  %v4103 = vld [vmem:[#allocation3 + $0xd0] sm:$0xff]
  %v4104 = vld [vmem:[#allocation3 + $0xd8] sm:$0xff]
  %v4105 = vld [vmem:[#allocation3 + $0xe0] sm:$0xff]
  %v4106 = vld [vmem:[#allocation3 + $0xe8] sm:$0xff]
  %v4107 = vld [vmem:[#allocation3 + $0xf0] sm:$0xff]
  %v4108 = vld [vmem:[#allocation3 + $0xf8] sm:$0xff]
  %v4109 = vld [vmem:[#allocation3 + $0x100] sm:$0xff]
  %v4110 = vld [vmem:[#allocation3 + $0x108] sm:$0xff]
  %v4111 = vld [vmem:[#allocation3 + $0x110] sm:$0xff]
  %v4112 = vld [vmem:[#allocation3 + $0x118] sm:$0xff]
  %s4113 = scalar_lea.vmem %s4, 448
  %v4114 = vld [vmem:[%s4113] sm:$0xff]
  %v4115 = vld [vmem:[%s4113 + $0x8] sm:$0xff]
  %v4116 = vld [vmem:[%s4113 + $0x10] sm:$0xff]
  %v4117 = vld [vmem:[%s4113 + $0x18] sm:$0xff]
  %v4118 = vld [vmem:[%s4113 + $0x20] sm:$0xff]
  %v4119 = vld [vmem:[%s4113 + $0x28] sm:$0xff]
  %v4120 = vld [vmem:[%s4113 + $0x30] sm:$0xff]
  %v4121 = vld [vmem:[%s4113 + $0x38] sm:$0xff]
  %v4122 = vld [vmem:[%s4113 + $0x40] sm:$0xff]
  %v4123 = vld [vmem:[%s4113 + $0x48] sm:$0xff]
  %v4124 = vld [vmem:[%s4113 + $0x50] sm:$0xff]
  %v4125 = vld [vmem:[%s4113 + $0x58] sm:$0xff]
  %v4126 = vld [vmem:[%s4113 + $0x60] sm:$0xff]
  %v4127 = vld [vmem:[%s4113 + $0x68] sm:$0xff]
  %v4128 = vld [vmem:[%s4113 + $0x70] sm:$0xff]
  %v4129 = vld [vmem:[%s4113 + $0x78] sm:$0xff]
  %v4130 = vld [vmem:[%s4113 + $0x80] sm:$0xff]
  %v4131 = vld [vmem:[%s4113 + $0x88] sm:$0xff]
  %v4132 = vld [vmem:[%s4113 + $0x90] sm:$0xff]
  %v4133 = vld [vmem:[%s4113 + $0x98] sm:$0xff]
  %v4134 = vld [vmem:[%s4113 + $0xa0] sm:$0xff]
  %v4135 = vld [vmem:[%s4113 + $0xa8] sm:$0xff]
  %v4136 = vld [vmem:[%s4113 + $0xb0] sm:$0xff]
  %v4137 = vld [vmem:[%s4113 + $0xb8] sm:$0xff]
  %v4138 = vld [vmem:[%s4113 + $0xc0] sm:$0xff]
  %v4139 = vld [vmem:[%s4113 + $0xc8] sm:$0xff]
  %v4140 = vld [vmem:[%s4113 + $0xd0] sm:$0xff]
  %v4141 = vld [vmem:[%s4113 + $0xd8] sm:$0xff]
  %v4174 = vunpack.c.l.b16 %v4081
  %v4175 = vunpack.c.h.b16 %v4081
  %v4176 = vunpack.c.l.b16 %v4082
  %v4177 = vunpack.c.h.b16 %v4082
  %v4178 = vunpack.c.l.b16 %v4083
  %v4179 = vunpack.c.h.b16 %v4083
  %v4180 = vunpack.c.l.b16 %v4084
  %v4181 = vunpack.c.h.b16 %v4084
  %v4182 = vunpack.c.l.b16 %v4085
  %v4183 = vunpack.c.h.b16 %v4085
  %v4184 = vunpack.c.l.b16 %v4086
  %v4185 = vunpack.c.h.b16 %v4086
  %v4186 = vunpack.c.l.b16 %v4087
  %v4187 = vunpack.c.h.b16 %v4087
  %v4188 = vunpack.c.l.b16 %v4088
  %v4189 = vunpack.c.h.b16 %v4088
  %v4190 = vunpack.c.l.b16 %v4089
  %v4191 = vunpack.c.h.b16 %v4089
  %v4192 = vunpack.c.l.b16 %v4090
  %v4193 = vunpack.c.h.b16 %v4090
  %v4194 = vunpack.c.l.b16 %v4091
  %v4195 = vunpack.c.h.b16 %v4091
  %v4196 = vunpack.c.l.b16 %v4092
  %v4197 = vunpack.c.h.b16 %v4092
  %v4198 = vunpack.c.l.b16 %v4093
  %v4199 = vunpack.c.h.b16 %v4093
  %v4200 = vunpack.c.l.b16 %v4094
  %v4201 = vunpack.c.h.b16 %v4094
  %v4202 = vunpack.c.l.b16 %v4095
  %v4203 = vunpack.c.h.b16 %v4095
  %v4204 = vunpack.c.l.b16 %v4096
  %v4205 = vunpack.c.h.b16 %v4096
  %v4206 = vunpack.c.l.b16 %v4097
  %v4207 = vunpack.c.h.b16 %v4097
  %v4208 = vunpack.c.l.b16 %v4098
  %v4209 = vunpack.c.h.b16 %v4098
  %v4210 = vunpack.c.l.b16 %v4099
  %v4211 = vunpack.c.h.b16 %v4099
  %v4212 = vunpack.c.l.b16 %v4100
  %v4213 = vunpack.c.h.b16 %v4100
  %v4214 = vunpack.c.l.b16 %v4101
  %v4215 = vunpack.c.h.b16 %v4101
  %v4216 = vunpack.c.l.b16 %v4102
  %v4217 = vunpack.c.h.b16 %v4102
  %v4218 = vunpack.c.l.b16 %v4103
  %v4219 = vunpack.c.h.b16 %v4103
  %v4220 = vunpack.c.l.b16 %v4104
  %v4221 = vunpack.c.h.b16 %v4104
  %v4222 = vunpack.c.l.b16 %v4105
  %v4223 = vunpack.c.h.b16 %v4105
  %v4224 = vunpack.c.l.b16 %v4106
  %v4225 = vunpack.c.h.b16 %v4106
  %v4226 = vunpack.c.l.b16 %v4107
  %v4227 = vunpack.c.h.b16 %v4107
  %v4228 = vunpack.c.l.b16 %v4108
  %v4229 = vunpack.c.h.b16 %v4108
  %v4230 = vunpack.c.l.b16 %v4109
  %v4231 = vunpack.c.h.b16 %v4109
  %v4232 = vunpack.c.l.b16 %v4110
  %v4233 = vunpack.c.h.b16 %v4110
  %v4234 = vunpack.c.l.b16 %v4111
  %v4235 = vunpack.c.h.b16 %v4111
  %v4236 = vunpack.c.l.b16 %v4112
  %v4237 = vunpack.c.h.b16 %v4112
  %v4238 = vpack.c.b16 %v4176, %v4174
  %v4239 = vpack.c.b16 %v4177, %v4175
  %v4240 = vpack.c.b16 %v4180, %v4178
  %v4241 = vpack.c.b16 %v4181, %v4179
  %v4242 = vpack.c.b16 %v4184, %v4182
  %v4243 = vpack.c.b16 %v4185, %v4183
  %v4244 = vpack.c.b16 %v4188, %v4186
  %v4245 = vpack.c.b16 %v4189, %v4187
  %v4246 = vpack.c.b16 %v4192, %v4190
  %v4247 = vpack.c.b16 %v4193, %v4191
  %v4248 = vpack.c.b16 %v4196, %v4194
  %v4249 = vpack.c.b16 %v4197, %v4195
  %v4250 = vpack.c.b16 %v4200, %v4198
  %v4251 = vpack.c.b16 %v4201, %v4199
  %v4252 = vpack.c.b16 %v4204, %v4202
  %v4253 = vpack.c.b16 %v4205, %v4203
  %v4254 = vpack.c.b16 %v4208, %v4206
  %v4255 = vpack.c.b16 %v4209, %v4207
  %v4256 = vpack.c.b16 %v4212, %v4210
  %v4257 = vpack.c.b16 %v4213, %v4211
  %v4258 = vpack.c.b16 %v4216, %v4214
  %v4259 = vpack.c.b16 %v4217, %v4215
  %v4260 = vpack.c.b16 %v4220, %v4218
  %v4261 = vpack.c.b16 %v4221, %v4219
  %v4262 = vpack.c.b16 %v4224, %v4222
  %v4263 = vpack.c.b16 %v4225, %v4223
  %v4264 = vpack.c.b16 %v4228, %v4226
  %v4265 = vpack.c.b16 %v4229, %v4227
  %v4266 = vpack.c.b16 %v4232, %v4230
  %v4267 = vpack.c.b16 %v4233, %v4231
  %v4268 = vpack.c.b16 %v4236, %v4234
  %v4269 = vpack.c.b16 %v4237, %v4235
  %v4314 = vunpack.c.l.b16 %v4114
  %v4315 = vunpack.c.h.b16 %v4114
  %v4316 = vunpack.c.l.b16 %v4115
  %v4317 = vunpack.c.h.b16 %v4115
  %v4318 = vunpack.c.l.b16 %v4116
  %v4319 = vunpack.c.h.b16 %v4116
  %v4320 = vunpack.c.l.b16 %v4117
  %v4321 = vunpack.c.h.b16 %v4117
  %v4322 = vunpack.c.l.b16 %v4118
  %v4323 = vunpack.c.h.b16 %v4118
  %v4324 = vunpack.c.l.b16 %v4119
  %v4325 = vunpack.c.h.b16 %v4119
  %v4326 = vunpack.c.l.b16 %v4120
  %v4327 = vunpack.c.h.b16 %v4120
  %v4328 = vunpack.c.l.b16 %v4121
  %v4329 = vunpack.c.h.b16 %v4121
  %v4330 = vunpack.c.l.b16 %v4122
  %v4331 = vunpack.c.h.b16 %v4122
  %v4332 = vunpack.c.l.b16 %v4123
  %v4333 = vunpack.c.h.b16 %v4123
  %v4334 = vunpack.c.l.b16 %v4124
  %v4335 = vunpack.c.h.b16 %v4124
  %v4336 = vunpack.c.l.b16 %v4125
  %v4337 = vunpack.c.h.b16 %v4125
  %v4338 = vunpack.c.l.b16 %v4126
  %v4339 = vunpack.c.h.b16 %v4126
  %v4340 = vunpack.c.l.b16 %v4127
  %v4341 = vunpack.c.h.b16 %v4127
  %v4342 = vunpack.c.l.b16 %v4128
  %v4343 = vunpack.c.h.b16 %v4128
  %v4344 = vunpack.c.l.b16 %v4129
  %v4345 = vunpack.c.h.b16 %v4129
  %v4346 = vunpack.c.l.b16 %v4130
  %v4347 = vunpack.c.h.b16 %v4130
  %v4348 = vunpack.c.l.b16 %v4131
  %v4349 = vunpack.c.h.b16 %v4131
  %v4350 = vunpack.c.l.b16 %v4132
  %v4351 = vunpack.c.h.b16 %v4132
  %v4352 = vunpack.c.l.b16 %v4133
  %v4353 = vunpack.c.h.b16 %v4133
  %v4354 = vunpack.c.l.b16 %v4134
  %v4355 = vunpack.c.h.b16 %v4134
  %v4356 = vunpack.c.l.b16 %v4135
  %v4357 = vunpack.c.h.b16 %v4135
  %v4358 = vunpack.c.l.b16 %v4136
  %v4359 = vunpack.c.h.b16 %v4136
  %v4360 = vunpack.c.l.b16 %v4137
  %v4361 = vunpack.c.h.b16 %v4137
  %v4362 = vunpack.c.l.b16 %v4138
  %v4363 = vunpack.c.h.b16 %v4138
  %v4364 = vunpack.c.l.b16 %v4139
  %v4365 = vunpack.c.h.b16 %v4139
  %v4366 = vunpack.c.l.b16 %v4140
  %v4367 = vunpack.c.h.b16 %v4140
  %v4368 = vunpack.c.l.b16 %v4141
  %v4369 = vunpack.c.h.b16 %v4141
  %v4370 = vpack.c.b16 %v4316, %v4314
  %v4371 = vpack.c.b16 %v4317, %v4315
  %v4372 = vpack.c.b16 %v4320, %v4318
  %v4373 = vpack.c.b16 %v4321, %v4319
  %v4374 = vpack.c.b16 %v4324, %v4322
  %v4375 = vpack.c.b16 %v4325, %v4323
  %v4376 = vpack.c.b16 %v4328, %v4326
  %v4377 = vpack.c.b16 %v4329, %v4327
  %v4378 = vpack.c.b16 %v4332, %v4330
  %v4379 = vpack.c.b16 %v4333, %v4331
  %v4380 = vpack.c.b16 %v4336, %v4334
  %v4381 = vpack.c.b16 %v4337, %v4335
  %v4382 = vpack.c.b16 %v4340, %v4338
  %v4383 = vpack.c.b16 %v4341, %v4339
  %v4384 = vpack.c.b16 %v4344, %v4342
  %v4385 = vpack.c.b16 %v4345, %v4343
  %v4386 = vpack.c.b16 %v4348, %v4346
  %v4387 = vpack.c.b16 %v4349, %v4347
  %v4388 = vpack.c.b16 %v4352, %v4350
  %v4389 = vpack.c.b16 %v4353, %v4351
  %v4390 = vpack.c.b16 %v4356, %v4354
  %v4391 = vpack.c.b16 %v4357, %v4355
  %v4392 = vpack.c.b16 %v4360, %v4358
  %v4393 = vpack.c.b16 %v4361, %v4359
  %v4394 = vpack.c.b16 %v4364, %v4362
  %v4395 = vpack.c.b16 %v4365, %v4363
  %v4396 = vpack.c.b16 %v4368, %v4366
  %v4397 = vpack.c.b16 %v4369, %v4367
  %v4427 = vsel %vm1398, %v4239, 0
  %v4430 = vsel %vm1398, %v4241, 0
  %v4433 = vsel %vm1398, %v4243, 0
  %v4436 = vsel %vm1398, %v4245, 0
  %v4439 = vsel %vm1398, %v4247, 0
  %v4442 = vsel %vm1398, %v4249, 0
  %v4445 = vsel %vm1398, %v4251, 0
  %v4448 = vsel %vm1398, %v4253, 0
  %v4451 = vsel %vm1398, %v4255, 0
  %v4454 = vsel %vm1398, %v4257, 0
  %v4457 = vsel %vm1398, %v4259, 0
  %v4460 = vsel %vm1398, %v4261, 0
  %v4463 = vsel %vm1398, %v4263, 0
  %v4466 = vsel %vm1398, %v4265, 0
  %v4469 = vsel %vm1398, %v4267, 0
  %v4472 = vsel %vm1398, %v4269, 0
  %4474 = vmatpush.bf16.msra.mxu0 %v4384
  %4475 = vmatpush.bf16.msra.mxu0 %v4382
  %4476 = vmatpush.bf16.msra.mxu0 %v4380
  %4477 = vmatpush.bf16.msra.mxu0 %v4378
  %4478 = vmatpush.bf16.msra.mxu0 %v4376
  %4479 = vmatpush.bf16.msra.mxu0 %v4374
  %4480 = vmatpush.bf16.msra.mxu0 %v4372
  %4481 = vmatpush.bf16.msra.mxu0 %v4370
  %4482 = vmatmul.bf16.gmra.mxu0 %v4238
  %v4483 = vpop.f32.mrf.mxu0
  %v4484 = vadd.f32 0.0, %v4483
  %v4485 = vpop.f32.mrf.mxu0
  %v4486 = vadd.f32 0.0, %v4485
  %4487 = vmatmul.bf16.gmra.mxu0 %v4240
  %v4488 = vpop.f32.mrf.mxu0
  %v4489 = vadd.f32 0.0, %v4488
  %v4490 = vpop.f32.mrf.mxu0
  %v4491 = vadd.f32 0.0, %v4490
  %4492 = vmatmul.bf16.gmra.mxu0 %v4242
  %v4493 = vpop.f32.mrf.mxu0
  %v4494 = vadd.f32 0.0, %v4493
  %v4495 = vpop.f32.mrf.mxu0
  %v4496 = vadd.f32 0.0, %v4495
  %4497 = vmatmul.bf16.gmra.mxu0 %v4244
  %v4498 = vpop.f32.mrf.mxu0
  %v4499 = vadd.f32 0.0, %v4498
  %v4500 = vpop.f32.mrf.mxu0
  %v4501 = vadd.f32 0.0, %v4500
  %4502 = vmatmul.bf16.gmra.mxu0 %v4246
  %v4503 = vpop.f32.mrf.mxu0
  %v4504 = vadd.f32 0.0, %v4503
  %v4505 = vpop.f32.mrf.mxu0
  %v4506 = vadd.f32 0.0, %v4505
  %4507 = vmatmul.bf16.gmra.mxu0 %v4248
  %v4508 = vpop.f32.mrf.mxu0
  %v4509 = vadd.f32 0.0, %v4508
  %v4510 = vpop.f32.mrf.mxu0
  %v4511 = vadd.f32 0.0, %v4510
  %4512 = vmatmul.bf16.gmra.mxu0 %v4250
  %v4513 = vpop.f32.mrf.mxu0
  %v4514 = vadd.f32 0.0, %v4513
  %v4515 = vpop.f32.mrf.mxu0
  %v4516 = vadd.f32 0.0, %v4515
  %4517 = vmatmul.bf16.gmra.mxu0 %v4252
  %v4518 = vpop.f32.mrf.mxu0
  %v4519 = vadd.f32 0.0, %v4518
  %v4520 = vpop.f32.mrf.mxu0
  %v4521 = vadd.f32 0.0, %v4520
  %4522 = vmatmul.bf16.gmra.mxu0 %v4254
  %v4523 = vpop.f32.mrf.mxu0
  %v4524 = vadd.f32 0.0, %v4523
  %v4525 = vpop.f32.mrf.mxu0
  %v4526 = vadd.f32 0.0, %v4525
  %4527 = vmatmul.bf16.gmra.mxu0 %v4256
  %v4528 = vpop.f32.mrf.mxu0
  %v4529 = vadd.f32 0.0, %v4528
  %v4530 = vpop.f32.mrf.mxu0
  %v4531 = vadd.f32 0.0, %v4530
  %4532 = vmatmul.bf16.gmra.mxu0 %v4258
  %v4533 = vpop.f32.mrf.mxu0
  %v4534 = vadd.f32 0.0, %v4533
  %v4535 = vpop.f32.mrf.mxu0
  %v4536 = vadd.f32 0.0, %v4535
  %4537 = vmatmul.bf16.gmra.mxu0 %v4260
  %v4538 = vpop.f32.mrf.mxu0
  %v4539 = vadd.f32 0.0, %v4538
  %v4540 = vpop.f32.mrf.mxu0
  %v4541 = vadd.f32 0.0, %v4540
  %4542 = vmatmul.bf16.gmra.mxu0 %v4262
  %v4543 = vpop.f32.mrf.mxu0
  %v4544 = vadd.f32 0.0, %v4543
  %v4545 = vpop.f32.mrf.mxu0
  %v4546 = vadd.f32 0.0, %v4545
  %4547 = vmatmul.bf16.gmra.mxu0 %v4264
  %v4548 = vpop.f32.mrf.mxu0
  %v4549 = vadd.f32 0.0, %v4548
  %v4550 = vpop.f32.mrf.mxu0
  %v4551 = vadd.f32 0.0, %v4550
  %4552 = vmatmul.bf16.gmra.mxu0 %v4266
  %v4553 = vpop.f32.mrf.mxu0
  %v4554 = vadd.f32 0.0, %v4553
  %v4555 = vpop.f32.mrf.mxu0
  %v4556 = vadd.f32 0.0, %v4555
  %4557 = vmatmul.bf16.gmra.mxu0 %v4268
  %v4558 = vpop.f32.mrf.mxu0
  %v4559 = vadd.f32 0.0, %v4558
  %v4560 = vpop.f32.mrf.mxu0
  %v4561 = vadd.f32 0.0, %v4560
  %4562 = vdwg.mxu0
  %4563 = vmatpush.bf16.msra.mxu0 0
  %4564 = vmatpush.bf16.msra.mxu0 0
  %4565 = vmatpush.bf16.msra.mxu0 %v4396
  %4566 = vmatpush.bf16.msra.mxu0 %v4394
  %4567 = vmatpush.bf16.msra.mxu0 %v4392
  %4568 = vmatpush.bf16.msra.mxu0 %v4390
  %4569 = vmatpush.bf16.msra.mxu0 %v4388
  %4570 = vmatpush.bf16.msra.mxu0 %v4386
  %4571 = vmatmul.bf16.gmra.mxu0 %v4427
  %v4572 = vpop.f32.mrf.mxu0
  %v4573 = vadd.f32 %v4484, %v4572
  %v4574 = vpop.f32.mrf.mxu0
  %v4575 = vadd.f32 %v4486, %v4574
  %4576 = vmatmul.bf16.gmra.mxu0 %v4430
  %v4577 = vpop.f32.mrf.mxu0
  %v4578 = vadd.f32 %v4489, %v4577
  %v4579 = vpop.f32.mrf.mxu0
  %v4580 = vadd.f32 %v4491, %v4579
  %4581 = vmatmul.bf16.gmra.mxu0 %v4433
  %v4582 = vpop.f32.mrf.mxu0
  %v4583 = vadd.f32 %v4494, %v4582
  %v4584 = vpop.f32.mrf.mxu0
  %v4585 = vadd.f32 %v4496, %v4584
  %4586 = vmatmul.bf16.gmra.mxu0 %v4436
  %v4587 = vpop.f32.mrf.mxu0
  %v4588 = vadd.f32 %v4499, %v4587
  %v4589 = vpop.f32.mrf.mxu0
  %v4590 = vadd.f32 %v4501, %v4589
  %4591 = vmatmul.bf16.gmra.mxu0 %v4439
  %v4592 = vpop.f32.mrf.mxu0
  %v4593 = vadd.f32 %v4504, %v4592
  %v4594 = vpop.f32.mrf.mxu0
  %v4595 = vadd.f32 %v4506, %v4594
  %4596 = vmatmul.bf16.gmra.mxu0 %v4442
  %v4597 = vpop.f32.mrf.mxu0
  %v4598 = vadd.f32 %v4509, %v4597
  %v4599 = vpop.f32.mrf.mxu0
  %v4600 = vadd.f32 %v4511, %v4599
  %4601 = vmatmul.bf16.gmra.mxu0 %v4445
  %v4602 = vpop.f32.mrf.mxu0
  %v4603 = vadd.f32 %v4514, %v4602
  %v4604 = vpop.f32.mrf.mxu0
  %v4605 = vadd.f32 %v4516, %v4604
  %4606 = vmatmul.bf16.gmra.mxu0 %v4448
  %v4607 = vpop.f32.mrf.mxu0
  %v4608 = vadd.f32 %v4519, %v4607
  %v4609 = vpop.f32.mrf.mxu0
  %v4610 = vadd.f32 %v4521, %v4609
  %4611 = vmatmul.bf16.gmra.mxu0 %v4451
  %v4612 = vpop.f32.mrf.mxu0
  %v4613 = vadd.f32 %v4524, %v4612
  %v4614 = vpop.f32.mrf.mxu0
  %v4615 = vadd.f32 %v4526, %v4614
  %4616 = vmatmul.bf16.gmra.mxu0 %v4454
  %v4617 = vpop.f32.mrf.mxu0
  %v4618 = vadd.f32 %v4529, %v4617
  %v4619 = vpop.f32.mrf.mxu0
  %v4620 = vadd.f32 %v4531, %v4619
  %4621 = vmatmul.bf16.gmra.mxu0 %v4457
  %v4622 = vpop.f32.mrf.mxu0
  %v4623 = vadd.f32 %v4534, %v4622
  %v4624 = vpop.f32.mrf.mxu0
  %v4625 = vadd.f32 %v4536, %v4624
  %4626 = vmatmul.bf16.gmra.mxu0 %v4460
  %v4627 = vpop.f32.mrf.mxu0
  %v4628 = vadd.f32 %v4539, %v4627
  %v4629 = vpop.f32.mrf.mxu0
  %v4630 = vadd.f32 %v4541, %v4629
  %4631 = vmatmul.bf16.gmra.mxu0 %v4463
  %v4632 = vpop.f32.mrf.mxu0
  %v4633 = vadd.f32 %v4544, %v4632
  %v4634 = vpop.f32.mrf.mxu0
  %v4635 = vadd.f32 %v4546, %v4634
  %4636 = vmatmul.bf16.gmra.mxu0 %v4466
  %v4637 = vpop.f32.mrf.mxu0
  %v4638 = vadd.f32 %v4549, %v4637
  %v4639 = vpop.f32.mrf.mxu0
  %v4640 = vadd.f32 %v4551, %v4639
  %4641 = vmatmul.bf16.gmra.mxu0 %v4469
  %v4642 = vpop.f32.mrf.mxu0
  %v4643 = vadd.f32 %v4554, %v4642
  %v4644 = vpop.f32.mrf.mxu0
  %v4645 = vadd.f32 %v4556, %v4644
  %4646 = vmatmul.bf16.gmra.mxu0 %v4472
  %v4647 = vpop.f32.mrf.mxu0
  %v4648 = vadd.f32 %v4559, %v4647
  %v4649 = vpop.f32.mrf.mxu0
  %v4650 = vadd.f32 %v4561, %v4649
  %4651 = vdwg.mxu0
  %4652 = vmatpush.bf16.msra.mxu0 %v4385
  %4653 = vmatpush.bf16.msra.mxu0 %v4383
  %4654 = vmatpush.bf16.msra.mxu0 %v4381
  %4655 = vmatpush.bf16.msra.mxu0 %v4379
  %4656 = vmatpush.bf16.msra.mxu0 %v4377
  %4657 = vmatpush.bf16.msra.mxu0 %v4375
  %4658 = vmatpush.bf16.msra.mxu0 %v4373
  %4659 = vmatpush.bf16.msra.mxu0 %v4371
  %4660 = vmatmul.bf16.gmra.mxu0 %v4238
  %v4661 = vpop.f32.mrf.mxu0
  %v4662 = vadd.f32 0.0, %v4661
  %v4663 = vpop.f32.mrf.mxu0
  %v4664 = vadd.f32 0.0, %v4663
  %4665 = vmatmul.bf16.gmra.mxu0 %v4240
  %v4666 = vpop.f32.mrf.mxu0
  %v4667 = vadd.f32 0.0, %v4666
  %v4668 = vpop.f32.mrf.mxu0
  %v4669 = vadd.f32 0.0, %v4668
  %4670 = vmatmul.bf16.gmra.mxu0 %v4242
  %v4671 = vpop.f32.mrf.mxu0
  %v4672 = vadd.f32 0.0, %v4671
  %v4673 = vpop.f32.mrf.mxu0
  %v4674 = vadd.f32 0.0, %v4673
  %4675 = vmatmul.bf16.gmra.mxu0 %v4244
  %v4676 = vpop.f32.mrf.mxu0
  %v4677 = vadd.f32 0.0, %v4676
  %v4678 = vpop.f32.mrf.mxu0
  %v4679 = vadd.f32 0.0, %v4678
  %4680 = vmatmul.bf16.gmra.mxu0 %v4246
  %v4681 = vpop.f32.mrf.mxu0
  %v4682 = vadd.f32 0.0, %v4681
  %v4683 = vpop.f32.mrf.mxu0
  %v4684 = vadd.f32 0.0, %v4683
  %4685 = vmatmul.bf16.gmra.mxu0 %v4248
  %v4686 = vpop.f32.mrf.mxu0
  %v4687 = vadd.f32 0.0, %v4686
  %v4688 = vpop.f32.mrf.mxu0
  %v4689 = vadd.f32 0.0, %v4688
  %4690 = vmatmul.bf16.gmra.mxu0 %v4250
  %v4691 = vpop.f32.mrf.mxu0
  %v4692 = vadd.f32 0.0, %v4691
  %v4693 = vpop.f32.mrf.mxu0
  %v4694 = vadd.f32 0.0, %v4693
  %4695 = vmatmul.bf16.gmra.mxu0 %v4252
  %v4696 = vpop.f32.mrf.mxu0
  %v4697 = vadd.f32 0.0, %v4696
  %v4698 = vpop.f32.mrf.mxu0
  %v4699 = vadd.f32 0.0, %v4698
  %4700 = vmatmul.bf16.gmra.mxu0 %v4254
  %v4701 = vpop.f32.mrf.mxu0
  %v4702 = vadd.f32 0.0, %v4701
  %v4703 = vpop.f32.mrf.mxu0
  %v4704 = vadd.f32 0.0, %v4703
  %4705 = vmatmul.bf16.gmra.mxu0 %v4256
  %v4706 = vpop.f32.mrf.mxu0
  %v4707 = vadd.f32 0.0, %v4706
  %v4708 = vpop.f32.mrf.mxu0
  %v4709 = vadd.f32 0.0, %v4708
  %4710 = vmatmul.bf16.gmra.mxu0 %v4258
  %v4711 = vpop.f32.mrf.mxu0
  %v4712 = vadd.f32 0.0, %v4711
  %v4713 = vpop.f32.mrf.mxu0
  %v4714 = vadd.f32 0.0, %v4713
  %4715 = vmatmul.bf16.gmra.mxu0 %v4260
  %v4716 = vpop.f32.mrf.mxu0
  %v4717 = vadd.f32 0.0, %v4716
  %v4718 = vpop.f32.mrf.mxu0
  %v4719 = vadd.f32 0.0, %v4718
  %4720 = vmatmul.bf16.gmra.mxu0 %v4262
  %v4721 = vpop.f32.mrf.mxu0
  %v4722 = vadd.f32 0.0, %v4721
  %v4723 = vpop.f32.mrf.mxu0
  %v4724 = vadd.f32 0.0, %v4723
  %4725 = vmatmul.bf16.gmra.mxu0 %v4264
  %v4726 = vpop.f32.mrf.mxu0
  %v4727 = vadd.f32 0.0, %v4726
  %v4728 = vpop.f32.mrf.mxu0
  %v4729 = vadd.f32 0.0, %v4728
  %4730 = vmatmul.bf16.gmra.mxu0 %v4266
  %v4731 = vpop.f32.mrf.mxu0
  %v4732 = vadd.f32 0.0, %v4731
  %v4733 = vpop.f32.mrf.mxu0
  %v4734 = vadd.f32 0.0, %v4733
  %4735 = vmatmul.bf16.gmra.mxu0 %v4268
  %v4736 = vpop.f32.mrf.mxu0
  %v4737 = vadd.f32 0.0, %v4736
  %v4738 = vpop.f32.mrf.mxu0
  %v4739 = vadd.f32 0.0, %v4738
  %4740 = vdwg.mxu0
  %4741 = vmatpush.bf16.msra.mxu0 0
  %4742 = vmatpush.bf16.msra.mxu0 0
  %4743 = vmatpush.bf16.msra.mxu0 %v4397
  %4744 = vmatpush.bf16.msra.mxu0 %v4395
  %4745 = vmatpush.bf16.msra.mxu0 %v4393
  %4746 = vmatpush.bf16.msra.mxu0 %v4391
  %4747 = vmatpush.bf16.msra.mxu0 %v4389
  %4748 = vmatpush.bf16.msra.mxu0 %v4387
  %4749 = vmatmul.bf16.gmra.mxu0 %v4427
  %v4750 = vpop.f32.mrf.mxu0
  %v4751 = vadd.f32 %v4662, %v4750
  %v4752 = vpop.f32.mrf.mxu0
  %v4753 = vadd.f32 %v4664, %v4752
  %4754 = vmatmul.bf16.gmra.mxu0 %v4430
  %v4755 = vpop.f32.mrf.mxu0
  %v4756 = vadd.f32 %v4667, %v4755
  %v4757 = vpop.f32.mrf.mxu0
  %v4758 = vadd.f32 %v4669, %v4757
  %4759 = vmatmul.bf16.gmra.mxu0 %v4433
  %v4760 = vpop.f32.mrf.mxu0
  %v4761 = vadd.f32 %v4672, %v4760
  %v4762 = vpop.f32.mrf.mxu0
  %v4763 = vadd.f32 %v4674, %v4762
  %4764 = vmatmul.bf16.gmra.mxu0 %v4436
  %v4765 = vpop.f32.mrf.mxu0
  %v4766 = vadd.f32 %v4677, %v4765
  %v4767 = vpop.f32.mrf.mxu0
  %v4768 = vadd.f32 %v4679, %v4767
  %4769 = vmatmul.bf16.gmra.mxu0 %v4439
  %v4770 = vpop.f32.mrf.mxu0
  %v4771 = vadd.f32 %v4682, %v4770
  %v4772 = vpop.f32.mrf.mxu0
  %v4773 = vadd.f32 %v4684, %v4772
  %4774 = vmatmul.bf16.gmra.mxu0 %v4442
  %v4775 = vpop.f32.mrf.mxu0
  %v4776 = vadd.f32 %v4687, %v4775
  %v4777 = vpop.f32.mrf.mxu0
  %v4778 = vadd.f32 %v4689, %v4777
  %4779 = vmatmul.bf16.gmra.mxu0 %v4445
  %v4780 = vpop.f32.mrf.mxu0
  %v4781 = vadd.f32 %v4692, %v4780
  %v4782 = vpop.f32.mrf.mxu0
  %v4783 = vadd.f32 %v4694, %v4782
  %4784 = vmatmul.bf16.gmra.mxu0 %v4448
  %v4785 = vpop.f32.mrf.mxu0
  %v4786 = vadd.f32 %v4697, %v4785
  %v4787 = vpop.f32.mrf.mxu0
  %v4788 = vadd.f32 %v4699, %v4787
  %4789 = vmatmul.bf16.gmra.mxu0 %v4451
  %v4790 = vpop.f32.mrf.mxu0
  %v4791 = vadd.f32 %v4702, %v4790
  %v4792 = vpop.f32.mrf.mxu0
  %v4793 = vadd.f32 %v4704, %v4792
  %4794 = vmatmul.bf16.gmra.mxu0 %v4454
  %v4795 = vpop.f32.mrf.mxu0
  %v4796 = vadd.f32 %v4707, %v4795
  %v4797 = vpop.f32.mrf.mxu0
  %v4798 = vadd.f32 %v4709, %v4797
  %4799 = vmatmul.bf16.gmra.mxu0 %v4457
  %v4800 = vpop.f32.mrf.mxu0
  %v4801 = vadd.f32 %v4712, %v4800
  %v4802 = vpop.f32.mrf.mxu0
  %v4803 = vadd.f32 %v4714, %v4802
  %4804 = vmatmul.bf16.gmra.mxu0 %v4460
  %v4805 = vpop.f32.mrf.mxu0
  %v4806 = vadd.f32 %v4717, %v4805
  %v4807 = vpop.f32.mrf.mxu0
  %v4808 = vadd.f32 %v4719, %v4807
  %4809 = vmatmul.bf16.gmra.mxu0 %v4463
  %v4810 = vpop.f32.mrf.mxu0
  %v4811 = vadd.f32 %v4722, %v4810
  %v4812 = vpop.f32.mrf.mxu0
  %v4813 = vadd.f32 %v4724, %v4812
  %4814 = vmatmul.bf16.gmra.mxu0 %v4466
  %v4815 = vpop.f32.mrf.mxu0
  %v4816 = vadd.f32 %v4727, %v4815
  %v4817 = vpop.f32.mrf.mxu0
  %v4818 = vadd.f32 %v4729, %v4817
  %4819 = vmatmul.bf16.gmra.mxu0 %v4469
  %v4820 = vpop.f32.mrf.mxu0
  %v4821 = vadd.f32 %v4732, %v4820
  %v4822 = vpop.f32.mrf.mxu0
  %v4823 = vadd.f32 %v4734, %v4822
  %4824 = vmatmul.bf16.gmra.mxu0 %v4472
  %v4825 = vpop.f32.mrf.mxu0
  %v4826 = vadd.f32 %v4737, %v4825
  %v4827 = vpop.f32.mrf.mxu0
  %v4828 = vadd.f32 %v4739, %v4827
  %4829 = vdwg.mxu0
  %v4830 = vadd.f32 %v2803, %v4573
  %v4831 = vadd.f32 %v2981, %v4751
  %v4832 = vadd.f32 %v2805, %v4575
  %v4833 = vadd.f32 %v2983, %v4753
  %v4834 = vadd.f32 %v2808, %v4578
  %v4835 = vadd.f32 %v2986, %v4756
  %v4836 = vadd.f32 %v2810, %v4580
  %v4837 = vadd.f32 %v2988, %v4758
  %v4838 = vadd.f32 %v2813, %v4583
  %v4839 = vadd.f32 %v2991, %v4761
  %v4840 = vadd.f32 %v2815, %v4585
  %v4841 = vadd.f32 %v2993, %v4763
  %v4842 = vadd.f32 %v2818, %v4588
  %v4843 = vadd.f32 %v2996, %v4766
  %v4844 = vadd.f32 %v2820, %v4590
  %v4845 = vadd.f32 %v2998, %v4768
  %v4846 = vadd.f32 %v2823, %v4593
  %v4847 = vadd.f32 %v3001, %v4771
  %v4848 = vadd.f32 %v2825, %v4595
  %v4849 = vadd.f32 %v3003, %v4773
  %v4850 = vadd.f32 %v2828, %v4598
  %v4851 = vadd.f32 %v3006, %v4776
  %v4852 = vadd.f32 %v2830, %v4600
  %v4853 = vadd.f32 %v3008, %v4778
  %v4854 = vadd.f32 %v2833, %v4603
  %v4855 = vadd.f32 %v3011, %v4781
  %v4856 = vadd.f32 %v2835, %v4605
  %v4857 = vadd.f32 %v3013, %v4783
  %v4858 = vadd.f32 %v2838, %v4608
  %v4859 = vadd.f32 %v3016, %v4786
  %v4860 = vadd.f32 %v2840, %v4610
  %v4861 = vadd.f32 %v3018, %v4788
  %v4862 = vadd.f32 %v2843, %v4613
  %v4863 = vadd.f32 %v3021, %v4791
  %v4864 = vadd.f32 %v2845, %v4615
  %v4865 = vadd.f32 %v3023, %v4793
  %v4866 = vadd.f32 %v2848, %v4618
  %v4867 = vadd.f32 %v3026, %v4796
  %v4868 = vadd.f32 %v2850, %v4620
  %v4869 = vadd.f32 %v3028, %v4798
  %v4870 = vadd.f32 %v2853, %v4623
  %v4871 = vadd.f32 %v3031, %v4801
  %v4872 = vadd.f32 %v2855, %v4625
  %v4873 = vadd.f32 %v3033, %v4803
  %v4874 = vadd.f32 %v2858, %v4628
  %v4875 = vadd.f32 %v3036, %v4806
  %v4876 = vadd.f32 %v2860, %v4630
  %v4877 = vadd.f32 %v3038, %v4808
  %v4878 = vadd.f32 %v2863, %v4633
  %v4879 = vadd.f32 %v3041, %v4811
  %v4880 = vadd.f32 %v2865, %v4635
  %v4881 = vadd.f32 %v3043, %v4813
  %v4882 = vadd.f32 %v2868, %v4638
  %v4883 = vadd.f32 %v3046, %v4816
  %v4884 = vadd.f32 %v2870, %v4640
  %v4885 = vadd.f32 %v3048, %v4818
  %v4886 = vadd.f32 %v2873, %v4643
  %v4887 = vadd.f32 %v3051, %v4821
  %v4888 = vadd.f32 %v2875, %v4645
  %v4889 = vadd.f32 %v3053, %v4823
  %v4890 = vadd.f32 %v2878, %v4648
  %v4891 = vadd.f32 %v3056, %v4826
  %v4892 = vadd.f32 %v2880, %v4650
  %v4893 = vadd.f32 %v3058, %v4828
  %s4894 = scalar_lea.vmem %s5, 448
  %v4895 = vld [vmem:[%s4894] sm:$0xff]
  %v4896 = vld [vmem:[%s4894 + $0x8] sm:$0xff]
  %v4897 = vld [vmem:[%s4894 + $0x10] sm:$0xff]
  %v4898 = vld [vmem:[%s4894 + $0x18] sm:$0xff]
  %v4899 = vld [vmem:[%s4894 + $0x20] sm:$0xff]
  %v4900 = vld [vmem:[%s4894 + $0x28] sm:$0xff]
  %v4901 = vld [vmem:[%s4894 + $0x30] sm:$0xff]
  %v4902 = vld [vmem:[%s4894 + $0x38] sm:$0xff]
  %v4903 = vld [vmem:[%s4894 + $0x40] sm:$0xff]
  %v4904 = vld [vmem:[%s4894 + $0x48] sm:$0xff]
  %v4905 = vld [vmem:[%s4894 + $0x50] sm:$0xff]
  %v4906 = vld [vmem:[%s4894 + $0x58] sm:$0xff]
  %v4907 = vld [vmem:[%s4894 + $0x60] sm:$0xff]
  %v4908 = vld [vmem:[%s4894 + $0x68] sm:$0xff]
  %v4909 = vld [vmem:[%s4894 + $0x70] sm:$0xff]
  %v4910 = vld [vmem:[%s4894 + $0x78] sm:$0xff]
  %v4911 = vld [vmem:[%s4894 + $0x80] sm:$0xff]
  %v4912 = vld [vmem:[%s4894 + $0x88] sm:$0xff]
  %v4913 = vld [vmem:[%s4894 + $0x90] sm:$0xff]
  %v4914 = vld [vmem:[%s4894 + $0x98] sm:$0xff]
  %v4915 = vld [vmem:[%s4894 + $0xa0] sm:$0xff]
  %v4916 = vld [vmem:[%s4894 + $0xa8] sm:$0xff]
  %v4917 = vld [vmem:[%s4894 + $0xb0] sm:$0xff]
  %v4918 = vld [vmem:[%s4894 + $0xb8] sm:$0xff]
  %v4919 = vld [vmem:[%s4894 + $0xc0] sm:$0xff]
  %v4920 = vld [vmem:[%s4894 + $0xc8] sm:$0xff]
  %v4921 = vld [vmem:[%s4894 + $0xd0] sm:$0xff]
  %v4922 = vld [vmem:[%s4894 + $0xd8] sm:$0xff]
  %v4951 = vunpack.c.l.b16 %v4895
  %v4952 = vunpack.c.h.b16 %v4895
  %v4953 = vunpack.c.l.b16 %v4896
  %v4954 = vunpack.c.h.b16 %v4896
  %v4955 = vunpack.c.l.b16 %v4897
  %v4956 = vunpack.c.h.b16 %v4897
  %v4957 = vunpack.c.l.b16 %v4898
  %v4958 = vunpack.c.h.b16 %v4898
  %v4959 = vunpack.c.l.b16 %v4899
  %v4960 = vunpack.c.h.b16 %v4899
  %v4961 = vunpack.c.l.b16 %v4900
  %v4962 = vunpack.c.h.b16 %v4900
  %v4963 = vunpack.c.l.b16 %v4901
  %v4964 = vunpack.c.h.b16 %v4901
  %v4965 = vunpack.c.l.b16 %v4902
  %v4966 = vunpack.c.h.b16 %v4902
  %v4967 = vunpack.c.l.b16 %v4903
  %v4968 = vunpack.c.h.b16 %v4903
  %v4969 = vunpack.c.l.b16 %v4904
  %v4970 = vunpack.c.h.b16 %v4904
  %v4971 = vunpack.c.l.b16 %v4905
  %v4972 = vunpack.c.h.b16 %v4905
  %v4973 = vunpack.c.l.b16 %v4906
  %v4974 = vunpack.c.h.b16 %v4906
  %v4975 = vunpack.c.l.b16 %v4907
  %v4976 = vunpack.c.h.b16 %v4907
  %v4977 = vunpack.c.l.b16 %v4908
  %v4978 = vunpack.c.h.b16 %v4908
  %v4979 = vunpack.c.l.b16 %v4909
  %v4980 = vunpack.c.h.b16 %v4909
  %v4981 = vunpack.c.l.b16 %v4910
  %v4982 = vunpack.c.h.b16 %v4910
  %v4983 = vunpack.c.l.b16 %v4911
  %v4984 = vunpack.c.h.b16 %v4911
  %v4985 = vunpack.c.l.b16 %v4912
  %v4986 = vunpack.c.h.b16 %v4912
  %v4987 = vunpack.c.l.b16 %v4913
  %v4988 = vunpack.c.h.b16 %v4913
  %v4989 = vunpack.c.l.b16 %v4914
  %v4990 = vunpack.c.h.b16 %v4914
  %v4991 = vunpack.c.l.b16 %v4915
  %v4992 = vunpack.c.h.b16 %v4915
  %v4993 = vunpack.c.l.b16 %v4916
  %v4994 = vunpack.c.h.b16 %v4916
  %v4995 = vunpack.c.l.b16 %v4917
  %v4996 = vunpack.c.h.b16 %v4917
  %v4997 = vunpack.c.l.b16 %v4918
  %v4998 = vunpack.c.h.b16 %v4918
  %v4999 = vunpack.c.l.b16 %v4919
  %v5000 = vunpack.c.h.b16 %v4919
  %v5001 = vunpack.c.l.b16 %v4920
  %v5002 = vunpack.c.h.b16 %v4920
  %v5003 = vunpack.c.l.b16 %v4921
  %v5004 = vunpack.c.h.b16 %v4921
  %v5005 = vunpack.c.l.b16 %v4922
  %v5006 = vunpack.c.h.b16 %v4922
  %v5007 = vpack.c.b16 %v4953, %v4951
  %v5008 = vpack.c.b16 %v4954, %v4952
  %v5009 = vpack.c.b16 %v4957, %v4955
  %v5010 = vpack.c.b16 %v4958, %v4956
  %v5011 = vpack.c.b16 %v4961, %v4959
  %v5012 = vpack.c.b16 %v4962, %v4960
  %v5013 = vpack.c.b16 %v4965, %v4963
  %v5014 = vpack.c.b16 %v4966, %v4964
  %v5015 = vpack.c.b16 %v4969, %v4967
  %v5016 = vpack.c.b16 %v4970, %v4968
  %v5017 = vpack.c.b16 %v4973, %v4971
  %v5018 = vpack.c.b16 %v4974, %v4972
  %v5019 = vpack.c.b16 %v4977, %v4975
  %v5020 = vpack.c.b16 %v4978, %v4976
  %v5021 = vpack.c.b16 %v4981, %v4979
  %v5022 = vpack.c.b16 %v4982, %v4980
  %v5023 = vpack.c.b16 %v4985, %v4983
  %v5024 = vpack.c.b16 %v4986, %v4984
  %v5025 = vpack.c.b16 %v4989, %v4987
  %v5026 = vpack.c.b16 %v4990, %v4988
  %v5027 = vpack.c.b16 %v4993, %v4991
  %v5028 = vpack.c.b16 %v4994, %v4992
  %v5029 = vpack.c.b16 %v4997, %v4995
  %v5030 = vpack.c.b16 %v4998, %v4996
  %v5031 = vpack.c.b16 %v5001, %v4999
  %v5032 = vpack.c.b16 %v5002, %v5000
  %v5033 = vpack.c.b16 %v5005, %v5003
  %v5034 = vpack.c.b16 %v5006, %v5004
  %5063 = vmatpush.bf16.msra.mxu0 %v5021
  %5064 = vmatpush.bf16.msra.mxu0 %v5019
  %5065 = vmatpush.bf16.msra.mxu0 %v5017
  %5066 = vmatpush.bf16.msra.mxu0 %v5015
  %5067 = vmatpush.bf16.msra.mxu0 %v5013
  %5068 = vmatpush.bf16.msra.mxu0 %v5011
  %5069 = vmatpush.bf16.msra.mxu0 %v5009
  %5070 = vmatpush.bf16.msra.mxu0 %v5007
  %5071 = vmatmul.bf16.gmra.mxu0 %v4238
  %v5072 = vpop.f32.mrf.mxu0
  %v5073 = vadd.f32 0.0, %v5072
  %v5074 = vpop.f32.mrf.mxu0
  %v5075 = vadd.f32 0.0, %v5074
  %5076 = vmatmul.bf16.gmra.mxu0 %v4240
  %v5077 = vpop.f32.mrf.mxu0
  %v5078 = vadd.f32 0.0, %v5077
  %v5079 = vpop.f32.mrf.mxu0
  %v5080 = vadd.f32 0.0, %v5079
  %5081 = vmatmul.bf16.gmra.mxu0 %v4242
  %v5082 = vpop.f32.mrf.mxu0
  %v5083 = vadd.f32 0.0, %v5082
  %v5084 = vpop.f32.mrf.mxu0
  %v5085 = vadd.f32 0.0, %v5084
  %5086 = vmatmul.bf16.gmra.mxu0 %v4244
  %v5087 = vpop.f32.mrf.mxu0
  %v5088 = vadd.f32 0.0, %v5087
  %v5089 = vpop.f32.mrf.mxu0
  %v5090 = vadd.f32 0.0, %v5089
  %5091 = vmatmul.bf16.gmra.mxu0 %v4246
  %v5092 = vpop.f32.mrf.mxu0
  %v5093 = vadd.f32 0.0, %v5092
  %v5094 = vpop.f32.mrf.mxu0
  %v5095 = vadd.f32 0.0, %v5094
  %5096 = vmatmul.bf16.gmra.mxu0 %v4248
  %v5097 = vpop.f32.mrf.mxu0
  %v5098 = vadd.f32 0.0, %v5097
  %v5099 = vpop.f32.mrf.mxu0
  %v5100 = vadd.f32 0.0, %v5099
  %5101 = vmatmul.bf16.gmra.mxu0 %v4250
  %v5102 = vpop.f32.mrf.mxu0
  %v5103 = vadd.f32 0.0, %v5102
  %v5104 = vpop.f32.mrf.mxu0
  %v5105 = vadd.f32 0.0, %v5104
  %5106 = vmatmul.bf16.gmra.mxu0 %v4252
  %v5107 = vpop.f32.mrf.mxu0
  %v5108 = vadd.f32 0.0, %v5107
  %v5109 = vpop.f32.mrf.mxu0
  %v5110 = vadd.f32 0.0, %v5109
  %5111 = vmatmul.bf16.gmra.mxu0 %v4254
  %v5112 = vpop.f32.mrf.mxu0
  %v5113 = vadd.f32 0.0, %v5112
  %v5114 = vpop.f32.mrf.mxu0
  %v5115 = vadd.f32 0.0, %v5114
  %5116 = vmatmul.bf16.gmra.mxu0 %v4256
  %v5117 = vpop.f32.mrf.mxu0
  %v5118 = vadd.f32 0.0, %v5117
  %v5119 = vpop.f32.mrf.mxu0
  %v5120 = vadd.f32 0.0, %v5119
  %5121 = vmatmul.bf16.gmra.mxu0 %v4258
  %v5122 = vpop.f32.mrf.mxu0
  %v5123 = vadd.f32 0.0, %v5122
  %v5124 = vpop.f32.mrf.mxu0
  %v5125 = vadd.f32 0.0, %v5124
  %5126 = vmatmul.bf16.gmra.mxu0 %v4260
  %v5127 = vpop.f32.mrf.mxu0
  %v5128 = vadd.f32 0.0, %v5127
  %v5129 = vpop.f32.mrf.mxu0
  %v5130 = vadd.f32 0.0, %v5129
  %5131 = vmatmul.bf16.gmra.mxu0 %v4262
  %v5132 = vpop.f32.mrf.mxu0
  %v5133 = vadd.f32 0.0, %v5132
  %v5134 = vpop.f32.mrf.mxu0
  %v5135 = vadd.f32 0.0, %v5134
  %5136 = vmatmul.bf16.gmra.mxu0 %v4264
  %v5137 = vpop.f32.mrf.mxu0
  %v5138 = vadd.f32 0.0, %v5137
  %v5139 = vpop.f32.mrf.mxu0
  %v5140 = vadd.f32 0.0, %v5139
  %5141 = vmatmul.bf16.gmra.mxu0 %v4266
  %v5142 = vpop.f32.mrf.mxu0
  %v5143 = vadd.f32 0.0, %v5142
  %v5144 = vpop.f32.mrf.mxu0
  %v5145 = vadd.f32 0.0, %v5144
  %5146 = vmatmul.bf16.gmra.mxu0 %v4268
  %v5147 = vpop.f32.mrf.mxu0
  %v5148 = vadd.f32 0.0, %v5147
  %v5149 = vpop.f32.mrf.mxu0
  %v5150 = vadd.f32 0.0, %v5149
  %5151 = vdwg.mxu0
  %5152 = vmatpush.bf16.msra.mxu0 0
  %5153 = vmatpush.bf16.msra.mxu0 0
  %5154 = vmatpush.bf16.msra.mxu0 %v5033
  %5155 = vmatpush.bf16.msra.mxu0 %v5031
  %5156 = vmatpush.bf16.msra.mxu0 %v5029
  %5157 = vmatpush.bf16.msra.mxu0 %v5027
  %5158 = vmatpush.bf16.msra.mxu0 %v5025
  %5159 = vmatpush.bf16.msra.mxu0 %v5023
  %5160 = vmatmul.bf16.gmra.mxu0 %v4427
  %v5161 = vpop.f32.mrf.mxu0
  %v5162 = vadd.f32 %v5073, %v5161
  %v5163 = vpop.f32.mrf.mxu0
  %v5164 = vadd.f32 %v5075, %v5163
  %5165 = vmatmul.bf16.gmra.mxu0 %v4430
  %v5166 = vpop.f32.mrf.mxu0
  %v5167 = vadd.f32 %v5078, %v5166
  %v5168 = vpop.f32.mrf.mxu0
  %v5169 = vadd.f32 %v5080, %v5168
  %5170 = vmatmul.bf16.gmra.mxu0 %v4433
  %v5171 = vpop.f32.mrf.mxu0
  %v5172 = vadd.f32 %v5083, %v5171
  %v5173 = vpop.f32.mrf.mxu0
  %v5174 = vadd.f32 %v5085, %v5173
  %5175 = vmatmul.bf16.gmra.mxu0 %v4436
  %v5176 = vpop.f32.mrf.mxu0
  %v5177 = vadd.f32 %v5088, %v5176
  %v5178 = vpop.f32.mrf.mxu0
  %v5179 = vadd.f32 %v5090, %v5178
  %5180 = vmatmul.bf16.gmra.mxu0 %v4439
  %v5181 = vpop.f32.mrf.mxu0
  %v5182 = vadd.f32 %v5093, %v5181
  %v5183 = vpop.f32.mrf.mxu0
  %v5184 = vadd.f32 %v5095, %v5183
  %5185 = vmatmul.bf16.gmra.mxu0 %v4442
  %v5186 = vpop.f32.mrf.mxu0
  %v5187 = vadd.f32 %v5098, %v5186
  %v5188 = vpop.f32.mrf.mxu0
  %v5189 = vadd.f32 %v5100, %v5188
  %5190 = vmatmul.bf16.gmra.mxu0 %v4445
  %v5191 = vpop.f32.mrf.mxu0
  %v5192 = vadd.f32 %v5103, %v5191
  %v5193 = vpop.f32.mrf.mxu0
  %v5194 = vadd.f32 %v5105, %v5193
  %5195 = vmatmul.bf16.gmra.mxu0 %v4448
  %v5196 = vpop.f32.mrf.mxu0
  %v5197 = vadd.f32 %v5108, %v5196
  %v5198 = vpop.f32.mrf.mxu0
  %v5199 = vadd.f32 %v5110, %v5198
  %5200 = vmatmul.bf16.gmra.mxu0 %v4451
  %v5201 = vpop.f32.mrf.mxu0
  %v5202 = vadd.f32 %v5113, %v5201
  %v5203 = vpop.f32.mrf.mxu0
  %v5204 = vadd.f32 %v5115, %v5203
  %5205 = vmatmul.bf16.gmra.mxu0 %v4454
  %v5206 = vpop.f32.mrf.mxu0
  %v5207 = vadd.f32 %v5118, %v5206
  %v5208 = vpop.f32.mrf.mxu0
  %v5209 = vadd.f32 %v5120, %v5208
  %5210 = vmatmul.bf16.gmra.mxu0 %v4457
  %v5211 = vpop.f32.mrf.mxu0
  %v5212 = vadd.f32 %v5123, %v5211
  %v5213 = vpop.f32.mrf.mxu0
  %v5214 = vadd.f32 %v5125, %v5213
  %5215 = vmatmul.bf16.gmra.mxu0 %v4460
  %v5216 = vpop.f32.mrf.mxu0
  %v5217 = vadd.f32 %v5128, %v5216
  %v5218 = vpop.f32.mrf.mxu0
  %v5219 = vadd.f32 %v5130, %v5218
  %5220 = vmatmul.bf16.gmra.mxu0 %v4463
  %v5221 = vpop.f32.mrf.mxu0
  %v5222 = vadd.f32 %v5133, %v5221
  %v5223 = vpop.f32.mrf.mxu0
  %v5224 = vadd.f32 %v5135, %v5223
  %5225 = vmatmul.bf16.gmra.mxu0 %v4466
  %v5226 = vpop.f32.mrf.mxu0
  %v5227 = vadd.f32 %v5138, %v5226
  %v5228 = vpop.f32.mrf.mxu0
  %v5229 = vadd.f32 %v5140, %v5228
  %5230 = vmatmul.bf16.gmra.mxu0 %v4469
  %v5231 = vpop.f32.mrf.mxu0
  %v5232 = vadd.f32 %v5143, %v5231
  %v5233 = vpop.f32.mrf.mxu0
  %v5234 = vadd.f32 %v5145, %v5233
  %5235 = vmatmul.bf16.gmra.mxu0 %v4472
  %v5236 = vpop.f32.mrf.mxu0
  %v5237 = vadd.f32 %v5148, %v5236
  %v5238 = vpop.f32.mrf.mxu0
  %v5239 = vadd.f32 %v5150, %v5238
  %5240 = vdwg.mxu0
  %5241 = vmatpush.bf16.msra.mxu0 %v5022
  %5242 = vmatpush.bf16.msra.mxu0 %v5020
  %5243 = vmatpush.bf16.msra.mxu0 %v5018
  %5244 = vmatpush.bf16.msra.mxu0 %v5016
  %5245 = vmatpush.bf16.msra.mxu0 %v5014
  %5246 = vmatpush.bf16.msra.mxu0 %v5012
  %5247 = vmatpush.bf16.msra.mxu0 %v5010
  %5248 = vmatpush.bf16.msra.mxu0 %v5008
  %5249 = vmatmul.bf16.gmra.mxu0 %v4238
  %v5250 = vpop.f32.mrf.mxu0
  %v5251 = vadd.f32 0.0, %v5250
  %v5252 = vpop.f32.mrf.mxu0
  %v5253 = vadd.f32 0.0, %v5252
  %5254 = vmatmul.bf16.gmra.mxu0 %v4240
  %v5255 = vpop.f32.mrf.mxu0
  %v5256 = vadd.f32 0.0, %v5255
  %v5257 = vpop.f32.mrf.mxu0
  %v5258 = vadd.f32 0.0, %v5257
  %5259 = vmatmul.bf16.gmra.mxu0 %v4242
  %v5260 = vpop.f32.mrf.mxu0
  %v5261 = vadd.f32 0.0, %v5260
  %v5262 = vpop.f32.mrf.mxu0
  %v5263 = vadd.f32 0.0, %v5262
  %5264 = vmatmul.bf16.gmra.mxu0 %v4244
  %v5265 = vpop.f32.mrf.mxu0
  %v5266 = vadd.f32 0.0, %v5265
  %v5267 = vpop.f32.mrf.mxu0
  %v5268 = vadd.f32 0.0, %v5267
  %5269 = vmatmul.bf16.gmra.mxu0 %v4246
  %v5270 = vpop.f32.mrf.mxu0
  %v5271 = vadd.f32 0.0, %v5270
  %v5272 = vpop.f32.mrf.mxu0
  %v5273 = vadd.f32 0.0, %v5272
  %5274 = vmatmul.bf16.gmra.mxu0 %v4248
  %v5275 = vpop.f32.mrf.mxu0
  %v5276 = vadd.f32 0.0, %v5275
  %v5277 = vpop.f32.mrf.mxu0
  %v5278 = vadd.f32 0.0, %v5277
  %5279 = vmatmul.bf16.gmra.mxu0 %v4250
  %v5280 = vpop.f32.mrf.mxu0
  %v5281 = vadd.f32 0.0, %v5280
  %v5282 = vpop.f32.mrf.mxu0
  %v5283 = vadd.f32 0.0, %v5282
  %5284 = vmatmul.bf16.gmra.mxu0 %v4252
  %v5285 = vpop.f32.mrf.mxu0
  %v5286 = vadd.f32 0.0, %v5285
  %v5287 = vpop.f32.mrf.mxu0
  %v5288 = vadd.f32 0.0, %v5287
  %5289 = vmatmul.bf16.gmra.mxu0 %v4254
  %v5290 = vpop.f32.mrf.mxu0
  %v5291 = vadd.f32 0.0, %v5290
  %v5292 = vpop.f32.mrf.mxu0
  %v5293 = vadd.f32 0.0, %v5292
  %5294 = vmatmul.bf16.gmra.mxu0 %v4256
  %v5295 = vpop.f32.mrf.mxu0
  %v5296 = vadd.f32 0.0, %v5295
  %v5297 = vpop.f32.mrf.mxu0
  %v5298 = vadd.f32 0.0, %v5297
  %5299 = vmatmul.bf16.gmra.mxu0 %v4258
  %v5300 = vpop.f32.mrf.mxu0
  %v5301 = vadd.f32 0.0, %v5300
  %v5302 = vpop.f32.mrf.mxu0
  %v5303 = vadd.f32 0.0, %v5302
  %5304 = vmatmul.bf16.gmra.mxu0 %v4260
  %v5305 = vpop.f32.mrf.mxu0
  %v5306 = vadd.f32 0.0, %v5305
  %v5307 = vpop.f32.mrf.mxu0
  %v5308 = vadd.f32 0.0, %v5307
  %5309 = vmatmul.bf16.gmra.mxu0 %v4262
  %v5310 = vpop.f32.mrf.mxu0
  %v5311 = vadd.f32 0.0, %v5310
  %v5312 = vpop.f32.mrf.mxu0
  %v5313 = vadd.f32 0.0, %v5312
  %5314 = vmatmul.bf16.gmra.mxu0 %v4264
  %v5315 = vpop.f32.mrf.mxu0
  %v5316 = vadd.f32 0.0, %v5315
  %v5317 = vpop.f32.mrf.mxu0
  %v5318 = vadd.f32 0.0, %v5317
  %5319 = vmatmul.bf16.gmra.mxu0 %v4266
  %v5320 = vpop.f32.mrf.mxu0
  %v5321 = vadd.f32 0.0, %v5320
  %v5322 = vpop.f32.mrf.mxu0
  %v5323 = vadd.f32 0.0, %v5322
  %5324 = vmatmul.bf16.gmra.mxu0 %v4268
  %v5325 = vpop.f32.mrf.mxu0
  %v5326 = vadd.f32 0.0, %v5325
  %v5327 = vpop.f32.mrf.mxu0
  %v5328 = vadd.f32 0.0, %v5327
  %5329 = vdwg.mxu0
  %5330 = vmatpush.bf16.msra.mxu0 0
  %5331 = vmatpush.bf16.msra.mxu0 0
  %5332 = vmatpush.bf16.msra.mxu0 %v5034
  %5333 = vmatpush.bf16.msra.mxu0 %v5032
  %5334 = vmatpush.bf16.msra.mxu0 %v5030
  %5335 = vmatpush.bf16.msra.mxu0 %v5028
  %5336 = vmatpush.bf16.msra.mxu0 %v5026
  %5337 = vmatpush.bf16.msra.mxu0 %v5024
  %5338 = vmatmul.bf16.gmra.mxu0 %v4427
  %v5339 = vpop.f32.mrf.mxu0
  %v5340 = vadd.f32 %v5251, %v5339
  %v5341 = vpop.f32.mrf.mxu0
  %v5342 = vadd.f32 %v5253, %v5341
  %5343 = vmatmul.bf16.gmra.mxu0 %v4430
  %v5344 = vpop.f32.mrf.mxu0
  %v5345 = vadd.f32 %v5256, %v5344
  %v5346 = vpop.f32.mrf.mxu0
  %v5347 = vadd.f32 %v5258, %v5346
  %5348 = vmatmul.bf16.gmra.mxu0 %v4433
  %v5349 = vpop.f32.mrf.mxu0
  %v5350 = vadd.f32 %v5261, %v5349
  %v5351 = vpop.f32.mrf.mxu0
  %v5352 = vadd.f32 %v5263, %v5351
  %5353 = vmatmul.bf16.gmra.mxu0 %v4436
  %v5354 = vpop.f32.mrf.mxu0
  %v5355 = vadd.f32 %v5266, %v5354
  %v5356 = vpop.f32.mrf.mxu0
  %v5357 = vadd.f32 %v5268, %v5356
  %5358 = vmatmul.bf16.gmra.mxu0 %v4439
  %v5359 = vpop.f32.mrf.mxu0
  %v5360 = vadd.f32 %v5271, %v5359
  %v5361 = vpop.f32.mrf.mxu0
  %v5362 = vadd.f32 %v5273, %v5361
  %5363 = vmatmul.bf16.gmra.mxu0 %v4442
  %v5364 = vpop.f32.mrf.mxu0
  %v5365 = vadd.f32 %v5276, %v5364
  %v5366 = vpop.f32.mrf.mxu0
  %v5367 = vadd.f32 %v5278, %v5366
  %5368 = vmatmul.bf16.gmra.mxu0 %v4445
  %v5369 = vpop.f32.mrf.mxu0
  %v5370 = vadd.f32 %v5281, %v5369
  %v5371 = vpop.f32.mrf.mxu0
  %v5372 = vadd.f32 %v5283, %v5371
  %5373 = vmatmul.bf16.gmra.mxu0 %v4448
  %v5374 = vpop.f32.mrf.mxu0
  %v5375 = vadd.f32 %v5286, %v5374
  %v5376 = vpop.f32.mrf.mxu0
  %v5377 = vadd.f32 %v5288, %v5376
  %5378 = vmatmul.bf16.gmra.mxu0 %v4451
  %v5379 = vpop.f32.mrf.mxu0
  %v5380 = vadd.f32 %v5291, %v5379
  %v5381 = vpop.f32.mrf.mxu0
  %v5382 = vadd.f32 %v5293, %v5381
  %5383 = vmatmul.bf16.gmra.mxu0 %v4454
  %v5384 = vpop.f32.mrf.mxu0
  %v5385 = vadd.f32 %v5296, %v5384
  %v5386 = vpop.f32.mrf.mxu0
  %v5387 = vadd.f32 %v5298, %v5386
  %5388 = vmatmul.bf16.gmra.mxu0 %v4457
  %v5389 = vpop.f32.mrf.mxu0
  %v5390 = vadd.f32 %v5301, %v5389
  %v5391 = vpop.f32.mrf.mxu0
  %v5392 = vadd.f32 %v5303, %v5391
  %5393 = vmatmul.bf16.gmra.mxu0 %v4460
  %v5394 = vpop.f32.mrf.mxu0
  %v5395 = vadd.f32 %v5306, %v5394
  %v5396 = vpop.f32.mrf.mxu0
  %v5397 = vadd.f32 %v5308, %v5396
  %5398 = vmatmul.bf16.gmra.mxu0 %v4463
  %v5399 = vpop.f32.mrf.mxu0
  %v5400 = vadd.f32 %v5311, %v5399
  %v5401 = vpop.f32.mrf.mxu0
  %v5402 = vadd.f32 %v5313, %v5401
  %5403 = vmatmul.bf16.gmra.mxu0 %v4466
  %v5404 = vpop.f32.mrf.mxu0
  %v5405 = vadd.f32 %v5316, %v5404
  %v5406 = vpop.f32.mrf.mxu0
  %v5407 = vadd.f32 %v5318, %v5406
  %5408 = vmatmul.bf16.gmra.mxu0 %v4469
  %v5409 = vpop.f32.mrf.mxu0
  %v5410 = vadd.f32 %v5321, %v5409
  %v5411 = vpop.f32.mrf.mxu0
  %v5412 = vadd.f32 %v5323, %v5411
  %5413 = vmatmul.bf16.gmra.mxu0 %v4472
  %v5414 = vpop.f32.mrf.mxu0
  %v5415 = vadd.f32 %v5326, %v5414
  %v5416 = vpop.f32.mrf.mxu0
  %v5417 = vadd.f32 %v5328, %v5416
  %5418 = vdwg.mxu0
  %v5419 = vadd.f32 %v3824, %v5162
  %v5420 = vadd.f32 %v4002, %v5340
  %v5421 = vadd.f32 %v3826, %v5164
  %v5422 = vadd.f32 %v4004, %v5342
  %v5423 = vadd.f32 %v3829, %v5167
  %v5424 = vadd.f32 %v4007, %v5345
  %v5425 = vadd.f32 %v3831, %v5169
  %v5426 = vadd.f32 %v4009, %v5347
  %v5427 = vadd.f32 %v3834, %v5172
  %v5428 = vadd.f32 %v4012, %v5350
  %v5429 = vadd.f32 %v3836, %v5174
  %v5430 = vadd.f32 %v4014, %v5352
  %v5431 = vadd.f32 %v3839, %v5177
  %v5432 = vadd.f32 %v4017, %v5355
  %v5433 = vadd.f32 %v3841, %v5179
  %v5434 = vadd.f32 %v4019, %v5357
  %v5435 = vadd.f32 %v3844, %v5182
  %v5436 = vadd.f32 %v4022, %v5360
  %v5437 = vadd.f32 %v3846, %v5184
  %v5438 = vadd.f32 %v4024, %v5362
  %v5439 = vadd.f32 %v3849, %v5187
  %v5440 = vadd.f32 %v4027, %v5365
  %v5441 = vadd.f32 %v3851, %v5189
  %v5442 = vadd.f32 %v4029, %v5367
  %v5443 = vadd.f32 %v3854, %v5192
  %v5444 = vadd.f32 %v4032, %v5370
  %v5445 = vadd.f32 %v3856, %v5194
  %v5446 = vadd.f32 %v4034, %v5372
  %v5447 = vadd.f32 %v3859, %v5197
  %v5448 = vadd.f32 %v4037, %v5375
  %v5449 = vadd.f32 %v3861, %v5199
  %v5450 = vadd.f32 %v4039, %v5377
  %v5451 = vadd.f32 %v3864, %v5202
  %v5452 = vadd.f32 %v4042, %v5380
  %v5453 = vadd.f32 %v3866, %v5204
  %v5454 = vadd.f32 %v4044, %v5382
  %v5455 = vadd.f32 %v3869, %v5207
  %v5456 = vadd.f32 %v4047, %v5385
  %v5457 = vadd.f32 %v3871, %v5209
  %v5458 = vadd.f32 %v4049, %v5387
  %v5459 = vadd.f32 %v3874, %v5212
  %v5460 = vadd.f32 %v4052, %v5390
  %v5461 = vadd.f32 %v3876, %v5214
  %v5462 = vadd.f32 %v4054, %v5392
  %v5463 = vadd.f32 %v3879, %v5217
  %v5464 = vadd.f32 %v4057, %v5395
  %v5465 = vadd.f32 %v3881, %v5219
  %v5466 = vadd.f32 %v4059, %v5397
  %v5467 = vadd.f32 %v3884, %v5222
  %v5468 = vadd.f32 %v4062, %v5400
  %v5469 = vadd.f32 %v3886, %v5224
  %v5470 = vadd.f32 %v4064, %v5402
  %v5471 = vadd.f32 %v3889, %v5227
  %v5472 = vadd.f32 %v4067, %v5405
  %v5473 = vadd.f32 %v3891, %v5229
  %v5474 = vadd.f32 %v4069, %v5407
  %v5475 = vadd.f32 %v3894, %v5232
  %v5476 = vadd.f32 %v4072, %v5410
  %v5477 = vadd.f32 %v3896, %v5234
  %v5478 = vadd.f32 %v4074, %v5412
  %v5479 = vadd.f32 %v3899, %v5237
  %v5480 = vadd.f32 %v4077, %v5415
  %v5481 = vadd.f32 %v3901, %v5239
  %v5482 = vadd.f32 %v4079, %v5417
  %v5483 = vld [vmem:[%s6] sm:$0x3]
  %v5485 = vperm.slane %v5483, 0
  %v5486 = vperm.slane %v5483, 1
  %v5489 = vadd.f32 %v4830, %v5485
  %v5490 = vadd.f32 %v4831, %v5486
  %v5491 = vadd.f32 %v4832, %v5485
  %v5492 = vadd.f32 %v4833, %v5486
  %v5493 = vadd.f32 %v4834, %v5485
  %v5494 = vadd.f32 %v4835, %v5486
  %v5495 = vadd.f32 %v4836, %v5485
  %v5496 = vadd.f32 %v4837, %v5486
  %v5497 = vadd.f32 %v4838, %v5485
  %v5498 = vadd.f32 %v4839, %v5486
  %v5499 = vadd.f32 %v4840, %v5485
  %v5500 = vadd.f32 %v4841, %v5486
  %v5501 = vadd.f32 %v4842, %v5485
  %v5502 = vadd.f32 %v4843, %v5486
  %v5503 = vadd.f32 %v4844, %v5485
  %v5504 = vadd.f32 %v4845, %v5486
  %v5505 = vadd.f32 %v4846, %v5485
  %v5506 = vadd.f32 %v4847, %v5486
  %v5507 = vadd.f32 %v4848, %v5485
  %v5508 = vadd.f32 %v4849, %v5486
  %v5509 = vadd.f32 %v4850, %v5485
  %v5510 = vadd.f32 %v4851, %v5486
  %v5511 = vadd.f32 %v4852, %v5485
  %v5512 = vadd.f32 %v4853, %v5486
  %v5513 = vadd.f32 %v4854, %v5485
  %v5514 = vadd.f32 %v4855, %v5486
  %v5515 = vadd.f32 %v4856, %v5485
  %v5516 = vadd.f32 %v4857, %v5486
  %v5517 = vadd.f32 %v4858, %v5485
  %v5518 = vadd.f32 %v4859, %v5486
  %v5519 = vadd.f32 %v4860, %v5485
  %v5520 = vadd.f32 %v4861, %v5486
  %v5521 = vadd.f32 %v4862, %v5485
  %v5522 = vadd.f32 %v4863, %v5486
  %v5523 = vadd.f32 %v4864, %v5485
  %v5524 = vadd.f32 %v4865, %v5486
  %v5525 = vadd.f32 %v4866, %v5485
  %v5526 = vadd.f32 %v4867, %v5486
  %v5527 = vadd.f32 %v4868, %v5485
  %v5528 = vadd.f32 %v4869, %v5486
  %v5529 = vadd.f32 %v4870, %v5485
  %v5530 = vadd.f32 %v4871, %v5486
  %v5531 = vadd.f32 %v4872, %v5485
  %v5532 = vadd.f32 %v4873, %v5486
  %v5533 = vadd.f32 %v4874, %v5485
  %v5534 = vadd.f32 %v4875, %v5486
  %v5535 = vadd.f32 %v4876, %v5485
  %v5536 = vadd.f32 %v4877, %v5486
  %v5537 = vadd.f32 %v4878, %v5485
  %v5538 = vadd.f32 %v4879, %v5486
  %v5539 = vadd.f32 %v4880, %v5485
  %v5540 = vadd.f32 %v4881, %v5486
  %v5541 = vadd.f32 %v4882, %v5485
  %v5542 = vadd.f32 %v4883, %v5486
  %v5543 = vadd.f32 %v4884, %v5485
  %v5544 = vadd.f32 %v4885, %v5486
  %v5545 = vadd.f32 %v4886, %v5485
  %v5546 = vadd.f32 %v4887, %v5486
  %v5547 = vadd.f32 %v4888, %v5485
  %v5548 = vadd.f32 %v4889, %v5486
  %v5549 = vadd.f32 %v4890, %v5485
  %v5550 = vadd.f32 %v4891, %v5486
  %v5551 = vadd.f32 %v4892, %v5485
  %v5552 = vadd.f32 %v4893, %v5486
  %v5553 = vmax.f32 %v5489, 0.0
  %v5554 = vmax.f32 %v5490, 0.0
  %v5555 = vmax.f32 %v5491, 0.0
  %v5556 = vmax.f32 %v5492, 0.0
  %v5557 = vmax.f32 %v5493, 0.0
  %v5558 = vmax.f32 %v5494, 0.0
  %v5559 = vmax.f32 %v5495, 0.0
  %v5560 = vmax.f32 %v5496, 0.0
  %v5561 = vmax.f32 %v5497, 0.0
  %v5562 = vmax.f32 %v5498, 0.0
  %v5563 = vmax.f32 %v5499, 0.0
  %v5564 = vmax.f32 %v5500, 0.0
  %v5565 = vmax.f32 %v5501, 0.0
  %v5566 = vmax.f32 %v5502, 0.0
  %v5567 = vmax.f32 %v5503, 0.0
  %v5568 = vmax.f32 %v5504, 0.0
  %v5569 = vmax.f32 %v5505, 0.0
  %v5570 = vmax.f32 %v5506, 0.0
  %v5571 = vmax.f32 %v5507, 0.0
  %v5572 = vmax.f32 %v5508, 0.0
  %v5573 = vmax.f32 %v5509, 0.0
  %v5574 = vmax.f32 %v5510, 0.0
  %v5575 = vmax.f32 %v5511, 0.0
  %v5576 = vmax.f32 %v5512, 0.0
  %v5577 = vmax.f32 %v5513, 0.0
  %v5578 = vmax.f32 %v5514, 0.0
  %v5579 = vmax.f32 %v5515, 0.0
  %v5580 = vmax.f32 %v5516, 0.0
  %v5581 = vmax.f32 %v5517, 0.0
  %v5582 = vmax.f32 %v5518, 0.0
  %v5583 = vmax.f32 %v5519, 0.0
  %v5584 = vmax.f32 %v5520, 0.0
  %v5585 = vmax.f32 %v5521, 0.0
  %v5586 = vmax.f32 %v5522, 0.0
  %v5587 = vmax.f32 %v5523, 0.0
  %v5588 = vmax.f32 %v5524, 0.0
  %v5589 = vmax.f32 %v5525, 0.0
  %v5590 = vmax.f32 %v5526, 0.0
  %v5591 = vmax.f32 %v5527, 0.0
  %v5592 = vmax.f32 %v5528, 0.0
  %v5593 = vmax.f32 %v5529, 0.0
  %v5594 = vmax.f32 %v5530, 0.0
  %v5595 = vmax.f32 %v5531, 0.0
  %v5596 = vmax.f32 %v5532, 0.0
  %v5597 = vmax.f32 %v5533, 0.0
  %v5598 = vmax.f32 %v5534, 0.0
  %v5599 = vmax.f32 %v5535, 0.0
  %v5600 = vmax.f32 %v5536, 0.0
  %v5601 = vmax.f32 %v5537, 0.0
  %v5602 = vmax.f32 %v5538, 0.0
  %v5603 = vmax.f32 %v5539, 0.0
  %v5604 = vmax.f32 %v5540, 0.0
  %v5605 = vmax.f32 %v5541, 0.0
  %v5606 = vmax.f32 %v5542, 0.0
  %v5607 = vmax.f32 %v5543, 0.0
  %v5608 = vmax.f32 %v5544, 0.0
  %v5609 = vmax.f32 %v5545, 0.0
  %v5610 = vmax.f32 %v5546, 0.0
  %v5611 = vmax.f32 %v5547, 0.0
  %v5612 = vmax.f32 %v5548, 0.0
  %v5613 = vmax.f32 %v5549, 0.0
  %v5614 = vmax.f32 %v5550, 0.0
  %v5615 = vmax.f32 %v5551, 0.0
  %v5616 = vmax.f32 %v5552, 0.0
  %v5617 = vadd.f32 %v5419, %v5485
  %v5618 = vadd.f32 %v5420, %v5486
  %v5619 = vadd.f32 %v5421, %v5485
  %v5620 = vadd.f32 %v5422, %v5486
  %v5621 = vadd.f32 %v5423, %v5485
  %v5622 = vadd.f32 %v5424, %v5486
  %v5623 = vadd.f32 %v5425, %v5485
  %v5624 = vadd.f32 %v5426, %v5486
  %v5625 = vadd.f32 %v5427, %v5485
  %v5626 = vadd.f32 %v5428, %v5486
  %v5627 = vadd.f32 %v5429, %v5485
  %v5628 = vadd.f32 %v5430, %v5486
  %v5629 = vadd.f32 %v5431, %v5485
  %v5630 = vadd.f32 %v5432, %v5486
  %v5631 = vadd.f32 %v5433, %v5485
  %v5632 = vadd.f32 %v5434, %v5486
  %v5633 = vadd.f32 %v5435, %v5485
  %v5634 = vadd.f32 %v5436, %v5486
  %v5635 = vadd.f32 %v5437, %v5485
  %v5636 = vadd.f32 %v5438, %v5486
  %v5637 = vadd.f32 %v5439, %v5485
  %v5638 = vadd.f32 %v5440, %v5486
  %v5639 = vadd.f32 %v5441, %v5485
  %v5640 = vadd.f32 %v5442, %v5486
  %v5641 = vadd.f32 %v5443, %v5485
  %v5642 = vadd.f32 %v5444, %v5486
  %v5643 = vadd.f32 %v5445, %v5485
  %v5644 = vadd.f32 %v5446, %v5486
  %v5645 = vadd.f32 %v5447, %v5485
  %v5646 = vadd.f32 %v5448, %v5486
  %v5647 = vadd.f32 %v5449, %v5485
  %v5648 = vadd.f32 %v5450, %v5486
  %v5649 = vadd.f32 %v5451, %v5485
  %v5650 = vadd.f32 %v5452, %v5486
  %v5651 = vadd.f32 %v5453, %v5485
  %v5652 = vadd.f32 %v5454, %v5486
  %v5653 = vadd.f32 %v5455, %v5485
  %v5654 = vadd.f32 %v5456, %v5486
  %v5655 = vadd.f32 %v5457, %v5485
  %v5656 = vadd.f32 %v5458, %v5486
  %v5657 = vadd.f32 %v5459, %v5485
  %v5658 = vadd.f32 %v5460, %v5486
  %v5659 = vadd.f32 %v5461, %v5485
  %v5660 = vadd.f32 %v5462, %v5486
  %v5661 = vadd.f32 %v5463, %v5485
  %v5662 = vadd.f32 %v5464, %v5486
  %v5663 = vadd.f32 %v5465, %v5485
  %v5664 = vadd.f32 %v5466, %v5486
  %v5665 = vadd.f32 %v5467, %v5485
  %v5666 = vadd.f32 %v5468, %v5486
  %v5667 = vadd.f32 %v5469, %v5485
  %v5668 = vadd.f32 %v5470, %v5486
  %v5669 = vadd.f32 %v5471, %v5485
  %v5670 = vadd.f32 %v5472, %v5486
  %v5671 = vadd.f32 %v5473, %v5485
  %v5672 = vadd.f32 %v5474, %v5486
  %v5673 = vadd.f32 %v5475, %v5485
  %v5674 = vadd.f32 %v5476, %v5486
  %v5675 = vadd.f32 %v5477, %v5485
  %v5676 = vadd.f32 %v5478, %v5486
  %v5677 = vadd.f32 %v5479, %v5485
  %v5678 = vadd.f32 %v5480, %v5486
  %v5679 = vadd.f32 %v5481, %v5485
  %v5680 = vadd.f32 %v5482, %v5486
  %v5681 = vmax.f32 %v5617, 0.0
  %v5682 = vmax.f32 %v5618, 0.0
  %v5683 = vmax.f32 %v5619, 0.0
  %v5684 = vmax.f32 %v5620, 0.0
  %v5685 = vmax.f32 %v5621, 0.0
  %v5686 = vmax.f32 %v5622, 0.0
  %v5687 = vmax.f32 %v5623, 0.0
  %v5688 = vmax.f32 %v5624, 0.0
  %v5689 = vmax.f32 %v5625, 0.0
  %v5690 = vmax.f32 %v5626, 0.0
  %v5691 = vmax.f32 %v5627, 0.0
  %v5692 = vmax.f32 %v5628, 0.0
  %v5693 = vmax.f32 %v5629, 0.0
  %v5694 = vmax.f32 %v5630, 0.0
  %v5695 = vmax.f32 %v5631, 0.0
  %v5696 = vmax.f32 %v5632, 0.0
  %v5697 = vmax.f32 %v5633, 0.0
  %v5698 = vmax.f32 %v5634, 0.0
  %v5699 = vmax.f32 %v5635, 0.0
  %v5700 = vmax.f32 %v5636, 0.0
  %v5701 = vmax.f32 %v5637, 0.0
  %v5702 = vmax.f32 %v5638, 0.0
  %v5703 = vmax.f32 %v5639, 0.0
  %v5704 = vmax.f32 %v5640, 0.0
  %v5705 = vmax.f32 %v5641, 0.0
  %v5706 = vmax.f32 %v5642, 0.0
  %v5707 = vmax.f32 %v5643, 0.0
  %v5708 = vmax.f32 %v5644, 0.0
  %v5709 = vmax.f32 %v5645, 0.0
  %v5710 = vmax.f32 %v5646, 0.0
  %v5711 = vmax.f32 %v5647, 0.0
  %v5712 = vmax.f32 %v5648, 0.0
  %v5713 = vmax.f32 %v5649, 0.0
  %v5714 = vmax.f32 %v5650, 0.0
  %v5715 = vmax.f32 %v5651, 0.0
  %v5716 = vmax.f32 %v5652, 0.0
  %v5717 = vmax.f32 %v5653, 0.0
  %v5718 = vmax.f32 %v5654, 0.0
  %v5719 = vmax.f32 %v5655, 0.0
  %v5720 = vmax.f32 %v5656, 0.0
  %v5721 = vmax.f32 %v5657, 0.0
  %v5722 = vmax.f32 %v5658, 0.0
  %v5723 = vmax.f32 %v5659, 0.0
  %v5724 = vmax.f32 %v5660, 0.0
  %v5725 = vmax.f32 %v5661, 0.0
  %v5726 = vmax.f32 %v5662, 0.0
  %v5727 = vmax.f32 %v5663, 0.0
  %v5728 = vmax.f32 %v5664, 0.0
  %v5729 = vmax.f32 %v5665, 0.0
  %v5730 = vmax.f32 %v5666, 0.0
  %v5731 = vmax.f32 %v5667, 0.0
  %v5732 = vmax.f32 %v5668, 0.0
  %v5733 = vmax.f32 %v5669, 0.0
  %v5734 = vmax.f32 %v5670, 0.0
  %v5735 = vmax.f32 %v5671, 0.0
  %v5736 = vmax.f32 %v5672, 0.0
  %v5737 = vmax.f32 %v5673, 0.0
  %v5738 = vmax.f32 %v5674, 0.0
  %v5739 = vmax.f32 %v5675, 0.0
  %v5740 = vmax.f32 %v5676, 0.0
  %v5741 = vmax.f32 %v5677, 0.0
  %v5742 = vmax.f32 %v5678, 0.0
  %v5743 = vmax.f32 %v5679, 0.0
  %v5744 = vmax.f32 %v5680, 0.0
  %v5745 = vmax.f32 %v5553, %v5681
  %v5746 = vmax.f32 %v5554, %v5682
  %v5747 = vmax.f32 %v5555, %v5683
  %v5748 = vmax.f32 %v5556, %v5684
  %v5749 = vmax.f32 %v5557, %v5685
  %v5750 = vmax.f32 %v5558, %v5686
  %v5751 = vmax.f32 %v5559, %v5687
  %v5752 = vmax.f32 %v5560, %v5688
  %v5753 = vmax.f32 %v5561, %v5689
  %v5754 = vmax.f32 %v5562, %v5690
  %v5755 = vmax.f32 %v5563, %v5691
  %v5756 = vmax.f32 %v5564, %v5692
  %v5757 = vmax.f32 %v5565, %v5693
  %v5758 = vmax.f32 %v5566, %v5694
  %v5759 = vmax.f32 %v5567, %v5695
  %v5760 = vmax.f32 %v5568, %v5696
  %v5761 = vmax.f32 %v5569, %v5697
  %v5762 = vmax.f32 %v5570, %v5698
  %v5763 = vmax.f32 %v5571, %v5699
  %v5764 = vmax.f32 %v5572, %v5700
  %v5765 = vmax.f32 %v5573, %v5701
  %v5766 = vmax.f32 %v5574, %v5702
  %v5767 = vmax.f32 %v5575, %v5703
  %v5768 = vmax.f32 %v5576, %v5704
  %v5769 = vmax.f32 %v5577, %v5705
  %v5770 = vmax.f32 %v5578, %v5706
  %v5771 = vmax.f32 %v5579, %v5707
  %v5772 = vmax.f32 %v5580, %v5708
  %v5773 = vmax.f32 %v5581, %v5709
  %v5774 = vmax.f32 %v5582, %v5710
  %v5775 = vmax.f32 %v5583, %v5711
  %v5776 = vmax.f32 %v5584, %v5712
  %v5777 = vmax.f32 %v5585, %v5713
  %v5778 = vmax.f32 %v5586, %v5714
  %v5779 = vmax.f32 %v5587, %v5715
  %v5780 = vmax.f32 %v5588, %v5716
  %v5781 = vmax.f32 %v5589, %v5717
  %v5782 = vmax.f32 %v5590, %v5718
  %v5783 = vmax.f32 %v5591, %v5719
  %v5784 = vmax.f32 %v5592, %v5720
  %v5785 = vmax.f32 %v5593, %v5721
  %v5786 = vmax.f32 %v5594, %v5722
  %v5787 = vmax.f32 %v5595, %v5723
  %v5788 = vmax.f32 %v5596, %v5724
  %v5789 = vmax.f32 %v5597, %v5725
  %v5790 = vmax.f32 %v5598, %v5726
  %v5791 = vmax.f32 %v5599, %v5727
  %v5792 = vmax.f32 %v5600, %v5728
  %v5793 = vmax.f32 %v5601, %v5729
  %v5794 = vmax.f32 %v5602, %v5730
  %v5795 = vmax.f32 %v5603, %v5731
  %v5796 = vmax.f32 %v5604, %v5732
  %v5797 = vmax.f32 %v5605, %v5733
  %v5798 = vmax.f32 %v5606, %v5734
  %v5799 = vmax.f32 %v5607, %v5735
  %v5800 = vmax.f32 %v5608, %v5736
  %v5801 = vmax.f32 %v5609, %v5737
  %v5802 = vmax.f32 %v5610, %v5738
  %v5803 = vmax.f32 %v5611, %v5739
  %v5804 = vmax.f32 %v5612, %v5740
  %v5805 = vmax.f32 %v5613, %v5741
  %v5806 = vmax.f32 %v5614, %v5742
  %v5807 = vmax.f32 %v5615, %v5743
  %v5808 = vmax.f32 %v5616, %v5744
  %5809 = vst [vmem:[#allocation4] sm:$0xff] %v5745
  %5810 = vst.msk [vmem:[#allocation4 + $0x8] sm:$0xff] %vm1398, %v5746
  %5811 = vst [vmem:[#allocation4 + $0x10] sm:$0xff] %v5747
  %5812 = vst.msk [vmem:[#allocation4 + $0x18] sm:$0xff] %vm1398, %v5748
  %5813 = vst [vmem:[#allocation4 + $0x20] sm:$0xff] %v5749
  %5814 = vst.msk [vmem:[#allocation4 + $0x28] sm:$0xff] %vm1398, %v5750
  %5815 = vst [vmem:[#allocation4 + $0x30] sm:$0xff] %v5751
  %5816 = vst.msk [vmem:[#allocation4 + $0x38] sm:$0xff] %vm1398, %v5752
  %5817 = vst [vmem:[#allocation4 + $0x40] sm:$0xff] %v5753
  %5818 = vst.msk [vmem:[#allocation4 + $0x48] sm:$0xff] %vm1398, %v5754
  %5819 = vst [vmem:[#allocation4 + $0x50] sm:$0xff] %v5755
  %5820 = vst.msk [vmem:[#allocation4 + $0x58] sm:$0xff] %vm1398, %v5756
  %5821 = vst [vmem:[#allocation4 + $0x60] sm:$0xff] %v5757
  %5822 = vst.msk [vmem:[#allocation4 + $0x68] sm:$0xff] %vm1398, %v5758
  %5823 = vst [vmem:[#allocation4 + $0x70] sm:$0xff] %v5759
  %5824 = vst.msk [vmem:[#allocation4 + $0x78] sm:$0xff] %vm1398, %v5760
  %5825 = vst [vmem:[#allocation4 + $0x80] sm:$0xff] %v5761
  %5826 = vst.msk [vmem:[#allocation4 + $0x88] sm:$0xff] %vm1398, %v5762
  %5827 = vst [vmem:[#allocation4 + $0x90] sm:$0xff] %v5763
  %5828 = vst.msk [vmem:[#allocation4 + $0x98] sm:$0xff] %vm1398, %v5764
  %5829 = vst [vmem:[#allocation4 + $0xa0] sm:$0xff] %v5765
  %5830 = vst.msk [vmem:[#allocation4 + $0xa8] sm:$0xff] %vm1398, %v5766
  %5831 = vst [vmem:[#allocation4 + $0xb0] sm:$0xff] %v5767
  %5832 = vst.msk [vmem:[#allocation4 + $0xb8] sm:$0xff] %vm1398, %v5768
  %5833 = vst [vmem:[#allocation4 + $0xc0] sm:$0xff] %v5769
  %5834 = vst.msk [vmem:[#allocation4 + $0xc8] sm:$0xff] %vm1398, %v5770
  %5835 = vst [vmem:[#allocation4 + $0xd0] sm:$0xff] %v5771
  %5836 = vst.msk [vmem:[#allocation4 + $0xd8] sm:$0xff] %vm1398, %v5772
  %5837 = vst [vmem:[#allocation4 + $0xe0] sm:$0xff] %v5773
  %5838 = vst.msk [vmem:[#allocation4 + $0xe8] sm:$0xff] %vm1398, %v5774
  %5839 = vst [vmem:[#allocation4 + $0xf0] sm:$0xff] %v5775
  %5840 = vst.msk [vmem:[#allocation4 + $0xf8] sm:$0xff] %vm1398, %v5776
  %5841 = vst [vmem:[#allocation4 + $0x100] sm:$0xff] %v5777
  %5842 = vst.msk [vmem:[#allocation4 + $0x108] sm:$0xff] %vm1398, %v5778
  %5843 = vst [vmem:[#allocation4 + $0x110] sm:$0xff] %v5779
  %5844 = vst.msk [vmem:[#allocation4 + $0x118] sm:$0xff] %vm1398, %v5780
  %5845 = vst [vmem:[#allocation4 + $0x120] sm:$0xff] %v5781
  %5846 = vst.msk [vmem:[#allocation4 + $0x128] sm:$0xff] %vm1398, %v5782
  %5847 = vst [vmem:[#allocation4 + $0x130] sm:$0xff] %v5783
  %5848 = vst.msk [vmem:[#allocation4 + $0x138] sm:$0xff] %vm1398, %v5784
  %5849 = vst [vmem:[#allocation4 + $0x140] sm:$0xff] %v5785
  %5850 = vst.msk [vmem:[#allocation4 + $0x148] sm:$0xff] %vm1398, %v5786
  %5851 = vst [vmem:[#allocation4 + $0x150] sm:$0xff] %v5787
  %5852 = vst.msk [vmem:[#allocation4 + $0x158] sm:$0xff] %vm1398, %v5788
  %5853 = vst [vmem:[#allocation4 + $0x160] sm:$0xff] %v5789
  %5854 = vst.msk [vmem:[#allocation4 + $0x168] sm:$0xff] %vm1398, %v5790
  %5855 = vst [vmem:[#allocation4 + $0x170] sm:$0xff] %v5791
  %5856 = vst.msk [vmem:[#allocation4 + $0x178] sm:$0xff] %vm1398, %v5792
  %5857 = vst [vmem:[#allocation4 + $0x180] sm:$0xff] %v5793
  %5858 = vst.msk [vmem:[#allocation4 + $0x188] sm:$0xff] %vm1398, %v5794
  %5859 = vst [vmem:[#allocation4 + $0x190] sm:$0xff] %v5795
  %5860 = vst.msk [vmem:[#allocation4 + $0x198] sm:$0xff] %vm1398, %v5796
  %5861 = vst [vmem:[#allocation4 + $0x1a0] sm:$0xff] %v5797
  %5862 = vst.msk [vmem:[#allocation4 + $0x1a8] sm:$0xff] %vm1398, %v5798
  %5863 = vst [vmem:[#allocation4 + $0x1b0] sm:$0xff] %v5799
  %5864 = vst.msk [vmem:[#allocation4 + $0x1b8] sm:$0xff] %vm1398, %v5800
  %5865 = vst [vmem:[#allocation4 + $0x1c0] sm:$0xff] %v5801
  %5866 = vst.msk [vmem:[#allocation4 + $0x1c8] sm:$0xff] %vm1398, %v5802
  %5867 = vst [vmem:[#allocation4 + $0x1d0] sm:$0xff] %v5803
  %5868 = vst.msk [vmem:[#allocation4 + $0x1d8] sm:$0xff] %vm1398, %v5804
  %5869 = vst [vmem:[#allocation4 + $0x1e0] sm:$0xff] %v5805
  %5870 = vst.msk [vmem:[#allocation4 + $0x1e8] sm:$0xff] %vm1398, %v5806
  %5871 = vst [vmem:[#allocation4 + $0x1f0] sm:$0xff] %v5807
  %5872 = vst.msk [vmem:[#allocation4 + $0x1f8] sm:$0xff] %vm1398, %v5808
  %v5873 = vld [vmem:[#allocation4] sm:$0xff]
  %v5874 = vld [vmem:[#allocation4 + $0x8] sm:$0xff]
  %v5875 = vld [vmem:[#allocation4 + $0x10] sm:$0xff]
  %v5876 = vld [vmem:[#allocation4 + $0x18] sm:$0xff]
  %v5877 = vld [vmem:[#allocation4 + $0x20] sm:$0xff]
  %v5878 = vld [vmem:[#allocation4 + $0x28] sm:$0xff]
  %v5879 = vld [vmem:[#allocation4 + $0x30] sm:$0xff]
  %v5880 = vld [vmem:[#allocation4 + $0x38] sm:$0xff]
  %v5881 = vmax.f32 %v5873, %v5877
  %v5882 = vmax.f32 %v5874, %v5878
  %v5883 = vmax.f32 %v5875, %v5879
  %v5884 = vmax.f32 %v5876, %v5880
  %v5885 = vpack.c.bf16 %v5883, %v5881
  %v5886 = vpack.c.bf16 %v5884, %v5882
  %v5887 = vld [vmem:[%s7] sm:$0xf]
  %v5888 = vld [vmem:[%s7 + $0x4] sm:$0xf]
  %v5889 = vld [vmem:[%s7 + $0x8] sm:$0xf]
  %v5890 = vld [vmem:[%s7 + $0xc] sm:$0xf]
  %v5891 = vld [vmem:[%s7 + $0x10] sm:$0xf]
  %v5892 = vld [vmem:[%s7 + $0x14] sm:$0xf]
  %v5893 = vld [vmem:[%s7 + $0x18] sm:$0xf]
  %v5894 = vld [vmem:[%s7 + $0x1c] sm:$0xf]
  %v5895 = vld [vmem:[%s7 + $0x20] sm:$0xf]
  %v5896 = vld [vmem:[%s7 + $0x24] sm:$0xf]
  %v5897 = vld [vmem:[%s7 + $0x28] sm:$0xf]
  %v5898 = vld [vmem:[%s7 + $0x2c] sm:$0xf]
  %v5899 = vld [vmem:[%s7 + $0x30] sm:$0xf]
  %v5900 = vld [vmem:[%s7 + $0x34] sm:$0xf]
  %v5901 = vld [vmem:[%s7 + $0x38] sm:$0xf]
  %v5902 = vld [vmem:[%s7 + $0x3c] sm:$0xf]
  %v5903 = vld [vmem:[%s7 + $0x40] sm:$0xf]
  %v5904 = vld [vmem:[%s7 + $0x44] sm:$0xf]
  %v5905 = vld [vmem:[%s7 + $0x48] sm:$0xf]
  %v5906 = vld [vmem:[%s7 + $0x4c] sm:$0xf]
  %v5907 = vld [vmem:[%s7 + $0x50] sm:$0xf]
  %v5908 = vld [vmem:[%s7 + $0x54] sm:$0xf]
  %v5909 = vld [vmem:[%s7 + $0x58] sm:$0xf]
  %v5910 = vld [vmem:[%s7 + $0x5c] sm:$0xf]
  %v5911 = vld [vmem:[%s7 + $0x60] sm:$0xf]
  %v5912 = vld [vmem:[%s7 + $0x64] sm:$0xf]
  %v5913 = vld [vmem:[%s7 + $0x68] sm:$0xf]
  %v5914 = vld [vmem:[%s7 + $0x6c] sm:$0xf]
  %v5915 = vld [vmem:[#allocation4 + $0x40] sm:$0xff]
  %v5916 = vld [vmem:[#allocation4 + $0x48] sm:$0xff]
  %v5917 = vld [vmem:[#allocation4 + $0x50] sm:$0xff]
  %v5918 = vld [vmem:[#allocation4 + $0x58] sm:$0xff]
  %v5919 = vld [vmem:[#allocation4 + $0x60] sm:$0xff]
  %v5920 = vld [vmem:[#allocation4 + $0x68] sm:$0xff]
  %v5921 = vld [vmem:[#allocation4 + $0x70] sm:$0xff]
  %v5922 = vld [vmem:[#allocation4 + $0x78] sm:$0xff]
  %v5923 = vmax.f32 %v5915, %v5919
  %v5924 = vmax.f32 %v5916, %v5920
  %v5925 = vmax.f32 %v5917, %v5921
  %v5926 = vmax.f32 %v5918, %v5922
  %v5927 = vpack.c.bf16 %v5925, %v5923
  %v5928 = vpack.c.bf16 %v5926, %v5924
  %v5929 = vld [vmem:[%s7 + $0x70] sm:$0xf]
  %v5930 = vld [vmem:[%s7 + $0x74] sm:$0xf]
  %v5931 = vld [vmem:[%s7 + $0x78] sm:$0xf]
  %v5932 = vld [vmem:[%s7 + $0x7c] sm:$0xf]
  %v5933 = vld [vmem:[%s7 + $0x80] sm:$0xf]
  %v5934 = vld [vmem:[%s7 + $0x84] sm:$0xf]
  %v5935 = vld [vmem:[%s7 + $0x88] sm:$0xf]
  %v5936 = vld [vmem:[%s7 + $0x8c] sm:$0xf]
  %v5937 = vld [vmem:[%s7 + $0x90] sm:$0xf]
  %v5938 = vld [vmem:[%s7 + $0x94] sm:$0xf]
  %v5939 = vld [vmem:[%s7 + $0x98] sm:$0xf]
  %v5940 = vld [vmem:[%s7 + $0x9c] sm:$0xf]
  %v5941 = vld [vmem:[%s7 + $0xa0] sm:$0xf]
  %v5942 = vld [vmem:[%s7 + $0xa4] sm:$0xf]
  %v5943 = vld [vmem:[%s7 + $0xa8] sm:$0xf]
  %v5944 = vld [vmem:[%s7 + $0xac] sm:$0xf]
  %v5945 = vld [vmem:[%s7 + $0xb0] sm:$0xf]
  %v5946 = vld [vmem:[%s7 + $0xb4] sm:$0xf]
  %v5947 = vld [vmem:[%s7 + $0xb8] sm:$0xf]
  %v5948 = vld [vmem:[%s7 + $0xbc] sm:$0xf]
  %v5949 = vld [vmem:[%s7 + $0xc0] sm:$0xf]
  %v5950 = vld [vmem:[%s7 + $0xc4] sm:$0xf]
  %v5951 = vld [vmem:[%s7 + $0xc8] sm:$0xf]
  %v5952 = vld [vmem:[%s7 + $0xcc] sm:$0xf]
  %v5953 = vld [vmem:[%s7 + $0xd0] sm:$0xf]
  %v5954 = vld [vmem:[%s7 + $0xd4] sm:$0xf]
  %v5955 = vld [vmem:[%s7 + $0xd8] sm:$0xf]
  %v5956 = vld [vmem:[%s7 + $0xdc] sm:$0xf]
  %v5985 = vunpack.c.l.b16 %v5929
  %v5986 = vunpack.c.l.b16 %v5930
  %v5987 = vunpack.c.l.b16 %v5931
  %v5988 = vunpack.c.l.b16 %v5932
  %v5989 = vunpack.c.l.b16 %v5933
  %v5990 = vunpack.c.l.b16 %v5934
  %v5991 = vunpack.c.l.b16 %v5935
  %v5992 = vunpack.c.l.b16 %v5936
  %v5993 = vunpack.c.l.b16 %v5937
  %v5994 = vunpack.c.l.b16 %v5938
  %v5995 = vunpack.c.l.b16 %v5939
  %v5996 = vunpack.c.l.b16 %v5940
  %v5997 = vunpack.c.l.b16 %v5941
  %v5998 = vunpack.c.l.b16 %v5942
  %v5999 = vunpack.c.l.b16 %v5943
  %v6000 = vunpack.c.l.b16 %v5944
  %v6001 = vunpack.c.l.b16 %v5945
  %v6002 = vunpack.c.l.b16 %v5946
  %v6003 = vunpack.c.l.b16 %v5947
  %v6004 = vunpack.c.l.b16 %v5948
  %v6005 = vunpack.c.l.b16 %v5949
  %v6006 = vunpack.c.l.b16 %v5950
  %v6007 = vunpack.c.l.b16 %v5951
  %v6008 = vunpack.c.l.b16 %v5952
  %v6009 = vunpack.c.l.b16 %v5953
  %v6010 = vunpack.c.l.b16 %v5954
  %v6011 = vunpack.c.l.b16 %v5955
  %v6012 = vunpack.c.l.b16 %v5956
  %v6013 = vpack.c.b16 %v5986, %v5985
  %v6014 = vpack.c.b16 %v5988, %v5987
  %v6015 = vpack.c.b16 %v5990, %v5989
  %v6016 = vpack.c.b16 %v5992, %v5991
  %v6017 = vpack.c.b16 %v5994, %v5993
  %v6018 = vpack.c.b16 %v5996, %v5995
  %v6019 = vpack.c.b16 %v5998, %v5997
  %v6020 = vpack.c.b16 %v6000, %v5999
  %v6021 = vpack.c.b16 %v6002, %v6001
  %v6022 = vpack.c.b16 %v6004, %v6003
  %v6023 = vpack.c.b16 %v6006, %v6005
  %v6024 = vpack.c.b16 %v6008, %v6007
  %v6025 = vpack.c.b16 %v6010, %v6009
  %v6026 = vpack.c.b16 %v6012, %v6011
  %v6042 = vsel %vm1398, %v5928, 0
  %6044 = vmatpush.bf16.msra.mxu0 %v6020
  %6045 = vmatpush.bf16.msra.mxu0 %v6019
  %6046 = vmatpush.bf16.msra.mxu0 %v6018
  %6047 = vmatpush.bf16.msra.mxu0 %v6017
  %6048 = vmatpush.bf16.msra.mxu0 %v6016
  %6049 = vmatpush.bf16.msra.mxu0 %v6015
  %6050 = vmatpush.bf16.msra.mxu0 %v6014
  %6051 = vmatpush.bf16.msra.mxu0 %v6013
  %6052 = vmatmul.bf16.gmra.mxu0 %v5927
  %v6053 = vpop.f32.mrf.mxu0
  %v6054 = vadd.f32 0.0, %v6053
  %v6055 = vpop.f32.mrf.mxu0
  %v6056 = vadd.f32 0.0, %v6055
  %6057 = vdwg.mxu0
  %6058 = vmatpush.bf16.msra.mxu0 0
  %6059 = vmatpush.bf16.msra.mxu0 0
  %6060 = vmatpush.bf16.msra.mxu0 %v6026
  %6061 = vmatpush.bf16.msra.mxu0 %v6025
  %6062 = vmatpush.bf16.msra.mxu0 %v6024
  %6063 = vmatpush.bf16.msra.mxu0 %v6023
  %6064 = vmatpush.bf16.msra.mxu0 %v6022
  %6065 = vmatpush.bf16.msra.mxu0 %v6021
  %6066 = vmatmul.bf16.gmra.mxu0 %v6042
  %v6067 = vpop.f32.mrf.mxu0
  %v6068 = vadd.f32 %v6054, %v6067
  %v6069 = vpop.f32.mrf.mxu0
  %v6070 = vadd.f32 %v6056, %v6069
  %6071 = vdwg.mxu0
  %v6100 = vunpack.c.l.b16 %v5887
  %v6101 = vunpack.c.l.b16 %v5888
  %v6102 = vunpack.c.l.b16 %v5889
  %v6103 = vunpack.c.l.b16 %v5890
  %v6104 = vunpack.c.l.b16 %v5891
  %v6105 = vunpack.c.l.b16 %v5892
  %v6106 = vunpack.c.l.b16 %v5893
  %v6107 = vunpack.c.l.b16 %v5894
  %v6108 = vunpack.c.l.b16 %v5895
  %v6109 = vunpack.c.l.b16 %v5896
  %v6110 = vunpack.c.l.b16 %v5897
  %v6111 = vunpack.c.l.b16 %v5898
  %v6112 = vunpack.c.l.b16 %v5899
  %v6113 = vunpack.c.l.b16 %v5900
  %v6114 = vunpack.c.l.b16 %v5901
  %v6115 = vunpack.c.l.b16 %v5902
  %v6116 = vunpack.c.l.b16 %v5903
  %v6117 = vunpack.c.l.b16 %v5904
  %v6118 = vunpack.c.l.b16 %v5905
  %v6119 = vunpack.c.l.b16 %v5906
  %v6120 = vunpack.c.l.b16 %v5907
  %v6121 = vunpack.c.l.b16 %v5908
  %v6122 = vunpack.c.l.b16 %v5909
  %v6123 = vunpack.c.l.b16 %v5910
  %v6124 = vunpack.c.l.b16 %v5911
  %v6125 = vunpack.c.l.b16 %v5912
  %v6126 = vunpack.c.l.b16 %v5913
  %v6127 = vunpack.c.l.b16 %v5914
  %v6128 = vpack.c.b16 %v6101, %v6100
  %v6129 = vpack.c.b16 %v6103, %v6102
  %v6130 = vpack.c.b16 %v6105, %v6104
  %v6131 = vpack.c.b16 %v6107, %v6106
  %v6132 = vpack.c.b16 %v6109, %v6108
  %v6133 = vpack.c.b16 %v6111, %v6110
  %v6134 = vpack.c.b16 %v6113, %v6112
  %v6135 = vpack.c.b16 %v6115, %v6114
  %v6136 = vpack.c.b16 %v6117, %v6116
  %v6137 = vpack.c.b16 %v6119, %v6118
  %v6138 = vpack.c.b16 %v6121, %v6120
  %v6139 = vpack.c.b16 %v6123, %v6122
  %v6140 = vpack.c.b16 %v6125, %v6124
  %v6141 = vpack.c.b16 %v6127, %v6126
  %v6157 = vsel %vm1398, %v5886, 0
  %6159 = vmatpush.bf16.msra.mxu0 %v6135
  %6160 = vmatpush.bf16.msra.mxu0 %v6134
  %6161 = vmatpush.bf16.msra.mxu0 %v6133
  %6162 = vmatpush.bf16.msra.mxu0 %v6132
  %6163 = vmatpush.bf16.msra.mxu0 %v6131
  %6164 = vmatpush.bf16.msra.mxu0 %v6130
  %6165 = vmatpush.bf16.msra.mxu0 %v6129
  %6166 = vmatpush.bf16.msra.mxu0 %v6128
  %6167 = vmatmul.bf16.gmra.mxu0 %v5885
  %v6168 = vpop.f32.mrf.mxu0
  %v6169 = vadd.f32 %v6068, %v6168
  %v6170 = vpop.f32.mrf.mxu0
  %v6171 = vadd.f32 %v6070, %v6170
  %6172 = vdwg.mxu0
  %6173 = vmatpush.bf16.msra.mxu0 0
  %6174 = vmatpush.bf16.msra.mxu0 0
  %6175 = vmatpush.bf16.msra.mxu0 %v6141
  %6176 = vmatpush.bf16.msra.mxu0 %v6140
  %6177 = vmatpush.bf16.msra.mxu0 %v6139
  %6178 = vmatpush.bf16.msra.mxu0 %v6138
  %6179 = vmatpush.bf16.msra.mxu0 %v6137
  %6180 = vmatpush.bf16.msra.mxu0 %v6136
  %6181 = vmatmul.bf16.gmra.mxu0 %v6157
  %v6182 = vpop.f32.mrf.mxu0
  %v6183 = vadd.f32 %v6169, %v6182
  %v6184 = vpop.f32.mrf.mxu0
  %v6185 = vadd.f32 %v6171, %v6184
  %6186 = vdwg.mxu0
  %v6187 = vld [vmem:[#allocation4 + $0x80] sm:$0xff]
  %v6188 = vld [vmem:[#allocation4 + $0x88] sm:$0xff]
  %v6189 = vld [vmem:[#allocation4 + $0x90] sm:$0xff]
  %v6190 = vld [vmem:[#allocation4 + $0x98] sm:$0xff]
  %v6191 = vld [vmem:[#allocation4 + $0xa0] sm:$0xff]
  %v6192 = vld [vmem:[#allocation4 + $0xa8] sm:$0xff]
  %v6193 = vld [vmem:[#allocation4 + $0xb0] sm:$0xff]
  %v6194 = vld [vmem:[#allocation4 + $0xb8] sm:$0xff]
  %v6195 = vmax.f32 %v6187, %v6191
  %v6196 = vmax.f32 %v6188, %v6192
  %v6197 = vmax.f32 %v6189, %v6193
  %v6198 = vmax.f32 %v6190, %v6194
  %v6199 = vpack.c.bf16 %v6197, %v6195
  %v6200 = vpack.c.bf16 %v6198, %v6196
  %v6201 = vld [vmem:[%s7 + $0xe0] sm:$0xf]
  %v6202 = vld [vmem:[%s7 + $0xe4] sm:$0xf]
  %v6203 = vld [vmem:[%s7 + $0xe8] sm:$0xf]
  %v6204 = vld [vmem:[%s7 + $0xec] sm:$0xf]
  %v6205 = vld [vmem:[%s7 + $0xf0] sm:$0xf]
  %v6206 = vld [vmem:[%s7 + $0xf4] sm:$0xf]
  %v6207 = vld [vmem:[%s7 + $0xf8] sm:$0xf]
  %v6208 = vld [vmem:[%s7 + $0xfc] sm:$0xf]
  %v6209 = vld [vmem:[%s7 + $0x100] sm:$0xf]
  %v6210 = vld [vmem:[%s7 + $0x104] sm:$0xf]
  %v6211 = vld [vmem:[%s7 + $0x108] sm:$0xf]
  %v6212 = vld [vmem:[%s7 + $0x10c] sm:$0xf]
  %v6213 = vld [vmem:[%s7 + $0x110] sm:$0xf]
  %v6214 = vld [vmem:[%s7 + $0x114] sm:$0xf]
  %v6215 = vld [vmem:[%s7 + $0x118] sm:$0xf]
  %v6216 = vld [vmem:[%s7 + $0x11c] sm:$0xf]
  %v6217 = vld [vmem:[%s7 + $0x120] sm:$0xf]
  %v6218 = vld [vmem:[%s7 + $0x124] sm:$0xf]
  %v6219 = vld [vmem:[%s7 + $0x128] sm:$0xf]
  %v6220 = vld [vmem:[%s7 + $0x12c] sm:$0xf]
  %v6221 = vld [vmem:[%s7 + $0x130] sm:$0xf]
  %v6222 = vld [vmem:[%s7 + $0x134] sm:$0xf]
  %v6223 = vld [vmem:[%s7 + $0x138] sm:$0xf]
  %v6224 = vld [vmem:[%s7 + $0x13c] sm:$0xf]
  %v6225 = vld [vmem:[%s7 + $0x140] sm:$0xf]
  %v6226 = vld [vmem:[%s7 + $0x144] sm:$0xf]
  %v6227 = vld [vmem:[%s7 + $0x148] sm:$0xf]
  %v6228 = vld [vmem:[%s7 + $0x14c] sm:$0xf]
  %v6257 = vunpack.c.l.b16 %v6201
  %v6258 = vunpack.c.l.b16 %v6202
  %v6259 = vunpack.c.l.b16 %v6203
  %v6260 = vunpack.c.l.b16 %v6204
  %v6261 = vunpack.c.l.b16 %v6205
  %v6262 = vunpack.c.l.b16 %v6206
  %v6263 = vunpack.c.l.b16 %v6207
  %v6264 = vunpack.c.l.b16 %v6208
  %v6265 = vunpack.c.l.b16 %v6209
  %v6266 = vunpack.c.l.b16 %v6210
  %v6267 = vunpack.c.l.b16 %v6211
  %v6268 = vunpack.c.l.b16 %v6212
  %v6269 = vunpack.c.l.b16 %v6213
  %v6270 = vunpack.c.l.b16 %v6214
  %v6271 = vunpack.c.l.b16 %v6215
  %v6272 = vunpack.c.l.b16 %v6216
  %v6273 = vunpack.c.l.b16 %v6217
  %v6274 = vunpack.c.l.b16 %v6218
  %v6275 = vunpack.c.l.b16 %v6219
  %v6276 = vunpack.c.l.b16 %v6220
  %v6277 = vunpack.c.l.b16 %v6221
  %v6278 = vunpack.c.l.b16 %v6222
  %v6279 = vunpack.c.l.b16 %v6223
  %v6280 = vunpack.c.l.b16 %v6224
  %v6281 = vunpack.c.l.b16 %v6225
  %v6282 = vunpack.c.l.b16 %v6226
  %v6283 = vunpack.c.l.b16 %v6227
  %v6284 = vunpack.c.l.b16 %v6228
  %v6285 = vpack.c.b16 %v6258, %v6257
  %v6286 = vpack.c.b16 %v6260, %v6259
  %v6287 = vpack.c.b16 %v6262, %v6261
  %v6288 = vpack.c.b16 %v6264, %v6263
  %v6289 = vpack.c.b16 %v6266, %v6265
  %v6290 = vpack.c.b16 %v6268, %v6267
  %v6291 = vpack.c.b16 %v6270, %v6269
  %v6292 = vpack.c.b16 %v6272, %v6271
  %v6293 = vpack.c.b16 %v6274, %v6273
  %v6294 = vpack.c.b16 %v6276, %v6275
  %v6295 = vpack.c.b16 %v6278, %v6277
  %v6296 = vpack.c.b16 %v6280, %v6279
  %v6297 = vpack.c.b16 %v6282, %v6281
  %v6298 = vpack.c.b16 %v6284, %v6283
  %v6314 = vsel %vm1398, %v6200, 0
  %6316 = vmatpush.bf16.msra.mxu0 %v6292
  %6317 = vmatpush.bf16.msra.mxu0 %v6291
  %6318 = vmatpush.bf16.msra.mxu0 %v6290
  %6319 = vmatpush.bf16.msra.mxu0 %v6289
  %6320 = vmatpush.bf16.msra.mxu0 %v6288
  %6321 = vmatpush.bf16.msra.mxu0 %v6287
  %6322 = vmatpush.bf16.msra.mxu0 %v6286
  %6323 = vmatpush.bf16.msra.mxu0 %v6285
  %6324 = vmatmul.bf16.gmra.mxu0 %v6199
  %v6325 = vpop.f32.mrf.mxu0
  %v6326 = vadd.f32 0.0, %v6325
  %v6327 = vpop.f32.mrf.mxu0
  %v6328 = vadd.f32 0.0, %v6327
  %6329 = vdwg.mxu0
  %6330 = vmatpush.bf16.msra.mxu0 0
  %6331 = vmatpush.bf16.msra.mxu0 0
  %6332 = vmatpush.bf16.msra.mxu0 %v6298
  %6333 = vmatpush.bf16.msra.mxu0 %v6297
  %6334 = vmatpush.bf16.msra.mxu0 %v6296
  %6335 = vmatpush.bf16.msra.mxu0 %v6295
  %6336 = vmatpush.bf16.msra.mxu0 %v6294
  %6337 = vmatpush.bf16.msra.mxu0 %v6293
  %6338 = vmatmul.bf16.gmra.mxu0 %v6314
  %v6339 = vpop.f32.mrf.mxu0
  %v6340 = vadd.f32 %v6326, %v6339
  %v6341 = vpop.f32.mrf.mxu0
  %v6342 = vadd.f32 %v6328, %v6341
  %6343 = vdwg.mxu0
  %v6344 = vadd.f32 %v6183, %v6340
  %v6345 = vadd.f32 %v6185, %v6342
  %v6346 = vld [vmem:[#allocation4 + $0xc0] sm:$0xff]
  %v6347 = vld [vmem:[#allocation4 + $0xc8] sm:$0xff]
  %v6348 = vld [vmem:[#allocation4 + $0xd0] sm:$0xff]
  %v6349 = vld [vmem:[#allocation4 + $0xd8] sm:$0xff]
  %v6350 = vld [vmem:[#allocation4 + $0xe0] sm:$0xff]
  %v6351 = vld [vmem:[#allocation4 + $0xe8] sm:$0xff]
  %v6352 = vld [vmem:[#allocation4 + $0xf0] sm:$0xff]
  %v6353 = vld [vmem:[#allocation4 + $0xf8] sm:$0xff]
  %v6354 = vmax.f32 %v6346, %v6350
  %v6355 = vmax.f32 %v6347, %v6351
  %v6356 = vmax.f32 %v6348, %v6352
  %v6357 = vmax.f32 %v6349, %v6353
  %v6358 = vpack.c.bf16 %v6356, %v6354
  %v6359 = vpack.c.bf16 %v6357, %v6355
  %v6360 = vld [vmem:[%s7 + $0x150] sm:$0xf]
  %v6361 = vld [vmem:[%s7 + $0x154] sm:$0xf]
  %v6362 = vld [vmem:[%s7 + $0x158] sm:$0xf]
  %v6363 = vld [vmem:[%s7 + $0x15c] sm:$0xf]
  %v6364 = vld [vmem:[%s7 + $0x160] sm:$0xf]
  %v6365 = vld [vmem:[%s7 + $0x164] sm:$0xf]
  %v6366 = vld [vmem:[%s7 + $0x168] sm:$0xf]
  %v6367 = vld [vmem:[%s7 + $0x16c] sm:$0xf]
  %v6368 = vld [vmem:[%s7 + $0x170] sm:$0xf]
  %v6369 = vld [vmem:[%s7 + $0x174] sm:$0xf]
  %v6370 = vld [vmem:[%s7 + $0x178] sm:$0xf]
  %v6371 = vld [vmem:[%s7 + $0x17c] sm:$0xf]
  %v6372 = vld [vmem:[%s7 + $0x180] sm:$0xf]
  %v6373 = vld [vmem:[%s7 + $0x184] sm:$0xf]
  %v6374 = vld [vmem:[%s7 + $0x188] sm:$0xf]
  %v6375 = vld [vmem:[%s7 + $0x18c] sm:$0xf]
  %v6376 = vld [vmem:[%s7 + $0x190] sm:$0xf]
  %v6377 = vld [vmem:[%s7 + $0x194] sm:$0xf]
  %v6378 = vld [vmem:[%s7 + $0x198] sm:$0xf]
  %v6379 = vld [vmem:[%s7 + $0x19c] sm:$0xf]
  %v6380 = vld [vmem:[%s7 + $0x1a0] sm:$0xf]
  %v6381 = vld [vmem:[%s7 + $0x1a4] sm:$0xf]
  %v6382 = vld [vmem:[%s7 + $0x1a8] sm:$0xf]
  %v6383 = vld [vmem:[%s7 + $0x1ac] sm:$0xf]
  %v6384 = vld [vmem:[%s7 + $0x1b0] sm:$0xf]
  %v6385 = vld [vmem:[%s7 + $0x1b4] sm:$0xf]
  %v6386 = vld [vmem:[%s7 + $0x1b8] sm:$0xf]
  %v6387 = vld [vmem:[%s7 + $0x1bc] sm:$0xf]
  %v6416 = vunpack.c.l.b16 %v6360
  %v6417 = vunpack.c.l.b16 %v6361
  %v6418 = vunpack.c.l.b16 %v6362
  %v6419 = vunpack.c.l.b16 %v6363
  %v6420 = vunpack.c.l.b16 %v6364
  %v6421 = vunpack.c.l.b16 %v6365
  %v6422 = vunpack.c.l.b16 %v6366
  %v6423 = vunpack.c.l.b16 %v6367
  %v6424 = vunpack.c.l.b16 %v6368
  %v6425 = vunpack.c.l.b16 %v6369
  %v6426 = vunpack.c.l.b16 %v6370
  %v6427 = vunpack.c.l.b16 %v6371
  %v6428 = vunpack.c.l.b16 %v6372
  %v6429 = vunpack.c.l.b16 %v6373
  %v6430 = vunpack.c.l.b16 %v6374
  %v6431 = vunpack.c.l.b16 %v6375
  %v6432 = vunpack.c.l.b16 %v6376
  %v6433 = vunpack.c.l.b16 %v6377
  %v6434 = vunpack.c.l.b16 %v6378
  %v6435 = vunpack.c.l.b16 %v6379
  %v6436 = vunpack.c.l.b16 %v6380
  %v6437 = vunpack.c.l.b16 %v6381
  %v6438 = vunpack.c.l.b16 %v6382
  %v6439 = vunpack.c.l.b16 %v6383
  %v6440 = vunpack.c.l.b16 %v6384
  %v6441 = vunpack.c.l.b16 %v6385
  %v6442 = vunpack.c.l.b16 %v6386
  %v6443 = vunpack.c.l.b16 %v6387
  %v6444 = vpack.c.b16 %v6417, %v6416
  %v6445 = vpack.c.b16 %v6419, %v6418
  %v6446 = vpack.c.b16 %v6421, %v6420
  %v6447 = vpack.c.b16 %v6423, %v6422
  %v6448 = vpack.c.b16 %v6425, %v6424
  %v6449 = vpack.c.b16 %v6427, %v6426
  %v6450 = vpack.c.b16 %v6429, %v6428
  %v6451 = vpack.c.b16 %v6431, %v6430
  %v6452 = vpack.c.b16 %v6433, %v6432
  %v6453 = vpack.c.b16 %v6435, %v6434
  %v6454 = vpack.c.b16 %v6437, %v6436
  %v6455 = vpack.c.b16 %v6439, %v6438
  %v6456 = vpack.c.b16 %v6441, %v6440
  %v6457 = vpack.c.b16 %v6443, %v6442
  %v6473 = vsel %vm1398, %v6359, 0
  %6475 = vmatpush.bf16.msra.mxu0 %v6451
  %6476 = vmatpush.bf16.msra.mxu0 %v6450
  %6477 = vmatpush.bf16.msra.mxu0 %v6449
  %6478 = vmatpush.bf16.msra.mxu0 %v6448
  %6479 = vmatpush.bf16.msra.mxu0 %v6447
  %6480 = vmatpush.bf16.msra.mxu0 %v6446
  %6481 = vmatpush.bf16.msra.mxu0 %v6445
  %6482 = vmatpush.bf16.msra.mxu0 %v6444
  %6483 = vmatmul.bf16.gmra.mxu0 %v6358
  %v6484 = vpop.f32.mrf.mxu0
  %v6485 = vadd.f32 0.0, %v6484
  %v6486 = vpop.f32.mrf.mxu0
  %v6487 = vadd.f32 0.0, %v6486
  %6488 = vdwg.mxu0
  %6489 = vmatpush.bf16.msra.mxu0 0
  %6490 = vmatpush.bf16.msra.mxu0 0
  %6491 = vmatpush.bf16.msra.mxu0 %v6457
  %6492 = vmatpush.bf16.msra.mxu0 %v6456
  %6493 = vmatpush.bf16.msra.mxu0 %v6455
  %6494 = vmatpush.bf16.msra.mxu0 %v6454
  %6495 = vmatpush.bf16.msra.mxu0 %v6453
  %6496 = vmatpush.bf16.msra.mxu0 %v6452
  %6497 = vmatmul.bf16.gmra.mxu0 %v6473
  %v6498 = vpop.f32.mrf.mxu0
  %v6499 = vadd.f32 %v6485, %v6498
  %v6500 = vpop.f32.mrf.mxu0
  %v6501 = vadd.f32 %v6487, %v6500
  %6502 = vdwg.mxu0
  %v6503 = vadd.f32 %v6344, %v6499
  %v6504 = vadd.f32 %v6345, %v6501
  %v6505 = vld [vmem:[#allocation4 + $0x100] sm:$0xff]
  %v6506 = vld [vmem:[#allocation4 + $0x108] sm:$0xff]
  %v6507 = vld [vmem:[#allocation4 + $0x110] sm:$0xff]
  %v6508 = vld [vmem:[#allocation4 + $0x118] sm:$0xff]
  %v6509 = vld [vmem:[#allocation4 + $0x120] sm:$0xff]
  %v6510 = vld [vmem:[#allocation4 + $0x128] sm:$0xff]
  %v6511 = vld [vmem:[#allocation4 + $0x130] sm:$0xff]
  %v6512 = vld [vmem:[#allocation4 + $0x138] sm:$0xff]
  %v6513 = vmax.f32 %v6505, %v6509
  %v6514 = vmax.f32 %v6506, %v6510
  %v6515 = vmax.f32 %v6507, %v6511
  %v6516 = vmax.f32 %v6508, %v6512
  %v6517 = vpack.c.bf16 %v6515, %v6513
  %v6518 = vpack.c.bf16 %v6516, %v6514
  %v6519 = vld [vmem:[%s7 + $0x1c0] sm:$0xf]
  %v6520 = vld [vmem:[%s7 + $0x1c4] sm:$0xf]
  %v6521 = vld [vmem:[%s7 + $0x1c8] sm:$0xf]
  %v6522 = vld [vmem:[%s7 + $0x1cc] sm:$0xf]
  %v6523 = vld [vmem:[%s7 + $0x1d0] sm:$0xf]
  %v6524 = vld [vmem:[%s7 + $0x1d4] sm:$0xf]
  %v6525 = vld [vmem:[%s7 + $0x1d8] sm:$0xf]
  %v6526 = vld [vmem:[%s7 + $0x1dc] sm:$0xf]
  %v6527 = vld [vmem:[%s7 + $0x1e0] sm:$0xf]
  %v6528 = vld [vmem:[%s7 + $0x1e4] sm:$0xf]
  %v6529 = vld [vmem:[%s7 + $0x1e8] sm:$0xf]
  %v6530 = vld [vmem:[%s7 + $0x1ec] sm:$0xf]
  %v6531 = vld [vmem:[%s7 + $0x1f0] sm:$0xf]
  %v6532 = vld [vmem:[%s7 + $0x1f4] sm:$0xf]
  %v6533 = vld [vmem:[%s7 + $0x1f8] sm:$0xf]
  %v6534 = vld [vmem:[%s7 + $0x1fc] sm:$0xf]
  %v6535 = vld [vmem:[%s7 + $0x200] sm:$0xf]
  %v6536 = vld [vmem:[%s7 + $0x204] sm:$0xf]
  %v6537 = vld [vmem:[%s7 + $0x208] sm:$0xf]
  %v6538 = vld [vmem:[%s7 + $0x20c] sm:$0xf]
  %v6539 = vld [vmem:[%s7 + $0x210] sm:$0xf]
  %v6540 = vld [vmem:[%s7 + $0x214] sm:$0xf]
  %v6541 = vld [vmem:[%s7 + $0x218] sm:$0xf]
  %v6542 = vld [vmem:[%s7 + $0x21c] sm:$0xf]
  %v6543 = vld [vmem:[%s7 + $0x220] sm:$0xf]
  %v6544 = vld [vmem:[%s7 + $0x224] sm:$0xf]
  %v6545 = vld [vmem:[%s7 + $0x228] sm:$0xf]
  %v6546 = vld [vmem:[%s7 + $0x22c] sm:$0xf]
  %v6575 = vunpack.c.l.b16 %v6519
  %v6576 = vunpack.c.l.b16 %v6520
  %v6577 = vunpack.c.l.b16 %v6521
  %v6578 = vunpack.c.l.b16 %v6522
  %v6579 = vunpack.c.l.b16 %v6523
  %v6580 = vunpack.c.l.b16 %v6524
  %v6581 = vunpack.c.l.b16 %v6525
  %v6582 = vunpack.c.l.b16 %v6526
  %v6583 = vunpack.c.l.b16 %v6527
  %v6584 = vunpack.c.l.b16 %v6528
  %v6585 = vunpack.c.l.b16 %v6529
  %v6586 = vunpack.c.l.b16 %v6530
  %v6587 = vunpack.c.l.b16 %v6531
  %v6588 = vunpack.c.l.b16 %v6532
  %v6589 = vunpack.c.l.b16 %v6533
  %v6590 = vunpack.c.l.b16 %v6534
  %v6591 = vunpack.c.l.b16 %v6535
  %v6592 = vunpack.c.l.b16 %v6536
  %v6593 = vunpack.c.l.b16 %v6537
  %v6594 = vunpack.c.l.b16 %v6538
  %v6595 = vunpack.c.l.b16 %v6539
  %v6596 = vunpack.c.l.b16 %v6540
  %v6597 = vunpack.c.l.b16 %v6541
  %v6598 = vunpack.c.l.b16 %v6542
  %v6599 = vunpack.c.l.b16 %v6543
  %v6600 = vunpack.c.l.b16 %v6544
  %v6601 = vunpack.c.l.b16 %v6545
  %v6602 = vunpack.c.l.b16 %v6546
  %v6603 = vpack.c.b16 %v6576, %v6575
  %v6604 = vpack.c.b16 %v6578, %v6577
  %v6605 = vpack.c.b16 %v6580, %v6579
  %v6606 = vpack.c.b16 %v6582, %v6581
  %v6607 = vpack.c.b16 %v6584, %v6583
  %v6608 = vpack.c.b16 %v6586, %v6585
  %v6609 = vpack.c.b16 %v6588, %v6587
  %v6610 = vpack.c.b16 %v6590, %v6589
  %v6611 = vpack.c.b16 %v6592, %v6591
  %v6612 = vpack.c.b16 %v6594, %v6593
  %v6613 = vpack.c.b16 %v6596, %v6595
  %v6614 = vpack.c.b16 %v6598, %v6597
  %v6615 = vpack.c.b16 %v6600, %v6599
  %v6616 = vpack.c.b16 %v6602, %v6601
  %v6632 = vsel %vm1398, %v6518, 0
  %6634 = vmatpush.bf16.msra.mxu0 %v6610
  %6635 = vmatpush.bf16.msra.mxu0 %v6609
  %6636 = vmatpush.bf16.msra.mxu0 %v6608
  %6637 = vmatpush.bf16.msra.mxu0 %v6607
  %6638 = vmatpush.bf16.msra.mxu0 %v6606
  %6639 = vmatpush.bf16.msra.mxu0 %v6605
  %6640 = vmatpush.bf16.msra.mxu0 %v6604
  %6641 = vmatpush.bf16.msra.mxu0 %v6603
  %6642 = vmatmul.bf16.gmra.mxu0 %v6517
  %v6643 = vpop.f32.mrf.mxu0
  %v6644 = vadd.f32 0.0, %v6643
  %v6645 = vpop.f32.mrf.mxu0
  %v6646 = vadd.f32 0.0, %v6645
  %6647 = vdwg.mxu0
  %6648 = vmatpush.bf16.msra.mxu0 0
  %6649 = vmatpush.bf16.msra.mxu0 0
  %6650 = vmatpush.bf16.msra.mxu0 %v6616
  %6651 = vmatpush.bf16.msra.mxu0 %v6615
  %6652 = vmatpush.bf16.msra.mxu0 %v6614
  %6653 = vmatpush.bf16.msra.mxu0 %v6613
  %6654 = vmatpush.bf16.msra.mxu0 %v6612
  %6655 = vmatpush.bf16.msra.mxu0 %v6611
  %6656 = vmatmul.bf16.gmra.mxu0 %v6632
  %v6657 = vpop.f32.mrf.mxu0
  %v6658 = vadd.f32 %v6644, %v6657
  %v6659 = vpop.f32.mrf.mxu0
  %v6660 = vadd.f32 %v6646, %v6659
  %6661 = vdwg.mxu0
  %v6662 = vadd.f32 %v6503, %v6658
  %v6663 = vadd.f32 %v6504, %v6660
  %v6664 = vld [vmem:[#allocation4 + $0x140] sm:$0xff]
  %v6665 = vld [vmem:[#allocation4 + $0x148] sm:$0xff]
  %v6666 = vld [vmem:[#allocation4 + $0x150] sm:$0xff]
  %v6667 = vld [vmem:[#allocation4 + $0x158] sm:$0xff]
  %v6668 = vld [vmem:[#allocation4 + $0x160] sm:$0xff]
  %v6669 = vld [vmem:[#allocation4 + $0x168] sm:$0xff]
  %v6670 = vld [vmem:[#allocation4 + $0x170] sm:$0xff]
  %v6671 = vld [vmem:[#allocation4 + $0x178] sm:$0xff]
  %v6672 = vmax.f32 %v6664, %v6668
  %v6673 = vmax.f32 %v6665, %v6669
  %v6674 = vmax.f32 %v6666, %v6670
  %v6675 = vmax.f32 %v6667, %v6671
  %v6676 = vpack.c.bf16 %v6674, %v6672
  %v6677 = vpack.c.bf16 %v6675, %v6673
  %v6678 = vld [vmem:[%s7 + $0x230] sm:$0xf]
  %v6679 = vld [vmem:[%s7 + $0x234] sm:$0xf]
  %v6680 = vld [vmem:[%s7 + $0x238] sm:$0xf]
  %v6681 = vld [vmem:[%s7 + $0x23c] sm:$0xf]
  %v6682 = vld [vmem:[%s7 + $0x240] sm:$0xf]
  %v6683 = vld [vmem:[%s7 + $0x244] sm:$0xf]
  %v6684 = vld [vmem:[%s7 + $0x248] sm:$0xf]
  %v6685 = vld [vmem:[%s7 + $0x24c] sm:$0xf]
  %v6686 = vld [vmem:[%s7 + $0x250] sm:$0xf]
  %v6687 = vld [vmem:[%s7 + $0x254] sm:$0xf]
  %v6688 = vld [vmem:[%s7 + $0x258] sm:$0xf]
  %v6689 = vld [vmem:[%s7 + $0x25c] sm:$0xf]
  %v6690 = vld [vmem:[%s7 + $0x260] sm:$0xf]
  %v6691 = vld [vmem:[%s7 + $0x264] sm:$0xf]
  %v6692 = vld [vmem:[%s7 + $0x268] sm:$0xf]
  %v6693 = vld [vmem:[%s7 + $0x26c] sm:$0xf]
  %v6694 = vld [vmem:[%s7 + $0x270] sm:$0xf]
  %v6695 = vld [vmem:[%s7 + $0x274] sm:$0xf]
  %v6696 = vld [vmem:[%s7 + $0x278] sm:$0xf]
  %v6697 = vld [vmem:[%s7 + $0x27c] sm:$0xf]
  %v6698 = vld [vmem:[%s7 + $0x280] sm:$0xf]
  %v6699 = vld [vmem:[%s7 + $0x284] sm:$0xf]
  %v6700 = vld [vmem:[%s7 + $0x288] sm:$0xf]
  %v6701 = vld [vmem:[%s7 + $0x28c] sm:$0xf]
  %v6702 = vld [vmem:[%s7 + $0x290] sm:$0xf]
  %v6703 = vld [vmem:[%s7 + $0x294] sm:$0xf]
  %v6704 = vld [vmem:[%s7 + $0x298] sm:$0xf]
  %v6705 = vld [vmem:[%s7 + $0x29c] sm:$0xf]
  %v6734 = vunpack.c.l.b16 %v6678
  %v6735 = vunpack.c.l.b16 %v6679
  %v6736 = vunpack.c.l.b16 %v6680
  %v6737 = vunpack.c.l.b16 %v6681
  %v6738 = vunpack.c.l.b16 %v6682
  %v6739 = vunpack.c.l.b16 %v6683
  %v6740 = vunpack.c.l.b16 %v6684
  %v6741 = vunpack.c.l.b16 %v6685
  %v6742 = vunpack.c.l.b16 %v6686
  %v6743 = vunpack.c.l.b16 %v6687
  %v6744 = vunpack.c.l.b16 %v6688
  %v6745 = vunpack.c.l.b16 %v6689
  %v6746 = vunpack.c.l.b16 %v6690
  %v6747 = vunpack.c.l.b16 %v6691
  %v6748 = vunpack.c.l.b16 %v6692
  %v6749 = vunpack.c.l.b16 %v6693
  %v6750 = vunpack.c.l.b16 %v6694
  %v6751 = vunpack.c.l.b16 %v6695
  %v6752 = vunpack.c.l.b16 %v6696
  %v6753 = vunpack.c.l.b16 %v6697
  %v6754 = vunpack.c.l.b16 %v6698
  %v6755 = vunpack.c.l.b16 %v6699
  %v6756 = vunpack.c.l.b16 %v6700
  %v6757 = vunpack.c.l.b16 %v6701
  %v6758 = vunpack.c.l.b16 %v6702
  %v6759 = vunpack.c.l.b16 %v6703
  %v6760 = vunpack.c.l.b16 %v6704
  %v6761 = vunpack.c.l.b16 %v6705
  %v6762 = vpack.c.b16 %v6735, %v6734
  %v6763 = vpack.c.b16 %v6737, %v6736
  %v6764 = vpack.c.b16 %v6739, %v6738
  %v6765 = vpack.c.b16 %v6741, %v6740
  %v6766 = vpack.c.b16 %v6743, %v6742
  %v6767 = vpack.c.b16 %v6745, %v6744
  %v6768 = vpack.c.b16 %v6747, %v6746
  %v6769 = vpack.c.b16 %v6749, %v6748
  %v6770 = vpack.c.b16 %v6751, %v6750
  %v6771 = vpack.c.b16 %v6753, %v6752
  %v6772 = vpack.c.b16 %v6755, %v6754
  %v6773 = vpack.c.b16 %v6757, %v6756
  %v6774 = vpack.c.b16 %v6759, %v6758
  %v6775 = vpack.c.b16 %v6761, %v6760
  %v6791 = vsel %vm1398, %v6677, 0
  %6793 = vmatpush.bf16.msra.mxu0 %v6769
  %6794 = vmatpush.bf16.msra.mxu0 %v6768
  %6795 = vmatpush.bf16.msra.mxu0 %v6767
  %6796 = vmatpush.bf16.msra.mxu0 %v6766
  %6797 = vmatpush.bf16.msra.mxu0 %v6765
  %6798 = vmatpush.bf16.msra.mxu0 %v6764
  %6799 = vmatpush.bf16.msra.mxu0 %v6763
  %6800 = vmatpush.bf16.msra.mxu0 %v6762
  %6801 = vmatmul.bf16.gmra.mxu0 %v6676
  %v6802 = vpop.f32.mrf.mxu0
  %v6803 = vadd.f32 0.0, %v6802
  %v6804 = vpop.f32.mrf.mxu0
  %v6805 = vadd.f32 0.0, %v6804
  %6806 = vdwg.mxu0
  %6807 = vmatpush.bf16.msra.mxu0 0
  %6808 = vmatpush.bf16.msra.mxu0 0
  %6809 = vmatpush.bf16.msra.mxu0 %v6775
  %6810 = vmatpush.bf16.msra.mxu0 %v6774
  %6811 = vmatpush.bf16.msra.mxu0 %v6773
  %6812 = vmatpush.bf16.msra.mxu0 %v6772
  %6813 = vmatpush.bf16.msra.mxu0 %v6771
  %6814 = vmatpush.bf16.msra.mxu0 %v6770
  %6815 = vmatmul.bf16.gmra.mxu0 %v6791
  %v6816 = vpop.f32.mrf.mxu0
  %v6817 = vadd.f32 %v6803, %v6816
  %v6818 = vpop.f32.mrf.mxu0
  %v6819 = vadd.f32 %v6805, %v6818
  %6820 = vdwg.mxu0
  %v6821 = vadd.f32 %v6662, %v6817
  %v6822 = vadd.f32 %v6663, %v6819
  %v6823 = vld [vmem:[#allocation4 + $0x180] sm:$0xff]
  %v6824 = vld [vmem:[#allocation4 + $0x188] sm:$0xff]
  %v6825 = vld [vmem:[#allocation4 + $0x190] sm:$0xff]
  %v6826 = vld [vmem:[#allocation4 + $0x198] sm:$0xff]
  %v6827 = vld [vmem:[#allocation4 + $0x1a0] sm:$0xff]
  %v6828 = vld [vmem:[#allocation4 + $0x1a8] sm:$0xff]
  %v6829 = vld [vmem:[#allocation4 + $0x1b0] sm:$0xff]
  %v6830 = vld [vmem:[#allocation4 + $0x1b8] sm:$0xff]
  %v6831 = vmax.f32 %v6823, %v6827
  %v6832 = vmax.f32 %v6824, %v6828
  %v6833 = vmax.f32 %v6825, %v6829
  %v6834 = vmax.f32 %v6826, %v6830
  %v6835 = vpack.c.bf16 %v6833, %v6831
  %v6836 = vpack.c.bf16 %v6834, %v6832
  %v6837 = vld [vmem:[%s7 + $0x2a0] sm:$0xf]
  %v6838 = vld [vmem:[%s7 + $0x2a4] sm:$0xf]
  %v6839 = vld [vmem:[%s7 + $0x2a8] sm:$0xf]
  %v6840 = vld [vmem:[%s7 + $0x2ac] sm:$0xf]
  %v6841 = vld [vmem:[%s7 + $0x2b0] sm:$0xf]
  %v6842 = vld [vmem:[%s7 + $0x2b4] sm:$0xf]
  %v6843 = vld [vmem:[%s7 + $0x2b8] sm:$0xf]
  %v6844 = vld [vmem:[%s7 + $0x2bc] sm:$0xf]
  %v6845 = vld [vmem:[%s7 + $0x2c0] sm:$0xf]
  %v6846 = vld [vmem:[%s7 + $0x2c4] sm:$0xf]
  %v6847 = vld [vmem:[%s7 + $0x2c8] sm:$0xf]
  %v6848 = vld [vmem:[%s7 + $0x2cc] sm:$0xf]
  %v6849 = vld [vmem:[%s7 + $0x2d0] sm:$0xf]
  %v6850 = vld [vmem:[%s7 + $0x2d4] sm:$0xf]
  %v6851 = vld [vmem:[%s7 + $0x2d8] sm:$0xf]
  %v6852 = vld [vmem:[%s7 + $0x2dc] sm:$0xf]
  %v6853 = vld [vmem:[%s7 + $0x2e0] sm:$0xf]
  %v6854 = vld [vmem:[%s7 + $0x2e4] sm:$0xf]
  %v6855 = vld [vmem:[%s7 + $0x2e8] sm:$0xf]
  %v6856 = vld [vmem:[%s7 + $0x2ec] sm:$0xf]
  %v6857 = vld [vmem:[%s7 + $0x2f0] sm:$0xf]
  %v6858 = vld [vmem:[%s7 + $0x2f4] sm:$0xf]
  %v6859 = vld [vmem:[%s7 + $0x2f8] sm:$0xf]
  %v6860 = vld [vmem:[%s7 + $0x2fc] sm:$0xf]
  %v6861 = vld [vmem:[%s7 + $0x300] sm:$0xf]
  %v6862 = vld [vmem:[%s7 + $0x304] sm:$0xf]
  %v6863 = vld [vmem:[%s7 + $0x308] sm:$0xf]
  %v6864 = vld [vmem:[%s7 + $0x30c] sm:$0xf]
  %v6893 = vunpack.c.l.b16 %v6837
  %v6894 = vunpack.c.l.b16 %v6838
  %v6895 = vunpack.c.l.b16 %v6839
  %v6896 = vunpack.c.l.b16 %v6840
  %v6897 = vunpack.c.l.b16 %v6841
  %v6898 = vunpack.c.l.b16 %v6842
  %v6899 = vunpack.c.l.b16 %v6843
  %v6900 = vunpack.c.l.b16 %v6844
  %v6901 = vunpack.c.l.b16 %v6845
  %v6902 = vunpack.c.l.b16 %v6846
  %v6903 = vunpack.c.l.b16 %v6847
  %v6904 = vunpack.c.l.b16 %v6848
  %v6905 = vunpack.c.l.b16 %v6849
  %v6906 = vunpack.c.l.b16 %v6850
  %v6907 = vunpack.c.l.b16 %v6851
  %v6908 = vunpack.c.l.b16 %v6852
  %v6909 = vunpack.c.l.b16 %v6853
  %v6910 = vunpack.c.l.b16 %v6854
  %v6911 = vunpack.c.l.b16 %v6855
  %v6912 = vunpack.c.l.b16 %v6856
  %v6913 = vunpack.c.l.b16 %v6857
  %v6914 = vunpack.c.l.b16 %v6858
  %v6915 = vunpack.c.l.b16 %v6859
  %v6916 = vunpack.c.l.b16 %v6860
  %v6917 = vunpack.c.l.b16 %v6861
  %v6918 = vunpack.c.l.b16 %v6862
  %v6919 = vunpack.c.l.b16 %v6863
  %v6920 = vunpack.c.l.b16 %v6864
  %v6921 = vpack.c.b16 %v6894, %v6893
  %v6922 = vpack.c.b16 %v6896, %v6895
  %v6923 = vpack.c.b16 %v6898, %v6897
  %v6924 = vpack.c.b16 %v6900, %v6899
  %v6925 = vpack.c.b16 %v6902, %v6901
  %v6926 = vpack.c.b16 %v6904, %v6903
  %v6927 = vpack.c.b16 %v6906, %v6905
  %v6928 = vpack.c.b16 %v6908, %v6907
  %v6929 = vpack.c.b16 %v6910, %v6909
  %v6930 = vpack.c.b16 %v6912, %v6911
  %v6931 = vpack.c.b16 %v6914, %v6913
  %v6932 = vpack.c.b16 %v6916, %v6915
  %v6933 = vpack.c.b16 %v6918, %v6917
  %v6934 = vpack.c.b16 %v6920, %v6919
  %v6950 = vsel %vm1398, %v6836, 0
  %6952 = vmatpush.bf16.msra.mxu0 %v6928
  %6953 = vmatpush.bf16.msra.mxu0 %v6927
  %6954 = vmatpush.bf16.msra.mxu0 %v6926
  %6955 = vmatpush.bf16.msra.mxu0 %v6925
  %6956 = vmatpush.bf16.msra.mxu0 %v6924
  %6957 = vmatpush.bf16.msra.mxu0 %v6923
  %6958 = vmatpush.bf16.msra.mxu0 %v6922
  %6959 = vmatpush.bf16.msra.mxu0 %v6921
  %6960 = vmatmul.bf16.gmra.mxu0 %v6835
  %v6961 = vpop.f32.mrf.mxu0
  %v6962 = vadd.f32 0.0, %v6961
  %v6963 = vpop.f32.mrf.mxu0
  %v6964 = vadd.f32 0.0, %v6963
  %6965 = vdwg.mxu0
  %6966 = vmatpush.bf16.msra.mxu0 0
  %6967 = vmatpush.bf16.msra.mxu0 0
  %6968 = vmatpush.bf16.msra.mxu0 %v6934
  %6969 = vmatpush.bf16.msra.mxu0 %v6933
  %6970 = vmatpush.bf16.msra.mxu0 %v6932
  %6971 = vmatpush.bf16.msra.mxu0 %v6931
  %6972 = vmatpush.bf16.msra.mxu0 %v6930
  %6973 = vmatpush.bf16.msra.mxu0 %v6929
  %6974 = vmatmul.bf16.gmra.mxu0 %v6950
  %v6975 = vpop.f32.mrf.mxu0
  %v6976 = vadd.f32 %v6962, %v6975
  %v6977 = vpop.f32.mrf.mxu0
  %v6978 = vadd.f32 %v6964, %v6977
  %6979 = vdwg.mxu0
  %v6980 = vadd.f32 %v6821, %v6976
  %v6981 = vadd.f32 %v6822, %v6978
  %v6982 = vld [vmem:[%s8] sm:$0x1]
  %v6984 = vperm.slane %v6982, 0
  %v6986 = vadd.f32 %v6980, %v6984
  %v6987 = vadd.f32 %v6981, %v6984
  %6988 = vst [vmem:[%s9] sm:$0xff] %v6986
  %6989 = vst [vmem:[%s9 + $0x8] sm:$0xff] %v6987
  // Predicated region
  $region38: #{simple_cnn_forward.1} parent=0 // pred_check
    _
  $region39: #{simple_cnn_forward.1} parent=0 // pred_check_branch
    %6991 = sbr.rel (0) target = $region41
  $region40: #{simple_cnn_forward.1} parent=0 // pred_region
    _
  $region41: #{simple_cnn_forward.1} parent=0 // pred_fallthru
    _
  // Predicated region
  $region42: #{simple_cnn_forward.1} parent=0 // pred_check
    _
  $region43: #{simple_cnn_forward.1} parent=0 // pred_check_branch
    %6993 = sbr.rel (0) target = $region45
  $region44: #{simple_cnn_forward.1} parent=0 // pred_region
    _
  $region45: #{simple_cnn_forward.1} parent=0 // pred_fallthru
    _

</llo_original>
